<compile_context>
chip_gen: v5e
topology: v5e:2x2
jax: 0.10.0
libtpu: 0.0.40
codegen_flags: <defaults>
</compile_context>

<pallas_src>
import functools

import jax
import jax.numpy as jnp
from jax.experimental import pallas as pl
from jax.experimental.pallas import tpu as pltpu

DTYPE = jnp.float32          # activations / LN / softmax math
MM_DTYPE = jnp.bfloat16      # streamed matmul weights (MXU fast path, f32 acc)
EPS = 1e-5
IMG_SIZE = 16
CONTEXT = 8
VOCAB = 64
LANE = 128


# --------------------------------------------------------------------------
# small in-kernel math helper
# --------------------------------------------------------------------------
def _ln(x, g, b):
    mu = jnp.mean(x, axis=-1, keepdims=True)
    var = jnp.mean((x - mu) ** 2, axis=-1, keepdims=True)
    return (x - mu) * jax.lax.rsqrt(var + EPS) * g + b


# --------------------------------------------------------------------------
# fused transformer encoder + feature head: one pallas_call, grid (B, L)
# --------------------------------------------------------------------------
_STACK_NAMES = ('ln1_g', 'ln1_b', 'w_qkv', 'b_qkv', 'w_out', 'b_out',
                'ln2_g', 'ln2_b', 'w_fc', 'b_fc', 'w_proj', 'b_proj')


def _encoder_kernel(sel_ref, *refs, heads, causal, pre_ln):
    # refs = x, [pre_g, pre_b]?, 12 stacked block params, head (g, b, w_pad),
    #        o_ref, then scratches (qkv, scores, attn, residual)
    qkv_ref, s_ref, attn_ref, acc_ref = refs[-4:]
    o_ref = refs[-5]
    x_ref = refs[0]
    base = 3 if pre_ln else 1
    (ln1_g, ln1_b, w_qkv, b_qkv, w_out, b_out,
     ln2_g, ln2_b, w_fc, b_fc, w_proj, b_proj,
     hg, hb, hw) = refs[base:base + 15]

    b = pl.program_id(0)
    l = pl.program_id(1)
    S, D = acc_ref.shape
    H = heads
    Dh = D // H
    scale = 1.0 / float(Dh) ** 0.5
    mm = w_qkv.dtype

    @pl.when(l == 0)
    def _():
        x0 = x_ref[...].astype(jnp.float32)
        if pre_ln:
            x0 = _ln(x0, refs[1][...], refs[2][...])
        acc_ref[...] = x0

    x = acc_ref[...]

    # ---- attention: ONE fused lane-dense QKV matmul (bf16 in, f32 acc) ----
    h = _ln(x, ln1_g[...], ln1_b[...])
    qkv_ref[...] = jnp.dot(h.astype(mm), w_qkv[...],
                           preferred_element_type=jnp.float32) + b_qkv[...]

    if causal:
        ri = jax.lax.broadcasted_iota(jnp.int32, (S, S), 0)
        ci = jax.lax.broadcasted_iota(jnp.int32, (S, S), 1)
        mask2d = jnp.where(ci <= ri, 0.0, -1e30).astype(jnp.float32)

    # per-head scores stacked along sublanes -> a single batched softmax
    for hh in range(H):
        q_h = qkv_ref[:, hh * Dh:(hh + 1) * Dh] * scale
        k_h = qkv_ref[:, D + hh * Dh:D + (hh + 1) * Dh]
        s_h = jax.lax.dot_general(q_h.astype(mm), k_h.astype(mm),
                                  (((1,), (1,)), ((), ())),
                                  preferred_element_type=jnp.float32)
        if causal:
            s_h = s_h + mask2d
        s_ref[hh * S:(hh + 1) * S, :] = s_h

    s = s_ref[...]
    s = s - jnp.max(s, axis=-1, keepdims=True)
    p = jnp.exp(s)
    p = p * pl.reciprocal(jnp.sum(p, axis=-1, keepdims=True), approx=True)
    s_ref[...] = p

    # per-head PV matmuls, heads re-assembled once, ONE (D, D) out projection
    for hh in range(H):
        v_h = qkv_ref[:, 2 * D + hh * Dh:2 * D + (hh + 1) * Dh]
        o_h = jnp.dot(s_ref[hh * S:(hh + 1) * S, :].astype(mm),
                      v_h.astype(mm), preferred_element_type=jnp.float32)
        attn_ref[:, hh * Dh:(hh + 1) * Dh] = o_h

    x = x + jnp.dot(attn_ref[...].astype(mm), w_out[...],
                    preferred_element_type=jnp.float32) + b_out[...]

    # ---- MLP with QuickGELU (as in CLIP) ----
    h2 = _ln(x, ln2_g[...], ln2_b[...])
    hid = jnp.dot(h2.astype(mm), w_fc[...],
                  preferred_element_type=jnp.float32) + b_fc[...]
    hid = hid * jax.nn.sigmoid(1.702 * hid)
    x = x + jnp.dot(hid.astype(mm), w_proj[...],
                    preferred_element_type=jnp.float32) + b_proj[...]
    acc_ref[...] = x

    # ---- fused head on the last layer: LN + proj + L2-normalise ----
    @pl.when(l == pl.num_programs(1) - 1)
    def _():
        row = acc_ref[pl.ds(sel_ref[b], 1), :]          # CLS / EOT token row
        f = _ln(row, hg[...], hb[...])
        y = jnp.dot(f.astype(hw.dtype), hw[...],
                    preferred_element_type=jnp.float32)  # (1, 128) zero-padded
        inv = jax.lax.rsqrt(
            jnp.maximum(jnp.sum(y * y, axis=-1, keepdims=True), 1e-24))
        o_ref[...] = jnp.broadcast_to(y * inv, o_ref.shape).astype(o_ref.dtype)


def run_encoder(x, stack, heads, *, causal, pre_ln, head, sel):
    """x: (B, S, D).  Runs all L layers + the feature head in one pallas_call.

    Grid (B, L): batch 'parallel', layers 'arbitrary' (residual stream stays
    in a VMEM scratch).  `sel` (B,) selects the CLS/EOT row per sample via
    scalar prefetch.  Output is a lane-dense (B, 8, 128) slab; row 0 holds the
    L2-normalised, zero-padded feature vector.
    """
    B, S, D = x.shape
    L = stack['w_qkv'].shape[0]
    H = heads
    hg, hb, hw = head
    Np = hw.shape[1]

    ops = [x]
    in_specs = [pl.BlockSpec((None, S, D), lambda b, l, s: (b, 0, 0))]
    if pre_ln is not None:
        g, bet = pre_ln
        ops += [g.reshape(1, D), bet.reshape(1, D)]
        in_specs += [pl.BlockSpec((1, D), lambda b, l, s: (0, 0)),
                     pl.BlockSpec((1, D), lambda b, l, s: (0, 0))]
    for name in _STACK_NAMES:
        w = stack[name]
        ops.append(w)
        in_specs.append(pl.BlockSpec((None,) + w.shape[1:],
                                     lambda b, l, s: (l, 0, 0)))
    ops += [hg.reshape(1, D), hb.reshape(1, D), hw]
    in_specs += [pl.BlockSpec((1, D), lambda b, l, s: (0, 0)),
                 pl.BlockSpec((1, D), lambda b, l, s: (0, 0)),
                 pl.BlockSpec(hw.shape, lambda b, l, s: (0, 0))]

    kern = functools.partial(_encoder_kernel, heads=heads, causal=causal,
                             pre_ln=pre_ln is not None)
    # NOTE: at real CLIP-L/14 widths (D=1024, 4D=4096, 24 layers) the stacked
    # w_fc / w_proj streaming must be tiled along the 4*D axis (inner k-grid
    # or pltpu.emit_pipeline) and vmem_limit_bytes set per TPU generation.
    out = pl.pallas_call(
        kern,
        out_shape=jax.ShapeDtypeStruct((B, 8, Np), x.dtype),
        grid_spec=pltpu.PrefetchScalarGridSpec(
            num_scalar_prefetch=1,
            grid=(B, L),
            in_specs=in_specs,
            out_specs=pl.BlockSpec((None, 8, Np), lambda b, l, s: (b, 0, 0)),
            scratch_shapes=[
                pltpu.VMEM((S, 3 * D), jnp.float32),   # fused QKV
                pltpu.VMEM((H * S, S), jnp.float32),   # head-stacked scores
                pltpu.VMEM((S, D), jnp.float32),       # re-assembled attention
                pltpu.VMEM((S, D), jnp.float32),       # residual stream
            ]),
        compiler_params=pltpu.CompilerParams(
            dimension_semantics=("parallel", "arbitrary")),
    )(sel, *ops)
    return out[:, 0, :]


# --------------------------------------------------------------------------
# Tiny CLIP-style encoders built on the fused kernel
# --------------------------------------------------------------------------
def clip_encode_image(p, x, cfg):
    """x is NCHW (B,3,H,W); patch-embed (im2col matmul) runs in plain XLA."""
    B, C, Himg, Wimg = x.shape
    patch, width = cfg['patch'], cfg['width']
    gh, gw = Himg // patch, Wimg // patch
    patches = x.reshape(B, C, gh, patch, gw, patch)
    patches = patches.transpose(0, 2, 4, 1, 3, 5).reshape(B, gh * gw,
                                                          C * patch * patch)
    w_conv = p['conv1_w'].reshape(width, C * patch * patch).T
    emb = jnp.dot(patches, w_conv)                          # conv1 (no bias)
    cls = jnp.broadcast_to(p['class_emb'][None, None, :], (B, 1, width))
    tokens = jnp.concatenate([cls, emb], axis=1) + p['pos_emb'][None]
    sel = jnp.zeros((B,), jnp.int32)                        # CLS token = row 0
    feats = run_encoder(tokens, p['stack'], cfg['heads'], causal=False,
                        pre_ln=(p['ln_pre_g'], p['ln_pre_b']),
                        head=(p['ln_post_g'], p['ln_post_b'], p['proj_pad']),
                        sel=sel)
    return feats[:, :cfg['embed']]


def clip_encode_text(p, t, cfg):
    B, S = t.shape
    D = cfg['text_width']
    x = p['token_emb'][t] + p['pos_emb_text'][None, :S]
    sel = jnp.argmax(t, axis=-1).astype(jnp.int32)          # EOT has max id
    feats = run_encoder(x, p['text_stack'], cfg['text_heads'], causal=True,
                        pre_ln=None,
                        head=(p['ln_final_g'], p['ln_final_b'],
                              p['text_proj_pad']),
                        sel=sel)
    return feats[:, :cfg['embed']]


# --------------------------------------------------------------------------
# Parameter initialisation (deterministic, synthetic)
# --------------------------------------------------------------------------
def init_block(key, width):
    ks = jax.random.split(key, 4)
    s = 0.02
    return dict(
        ln1_g=jnp.ones((width,), DTYPE), ln1_b=jnp.zeros((width,), DTYPE),
        w_qkv=jax.random.normal(ks[0], (width, 3 * width), DTYPE) * s,
        b_qkv=jnp.zeros((3 * width,), DTYPE),
        w_out=jax.random.normal(ks[1], (width, width), DTYPE) * s,
        b_out=jnp.zeros((width,), DTYPE),
        ln2_g=jnp.ones((width,), DTYPE), ln2_b=jnp.zeros((width,), DTYPE),
        w_fc=jax.random.normal(ks[2], (width, 4 * width), DTYPE) * s,
        b_fc=jnp.zeros((4 * width,), DTYPE),
        w_proj=jax.random.normal(ks[3], (4 * width, width), DTYPE) * s,
        b_proj=jnp.zeros((width,), DTYPE),
    )


def stack_blocks(blocks):
    """Stack per-layer params on a leading L axis.  Big matmul weights go to
    bf16 for the MXU (f32 accumulation in-kernel); LN params and biases stay
    f32 so all VPU/EUP elementwise math remains f32."""
    L = len(blocks)
    D = blocks[0]['w_out'].shape[0]
    stk = lambda n, dt=DTYPE: jnp.stack([blk[n] for blk in blocks]).astype(dt)
    return dict(
        ln1_g=stk('ln1_g').reshape(L, 1, D), ln1_b=stk('ln1_b').reshape(L, 1, D),
        w_qkv=stk('w_qkv', MM_DTYPE),                        # (L, D, 3D) fused
        b_qkv=stk('b_qkv').reshape(L, 1, 3 * D),
        w_out=stk('w_out', MM_DTYPE),                        # (L, D, D)
        b_out=stk('b_out').reshape(L, 1, D),
        ln2_g=stk('ln2_g').reshape(L, 1, D), ln2_b=stk('ln2_b').reshape(L, 1, D),
        w_fc=stk('w_fc', MM_DTYPE), b_fc=stk('b_fc').reshape(L, 1, 4 * D),
        w_proj=stk('w_proj', MM_DTYPE), b_proj=stk('b_proj').reshape(L, 1, D),
    )


def init_clip_params(key, cfg):
    width, embed, tw = cfg['width'], cfg['embed'], cfg['text_width']
    patch = cfg['patch']
    n_tok = (IMG_SIZE // patch) ** 2 + 1
    keys = jax.random.split(key, 9)
    s = 0.02
    proj = jax.random.normal(keys[3], (width, embed), DTYPE) * s
    text_proj = jax.random.normal(keys[6], (tw, embed), DTYPE) * s
    params = dict(
        conv1_w=jax.random.normal(keys[0], (width, 3, patch, patch), DTYPE) * s,
        class_emb=jax.random.normal(keys[1], (width,), DTYPE) * s,
        pos_emb=jax.random.normal(keys[2], (n_tok, width), DTYPE) * s,
        ln_pre_g=jnp.ones((width,), DTYPE), ln_pre_b=jnp.zeros((width,), DTYPE),
        ln_post_g=jnp.ones((width,), DTYPE), ln_post_b=jnp.zeros((width,), DTYPE),
        # 128-lane zero-padded projection heads, built ONCE at init
        # (padded columns contribute 0 to the L2 norm -> result unchanged)
        proj_pad=jnp.zeros((width, LANE), MM_DTYPE).at[:, :embed].set(
            proj.astype(MM_DTYPE)),
        token_emb=jax.random.normal(keys[4], (cfg['vocab'], tw), DTYPE) * s,
        pos_emb_text=jax.random.normal(keys[5], (cfg['context'], tw), DTYPE) * s,
        ln_final_g=jnp.ones((tw,), DTYPE), ln_final_b=jnp.zeros((tw,), DTYPE),
        text_proj_pad=jnp.zeros((tw, LANE), MM_DTYPE).at[:, :embed].set(
            text_proj.astype(MM_DTYPE)),
    )
    params['stack'] = stack_blocks(
        [init_block(k, width) for k in jax.random.split(keys[7], cfg['layers'])])
    params['text_stack'] = stack_blocks(
        [init_block(k, tw) for k in jax.random.split(keys[8], cfg['text_layers'])])
    return params


# --------------------------------------------------------------------------
# Wrapper (mirrors the PyTorch module's forward)
# --------------------------------------------------------------------------
class Blip2ClipB32L14Wrapper:
    name = 'blip2clipb32l14'

    def __init__(self, key):
        kb, kl, kg = jax.random.split(key, 3)
        self.b32_cfg = dict(patch=8, width=32, heads=2, layers=2, embed=16,
                            text_width=32, text_heads=2, text_layers=2,
                            vocab=VOCAB, context=CONTEXT)
        self.l14_cfg = dict(patch=4, width=64, heads=4, layers=2, embed=24,
                            text_width=64, text_heads=4, text_layers=2,
                            vocab=VOCAB, context=CONTEXT)
        self.b32 = init_clip_params(kb, self.b32_cfg)
        self.l14 = init_clip_params(kl, self.l14_cfg)
        self.gen_w = jax.random.normal(kg, (3, CONTEXT * VOCAB), DTYPE) * 0.5
        self._forward_jit = jax.jit(self._forward_numeric)

    def _generate_proxy(self, x_blip):
        # TODO(synk): real BLIP-2 autoregressive generation (sampling, top-k,
        # min/max length) and the HF batch_decode / clip.tokenize BPE
        # round-trip have no Pallas equivalent; deterministic pixel->id proxy.
        B = x_blip.shape[0]
        pooled = jnp.mean(x_blip, axis=(2, 3))                  # (B, 3)
        logits = jnp.dot(pooled, self.gen_w).reshape(B, CONTEXT, VOCAB)
        ids = jnp.clip(jnp.argmax(logits, axis=-1).astype(jnp.int32),
                       1, VOCAB - 3)
        sot = jnp.full((B, 1), VOCAB - 2, jnp.int32)
        eot = jnp.full((B, 1), VOCAB - 1, jnp.int32)
        return jnp.concatenate([sot, ids[:, :CONTEXT - 2], eot], axis=1)

    def _forward_numeric(self, x_blip, x_clip, t_clip):
        gen_ids = self._generate_proxy(x_blip)          # stands in for clip.tokenize
        B = t_clip.shape[0]
        t_all = jnp.concatenate([t_clip, gen_ids], axis=0)   # batch both text encodes
        feats = []
        for params, cfg in ((self.b32, self.b32_cfg), (self.l14, self.l14_cfg)):
            img = clip_encode_image(params, x_clip, cfg)
            txt = clip_encode_text(params, t_all, cfg)
            feats += [img, txt[:B], txt[B:]]
        return gen_ids, tuple(feats)

    def __call__(self, x_blip, x_clip, t_clip):
        gen_ids, feats = self._forward_jit(x_blip, x_clip, t_clip)
        # host-side text decode happens only after all device work is dispatched
        generated_text = [" ".join(f"tok{int(i)}" for i in row[1:-1])
                          for row in jax.device_get(gen_ids)]
        return (feats[0], feats[1], feats[2], feats[3], feats[4], feats[5],
                generated_text)


# --------------------------------------------------------------------------
if __name__ == "__main__":
    key = jax.random.PRNGKey(0)
    k1, k2, k3 = jax.random.split(key, 3)
    B = 2
    x_blip = jax.random.normal(k1, (B, 3, IMG_SIZE, IMG_SIZE), DTYPE)   # NCHW
    x_clip = jax.random.normal(k2, (B, 3, IMG_SIZE, IMG_SIZE), DTYPE)   # NCHW
    t_clip = jax.random.randint(k3, (B, CONTEXT), 1, VOCAB - 2).astype(jnp.int32)
    t_clip = t_clip.at[:, 0].set(VOCAB - 2)    # SOT
    t_clip = t_clip.at[:, -1].set(VOCAB - 1)   # EOT (max id -> argmax picks it)

    model = Blip2ClipB32L14Wrapper(jax.random.PRNGKey(42))
    out = model(x_blip, x_clip, t_clip)
    jax.block_until_ready(out[:6])

    print("KERNEL_OK")
</pallas_src>

<mosaic_0001>
module attributes {stable_mosaic.version = 11 : i64} {
  func.func @_encoder_kernel(%arg0: i32, %arg1: i32, %arg2: memref<2xi32, #tpu.memory_space<smem>>, %arg3: memref<1x5x32xf32, #tpu.memory_space<vmem>>, %arg4: memref<1x32xf32, #tpu.memory_space<vmem>>, %arg5: memref<1x32xf32, #tpu.memory_space<vmem>>, %arg6: memref<1x1x32xf32, #tpu.memory_space<vmem>>, %arg7: memref<1x1x32xf32, #tpu.memory_space<vmem>>, %arg8: memref<1x32x96xbf16, #tpu.memory_space<vmem>>, %arg9: memref<1x1x96xf32, #tpu.memory_space<vmem>>, %arg10: memref<1x32x32xbf16, #tpu.memory_space<vmem>>, %arg11: memref<1x1x32xf32, #tpu.memory_space<vmem>>, %arg12: memref<1x1x32xf32, #tpu.memory_space<vmem>>, %arg13: memref<1x1x32xf32, #tpu.memory_space<vmem>>, %arg14: memref<1x32x128xbf16, #tpu.memory_space<vmem>>, %arg15: memref<1x1x128xf32, #tpu.memory_space<vmem>>, %arg16: memref<1x128x32xbf16, #tpu.memory_space<vmem>>, %arg17: memref<1x1x32xf32, #tpu.memory_space<vmem>>, %arg18: memref<1x32xf32, #tpu.memory_space<vmem>>, %arg19: memref<1x32xf32, #tpu.memory_space<vmem>>, %arg20: memref<32x128xbf16, #tpu.memory_space<vmem>>, %arg21: memref<1x8x128xf32, #tpu.memory_space<vmem>>, %arg22: memref<5x96xf32, #tpu.memory_space<vmem>>, %arg23: memref<10x5xf32, #tpu.memory_space<vmem>>, %arg24: memref<5x32xf32, #tpu.memory_space<vmem>>, %arg25: memref<5x32xf32, #tpu.memory_space<vmem>>) attributes {dimension_semantics = [#tpu.dimension_semantics<parallel>, #tpu.dimension_semantics<arbitrary>], iteration_bounds = array<i64: 2, 2>, scalar_prefetch = 1 : i64, scratch_operands = 4 : i64, tpu.core_type = #tpu.core_type<tc>, window_params = [{transform_indices = @transform_0, window_bounds = array<i64: 1, 5, 32>}, {pipeline_mode = #tpu.pipeline_mode<synchronous>, transform_indices = @transform_1, window_bounds = array<i64: 1, 32>}, {pipeline_mode = #tpu.pipeline_mode<synchronous>, transform_indices = @transform_2, window_bounds = array<i64: 1, 32>}, {transform_indices = @transform_3, window_bounds = array<i64: 1, 1, 32>}, {transform_indices = @transform_4, window_bounds = array<i64: 1, 1, 32>}, {transform_indices = @transform_5, window_bounds = array<i64: 1, 32, 96>}, {transform_indices = @transform_6, window_bounds = array<i64: 1, 1, 96>}, {transform_indices = @transform_7, window_bounds = array<i64: 1, 32, 32>}, {transform_indices = @transform_8, window_bounds = array<i64: 1, 1, 32>}, {transform_indices = @transform_9, window_bounds = array<i64: 1, 1, 32>}, {transform_indices = @transform_10, window_bounds = array<i64: 1, 1, 32>}, {transform_indices = @transform_11, window_bounds = array<i64: 1, 32, 128>}, {transform_indices = @transform_12, window_bounds = array<i64: 1, 1, 128>}, {transform_indices = @transform_13, window_bounds = array<i64: 1, 128, 32>}, {transform_indices = @transform_14, window_bounds = array<i64: 1, 1, 32>}, {pipeline_mode = #tpu.pipeline_mode<synchronous>, transform_indices = @transform_15, window_bounds = array<i64: 1, 32>}, {pipeline_mode = #tpu.pipeline_mode<synchronous>, transform_indices = @transform_16, window_bounds = array<i64: 1, 32>}, {pipeline_mode = #tpu.pipeline_mode<synchronous>, transform_indices = @transform_17, window_bounds = array<i64: 32, 128>}, {transform_indices = @transform_18, window_bounds = array<i64: 1, 8, 128>}]} {
    %c0_i32 = arith.constant 0 : i32
    %0 = arith.cmpi eq, %arg1, %c0_i32 : i32
    %1 = arith.extui %0 : i1 to i32
    %c0_i32_0 = arith.constant 0 : i32
    %2 = arith.cmpi ne, %1, %c0_i32_0 : i32
    scf.if %2 {
      %c0_90 = arith.constant 0 : index
      %c0_91 = arith.constant 0 : index
      %c0_92 = arith.constant 0 : index
      %144 = vector.load %arg3[%c0_90, %c0_91, %c0_92] : memref<1x5x32xf32, #tpu.memory_space<vmem>>, vector<1x5x32xf32>
      %145 = vector.shape_cast %144 : vector<1x5x32xf32> to vector<5x32xf32>
      %c0_93 = arith.constant 0 : index
      %c0_94 = arith.constant 0 : index
      %146 = vector.load %arg4[%c0_93, %c0_94] : memref<1x32xf32, #tpu.memory_space<vmem>>, vector<1x32xf32>
      %c0_95 = arith.constant 0 : index
      %c0_96 = arith.constant 0 : index
      %147 = vector.load %arg5[%c0_95, %c0_96] : memref<1x32xf32, #tpu.memory_space<vmem>>, vector<1x32xf32>
      %cst_97 = arith.constant dense<0.000000e+00> : vector<5xf32>
      %148 = vector.multi_reduction <add>, %145, %cst_97 [1] : vector<5x32xf32> to vector<5xf32>
      %149 = vector.shape_cast %148 : vector<5xf32> to vector<5x1xf32>
      %cst_98 = arith.constant 3.200000e+01 : f32
      %150 = vector.broadcast %cst_98 : f32 to vector<5x1xf32>
      %151 = arith.divf %149, %150 : vector<5x1xf32>
      %152 = vector.broadcast %151 : vector<5x1xf32> to vector<5x32xf32>
      %153 = arith.subf %145, %152 : vector<5x32xf32>
      %154 = arith.mulf %153, %153 : vector<5x32xf32>
      %cst_99 = arith.constant dense<0.000000e+00> : vector<5xf32>
      %155 = vector.multi_reduction <add>, %154, %cst_99 [1] : vector<5x32xf32> to vector<5xf32>
      %156 = vector.shape_cast %155 : vector<5xf32> to vector<5x1xf32>
      %cst_100 = arith.constant 3.200000e+01 : f32
      %157 = vector.broadcast %cst_100 : f32 to vector<5x1xf32>
      %158 = arith.divf %156, %157 : vector<5x1xf32>
      %159 = vector.broadcast %151 : vector<5x1xf32> to vector<5x32xf32>
      %160 = arith.subf %145, %159 : vector<5x32xf32>
      %cst_101 = arith.constant 9.99999974E-6 : f32
      %161 = vector.broadcast %cst_101 : f32 to vector<5x1xf32>
      %162 = arith.addf %158, %161 : vector<5x1xf32>
      %163 = math.rsqrt %162 : vector<5x1xf32>
      %164 = vector.broadcast %163 : vector<5x1xf32> to vector<5x32xf32>
      %165 = arith.mulf %160, %164 : vector<5x32xf32>
      %166 = vector.broadcast %146 : vector<1x32xf32> to vector<5x32xf32>
      %167 = arith.mulf %165, %166 : vector<5x32xf32>
      %168 = vector.broadcast %147 : vector<1x32xf32> to vector<5x32xf32>
      %169 = arith.addf %167, %168 : vector<5x32xf32>
      %c0_102 = arith.constant 0 : index
      %c0_103 = arith.constant 0 : index
      %170 = vector.load %arg25[%c0_102, %c0_103] : memref<5x32xf32, #tpu.memory_space<vmem>>, vector<5x32xf32>
      tpu.vector_store %arg25[%c0_102, %c0_103], %169 {strides = array<i32>} : memref<5x32xf32, #tpu.memory_space<vmem>>, vector<5x32xf32>,
    } else {
    }
    %c0 = arith.constant 0 : index
    %c0_1 = arith.constant 0 : index
    %3 = vector.load %arg25[%c0, %c0_1] : memref<5x32xf32, #tpu.memory_space<vmem>>, vector<5x32xf32>
    %c0_2 = arith.constant 0 : index
    %c0_3 = arith.constant 0 : index
    %c0_4 = arith.constant 0 : index
    %4 = vector.load %arg6[%c0_2, %c0_3, %c0_4] : memref<1x1x32xf32, #tpu.memory_space<vmem>>, vector<1x1x32xf32>
    %5 = vector.shape_cast %4 : vector<1x1x32xf32> to vector<1x32xf32>
    %c0_5 = arith.constant 0 : index
    %c0_6 = arith.constant 0 : index
    %c0_7 = arith.constant 0 : index
    %6 = vector.load %arg7[%c0_5, %c0_6, %c0_7] : memref<1x1x32xf32, #tpu.memory_space<vmem>>, vector<1x1x32xf32>
    %7 = vector.shape_cast %6 : vector<1x1x32xf32> to vector<1x32xf32>
    %cst = arith.constant dense<0.000000e+00> : vector<5xf32>
    %8 = vector.multi_reduction <add>, %3, %cst [1] : vector<5x32xf32> to vector<5xf32>
    %9 = vector.shape_cast %8 : vector<5xf32> to vector<5x1xf32>
    %cst_8 = arith.constant 3.200000e+01 : f32
    %10 = vector.broadcast %cst_8 : f32 to vector<5x1xf32>
    %11 = arith.divf %9, %10 : vector<5x1xf32>
    %12 = vector.broadcast %11 : vector<5x1xf32> to vector<5x32xf32>
    %13 = arith.subf %3, %12 : vector<5x32xf32>
    %14 = arith.mulf %13, %13 : vector<5x32xf32>
    %cst_9 = arith.constant dense<0.000000e+00> : vector<5xf32>
    %15 = vector.multi_reduction <add>, %14, %cst_9 [1] : vector<5x32xf32> to vector<5xf32>
    %16 = vector.shape_cast %15 : vector<5xf32> to vector<5x1xf32>
    %cst_10 = arith.constant 3.200000e+01 : f32
    %17 = vector.broadcast %cst_10 : f32 to vector<5x1xf32>
    %18 = arith.divf %16, %17 : vector<5x1xf32>
    %19 = vector.broadcast %11 : vector<5x1xf32> to vector<5x32xf32>
    %20 = arith.subf %3, %19 : vector<5x32xf32>
    %cst_11 = arith.constant 9.99999974E-6 : f32
    %21 = vector.broadcast %cst_11 : f32 to vector<5x1xf32>
    %22 = arith.addf %18, %21 : vector<5x1xf32>
    %23 = math.rsqrt %22 : vector<5x1xf32>
    %24 = vector.broadcast %23 : vector<5x1xf32> to vector<5x32xf32>
    %25 = arith.mulf %20, %24 : vector<5x32xf32>
    %26 = vector.broadcast %5 : vector<1x32xf32> to vector<5x32xf32>
    %27 = arith.mulf %25, %26 : vector<5x32xf32>
    %28 = vector.broadcast %7 : vector<1x32xf32> to vector<5x32xf32>
    %29 = arith.addf %27, %28 : vector<5x32xf32>
    %30 = arith.truncf %29 : vector<5x32xf32> to vector<5x32xbf16>
    %c0_12 = arith.constant 0 : index
    %c0_13 = arith.constant 0 : index
    %c0_14 = arith.constant 0 : index
    %31 = vector.load %arg8[%c0_12, %c0_13, %c0_14] : memref<1x32x96xbf16, #tpu.memory_space<vmem>>, vector<1x32x96xbf16>
    %32 = vector.shape_cast %31 : vector<1x32x96xbf16> to vector<32x96xbf16>
    %cst_15 = arith.constant dense<0.000000e+00> : vector<5x96xf32>
    %33 = tpu.matmul %30, %32, %cst_15 {dimension_numbers = #tpu.dot_dimension_numbers<[1], [0], [0], [1], [0, 0, 1, 1], [], []>} : vector<5x32xbf16>, vector<32x96xbf16>, vector<5x96xf32> -> vector<5x96xf32>
    %c0_16 = arith.constant 0 : index
    %c0_17 = arith.constant 0 : index
    %c0_18 = arith.constant 0 : index
    %34 = vector.load %arg9[%c0_16, %c0_17, %c0_18] : memref<1x1x96xf32, #tpu.memory_space<vmem>>, vector<1x1x96xf32>
    %35 = vector.shape_cast %34 : vector<1x1x96xf32> to vector<1x96xf32>
    %36 = vector.broadcast %35 : vector<1x96xf32> to vector<5x96xf32>
    %37 = arith.addf %33, %36 : vector<5x96xf32>
    %c0_19 = arith.constant 0 : index
    %c0_20 = arith.constant 0 : index
    %38 = vector.load %arg22[%c0_19, %c0_20] : memref<5x96xf32, #tpu.memory_space<vmem>>, vector<5x96xf32>
    tpu.vector_store %arg22[%c0_19, %c0_20], %37 {strides = array<i32>} : memref<5x96xf32, #tpu.memory_space<vmem>>, vector<5x96xf32>,
    %c0_21 = arith.constant 0 : index
    %c0_22 = arith.constant 0 : index
    %39 = vector.load %arg22[%c0_21, %c0_22] : memref<5x96xf32, #tpu.memory_space<vmem>>, vector<5x16xf32>
    %cst_23 = arith.constant 2.500000e-01 : f32
    %40 = vector.broadcast %cst_23 : f32 to vector<5x16xf32>
    %41 = arith.mulf %39, %40 : vector<5x16xf32>
    %c0_24 = arith.constant 0 : index
    %c32 = arith.constant 32 : index
    %42 = vector.load %arg22[%c0_24, %c32] : memref<5x96xf32, #tpu.memory_space<vmem>>, vector<5x16xf32>
    %43 = arith.truncf %41 : vector<5x16xf32> to vector<5x16xbf16>
    %44 = arith.truncf %42 : vector<5x16xf32> to vector<5x16xbf16>
    %cst_25 = arith.constant dense<0.000000e+00> : vector<5x5xf32>
    %45 = tpu.matmul %43, %44, %cst_25 {dimension_numbers = #tpu.dot_dimension_numbers<[1], [1], [0], [0], [0, 0, 1, 0], [], []>} : vector<5x16xbf16>, vector<5x16xbf16>, vector<5x5xf32> -> vector<5x5xf32>
    %c0_26 = arith.constant 0 : index
    %c0_27 = arith.constant 0 : index
    %46 = vector.load %arg23[%c0_26, %c0_27] : memref<10x5xf32, #tpu.memory_space<vmem>>, vector<5x5xf32>
    tpu.vector_store %arg23[%c0_26, %c0_27], %45 {strides = array<i32>} : memref<10x5xf32, #tpu.memory_space<vmem>>, vector<5x5xf32>,
    %c0_28 = arith.constant 0 : index
    %c16 = arith.constant 16 : index
    %47 = vector.load %arg22[%c0_28, %c16] : memref<5x96xf32, #tpu.memory_space<vmem>>, vector<5x16xf32>
    %cst_29 = arith.constant 2.500000e-01 : f32
    %48 = vector.broadcast %cst_29 : f32 to vector<5x16xf32>
    %49 = arith.mulf %47, %48 : vector<5x16xf32>
    %c0_30 = arith.constant 0 : index
    %c48 = arith.constant 48 : index
    %50 = vector.load %arg22[%c0_30, %c48] : memref<5x96xf32, #tpu.memory_space<vmem>>, vector<5x16xf32>
    %51 = arith.truncf %49 : vector<5x16xf32> to vector<5x16xbf16>
    %52 = arith.truncf %50 : vector<5x16xf32> to vector<5x16xbf16>
    %cst_31 = arith.constant dense<0.000000e+00> : vector<5x5xf32>
    %53 = tpu.matmul %51, %52, %cst_31 {dimension_numbers = #tpu.dot_dimension_numbers<[1], [1], [0], [0], [0, 0, 1, 0], [], []>} : vector<5x16xbf16>, vector<5x16xbf16>, vector<5x5xf32> -> vector<5x5xf32>
    %c5 = arith.constant 5 : index
    %c0_32 = arith.constant 0 : index
    %54 = vector.load %arg23[%c5, %c0_32] : memref<10x5xf32, #tpu.memory_space<vmem>>, vector<5x5xf32>
    tpu.vector_store %arg23[%c5, %c0_32], %53 {strides = array<i32>} : memref<10x5xf32, #tpu.memory_space<vmem>>, vector<5x5xf32>,
    %c0_33 = arith.constant 0 : index
    %c0_34 = arith.constant 0 : index
    %55 = vector.load %arg23[%c0_33, %c0_34] : memref<10x5xf32, #tpu.memory_space<vmem>>, vector<10x5xf32>
    %cst_35 = arith.constant dense<0xFF800000> : vector<10xf32>
    %56 = vector.multi_reduction <maximumf>, %55, %cst_35 [1] : vector<10x5xf32> to vector<10xf32>
    %57 = vector.shape_cast %56 : vector<10xf32> to vector<10x1xf32>
    %58 = vector.broadcast %57 : vector<10x1xf32> to vector<10x5xf32>
    %59 = arith.subf %55, %58 : vector<10x5xf32>
    %60 = math.exp %59 : vector<10x5xf32>
    %cst_36 = arith.constant dense<0.000000e+00> : vector<10xf32>
    %61 = vector.multi_reduction <add>, %60, %cst_36 [1] : vector<10x5xf32> to vector<10xf32>
    %62 = vector.shape_cast %61 : vector<10xf32> to vector<10x1xf32>
    %63 = tpu.reciprocal %62 {approx = true} : vector<10x1xf32> -> vector<10x1xf32>
    %64 = vector.broadcast %63 : vector<10x1xf32> to vector<10x5xf32>
    %65 = arith.mulf %60, %64 : vector<10x5xf32>
    %c0_37 = arith.constant 0 : index
    %c0_38 = arith.constant 0 : index
    %66 = vector.load %arg23[%c0_37, %c0_38] : memref<10x5xf32, #tpu.memory_space<vmem>>, vector<10x5xf32>
    tpu.vector_store %arg23[%c0_37, %c0_38], %65 {strides = array<i32>} : memref<10x5xf32, #tpu.memory_space<vmem>>, vector<10x5xf32>,
    %c0_39 = arith.constant 0 : index
    %c64 = arith.constant 64 : index
    %67 = vector.load %arg22[%c0_39, %c64] : memref<5x96xf32, #tpu.memory_space<vmem>>, vector<5x16xf32>
    %c0_40 = arith.constant 0 : index
    %c0_41 = arith.constant 0 : index
    %68 = vector.load %arg23[%c0_40, %c0_41] : memref<10x5xf32, #tpu.memory_space<vmem>>, vector<5x5xf32>
    %69 = arith.truncf %68 : vector<5x5xf32> to vector<5x5xbf16>
    %70 = arith.truncf %67 : vector<5x16xf32> to vector<5x16xbf16>
    %cst_42 = arith.constant dense<0.000000e+00> : vector<5x16xf32>
    %71 = tpu.matmul %69, %70, %cst_42 {dimension_numbers = #tpu.dot_dimension_numbers<[1], [0], [0], [1], [0, 0, 1, 1], [], []>} : vector<5x5xbf16>, vector<5x16xbf16>, vector<5x16xf32> -> vector<5x16xf32>
    %c0_43 = arith.constant 0 : index
    %c0_44 = arith.constant 0 : index
    %72 = vector.load %arg24[%c0_43, %c0_44] : memref<5x32xf32, #tpu.memory_space<vmem>>, vector<5x16xf32>
    tpu.vector_store %arg24[%c0_43, %c0_44], %71 {strides = array<i32>} : memref<5x32xf32, #tpu.memory_space<vmem>>, vector<5x16xf32>,
    %c0_45 = arith.constant 0 : index
    %c80 = arith.constant 80 : index
    %73 = vector.load %arg22[%c0_45, %c80] : memref<5x96xf32, #tpu.memory_space<vmem>>, vector<5x16xf32>
    %c5_46 = arith.constant 5 : index
    %c0_47 = arith.constant 0 : index
    %74 = vector.load %arg23[%c5_46, %c0_47] : memref<10x5xf32, #tpu.memory_space<vmem>>, vector<5x5xf32>
    %75 = arith.truncf %74 : vector<5x5xf32> to vector<5x5xbf16>
    %76 = arith.truncf %73 : vector<5x16xf32> to vector<5x16xbf16>
    %cst_48 = arith.constant dense<0.000000e+00> : vector<5x16xf32>
    %77 = tpu.matmul %75, %76, %cst_48 {dimension_numbers = #tpu.dot_dimension_numbers<[1], [0], [0], [1], [0, 0, 1, 1], [], []>} : vector<5x5xbf16>, vector<5x16xbf16>, vector<5x16xf32> -> vector<5x16xf32>
    %c0_49 = arith.constant 0 : index
    %c16_50 = arith.constant 16 : index
    %78 = vector.load %arg24[%c0_49, %c16_50] : memref<5x32xf32, #tpu.memory_space<vmem>>, vector<5x16xf32>
    tpu.vector_store %arg24[%c0_49, %c16_50], %77 {strides = array<i32>} : memref<5x32xf32, #tpu.memory_space<vmem>>, vector<5x16xf32>,
    %c0_51 = arith.constant 0 : index
    %c0_52 = arith.constant 0 : index
    %79 = vector.load %arg24[%c0_51, %c0_52] : memref<5x32xf32, #tpu.memory_space<vmem>>, vector<5x32xf32>
    %80 = arith.truncf %79 : vector<5x32xf32> to vector<5x32xbf16>
    %c0_53 = arith.constant 0 : index
    %c0_54 = arith.constant 0 : index
    %c0_55 = arith.constant 0 : index
    %81 = vector.load %arg10[%c0_53, %c0_54, %c0_55] : memref<1x32x32xbf16, #tpu.memory_space<vmem>>, vector<1x32x32xbf16>
    %82 = vector.shape_cast %81 : vector<1x32x32xbf16> to vector<32x32xbf16>
    %cst_56 = arith.constant dense<0.000000e+00> : vector<5x32xf32>
    %83 = tpu.matmul %80, %82, %cst_56 {dimension_numbers = #tpu.dot_dimension_numbers<[1], [0], [0], [1], [0, 0, 1, 1], [], []>} : vector<5x32xbf16>, vector<32x32xbf16>, vector<5x32xf32> -> vector<5x32xf32>
    %84 = arith.addf %3, %83 : vector<5x32xf32>
    %c0_57 = arith.constant 0 : index
    %c0_58 = arith.constant 0 : index
    %c0_59 = arith.constant 0 : index
    %85 = vector.load %arg11[%c0_57, %c0_58, %c0_59] : memref<1x1x32xf32, #tpu.memory_space<vmem>>, vector<1x1x32xf32>
    %86 = vector.shape_cast %85 : vector<1x1x32xf32> to vector<1x32xf32>
    %87 = vector.broadcast %86 : vector<1x32xf32> to vector<5x32xf32>
    %88 = arith.addf %84, %87 : vector<5x32xf32>
    %c0_60 = arith.constant 0 : index
    %c0_61 = arith.constant 0 : index
    %c0_62 = arith.constant 0 : index
    %89 = vector.load %arg12[%c0_60, %c0_61, %c0_62] : memref<1x1x32xf32, #tpu.memory_space<vmem>>, vector<1x1x32xf32>
    %90 = vector.shape_cast %89 : vector<1x1x32xf32> to vector<1x32xf32>
    %c0_63 = arith.constant 0 : index
    %c0_64 = arith.constant 0 : index
    %c0_65 = arith.constant 0 : index
    %91 = vector.load %arg13[%c0_63, %c0_64, %c0_65] : memref<1x1x32xf32, #tpu.memory_space<vmem>>, vector<1x1x32xf32>
    %92 = vector.shape_cast %91 : vector<1x1x32xf32> to vector<1x32xf32>
    %cst_66 = arith.constant dense<0.000000e+00> : vector<5xf32>
    %93 = vector.multi_reduction <add>, %88, %cst_66 [1] : vector<5x32xf32> to vector<5xf32>
    %94 = vector.shape_cast %93 : vector<5xf32> to vector<5x1xf32>
    %cst_67 = arith.constant 3.200000e+01 : f32
    %95 = vector.broadcast %cst_67 : f32 to vector<5x1xf32>
    %96 = arith.divf %94, %95 : vector<5x1xf32>
    %97 = vector.broadcast %96 : vector<5x1xf32> to vector<5x32xf32>
    %98 = arith.subf %88, %97 : vector<5x32xf32>
    %99 = arith.mulf %98, %98 : vector<5x32xf32>
    %cst_68 = arith.constant dense<0.000000e+00> : vector<5xf32>
    %100 = vector.multi_reduction <add>, %99, %cst_68 [1] : vector<5x32xf32> to vector<5xf32>
    %101 = vector.shape_cast %100 : vector<5xf32> to vector<5x1xf32>
    %cst_69 = arith.constant 3.200000e+01 : f32
    %102 = vector.broadcast %cst_69 : f32 to vector<5x1xf32>
    %103 = arith.divf %101, %102 : vector<5x1xf32>
    %104 = vector.broadcast %96 : vector<5x1xf32> to vector<5x32xf32>
    %105 = arith.subf %88, %104 : vector<5x32xf32>
    %cst_70 = arith.constant 9.99999974E-6 : f32
    %106 = vector.broadcast %cst_70 : f32 to vector<5x1xf32>
    %107 = arith.addf %103, %106 : vector<5x1xf32>
    %108 = math.rsqrt %107 : vector<5x1xf32>
    %109 = vector.broadcast %108 : vector<5x1xf32> to vector<5x32xf32>
    %110 = arith.mulf %105, %109 : vector<5x32xf32>
    %111 = vector.broadcast %90 : vector<1x32xf32> to vector<5x32xf32>
    %112 = arith.mulf %110, %111 : vector<5x32xf32>
    %113 = vector.broadcast %92 : vector<1x32xf32> to vector<5x32xf32>
    %114 = arith.addf %112, %113 : vector<5x32xf32>
    %115 = arith.truncf %114 : vector<5x32xf32> to vector<5x32xbf16>
    %c0_71 = arith.constant 0 : index
    %c0_72 = arith.constant 0 : index
    %c0_73 = arith.constant 0 : index
    %116 = vector.load %arg14[%c0_71, %c0_72, %c0_73] : memref<1x32x128xbf16, #tpu.memory_space<vmem>>, vector<1x32x128xbf16>
    %117 = vector.shape_cast %116 : vector<1x32x128xbf16> to vector<32x128xbf16>
    %cst_74 = arith.constant dense<0.000000e+00> : vector<5x128xf32>
    %118 = tpu.matmul %115, %117, %cst_74 {dimension_numbers = #tpu.dot_dimension_numbers<[1], [0], [0], [1], [0, 0, 1, 1], [], []>} : vector<5x32xbf16>, vector<32x128xbf16>, vector<5x128xf32> -> vector<5x128xf32>
    %c0_75 = arith.constant 0 : index
    %c0_76 = arith.constant 0 : index
    %c0_77 = arith.constant 0 : index
    %119 = vector.load %arg15[%c0_75, %c0_76, %c0_77] : memref<1x1x128xf32, #tpu.memory_space<vmem>>, vector<1x1x128xf32>
    %120 = vector.shape_cast %119 : vector<1x1x128xf32> to vector<1x128xf32>
    %121 = vector.broadcast %120 : vector<1x128xf32> to vector<5x128xf32>
    %122 = arith.addf %118, %121 : vector<5x128xf32>
    %cst_78 = arith.constant 1.702000e+00 : f32
    %123 = vector.broadcast %cst_78 : f32 to vector<5x128xf32>
    %124 = arith.mulf %123, %122 : vector<5x128xf32>
    %125 = arith.negf %124 : vector<5x128xf32>
    %126 = math.exp %125 : vector<5x128xf32>
    %cst_79 = arith.constant 1.000000e+00 : f32
    %127 = vector.broadcast %cst_79 : f32 to vector<5x128xf32>
    %128 = arith.addf %127, %126 : vector<5x128xf32>
    %129 = arith.divf %127, %128 : vector<5x128xf32>
    %130 = arith.mulf %122, %129 : vector<5x128xf32>
    %131 = arith.truncf %130 : vector<5x128xf32> to vector<5x128xbf16>
    %c0_80 = arith.constant 0 : index
    %c0_81 = arith.constant 0 : index
    %c0_82 = arith.constant 0 : index
    %132 = vector.load %arg16[%c0_80, %c0_81, %c0_82] : memref<1x128x32xbf16, #tpu.memory_space<vmem>>, vector<1x128x32xbf16>
    %133 = vector.shape_cast %132 : vector<1x128x32xbf16> to vector<128x32xbf16>
    %cst_83 = arith.constant dense<0.000000e+00> : vector<5x32xf32>
    %134 = tpu.matmul %131, %133, %cst_83 {dimension_numbers = #tpu.dot_dimension_numbers<[1], [0], [0], [1], [0, 0, 1, 1], [], []>} : vector<5x128xbf16>, vector<128x32xbf16>, vector<5x32xf32> -> vector<5x32xf32>
    %135 = arith.addf %88, %134 : vector<5x32xf32>
    %c0_84 = arith.constant 0 : index
    %c0_85 = arith.constant 0 : index
    %c0_86 = arith.constant 0 : index
    %136 = vector.load %arg17[%c0_84, %c0_85, %c0_86] : memref<1x1x32xf32, #tpu.memory_space<vmem>>, vector<1x1x32xf32>
    %137 = vector.shape_cast %136 : vector<1x1x32xf32> to vector<1x32xf32>
    %138 = vector.broadcast %137 : vector<1x32xf32> to vector<5x32xf32>
    %139 = arith.addf %135, %138 : vector<5x32xf32>
    %c0_87 = arith.constant 0 : index
    %c0_88 = arith.constant 0 : index
    %140 = vector.load %arg25[%c0_87, %c0_88] : memref<5x32xf32, #tpu.memory_space<vmem>>, vector<5x32xf32>
    tpu.vector_store %arg25[%c0_87, %c0_88], %139 {strides = array<i32>} : memref<5x32xf32, #tpu.memory_space<vmem>>, vector<5x32xf32>,
    %c1_i32 = arith.constant 1 : i32
    %141 = arith.cmpi eq, %arg1, %c1_i32 : i32
    %142 = arith.extui %141 : i1 to i32
    %c0_i32_89 = arith.constant 0 : i32
    %143 = arith.cmpi ne, %142, %c0_i32_89 : i32
    scf.if %143 {
      %144 = arith.index_cast %arg0 : i32 to index
      %145 = memref.load %arg2[%144] : memref<2xi32, #tpu.memory_space<smem>>
      %146 = arith.index_cast %145 : i32 to index
      %c0_90 = arith.constant 0 : index
      %147 = vector.load %arg25[%146, %c0_90] : memref<5x32xf32, #tpu.memory_space<vmem>>, vector<1x32xf32>
      %c0_91 = arith.constant 0 : index
      %c0_92 = arith.constant 0 : index
      %148 = vector.load %arg18[%c0_91, %c0_92] : memref<1x32xf32, #tpu.memory_space<vmem>>, vector<1x32xf32>
      %c0_93 = arith.constant 0 : index
      %c0_94 = arith.constant 0 : index
      %149 = vector.load %arg19[%c0_93, %c0_94] : memref<1x32xf32, #tpu.memory_space<vmem>>, vector<1x32xf32>
      %cst_95 = arith.constant dense<0.000000e+00> : vector<1xf32>
      %150 = vector.multi_reduction <add>, %147, %cst_95 [1] : vector<1x32xf32> to vector<1xf32>
      %151 = vector.shape_cast %150 : vector<1xf32> to vector<1x1xf32>
      %cst_96 = arith.constant 3.200000e+01 : f32
      %152 = vector.broadcast %cst_96 : f32 to vector<1x1xf32>
      %153 = arith.divf %151, %152 : vector<1x1xf32>
      %154 = vector.broadcast %153 : vector<1x1xf32> to vector<1x32xf32>
      %155 = arith.subf %147, %154 : vector<1x32xf32>
      %156 = arith.mulf %155, %155 : vector<1x32xf32>
      %cst_97 = arith.constant dense<0.000000e+00> : vector<1xf32>
      %157 = vector.multi_reduction <add>, %156, %cst_97 [1] : vector<1x32xf32> to vector<1xf32>
      %158 = vector.shape_cast %157 : vector<1xf32> to vector<1x1xf32>
      %cst_98 = arith.constant 3.200000e+01 : f32
      %159 = vector.broadcast %cst_98 : f32 to vector<1x1xf32>
      %160 = arith.divf %158, %159 : vector<1x1xf32>
      %161 = vector.broadcast %153 : vector<1x1xf32> to vector<1x32xf32>
      %162 = arith.subf %147, %161 : vector<1x32xf32>
      %cst_99 = arith.constant 9.99999974E-6 : f32
      %163 = vector.broadcast %cst_99 : f32 to vector<1x1xf32>
      %164 = arith.addf %160, %163 : vector<1x1xf32>
      %165 = math.rsqrt %164 : vector<1x1xf32>
      %166 = vector.broadcast %165 : vector<1x1xf32> to vector<1x32xf32>
      %167 = arith.mulf %162, %166 : vector<1x32xf32>
      %168 = arith.mulf %167, %148 : vector<1x32xf32>
      %169 = arith.addf %168, %149 : vector<1x32xf32>
      %170 = arith.truncf %169 : vector<1x32xf32> to vector<1x32xbf16>
      %c0_100 = arith.constant 0 : index
      %c0_101 = arith.constant 0 : index
      %171 = vector.load %arg20[%c0_100, %c0_101] : memref<32x128xbf16, #tpu.memory_space<vmem>>, vector<32x128xbf16>
      %cst_102 = arith.constant dense<0.000000e+00> : vector<1x128xf32>
      %172 = tpu.matmul %170, %171, %cst_102 {dimension_numbers = #tpu.dot_dimension_numbers<[1], [0], [0], [1], [0, 0, 1, 1], [], []>} : vector<1x32xbf16>, vector<32x128xbf16>, vector<1x128xf32> -> vector<1x128xf32>
      %173 = arith.mulf %172, %172 : vector<1x128xf32>
      %cst_103 = arith.constant dense<0.000000e+00> : vector<1xf32>
      %174 = vector.multi_reduction <add>, %173, %cst_103 [1] : vector<1x128xf32> to vector<1xf32>
      %175 = vector.shape_cast %174 : vector<1xf32> to vector<1x1xf32>
      %cst_104 = arith.constant 1.000000e-24 : f32
      %176 = vector.broadcast %cst_104 : f32 to vector<1x1xf32>
      %177 = arith.maximumf %175, %176 : vector<1x1xf32>
      %178 = math.rsqrt %177 : vector<1x1xf32>
      %179 = vector.broadcast %178 : vector<1x1xf32> to vector<1x128xf32>
      %180 = arith.mulf %172, %179 : vector<1x128xf32>
      %181 = vector.shape_cast %180 : vector<1x128xf32> to vector<1x128xf32>
      %182 = vector.broadcast %181 : vector<1x128xf32> to vector<8x128xf32>
      %c0_105 = arith.constant 0 : index
      %c0_106 = arith.constant 0 : index
      %c0_107 = arith.constant 0 : index
      %183 = vector.load %arg21[%c0_105, %c0_106, %c0_107] : memref<1x8x128xf32, #tpu.memory_space<vmem>>, vector<1x8x128xf32>
      %184 = vector.shape_cast %183 : vector<1x8x128xf32> to vector<8x128xf32>
      %185 = vector.shape_cast %182 : vector<8x128xf32> to vector<1x8x128xf32>
      tpu.vector_store %arg21[%c0_105, %c0_106, %c0_107], %185 {strides = array<i32>} : memref<1x8x128xf32, #tpu.memory_space<vmem>>, vector<1x8x128xf32>,
    } else {
    }
    return
  }
  func.func @transform_0(%arg0: i32, %arg1: i32, %arg2: memref<2xi32, #tpu.memory_space<smem>>) -> (i32, i32, i32) {
    %c0_i32 = arith.constant 0 : i32
    %c0_i32_0 = arith.constant 0 : i32
    %c0_i32_1 = arith.constant 0 : i32
    return %arg0, %c0_i32, %c0_i32_0 : i32, i32, i32
  }
  func.func @transform_1(%arg0: i32, %arg1: i32, %arg2: memref<2xi32, #tpu.memory_space<smem>>) -> (i32, i32) {
    %c0_i32 = arith.constant 0 : i32
    %c0_i32_0 = arith.constant 0 : i32
    %c0_i32_1 = arith.constant 0 : i32
    return %c0_i32, %c0_i32_0 : i32, i32
  }
  func.func @transform_2(%arg0: i32, %arg1: i32, %arg2: memref<2xi32, #tpu.memory_space<smem>>) -> (i32, i32) {
    %c0_i32 = arith.constant 0 : i32
    %c0_i32_0 = arith.constant 0 : i32
    %c0_i32_1 = arith.constant 0 : i32
    return %c0_i32, %c0_i32_0 : i32, i32
  }
  func.func @transform_3(%arg0: i32, %arg1: i32, %arg2: memref<2xi32, #tpu.memory_space<smem>>) -> (i32, i32, i32) {
    %c0_i32 = arith.constant 0 : i32
    %c0_i32_0 = arith.constant 0 : i32
    %c0_i32_1 = arith.constant 0 : i32
    return %arg1, %c0_i32, %c0_i32_0 : i32, i32, i32
  }
  func.func @transform_4(%arg0: i32, %arg1: i32, %arg2: memref<2xi32, #tpu.memory_space<smem>>) -> (i32, i32, i32) {
    %c0_i32 = arith.constant 0 : i32
    %c0_i32_0 = arith.constant 0 : i32
    %c0_i32_1 = arith.constant 0 : i32
    return %arg1, %c0_i32, %c0_i32_0 : i32, i32, i32
  }
  func.func @transform_5(%arg0: i32, %arg1: i32, %arg2: memref<2xi32, #tpu.memory_space<smem>>) -> (i32, i32, i32) {
    %c0_i32 = arith.constant 0 : i32
    %c0_i32_0 = arith.constant 0 : i32
    %c0_i32_1 = arith.constant 0 : i32
    return %arg1, %c0_i32, %c0_i32_0 : i32, i32, i32
  }
  func.func @transform_6(%arg0: i32, %arg1: i32, %arg2: memref<2xi32, #tpu.memory_space<smem>>) -> (i32, i32, i32) {
    %c0_i32 = arith.constant 0 : i32
    %c0_i32_0 = arith.constant 0 : i32
    %c0_i32_1 = arith.constant 0 : i32
    return %arg1, %c0_i32, %c0_i32_0 : i32, i32, i32
  }
  func.func @transform_7(%arg0: i32, %arg1: i32, %arg2: memref<2xi32, #tpu.memory_space<smem>>) -> (i32, i32, i32) {
    %c0_i32 = arith.constant 0 : i32
    %c0_i32_0 = arith.constant 0 : i32
    %c0_i32_1 = arith.constant 0 : i32
    return %arg1, %c0_i32, %c0_i32_0 : i32, i32, i32
  }
  func.func @transform_8(%arg0: i32, %arg1: i32, %arg2: memref<2xi32, #tpu.memory_space<smem>>) -> (i32, i32, i32) {
    %c0_i32 = arith.constant 0 : i32
    %c0_i32_0 = arith.constant 0 : i32
    %c0_i32_1 = arith.constant 0 : i32
    return %arg1, %c0_i32, %c0_i32_0 : i32, i32, i32
  }
  func.func @transform_9(%arg0: i32, %arg1: i32, %arg2: memref<2xi32, #tpu.memory_space<smem>>) -> (i32, i32, i32) {
    %c0_i32 = arith.constant 0 : i32
    %c0_i32_0 = arith.constant 0 : i32
    %c0_i32_1 = arith.constant 0 : i32
    return %arg1, %c0_i32, %c0_i32_0 : i32, i32, i32
  }
  func.func @transform_10(%arg0: i32, %arg1: i32, %arg2: memref<2xi32, #tpu.memory_space<smem>>) -> (i32, i32, i32) {
    %c0_i32 = arith.constant 0 : i32
    %c0_i32_0 = arith.constant 0 : i32
    %c0_i32_1 = arith.constant 0 : i32
    return %arg1, %c0_i32, %c0_i32_0 : i32, i32, i32
  }
  func.func @transform_11(%arg0: i32, %arg1: i32, %arg2: memref<2xi32, #tpu.memory_space<smem>>) -> (i32, i32, i32) {
    %c0_i32 = arith.constant 0 : i32
    %c0_i32_0 = arith.constant 0 : i32
    %c0_i32_1 = arith.constant 0 : i32
    return %arg1, %c0_i32, %c0_i32_0 : i32, i32, i32
  }
  func.func @transform_12(%arg0: i32, %arg1: i32, %arg2: memref<2xi32, #tpu.memory_space<smem>>) -> (i32, i32, i32) {
    %c0_i32 = arith.constant 0 : i32
    %c0_i32_0 = arith.constant 0 : i32
    %c0_i32_1 = arith.constant 0 : i32
    return %arg1, %c0_i32, %c0_i32_0 : i32, i32, i32
  }
  func.func @transform_13(%arg0: i32, %arg1: i32, %arg2: memref<2xi32, #tpu.memory_space<smem>>) -> (i32, i32, i32) {
    %c0_i32 = arith.constant 0 : i32
    %c0_i32_0 = arith.constant 0 : i32
    %c0_i32_1 = arith.constant 0 : i32
    return %arg1, %c0_i32, %c0_i32_0 : i32, i32, i32
  }
  func.func @transform_14(%arg0: i32, %arg1: i32, %arg2: memref<2xi32, #tpu.memory_space<smem>>) -> (i32, i32, i32) {
    %c0_i32 = arith.constant 0 : i32
    %c0_i32_0 = arith.constant 0 : i32
    %c0_i32_1 = arith.constant 0 : i32
    return %arg1, %c0_i32, %c0_i32_0 : i32, i32, i32
  }
  func.func @transform_15(%arg0: i32, %arg1: i32, %arg2: memref<2xi32, #tpu.memory_space<smem>>) -> (i32, i32) {
    %c0_i32 = arith.constant 0 : i32
    %c0_i32_0 = arith.constant 0 : i32
    %c0_i32_1 = arith.constant 0 : i32
    return %c0_i32, %c0_i32_0 : i32, i32
  }
  func.func @transform_16(%arg0: i32, %arg1: i32, %arg2: memref<2xi32, #tpu.memory_space<smem>>) -> (i32, i32) {
    %c0_i32 = arith.constant 0 : i32
    %c0_i32_0 = arith.constant 0 : i32
    %c0_i32_1 = arith.constant 0 : i32
    return %c0_i32, %c0_i32_0 : i32, i32
  }
  func.func @transform_17(%arg0: i32, %arg1: i32, %arg2: memref<2xi32, #tpu.memory_space<smem>>) -> (i32, i32) {
    %c0_i32 = arith.constant 0 : i32
    %c0_i32_0 = arith.constant 0 : i32
    %c0_i32_1 = arith.constant 0 : i32
    return %c0_i32, %c0_i32_0 : i32, i32
  }
  func.func @transform_18(%arg0: i32, %arg1: i32, %arg2: memref<2xi32, #tpu.memory_space<smem>>) -> (i32, i32, i32) {
    %c0_i32 = arith.constant 0 : i32
    %c0_i32_0 = arith.constant 0 : i32
    %c0_i32_1 = arith.constant 0 : i32
    return %arg0, %c0_i32, %c0_i32_0 : i32, i32, i32
  }
}

module attributes {stable_mosaic.version = 11 : i64} {
  func.func @_encoder_kernel(%arg0: i32, %arg1: i32, %arg2: memref<4xi32, #tpu.memory_space<smem>>, %arg3: memref<1x8x32xf32, #tpu.memory_space<vmem>>, %arg4: memref<1x1x32xf32, #tpu.memory_space<vmem>>, %arg5: memref<1x1x32xf32, #tpu.memory_space<vmem>>, %arg6: memref<1x32x96xbf16, #tpu.memory_space<vmem>>, %arg7: memref<1x1x96xf32, #tpu.memory_space<vmem>>, %arg8: memref<1x32x32xbf16, #tpu.memory_space<vmem>>, %arg9: memref<1x1x32xf32, #tpu.memory_space<vmem>>, %arg10: memref<1x1x32xf32, #tpu.memory_space<vmem>>, %arg11: memref<1x1x32xf32, #tpu.memory_space<vmem>>, %arg12: memref<1x32x128xbf16, #tpu.memory_space<vmem>>, %arg13: memref<1x1x128xf32, #tpu.memory_space<vmem>>, %arg14: memref<1x128x32xbf16, #tpu.memory_space<vmem>>, %arg15: memref<1x1x32xf32, #tpu.memory_space<vmem>>, %arg16: memref<1x32xf32, #tpu.memory_space<vmem>>, %arg17: memref<1x32xf32, #tpu.memory_space<vmem>>, %arg18: memref<32x128xbf16, #tpu.memory_space<vmem>>, %arg19: memref<1x8x128xf32, #tpu.memory_space<vmem>>, %arg20: memref<8x96xf32, #tpu.memory_space<vmem>>, %arg21: memref<16x8xf32, #tpu.memory_space<vmem>>, %arg22: memref<8x32xf32, #tpu.memory_space<vmem>>, %arg23: memref<8x32xf32, #tpu.memory_space<vmem>>) attributes {dimension_semantics = [#tpu.dimension_semantics<parallel>, #tpu.dimension_semantics<arbitrary>], iteration_bounds = array<i64: 4, 2>, scalar_prefetch = 1 : i64, scratch_operands = 4 : i64, tpu.core_type = #tpu.core_type<tc>, window_params = [{transform_indices = @transform_0, window_bounds = array<i64: 1, 8, 32>}, {transform_indices = @transform_1, window_bounds = array<i64: 1, 1, 32>}, {transform_indices = @transform_2, window_bounds = array<i64: 1, 1, 32>}, {transform_indices = @transform_3, window_bounds = array<i64: 1, 32, 96>}, {transform_indices = @transform_4, window_bounds = array<i64: 1, 1, 96>}, {transform_indices = @transform_5, window_bounds = array<i64: 1, 32, 32>}, {transform_indices = @transform_6, window_bounds = array<i64: 1, 1, 32>}, {transform_indices = @transform_7, window_bounds = array<i64: 1, 1, 32>}, {transform_indices = @transform_8, window_bounds = array<i64: 1, 1, 32>}, {transform_indices = @transform_9, window_bounds = array<i64: 1, 32, 128>}, {transform_indices = @transform_10, window_bounds = array<i64: 1, 1, 128>}, {transform_indices = @transform_11, window_bounds = array<i64: 1, 128, 32>}, {transform_indices = @transform_12, window_bounds = array<i64: 1, 1, 32>}, {pipeline_mode = #tpu.pipeline_mode<synchronous>, transform_indices = @transform_13, window_bounds = array<i64: 1, 32>}, {pipeline_mode = #tpu.pipeline_mode<synchronous>, transform_indices = @transform_14, window_bounds = array<i64: 1, 32>}, {pipeline_mode = #tpu.pipeline_mode<synchronous>, transform_indices = @transform_15, window_bounds = array<i64: 32, 128>}, {transform_indices = @transform_16, window_bounds = array<i64: 1, 8, 128>}]} {
    %c0_i32 = arith.constant 0 : i32
    %0 = arith.cmpi eq, %arg1, %c0_i32 : i32
    %1 = arith.extui %0 : i1 to i32
    %c0_i32_0 = arith.constant 0 : i32
    %2 = arith.cmpi ne, %1, %c0_i32_0 : i32
    scf.if %2 {
      %c0_92 = arith.constant 0 : index
      %c0_93 = arith.constant 0 : index
      %c0_94 = arith.constant 0 : index
      %152 = vector.load %arg3[%c0_92, %c0_93, %c0_94] : memref<1x8x32xf32, #tpu.memory_space<vmem>>, vector<1x8x32xf32>
      %153 = vector.shape_cast %152 : vector<1x8x32xf32> to vector<8x32xf32>
      %c0_95 = arith.constant 0 : index
      %c0_96 = arith.constant 0 : index
      %154 = vector.load %arg23[%c0_95, %c0_96] : memref<8x32xf32, #tpu.memory_space<vmem>>, vector<8x32xf32>
      tpu.vector_store %arg23[%c0_95, %c0_96], %153 {strides = array<i32>} : memref<8x32xf32, #tpu.memory_space<vmem>>, vector<8x32xf32>,
    } else {
    }
    %c0 = arith.constant 0 : index
    %c0_1 = arith.constant 0 : index
    %3 = vector.load %arg23[%c0, %c0_1] : memref<8x32xf32, #tpu.memory_space<vmem>>, vector<8x32xf32>
    %c0_2 = arith.constant 0 : index
    %c0_3 = arith.constant 0 : index
    %c0_4 = arith.constant 0 : index
    %4 = vector.load %arg4[%c0_2, %c0_3, %c0_4] : memref<1x1x32xf32, #tpu.memory_space<vmem>>, vector<1x1x32xf32>
    %5 = vector.shape_cast %4 : vector<1x1x32xf32> to vector<1x32xf32>
    %c0_5 = arith.constant 0 : index
    %c0_6 = arith.constant 0 : index
    %c0_7 = arith.constant 0 : index
    %6 = vector.load %arg5[%c0_5, %c0_6, %c0_7] : memref<1x1x32xf32, #tpu.memory_space<vmem>>, vector<1x1x32xf32>
    %7 = vector.shape_cast %6 : vector<1x1x32xf32> to vector<1x32xf32>
    %cst = arith.constant dense<0.000000e+00> : vector<8xf32>
    %8 = vector.multi_reduction <add>, %3, %cst [1] : vector<8x32xf32> to vector<8xf32>
    %9 = vector.shape_cast %8 : vector<8xf32> to vector<8x1xf32>
    %cst_8 = arith.constant 3.200000e+01 : f32
    %10 = vector.broadcast %cst_8 : f32 to vector<8x1xf32>
    %11 = arith.divf %9, %10 : vector<8x1xf32>
    %12 = vector.broadcast %11 : vector<8x1xf32> to vector<8x32xf32>
    %13 = arith.subf %3, %12 : vector<8x32xf32>
    %14 = arith.mulf %13, %13 : vector<8x32xf32>
    %cst_9 = arith.constant dense<0.000000e+00> : vector<8xf32>
    %15 = vector.multi_reduction <add>, %14, %cst_9 [1] : vector<8x32xf32> to vector<8xf32>
    %16 = vector.shape_cast %15 : vector<8xf32> to vector<8x1xf32>
    %cst_10 = arith.constant 3.200000e+01 : f32
    %17 = vector.broadcast %cst_10 : f32 to vector<8x1xf32>
    %18 = arith.divf %16, %17 : vector<8x1xf32>
    %19 = vector.broadcast %11 : vector<8x1xf32> to vector<8x32xf32>
    %20 = arith.subf %3, %19 : vector<8x32xf32>
    %cst_11 = arith.constant 9.99999974E-6 : f32
    %21 = vector.broadcast %cst_11 : f32 to vector<8x1xf32>
    %22 = arith.addf %18, %21 : vector<8x1xf32>
    %23 = math.rsqrt %22 : vector<8x1xf32>
    %24 = vector.broadcast %23 : vector<8x1xf32> to vector<8x32xf32>
    %25 = arith.mulf %20, %24 : vector<8x32xf32>
    %26 = vector.broadcast %5 : vector<1x32xf32> to vector<8x32xf32>
    %27 = arith.mulf %25, %26 : vector<8x32xf32>
    %28 = vector.broadcast %7 : vector<1x32xf32> to vector<8x32xf32>
    %29 = arith.addf %27, %28 : vector<8x32xf32>
    %30 = arith.truncf %29 : vector<8x32xf32> to vector<8x32xbf16>
    %c0_12 = arith.constant 0 : index
    %c0_13 = arith.constant 0 : index
    %c0_14 = arith.constant 0 : index
    %31 = vector.load %arg6[%c0_12, %c0_13, %c0_14] : memref<1x32x96xbf16, #tpu.memory_space<vmem>>, vector<1x32x96xbf16>
    %32 = vector.shape_cast %31 : vector<1x32x96xbf16> to vector<32x96xbf16>
    %cst_15 = arith.constant dense<0.000000e+00> : vector<8x96xf32>
    %33 = tpu.matmul %30, %32, %cst_15 {dimension_numbers = #tpu.dot_dimension_numbers<[1], [0], [0], [1], [0, 0, 1, 1], [], []>} : vector<8x32xbf16>, vector<32x96xbf16>, vector<8x96xf32> -> vector<8x96xf32>
    %c0_16 = arith.constant 0 : index
    %c0_17 = arith.constant 0 : index
    %c0_18 = arith.constant 0 : index
    %34 = vector.load %arg7[%c0_16, %c0_17, %c0_18] : memref<1x1x96xf32, #tpu.memory_space<vmem>>, vector<1x1x96xf32>
    %35 = vector.shape_cast %34 : vector<1x1x96xf32> to vector<1x96xf32>
    %36 = vector.broadcast %35 : vector<1x96xf32> to vector<8x96xf32>
    %37 = arith.addf %33, %36 : vector<8x96xf32>
    %c0_19 = arith.constant 0 : index
    %c0_20 = arith.constant 0 : index
    %38 = vector.load %arg20[%c0_19, %c0_20] : memref<8x96xf32, #tpu.memory_space<vmem>>, vector<8x96xf32>
    tpu.vector_store %arg20[%c0_19, %c0_20], %37 {strides = array<i32>} : memref<8x96xf32, #tpu.memory_space<vmem>>, vector<8x96xf32>,
    %39 = tpu.iota {dimensions = array<i32: 0>} : vector<8x8xi32>
    %40 = tpu.iota {dimensions = array<i32: 1>} : vector<8x8xi32>
    %41 = arith.cmpi sle, %40, %39 : vector<8x8xi32>
    %cst_21 = arith.constant 0.000000e+00 : f32
    %cst_22 = arith.constant -1.000000e+30 : f32
    %42 = vector.broadcast %cst_21 : f32 to vector<8x8xf32>
    %43 = vector.broadcast %cst_22 : f32 to vector<8x8xf32>
    %44 = arith.select %41, %42, %43 : vector<8x8xi1>, vector<8x8xf32>
    %c0_23 = arith.constant 0 : index
    %c0_24 = arith.constant 0 : index
    %45 = vector.load %arg20[%c0_23, %c0_24] : memref<8x96xf32, #tpu.memory_space<vmem>>, vector<8x16xf32>
    %cst_25 = arith.constant 2.500000e-01 : f32
    %46 = vector.broadcast %cst_25 : f32 to vector<8x16xf32>
    %47 = arith.mulf %45, %46 : vector<8x16xf32>
    %c0_26 = arith.constant 0 : index
    %c32 = arith.constant 32 : index
    %48 = vector.load %arg20[%c0_26, %c32] : memref<8x96xf32, #tpu.memory_space<vmem>>, vector<8x16xf32>
    %49 = arith.truncf %47 : vector<8x16xf32> to vector<8x16xbf16>
    %50 = arith.truncf %48 : vector<8x16xf32> to vector<8x16xbf16>
    %cst_27 = arith.constant dense<0.000000e+00> : vector<8x8xf32>
    %51 = tpu.matmul %49, %50, %cst_27 {dimension_numbers = #tpu.dot_dimension_numbers<[1], [1], [0], [0], [0, 0, 1, 0], [], []>} : vector<8x16xbf16>, vector<8x16xbf16>, vector<8x8xf32> -> vector<8x8xf32>
    %52 = arith.addf %51, %44 : vector<8x8xf32>
    %c0_28 = arith.constant 0 : index
    %c0_29 = arith.constant 0 : index
    %53 = vector.load %arg21[%c0_28, %c0_29] : memref<16x8xf32, #tpu.memory_space<vmem>>, vector<8x8xf32>
    tpu.vector_store %arg21[%c0_28, %c0_29], %52 {strides = array<i32>} : memref<16x8xf32, #tpu.memory_space<vmem>>, vector<8x8xf32>,
    %c0_30 = arith.constant 0 : index
    %c16 = arith.constant 16 : index
    %54 = vector.load %arg20[%c0_30, %c16] : memref<8x96xf32, #tpu.memory_space<vmem>>, vector<8x16xf32>
    %cst_31 = arith.constant 2.500000e-01 : f32
    %55 = vector.broadcast %cst_31 : f32 to vector<8x16xf32>
    %56 = arith.mulf %54, %55 : vector<8x16xf32>
    %c0_32 = arith.constant 0 : index
    %c48 = arith.constant 48 : index
    %57 = vector.load %arg20[%c0_32, %c48] : memref<8x96xf32, #tpu.memory_space<vmem>>, vector<8x16xf32>
    %58 = arith.truncf %56 : vector<8x16xf32> to vector<8x16xbf16>
    %59 = arith.truncf %57 : vector<8x16xf32> to vector<8x16xbf16>
    %cst_33 = arith.constant dense<0.000000e+00> : vector<8x8xf32>
    %60 = tpu.matmul %58, %59, %cst_33 {dimension_numbers = #tpu.dot_dimension_numbers<[1], [1], [0], [0], [0, 0, 1, 0], [], []>} : vector<8x16xbf16>, vector<8x16xbf16>, vector<8x8xf32> -> vector<8x8xf32>
    %61 = arith.addf %60, %44 : vector<8x8xf32>
    %c8 = arith.constant 8 : index
    %c0_34 = arith.constant 0 : index
    %62 = vector.load %arg21[%c8, %c0_34] : memref<16x8xf32, #tpu.memory_space<vmem>>, vector<8x8xf32>
    tpu.vector_store %arg21[%c8, %c0_34], %61 {strides = array<i32>} : memref<16x8xf32, #tpu.memory_space<vmem>>, vector<8x8xf32>,
    %c0_35 = arith.constant 0 : index
    %c0_36 = arith.constant 0 : index
    %63 = vector.load %arg21[%c0_35, %c0_36] : memref<16x8xf32, #tpu.memory_space<vmem>>, vector<16x8xf32>
    %cst_37 = arith.constant dense<0xFF800000> : vector<16xf32>
    %64 = vector.multi_reduction <maximumf>, %63, %cst_37 [1] : vector<16x8xf32> to vector<16xf32>
    %65 = vector.shape_cast %64 : vector<16xf32> to vector<16x1xf32>
    %66 = vector.broadcast %65 : vector<16x1xf32> to vector<16x8xf32>
    %67 = arith.subf %63, %66 : vector<16x8xf32>
    %68 = math.exp %67 : vector<16x8xf32>
    %cst_38 = arith.constant dense<0.000000e+00> : vector<16xf32>
    %69 = vector.multi_reduction <add>, %68, %cst_38 [1] : vector<16x8xf32> to vector<16xf32>
    %70 = vector.shape_cast %69 : vector<16xf32> to vector<16x1xf32>
    %71 = tpu.reciprocal %70 {approx = true} : vector<16x1xf32> -> vector<16x1xf32>
    %72 = vector.broadcast %71 : vector<16x1xf32> to vector<16x8xf32>
    %73 = arith.mulf %68, %72 : vector<16x8xf32>
    %c0_39 = arith.constant 0 : index
    %c0_40 = arith.constant 0 : index
    %74 = vector.load %arg21[%c0_39, %c0_40] : memref<16x8xf32, #tpu.memory_space<vmem>>, vector<16x8xf32>
    tpu.vector_store %arg21[%c0_39, %c0_40], %73 {strides = array<i32>} : memref<16x8xf32, #tpu.memory_space<vmem>>, vector<16x8xf32>,
    %c0_41 = arith.constant 0 : index
    %c64 = arith.constant 64 : index
    %75 = vector.load %arg20[%c0_41, %c64] : memref<8x96xf32, #tpu.memory_space<vmem>>, vector<8x16xf32>
    %c0_42 = arith.constant 0 : index
    %c0_43 = arith.constant 0 : index
    %76 = vector.load %arg21[%c0_42, %c0_43] : memref<16x8xf32, #tpu.memory_space<vmem>>, vector<8x8xf32>
    %77 = arith.truncf %76 : vector<8x8xf32> to vector<8x8xbf16>
    %78 = arith.truncf %75 : vector<8x16xf32> to vector<8x16xbf16>
    %cst_44 = arith.constant dense<0.000000e+00> : vector<8x16xf32>
    %79 = tpu.matmul %77, %78, %cst_44 {dimension_numbers = #tpu.dot_dimension_numbers<[1], [0], [0], [1], [0, 0, 1, 1], [], []>} : vector<8x8xbf16>, vector<8x16xbf16>, vector<8x16xf32> -> vector<8x16xf32>
    %c0_45 = arith.constant 0 : index
    %c0_46 = arith.constant 0 : index
    %80 = vector.load %arg22[%c0_45, %c0_46] : memref<8x32xf32, #tpu.memory_space<vmem>>, vector<8x16xf32>
    tpu.vector_store %arg22[%c0_45, %c0_46], %79 {strides = array<i32>} : memref<8x32xf32, #tpu.memory_space<vmem>>, vector<8x16xf32>,
    %c0_47 = arith.constant 0 : index
    %c80 = arith.constant 80 : index
    %81 = vector.load %arg20[%c0_47, %c80] : memref<8x96xf32, #tpu.memory_space<vmem>>, vector<8x16xf32>
    %c8_48 = arith.constant 8 : index
    %c0_49 = arith.constant 0 : index
    %82 = vector.load %arg21[%c8_48, %c0_49] : memref<16x8xf32, #tpu.memory_space<vmem>>, vector<8x8xf32>
    %83 = arith.truncf %82 : vector<8x8xf32> to vector<8x8xbf16>
    %84 = arith.truncf %81 : vector<8x16xf32> to vector<8x16xbf16>
    %cst_50 = arith.constant dense<0.000000e+00> : vector<8x16xf32>
    %85 = tpu.matmul %83, %84, %cst_50 {dimension_numbers = #tpu.dot_dimension_numbers<[1], [0], [0], [1], [0, 0, 1, 1], [], []>} : vector<8x8xbf16>, vector<8x16xbf16>, vector<8x16xf32> -> vector<8x16xf32>
    %c0_51 = arith.constant 0 : index
    %c16_52 = arith.constant 16 : index
    %86 = vector.load %arg22[%c0_51, %c16_52] : memref<8x32xf32, #tpu.memory_space<vmem>>, vector<8x16xf32>
    tpu.vector_store %arg22[%c0_51, %c16_52], %85 {strides = array<i32>} : memref<8x32xf32, #tpu.memory_space<vmem>>, vector<8x16xf32>,
    %c0_53 = arith.constant 0 : index
    %c0_54 = arith.constant 0 : index
    %87 = vector.load %arg22[%c0_53, %c0_54] : memref<8x32xf32, #tpu.memory_space<vmem>>, vector<8x32xf32>
    %88 = arith.truncf %87 : vector<8x32xf32> to vector<8x32xbf16>
    %c0_55 = arith.constant 0 : index
    %c0_56 = arith.constant 0 : index
    %c0_57 = arith.constant 0 : index
    %89 = vector.load %arg8[%c0_55, %c0_56, %c0_57] : memref<1x32x32xbf16, #tpu.memory_space<vmem>>, vector<1x32x32xbf16>
    %90 = vector.shape_cast %89 : vector<1x32x32xbf16> to vector<32x32xbf16>
    %cst_58 = arith.constant dense<0.000000e+00> : vector<8x32xf32>
    %91 = tpu.matmul %88, %90, %cst_58 {dimension_numbers = #tpu.dot_dimension_numbers<[1], [0], [0], [1], [0, 0, 1, 1], [], []>} : vector<8x32xbf16>, vector<32x32xbf16>, vector<8x32xf32> -> vector<8x32xf32>
    %92 = arith.addf %3, %91 : vector<8x32xf32>
    %c0_59 = arith.constant 0 : index
    %c0_60 = arith.constant 0 : index
    %c0_61 = arith.constant 0 : index
    %93 = vector.load %arg9[%c0_59, %c0_60, %c0_61] : memref<1x1x32xf32, #tpu.memory_space<vmem>>, vector<1x1x32xf32>
    %94 = vector.shape_cast %93 : vector<1x1x32xf32> to vector<1x32xf32>
    %95 = vector.broadcast %94 : vector<1x32xf32> to vector<8x32xf32>
    %96 = arith.addf %92, %95 : vector<8x32xf32>
    %c0_62 = arith.constant 0 : index
    %c0_63 = arith.constant 0 : index
    %c0_64 = arith.constant 0 : index
    %97 = vector.load %arg10[%c0_62, %c0_63, %c0_64] : memref<1x1x32xf32, #tpu.memory_space<vmem>>, vector<1x1x32xf32>
    %98 = vector.shape_cast %97 : vector<1x1x32xf32> to vector<1x32xf32>
    %c0_65 = arith.constant 0 : index
    %c0_66 = arith.constant 0 : index
    %c0_67 = arith.constant 0 : index
    %99 = vector.load %arg11[%c0_65, %c0_66, %c0_67] : memref<1x1x32xf32, #tpu.memory_space<vmem>>, vector<1x1x32xf32>
    %100 = vector.shape_cast %99 : vector<1x1x32xf32> to vector<1x32xf32>
    %cst_68 = arith.constant dense<0.000000e+00> : vector<8xf32>
    %101 = vector.multi_reduction <add>, %96, %cst_68 [1] : vector<8x32xf32> to vector<8xf32>
    %102 = vector.shape_cast %101 : vector<8xf32> to vector<8x1xf32>
    %cst_69 = arith.constant 3.200000e+01 : f32
    %103 = vector.broadcast %cst_69 : f32 to vector<8x1xf32>
    %104 = arith.divf %102, %103 : vector<8x1xf32>
    %105 = vector.broadcast %104 : vector<8x1xf32> to vector<8x32xf32>
    %106 = arith.subf %96, %105 : vector<8x32xf32>
    %107 = arith.mulf %106, %106 : vector<8x32xf32>
    %cst_70 = arith.constant dense<0.000000e+00> : vector<8xf32>
    %108 = vector.multi_reduction <add>, %107, %cst_70 [1] : vector<8x32xf32> to vector<8xf32>
    %109 = vector.shape_cast %108 : vector<8xf32> to vector<8x1xf32>
    %cst_71 = arith.constant 3.200000e+01 : f32
    %110 = vector.broadcast %cst_71 : f32 to vector<8x1xf32>
    %111 = arith.divf %109, %110 : vector<8x1xf32>
    %112 = vector.broadcast %104 : vector<8x1xf32> to vector<8x32xf32>
    %113 = arith.subf %96, %112 : vector<8x32xf32>
    %cst_72 = arith.constant 9.99999974E-6 : f32
    %114 = vector.broadcast %cst_72 : f32 to vector<8x1xf32>
    %115 = arith.addf %111, %114 : vector<8x1xf32>
    %116 = math.rsqrt %115 : vector<8x1xf32>
    %117 = vector.broadcast %116 : vector<8x1xf32> to vector<8x32xf32>
    %118 = arith.mulf %113, %117 : vector<8x32xf32>
    %119 = vector.broadcast %98 : vector<1x32xf32> to vector<8x32xf32>
    %120 = arith.mulf %118, %119 : vector<8x32xf32>
    %121 = vector.broadcast %100 : vector<1x32xf32> to vector<8x32xf32>
    %122 = arith.addf %120, %121 : vector<8x32xf32>
    %123 = arith.truncf %122 : vector<8x32xf32> to vector<8x32xbf16>
    %c0_73 = arith.constant 0 : index
    %c0_74 = arith.constant 0 : index
    %c0_75 = arith.constant 0 : index
    %124 = vector.load %arg12[%c0_73, %c0_74, %c0_75] : memref<1x32x128xbf16, #tpu.memory_space<vmem>>, vector<1x32x128xbf16>
    %125 = vector.shape_cast %124 : vector<1x32x128xbf16> to vector<32x128xbf16>
    %cst_76 = arith.constant dense<0.000000e+00> : vector<8x128xf32>
    %126 = tpu.matmul %123, %125, %cst_76 {dimension_numbers = #tpu.dot_dimension_numbers<[1], [0], [0], [1], [0, 0, 1, 1], [], []>} : vector<8x32xbf16>, vector<32x128xbf16>, vector<8x128xf32> -> vector<8x128xf32>
    %c0_77 = arith.constant 0 : index
    %c0_78 = arith.constant 0 : index
    %c0_79 = arith.constant 0 : index
    %127 = vector.load %arg13[%c0_77, %c0_78, %c0_79] : memref<1x1x128xf32, #tpu.memory_space<vmem>>, vector<1x1x128xf32>
    %128 = vector.shape_cast %127 : vector<1x1x128xf32> to vector<1x128xf32>
    %129 = vector.broadcast %128 : vector<1x128xf32> to vector<8x128xf32>
    %130 = arith.addf %126, %129 : vector<8x128xf32>
    %cst_80 = arith.constant 1.702000e+00 : f32
    %131 = vector.broadcast %cst_80 : f32 to vector<8x128xf32>
    %132 = arith.mulf %131, %130 : vector<8x128xf32>
    %133 = arith.negf %132 : vector<8x128xf32>
    %134 = math.exp %133 : vector<8x128xf32>
    %cst_81 = arith.constant 1.000000e+00 : f32
    %135 = vector.broadcast %cst_81 : f32 to vector<8x128xf32>
    %136 = arith.addf %135, %134 : vector<8x128xf32>
    %137 = arith.divf %135, %136 : vector<8x128xf32>
    %138 = arith.mulf %130, %137 : vector<8x128xf32>
    %139 = arith.truncf %138 : vector<8x128xf32> to vector<8x128xbf16>
    %c0_82 = arith.constant 0 : index
    %c0_83 = arith.constant 0 : index
    %c0_84 = arith.constant 0 : index
    %140 = vector.load %arg14[%c0_82, %c0_83, %c0_84] : memref<1x128x32xbf16, #tpu.memory_space<vmem>>, vector<1x128x32xbf16>
    %141 = vector.shape_cast %140 : vector<1x128x32xbf16> to vector<128x32xbf16>
    %cst_85 = arith.constant dense<0.000000e+00> : vector<8x32xf32>
    %142 = tpu.matmul %139, %141, %cst_85 {dimension_numbers = #tpu.dot_dimension_numbers<[1], [0], [0], [1], [0, 0, 1, 1], [], []>} : vector<8x128xbf16>, vector<128x32xbf16>, vector<8x32xf32> -> vector<8x32xf32>
    %143 = arith.addf %96, %142 : vector<8x32xf32>
    %c0_86 = arith.constant 0 : index
    %c0_87 = arith.constant 0 : index
    %c0_88 = arith.constant 0 : index
    %144 = vector.load %arg15[%c0_86, %c0_87, %c0_88] : memref<1x1x32xf32, #tpu.memory_space<vmem>>, vector<1x1x32xf32>
    %145 = vector.shape_cast %144 : vector<1x1x32xf32> to vector<1x32xf32>
    %146 = vector.broadcast %145 : vector<1x32xf32> to vector<8x32xf32>
    %147 = arith.addf %143, %146 : vector<8x32xf32>
    %c0_89 = arith.constant 0 : index
    %c0_90 = arith.constant 0 : index
    %148 = vector.load %arg23[%c0_89, %c0_90] : memref<8x32xf32, #tpu.memory_space<vmem>>, vector<8x32xf32>
    tpu.vector_store %arg23[%c0_89, %c0_90], %147 {strides = array<i32>} : memref<8x32xf32, #tpu.memory_space<vmem>>, vector<8x32xf32>,
    %c1_i32 = arith.constant 1 : i32
    %149 = arith.cmpi eq, %arg1, %c1_i32 : i32
    %150 = arith.extui %149 : i1 to i32
    %c0_i32_91 = arith.constant 0 : i32
    %151 = arith.cmpi ne, %150, %c0_i32_91 : i32
    scf.if %151 {
      %152 = arith.index_cast %arg0 : i32 to index
      %153 = memref.load %arg2[%152] : memref<4xi32, #tpu.memory_space<smem>>
      %154 = arith.index_cast %153 : i32 to index
      %c0_92 = arith.constant 0 : index
      %155 = vector.load %arg23[%154, %c0_92] : memref<8x32xf32, #tpu.memory_space<vmem>>, vector<1x32xf32>
      %c0_93 = arith.constant 0 : index
      %c0_94 = arith.constant 0 : index
      %156 = vector.load %arg16[%c0_93, %c0_94] : memref<1x32xf32, #tpu.memory_space<vmem>>, vector<1x32xf32>
      %c0_95 = arith.constant 0 : index
      %c0_96 = arith.constant 0 : index
      %157 = vector.load %arg17[%c0_95, %c0_96] : memref<1x32xf32, #tpu.memory_space<vmem>>, vector<1x32xf32>
      %cst_97 = arith.constant dense<0.000000e+00> : vector<1xf32>
      %158 = vector.multi_reduction <add>, %155, %cst_97 [1] : vector<1x32xf32> to vector<1xf32>
      %159 = vector.shape_cast %158 : vector<1xf32> to vector<1x1xf32>
      %cst_98 = arith.constant 3.200000e+01 : f32
      %160 = vector.broadcast %cst_98 : f32 to vector<1x1xf32>
      %161 = arith.divf %159, %160 : vector<1x1xf32>
      %162 = vector.broadcast %161 : vector<1x1xf32> to vector<1x32xf32>
      %163 = arith.subf %155, %162 : vector<1x32xf32>
      %164 = arith.mulf %163, %163 : vector<1x32xf32>
      %cst_99 = arith.constant dense<0.000000e+00> : vector<1xf32>
      %165 = vector.multi_reduction <add>, %164, %cst_99 [1] : vector<1x32xf32> to vector<1xf32>
      %166 = vector.shape_cast %165 : vector<1xf32> to vector<1x1xf32>
      %cst_100 = arith.constant 3.200000e+01 : f32
      %167 = vector.broadcast %cst_100 : f32 to vector<1x1xf32>
      %168 = arith.divf %166, %167 : vector<1x1xf32>
      %169 = vector.broadcast %161 : vector<1x1xf32> to vector<1x32xf32>
      %170 = arith.subf %155, %169 : vector<1x32xf32>
      %cst_101 = arith.constant 9.99999974E-6 : f32
      %171 = vector.broadcast %cst_101 : f32 to vector<1x1xf32>
      %172 = arith.addf %168, %171 : vector<1x1xf32>
      %173 = math.rsqrt %172 : vector<1x1xf32>
      %174 = vector.broadcast %173 : vector<1x1xf32> to vector<1x32xf32>
      %175 = arith.mulf %170, %174 : vector<1x32xf32>
      %176 = arith.mulf %175, %156 : vector<1x32xf32>
      %177 = arith.addf %176, %157 : vector<1x32xf32>
      %178 = arith.truncf %177 : vector<1x32xf32> to vector<1x32xbf16>
      %c0_102 = arith.constant 0 : index
      %c0_103 = arith.constant 0 : index
      %179 = vector.load %arg18[%c0_102, %c0_103] : memref<32x128xbf16, #tpu.memory_space<vmem>>, vector<32x128xbf16>
      %cst_104 = arith.constant dense<0.000000e+00> : vector<1x128xf32>
      %180 = tpu.matmul %178, %179, %cst_104 {dimension_numbers = #tpu.dot_dimension_numbers<[1], [0], [0], [1], [0, 0, 1, 1], [], []>} : vector<1x32xbf16>, vector<32x128xbf16>, vector<1x128xf32> -> vector<1x128xf32>
      %181 = arith.mulf %180, %180 : vector<1x128xf32>
      %cst_105 = arith.constant dense<0.000000e+00> : vector<1xf32>
      %182 = vector.multi_reduction <add>, %181, %cst_105 [1] : vector<1x128xf32> to vector<1xf32>
      %183 = vector.shape_cast %182 : vector<1xf32> to vector<1x1xf32>
      %cst_106 = arith.constant 1.000000e-24 : f32
      %184 = vector.broadcast %cst_106 : f32 to vector<1x1xf32>
      %185 = arith.maximumf %183, %184 : vector<1x1xf32>
      %186 = math.rsqrt %185 : vector<1x1xf32>
      %187 = vector.broadcast %186 : vector<1x1xf32> to vector<1x128xf32>
      %188 = arith.mulf %180, %187 : vector<1x128xf32>
      %189 = vector.shape_cast %188 : vector<1x128xf32> to vector<1x128xf32>
      %190 = vector.broadcast %189 : vector<1x128xf32> to vector<8x128xf32>
      %c0_107 = arith.constant 0 : index
      %c0_108 = arith.constant 0 : index
      %c0_109 = arith.constant 0 : index
      %191 = vector.load %arg19[%c0_107, %c0_108, %c0_109] : memref<1x8x128xf32, #tpu.memory_space<vmem>>, vector<1x8x128xf32>
      %192 = vector.shape_cast %191 : vector<1x8x128xf32> to vector<8x128xf32>
      %193 = vector.shape_cast %190 : vector<8x128xf32> to vector<1x8x128xf32>
      tpu.vector_store %arg19[%c0_107, %c0_108, %c0_109], %193 {strides = array<i32>} : memref<1x8x128xf32, #tpu.memory_space<vmem>>, vector<1x8x128xf32>,
    } else {
    }
    return
  }
  func.func @transform_0(%arg0: i32, %arg1: i32, %arg2: memref<4xi32, #tpu.memory_space<smem>>) -> (i32, i32, i32) {
    %c0_i32 = arith.constant 0 : i32
    %c0_i32_0 = arith.constant 0 : i32
    %c0_i32_1 = arith.constant 0 : i32
    return %arg0, %c0_i32, %c0_i32_0 : i32, i32, i32
  }
  func.func @transform_1(%arg0: i32, %arg1: i32, %arg2: memref<4xi32, #tpu.memory_space<smem>>) -> (i32, i32, i32) {
    %c0_i32 = arith.constant 0 : i32
    %c0_i32_0 = arith.constant 0 : i32
    %c0_i32_1 = arith.constant 0 : i32
    return %arg1, %c0_i32, %c0_i32_0 : i32, i32, i32
  }
  func.func @transform_2(%arg0: i32, %arg1: i32, %arg2: memref<4xi32, #tpu.memory_space<smem>>) -> (i32, i32, i32) {
    %c0_i32 = arith.constant 0 : i32
    %c0_i32_0 = arith.constant 0 : i32
    %c0_i32_1 = arith.constant 0 : i32
    return %arg1, %c0_i32, %c0_i32_0 : i32, i32, i32
  }
  func.func @transform_3(%arg0: i32, %arg1: i32, %arg2: memref<4xi32, #tpu.memory_space<smem>>) -> (i32, i32, i32) {
    %c0_i32 = arith.constant 0 : i32
    %c0_i32_0 = arith.constant 0 : i32
    %c0_i32_1 = arith.constant 0 : i32
    return %arg1, %c0_i32, %c0_i32_0 : i32, i32, i32
  }
  func.func @transform_4(%arg0: i32, %arg1: i32, %arg2: memref<4xi32, #tpu.memory_space<smem>>) -> (i32, i32, i32) {
    %c0_i32 = arith.constant 0 : i32
    %c0_i32_0 = arith.constant 0 : i32
    %c0_i32_1 = arith.constant 0 : i32
    return %arg1, %c0_i32, %c0_i32_0 : i32, i32, i32
  }
  func.func @transform_5(%arg0: i32, %arg1: i32, %arg2: memref<4xi32, #tpu.memory_space<smem>>) -> (i32, i32, i32) {
    %c0_i32 = arith.constant 0 : i32
    %c0_i32_0 = arith.constant 0 : i32
    %c0_i32_1 = arith.constant 0 : i32
    return %arg1, %c0_i32, %c0_i32_0 : i32, i32, i32
  }
  func.func @transform_6(%arg0: i32, %arg1: i32, %arg2: memref<4xi32, #tpu.memory_space<smem>>) -> (i32, i32, i32) {
    %c0_i32 = arith.constant 0 : i32
    %c0_i32_0 = arith.constant 0 : i32
    %c0_i32_1 = arith.constant 0 : i32
    return %arg1, %c0_i32, %c0_i32_0 : i32, i32, i32
  }
  func.func @transform_7(%arg0: i32, %arg1: i32, %arg2: memref<4xi32, #tpu.memory_space<smem>>) -> (i32, i32, i32) {
    %c0_i32 = arith.constant 0 : i32
    %c0_i32_0 = arith.constant 0 : i32
    %c0_i32_1 = arith.constant 0 : i32
    return %arg1, %c0_i32, %c0_i32_0 : i32, i32, i32
  }
  func.func @transform_8(%arg0: i32, %arg1: i32, %arg2: memref<4xi32, #tpu.memory_space<smem>>) -> (i32, i32, i32) {
    %c0_i32 = arith.constant 0 : i32
    %c0_i32_0 = arith.constant 0 : i32
    %c0_i32_1 = arith.constant 0 : i32
    return %arg1, %c0_i32, %c0_i32_0 : i32, i32, i32
  }
  func.func @transform_9(%arg0: i32, %arg1: i32, %arg2: memref<4xi32, #tpu.memory_space<smem>>) -> (i32, i32, i32) {
    %c0_i32 = arith.constant 0 : i32
    %c0_i32_0 = arith.constant 0 : i32
    %c0_i32_1 = arith.constant 0 : i32
    return %arg1, %c0_i32, %c0_i32_0 : i32, i32, i32
  }
  func.func @transform_10(%arg0: i32, %arg1: i32, %arg2: memref<4xi32, #tpu.memory_space<smem>>) -> (i32, i32, i32) {
    %c0_i32 = arith.constant 0 : i32
    %c0_i32_0 = arith.constant 0 : i32
    %c0_i32_1 = arith.constant 0 : i32
    return %arg1, %c0_i32, %c0_i32_0 : i32, i32, i32
  }
  func.func @transform_11(%arg0: i32, %arg1: i32, %arg2: memref<4xi32, #tpu.memory_space<smem>>) -> (i32, i32, i32) {
    %c0_i32 = arith.constant 0 : i32
    %c0_i32_0 = arith.constant 0 : i32
    %c0_i32_1 = arith.constant 0 : i32
    return %arg1, %c0_i32, %c0_i32_0 : i32, i32, i32
  }
  func.func @transform_12(%arg0: i32, %arg1: i32, %arg2: memref<4xi32, #tpu.memory_space<smem>>) -> (i32, i32, i32) {
    %c0_i32 = arith.constant 0 : i32
    %c0_i32_0 = arith.constant 0 : i32
    %c0_i32_1 = arith.constant 0 : i32
    return %arg1, %c0_i32, %c0_i32_0 : i32, i32, i32
  }
  func.func @transform_13(%arg0: i32, %arg1: i32, %arg2: memref<4xi32, #tpu.memory_space<smem>>) -> (i32, i32) {
    %c0_i32 = arith.constant 0 : i32
    %c0_i32_0 = arith.constant 0 : i32
    %c0_i32_1 = arith.constant 0 : i32
    return %c0_i32, %c0_i32_0 : i32, i32
  }
  func.func @transform_14(%arg0: i32, %arg1: i32, %arg2: memref<4xi32, #tpu.memory_space<smem>>) -> (i32, i32) {
    %c0_i32 = arith.constant 0 : i32
    %c0_i32_0 = arith.constant 0 : i32
    %c0_i32_1 = arith.constant 0 : i32
    return %c0_i32, %c0_i32_0 : i32, i32
  }
  func.func @transform_15(%arg0: i32, %arg1: i32, %arg2: memref<4xi32, #tpu.memory_space<smem>>) -> (i32, i32) {
    %c0_i32 = arith.constant 0 : i32
    %c0_i32_0 = arith.constant 0 : i32
    %c0_i32_1 = arith.constant 0 : i32
    return %c0_i32, %c0_i32_0 : i32, i32
  }
  func.func @transform_16(%arg0: i32, %arg1: i32, %arg2: memref<4xi32, #tpu.memory_space<smem>>) -> (i32, i32, i32) {
    %c0_i32 = arith.constant 0 : i32
    %c0_i32_0 = arith.constant 0 : i32
    %c0_i32_1 = arith.constant 0 : i32
    return %arg0, %c0_i32, %c0_i32_0 : i32, i32, i32
  }
}

module attributes {stable_mosaic.version = 11 : i64} {
  func.func @_encoder_kernel(%arg0: i32, %arg1: i32, %arg2: memref<2xi32, #tpu.memory_space<smem>>, %arg3: memref<1x17x64xf32, #tpu.memory_space<vmem>>, %arg4: memref<1x64xf32, #tpu.memory_space<vmem>>, %arg5: memref<1x64xf32, #tpu.memory_space<vmem>>, %arg6: memref<1x1x64xf32, #tpu.memory_space<vmem>>, %arg7: memref<1x1x64xf32, #tpu.memory_space<vmem>>, %arg8: memref<1x64x192xbf16, #tpu.memory_space<vmem>>, %arg9: memref<1x1x192xf32, #tpu.memory_space<vmem>>, %arg10: memref<1x64x64xbf16, #tpu.memory_space<vmem>>, %arg11: memref<1x1x64xf32, #tpu.memory_space<vmem>>, %arg12: memref<1x1x64xf32, #tpu.memory_space<vmem>>, %arg13: memref<1x1x64xf32, #tpu.memory_space<vmem>>, %arg14: memref<1x64x256xbf16, #tpu.memory_space<vmem>>, %arg15: memref<1x1x256xf32, #tpu.memory_space<vmem>>, %arg16: memref<1x256x64xbf16, #tpu.memory_space<vmem>>, %arg17: memref<1x1x64xf32, #tpu.memory_space<vmem>>, %arg18: memref<1x64xf32, #tpu.memory_space<vmem>>, %arg19: memref<1x64xf32, #tpu.memory_space<vmem>>, %arg20: memref<64x128xbf16, #tpu.memory_space<vmem>>, %arg21: memref<1x8x128xf32, #tpu.memory_space<vmem>>, %arg22: memref<17x192xf32, #tpu.memory_space<vmem>>, %arg23: memref<68x17xf32, #tpu.memory_space<vmem>>, %arg24: memref<17x64xf32, #tpu.memory_space<vmem>>, %arg25: memref<17x64xf32, #tpu.memory_space<vmem>>) attributes {dimension_semantics = [#tpu.dimension_semantics<parallel>, #tpu.dimension_semantics<arbitrary>], iteration_bounds = array<i64: 2, 2>, scalar_prefetch = 1 : i64, scratch_operands = 4 : i64, tpu.core_type = #tpu.core_type<tc>, window_params = [{transform_indices = @transform_0, window_bounds = array<i64: 1, 17, 64>}, {pipeline_mode = #tpu.pipeline_mode<synchronous>, transform_indices = @transform_1, window_bounds = array<i64: 1, 64>}, {pipeline_mode = #tpu.pipeline_mode<synchronous>, transform_indices = @transform_2, window_bounds = array<i64: 1, 64>}, {transform_indices = @transform_3, window_bounds = array<i64: 1, 1, 64>}, {transform_indices = @transform_4, window_bounds = array<i64: 1, 1, 64>}, {transform_indices = @transform_5, window_bounds = array<i64: 1, 64, 192>}, {transform_indices = @transform_6, window_bounds = array<i64: 1, 1, 192>}, {transform_indices = @transform_7, window_bounds = array<i64: 1, 64, 64>}, {transform_indices = @transform_8, window_bounds = array<i64: 1, 1, 64>}, {transform_indices = @transform_9, window_bounds = array<i64: 1, 1, 64>}, {transform_indices = @transform_10, window_bounds = array<i64: 1, 1, 64>}, {transform_indices = @transform_11, window_bounds = array<i64: 1, 64, 256>}, {transform_indices = @transform_12, window_bounds = array<i64: 1, 1, 256>}, {transform_indices = @transform_13, window_bounds = array<i64: 1, 256, 64>}, {transform_indices = @transform_14, window_bounds = array<i64: 1, 1, 64>}, {pipeline_mode = #tpu.pipeline_mode<synchronous>, transform_indices = @transform_15, window_bounds = array<i64: 1, 64>}, {pipeline_mode = #tpu.pipeline_mode<synchronous>, transform_indices = @transform_16, window_bounds = array<i64: 1, 64>}, {pipeline_mode = #tpu.pipeline_mode<synchronous>, transform_indices = @transform_17, window_bounds = array<i64: 64, 128>}, {transform_indices = @transform_18, window_bounds = array<i64: 1, 8, 128>}]} {
    %c0_i32 = arith.constant 0 : i32
    %0 = arith.cmpi eq, %arg1, %c0_i32 : i32
    %1 = arith.extui %0 : i1 to i32
    %c0_i32_0 = arith.constant 0 : i32
    %2 = arith.cmpi ne, %1, %c0_i32_0 : i32
    scf.if %2 {
      %c0_112 = arith.constant 0 : index
      %c0_113 = arith.constant 0 : index
      %c0_114 = arith.constant 0 : index
      %172 = vector.load %arg3[%c0_112, %c0_113, %c0_114] : memref<1x17x64xf32, #tpu.memory_space<vmem>>, vector<1x17x64xf32>
      %173 = vector.shape_cast %172 : vector<1x17x64xf32> to vector<17x64xf32>
      %c0_115 = arith.constant 0 : index
      %c0_116 = arith.constant 0 : index
      %174 = vector.load %arg4[%c0_115, %c0_116] : memref<1x64xf32, #tpu.memory_space<vmem>>, vector<1x64xf32>
      %c0_117 = arith.constant 0 : index
      %c0_118 = arith.constant 0 : index
      %175 = vector.load %arg5[%c0_117, %c0_118] : memref<1x64xf32, #tpu.memory_space<vmem>>, vector<1x64xf32>
      %cst_119 = arith.constant dense<0.000000e+00> : vector<17xf32>
      %176 = vector.multi_reduction <add>, %173, %cst_119 [1] : vector<17x64xf32> to vector<17xf32>
      %177 = vector.shape_cast %176 : vector<17xf32> to vector<17x1xf32>
      %cst_120 = arith.constant 6.400000e+01 : f32
      %178 = vector.broadcast %cst_120 : f32 to vector<17x1xf32>
      %179 = arith.divf %177, %178 : vector<17x1xf32>
      %180 = vector.broadcast %179 : vector<17x1xf32> to vector<17x64xf32>
      %181 = arith.subf %173, %180 : vector<17x64xf32>
      %182 = arith.mulf %181, %181 : vector<17x64xf32>
      %cst_121 = arith.constant dense<0.000000e+00> : vector<17xf32>
      %183 = vector.multi_reduction <add>, %182, %cst_121 [1] : vector<17x64xf32> to vector<17xf32>
      %184 = vector.shape_cast %183 : vector<17xf32> to vector<17x1xf32>
      %cst_122 = arith.constant 6.400000e+01 : f32
      %185 = vector.broadcast %cst_122 : f32 to vector<17x1xf32>
      %186 = arith.divf %184, %185 : vector<17x1xf32>
      %187 = vector.broadcast %179 : vector<17x1xf32> to vector<17x64xf32>
      %188 = arith.subf %173, %187 : vector<17x64xf32>
      %cst_123 = arith.constant 9.99999974E-6 : f32
      %189 = vector.broadcast %cst_123 : f32 to vector<17x1xf32>
      %190 = arith.addf %186, %189 : vector<17x1xf32>
      %191 = math.rsqrt %190 : vector<17x1xf32>
      %192 = vector.broadcast %191 : vector<17x1xf32> to vector<17x64xf32>
      %193 = arith.mulf %188, %192 : vector<17x64xf32>
      %194 = vector.broadcast %174 : vector<1x64xf32> to vector<17x64xf32>
      %195 = arith.mulf %193, %194 : vector<17x64xf32>
      %196 = vector.broadcast %175 : vector<1x64xf32> to vector<17x64xf32>
      %197 = arith.addf %195, %196 : vector<17x64xf32>
      %c0_124 = arith.constant 0 : index
      %c0_125 = arith.constant 0 : index
      %198 = vector.load %arg25[%c0_124, %c0_125] : memref<17x64xf32, #tpu.memory_space<vmem>>, vector<17x64xf32>
      tpu.vector_store %arg25[%c0_124, %c0_125], %197 {strides = array<i32>} : memref<17x64xf32, #tpu.memory_space<vmem>>, vector<17x64xf32>,
    } else {
    }
    %c0 = arith.constant 0 : index
    %c0_1 = arith.constant 0 : index
    %3 = vector.load %arg25[%c0, %c0_1] : memref<17x64xf32, #tpu.memory_space<vmem>>, vector<17x64xf32>
    %c0_2 = arith.constant 0 : index
    %c0_3 = arith.constant 0 : index
    %c0_4 = arith.constant 0 : index
    %4 = vector.load %arg6[%c0_2, %c0_3, %c0_4] : memref<1x1x64xf32, #tpu.memory_space<vmem>>, vector<1x1x64xf32>
    %5 = vector.shape_cast %4 : vector<1x1x64xf32> to vector<1x64xf32>
    %c0_5 = arith.constant 0 : index
    %c0_6 = arith.constant 0 : index
    %c0_7 = arith.constant 0 : index
    %6 = vector.load %arg7[%c0_5, %c0_6, %c0_7] : memref<1x1x64xf32, #tpu.memory_space<vmem>>, vector<1x1x64xf32>
    %7 = vector.shape_cast %6 : vector<1x1x64xf32> to vector<1x64xf32>
    %cst = arith.constant dense<0.000000e+00> : vector<17xf32>
    %8 = vector.multi_reduction <add>, %3, %cst [1] : vector<17x64xf32> to vector<17xf32>
    %9 = vector.shape_cast %8 : vector<17xf32> to vector<17x1xf32>
    %cst_8 = arith.constant 6.400000e+01 : f32
    %10 = vector.broadcast %cst_8 : f32 to vector<17x1xf32>
    %11 = arith.divf %9, %10 : vector<17x1xf32>
    %12 = vector.broadcast %11 : vector<17x1xf32> to vector<17x64xf32>
    %13 = arith.subf %3, %12 : vector<17x64xf32>
    %14 = arith.mulf %13, %13 : vector<17x64xf32>
    %cst_9 = arith.constant dense<0.000000e+00> : vector<17xf32>
    %15 = vector.multi_reduction <add>, %14, %cst_9 [1] : vector<17x64xf32> to vector<17xf32>
    %16 = vector.shape_cast %15 : vector<17xf32> to vector<17x1xf32>
    %cst_10 = arith.constant 6.400000e+01 : f32
    %17 = vector.broadcast %cst_10 : f32 to vector<17x1xf32>
    %18 = arith.divf %16, %17 : vector<17x1xf32>
    %19 = vector.broadcast %11 : vector<17x1xf32> to vector<17x64xf32>
    %20 = arith.subf %3, %19 : vector<17x64xf32>
    %cst_11 = arith.constant 9.99999974E-6 : f32
    %21 = vector.broadcast %cst_11 : f32 to vector<17x1xf32>
    %22 = arith.addf %18, %21 : vector<17x1xf32>
    %23 = math.rsqrt %22 : vector<17x1xf32>
    %24 = vector.broadcast %23 : vector<17x1xf32> to vector<17x64xf32>
    %25 = arith.mulf %20, %24 : vector<17x64xf32>
    %26 = vector.broadcast %5 : vector<1x64xf32> to vector<17x64xf32>
    %27 = arith.mulf %25, %26 : vector<17x64xf32>
    %28 = vector.broadcast %7 : vector<1x64xf32> to vector<17x64xf32>
    %29 = arith.addf %27, %28 : vector<17x64xf32>
    %30 = arith.truncf %29 : vector<17x64xf32> to vector<17x64xbf16>
    %c0_12 = arith.constant 0 : index
    %c0_13 = arith.constant 0 : index
    %c0_14 = arith.constant 0 : index
    %31 = vector.load %arg8[%c0_12, %c0_13, %c0_14] : memref<1x64x192xbf16, #tpu.memory_space<vmem>>, vector<1x64x192xbf16>
    %32 = vector.shape_cast %31 : vector<1x64x192xbf16> to vector<64x192xbf16>
    %cst_15 = arith.constant dense<0.000000e+00> : vector<17x192xf32>
    %33 = tpu.matmul %30, %32, %cst_15 {dimension_numbers = #tpu.dot_dimension_numbers<[1], [0], [0], [1], [0, 0, 1, 1], [], []>} : vector<17x64xbf16>, vector<64x192xbf16>, vector<17x192xf32> -> vector<17x192xf32>
    %c0_16 = arith.constant 0 : index
    %c0_17 = arith.constant 0 : index
    %c0_18 = arith.constant 0 : index
    %34 = vector.load %arg9[%c0_16, %c0_17, %c0_18] : memref<1x1x192xf32, #tpu.memory_space<vmem>>, vector<1x1x192xf32>
    %35 = vector.shape_cast %34 : vector<1x1x192xf32> to vector<1x192xf32>
    %36 = vector.broadcast %35 : vector<1x192xf32> to vector<17x192xf32>
    %37 = arith.addf %33, %36 : vector<17x192xf32>
    %c0_19 = arith.constant 0 : index
    %c0_20 = arith.constant 0 : index
    %38 = vector.load %arg22[%c0_19, %c0_20] : memref<17x192xf32, #tpu.memory_space<vmem>>, vector<17x192xf32>
    tpu.vector_store %arg22[%c0_19, %c0_20], %37 {strides = array<i32>} : memref<17x192xf32, #tpu.memory_space<vmem>>, vector<17x192xf32>,
    %c0_21 = arith.constant 0 : index
    %c0_22 = arith.constant 0 : index
    %39 = vector.load %arg22[%c0_21, %c0_22] : memref<17x192xf32, #tpu.memory_space<vmem>>, vector<17x16xf32>
    %cst_23 = arith.constant 2.500000e-01 : f32
    %40 = vector.broadcast %cst_23 : f32 to vector<17x16xf32>
    %41 = arith.mulf %39, %40 : vector<17x16xf32>
    %c0_24 = arith.constant 0 : index
    %c64 = arith.constant 64 : index
    %42 = vector.load %arg22[%c0_24, %c64] : memref<17x192xf32, #tpu.memory_space<vmem>>, vector<17x16xf32>
    %43 = arith.truncf %41 : vector<17x16xf32> to vector<17x16xbf16>
    %44 = arith.truncf %42 : vector<17x16xf32> to vector<17x16xbf16>
    %cst_25 = arith.constant dense<0.000000e+00> : vector<17x17xf32>
    %45 = tpu.matmul %43, %44, %cst_25 {dimension_numbers = #tpu.dot_dimension_numbers<[1], [1], [0], [0], [0, 0, 1, 0], [], []>} : vector<17x16xbf16>, vector<17x16xbf16>, vector<17x17xf32> -> vector<17x17xf32>
    %c0_26 = arith.constant 0 : index
    %c0_27 = arith.constant 0 : index
    %46 = vector.load %arg23[%c0_26, %c0_27] : memref<68x17xf32, #tpu.memory_space<vmem>>, vector<17x17xf32>
    tpu.vector_store %arg23[%c0_26, %c0_27], %45 {strides = array<i32>} : memref<68x17xf32, #tpu.memory_space<vmem>>, vector<17x17xf32>,
    %c0_28 = arith.constant 0 : index
    %c16 = arith.constant 16 : index
    %47 = vector.load %arg22[%c0_28, %c16] : memref<17x192xf32, #tpu.memory_space<vmem>>, vector<17x16xf32>
    %cst_29 = arith.constant 2.500000e-01 : f32
    %48 = vector.broadcast %cst_29 : f32 to vector<17x16xf32>
    %49 = arith.mulf %47, %48 : vector<17x16xf32>
    %c0_30 = arith.constant 0 : index
    %c80 = arith.constant 80 : index
    %50 = vector.load %arg22[%c0_30, %c80] : memref<17x192xf32, #tpu.memory_space<vmem>>, vector<17x16xf32>
    %51 = arith.truncf %49 : vector<17x16xf32> to vector<17x16xbf16>
    %52 = arith.truncf %50 : vector<17x16xf32> to vector<17x16xbf16>
    %cst_31 = arith.constant dense<0.000000e+00> : vector<17x17xf32>
    %53 = tpu.matmul %51, %52, %cst_31 {dimension_numbers = #tpu.dot_dimension_numbers<[1], [1], [0], [0], [0, 0, 1, 0], [], []>} : vector<17x16xbf16>, vector<17x16xbf16>, vector<17x17xf32> -> vector<17x17xf32>
    %c17 = arith.constant 17 : index
    %c0_32 = arith.constant 0 : index
    %54 = vector.load %arg23[%c17, %c0_32] : memref<68x17xf32, #tpu.memory_space<vmem>>, vector<17x17xf32>
    tpu.vector_store %arg23[%c17, %c0_32], %53 {strides = array<i32>} : memref<68x17xf32, #tpu.memory_space<vmem>>, vector<17x17xf32>,
    %c0_33 = arith.constant 0 : index
    %c32 = arith.constant 32 : index
    %55 = vector.load %arg22[%c0_33, %c32] : memref<17x192xf32, #tpu.memory_space<vmem>>, vector<17x16xf32>
    %cst_34 = arith.constant 2.500000e-01 : f32
    %56 = vector.broadcast %cst_34 : f32 to vector<17x16xf32>
    %57 = arith.mulf %55, %56 : vector<17x16xf32>
    %c0_35 = arith.constant 0 : index
    %c96 = arith.constant 96 : index
    %58 = vector.load %arg22[%c0_35, %c96] : memref<17x192xf32, #tpu.memory_space<vmem>>, vector<17x16xf32>
    %59 = arith.truncf %57 : vector<17x16xf32> to vector<17x16xbf16>
    %60 = arith.truncf %58 : vector<17x16xf32> to vector<17x16xbf16>
    %cst_36 = arith.constant dense<0.000000e+00> : vector<17x17xf32>
    %61 = tpu.matmul %59, %60, %cst_36 {dimension_numbers = #tpu.dot_dimension_numbers<[1], [1], [0], [0], [0, 0, 1, 0], [], []>} : vector<17x16xbf16>, vector<17x16xbf16>, vector<17x17xf32> -> vector<17x17xf32>
    %c34 = arith.constant 34 : index
    %c0_37 = arith.constant 0 : index
    %62 = vector.load %arg23[%c34, %c0_37] : memref<68x17xf32, #tpu.memory_space<vmem>>, vector<17x17xf32>
    tpu.vector_store %arg23[%c34, %c0_37], %61 {strides = array<i32>} : memref<68x17xf32, #tpu.memory_space<vmem>>, vector<17x17xf32>,
    %c0_38 = arith.constant 0 : index
    %c48 = arith.constant 48 : index
    %63 = vector.load %arg22[%c0_38, %c48] : memref<17x192xf32, #tpu.memory_space<vmem>>, vector<17x16xf32>
    %cst_39 = arith.constant 2.500000e-01 : f32
    %64 = vector.broadcast %cst_39 : f32 to vector<17x16xf32>
    %65 = arith.mulf %63, %64 : vector<17x16xf32>
    %c0_40 = arith.constant 0 : index
    %c112 = arith.constant 112 : index
    %66 = vector.load %arg22[%c0_40, %c112] : memref<17x192xf32, #tpu.memory_space<vmem>>, vector<17x16xf32>
    %67 = arith.truncf %65 : vector<17x16xf32> to vector<17x16xbf16>
    %68 = arith.truncf %66 : vector<17x16xf32> to vector<17x16xbf16>
    %cst_41 = arith.constant dense<0.000000e+00> : vector<17x17xf32>
    %69 = tpu.matmul %67, %68, %cst_41 {dimension_numbers = #tpu.dot_dimension_numbers<[1], [1], [0], [0], [0, 0, 1, 0], [], []>} : vector<17x16xbf16>, vector<17x16xbf16>, vector<17x17xf32> -> vector<17x17xf32>
    %c51 = arith.constant 51 : index
    %c0_42 = arith.constant 0 : index
    %70 = vector.load %arg23[%c51, %c0_42] : memref<68x17xf32, #tpu.memory_space<vmem>>, vector<17x17xf32>
    tpu.vector_store %arg23[%c51, %c0_42], %69 {strides = array<i32>} : memref<68x17xf32, #tpu.memory_space<vmem>>, vector<17x17xf32>,
    %c0_43 = arith.constant 0 : index
    %c0_44 = arith.constant 0 : index
    %71 = vector.load %arg23[%c0_43, %c0_44] : memref<68x17xf32, #tpu.memory_space<vmem>>, vector<68x17xf32>
    %cst_45 = arith.constant dense<0xFF800000> : vector<68xf32>
    %72 = vector.multi_reduction <maximumf>, %71, %cst_45 [1] : vector<68x17xf32> to vector<68xf32>
    %73 = vector.shape_cast %72 : vector<68xf32> to vector<68x1xf32>
    %74 = vector.broadcast %73 : vector<68x1xf32> to vector<68x17xf32>
    %75 = arith.subf %71, %74 : vector<68x17xf32>
    %76 = math.exp %75 : vector<68x17xf32>
    %cst_46 = arith.constant dense<0.000000e+00> : vector<68xf32>
    %77 = vector.multi_reduction <add>, %76, %cst_46 [1] : vector<68x17xf32> to vector<68xf32>
    %78 = vector.shape_cast %77 : vector<68xf32> to vector<68x1xf32>
    %79 = tpu.reciprocal %78 {approx = true} : vector<68x1xf32> -> vector<68x1xf32>
    %80 = vector.broadcast %79 : vector<68x1xf32> to vector<68x17xf32>
    %81 = arith.mulf %76, %80 : vector<68x17xf32>
    %c0_47 = arith.constant 0 : index
    %c0_48 = arith.constant 0 : index
    %82 = vector.load %arg23[%c0_47, %c0_48] : memref<68x17xf32, #tpu.memory_space<vmem>>, vector<68x17xf32>
    tpu.vector_store %arg23[%c0_47, %c0_48], %81 {strides = array<i32>} : memref<68x17xf32, #tpu.memory_space<vmem>>, vector<68x17xf32>,
    %c0_49 = arith.constant 0 : index
    %c128 = arith.constant 128 : index
    %83 = vector.load %arg22[%c0_49, %c128] : memref<17x192xf32, #tpu.memory_space<vmem>>, vector<17x16xf32>
    %c0_50 = arith.constant 0 : index
    %c0_51 = arith.constant 0 : index
    %84 = vector.load %arg23[%c0_50, %c0_51] : memref<68x17xf32, #tpu.memory_space<vmem>>, vector<17x17xf32>
    %85 = arith.truncf %84 : vector<17x17xf32> to vector<17x17xbf16>
    %86 = arith.truncf %83 : vector<17x16xf32> to vector<17x16xbf16>
    %cst_52 = arith.constant dense<0.000000e+00> : vector<17x16xf32>
    %87 = tpu.matmul %85, %86, %cst_52 {dimension_numbers = #tpu.dot_dimension_numbers<[1], [0], [0], [1], [0, 0, 1, 1], [], []>} : vector<17x17xbf16>, vector<17x16xbf16>, vector<17x16xf32> -> vector<17x16xf32>
    %c0_53 = arith.constant 0 : index
    %c0_54 = arith.constant 0 : index
    %88 = vector.load %arg24[%c0_53, %c0_54] : memref<17x64xf32, #tpu.memory_space<vmem>>, vector<17x16xf32>
    tpu.vector_store %arg24[%c0_53, %c0_54], %87 {strides = array<i32>} : memref<17x64xf32, #tpu.memory_space<vmem>>, vector<17x16xf32>,
    %c0_55 = arith.constant 0 : index
    %c144 = arith.constant 144 : index
    %89 = vector.load %arg22[%c0_55, %c144] : memref<17x192xf32, #tpu.memory_space<vmem>>, vector<17x16xf32>
    %c17_56 = arith.constant 17 : index
    %c0_57 = arith.constant 0 : index
    %90 = vector.load %arg23[%c17_56, %c0_57] : memref<68x17xf32, #tpu.memory_space<vmem>>, vector<17x17xf32>
    %91 = arith.truncf %90 : vector<17x17xf32> to vector<17x17xbf16>
    %92 = arith.truncf %89 : vector<17x16xf32> to vector<17x16xbf16>
    %cst_58 = arith.constant dense<0.000000e+00> : vector<17x16xf32>
    %93 = tpu.matmul %91, %92, %cst_58 {dimension_numbers = #tpu.dot_dimension_numbers<[1], [0], [0], [1], [0, 0, 1, 1], [], []>} : vector<17x17xbf16>, vector<17x16xbf16>, vector<17x16xf32> -> vector<17x16xf32>
    %c0_59 = arith.constant 0 : index
    %c16_60 = arith.constant 16 : index
    %94 = vector.load %arg24[%c0_59, %c16_60] : memref<17x64xf32, #tpu.memory_space<vmem>>, vector<17x16xf32>
    tpu.vector_store %arg24[%c0_59, %c16_60], %93 {strides = array<i32>} : memref<17x64xf32, #tpu.memory_space<vmem>>, vector<17x16xf32>,
    %c0_61 = arith.constant 0 : index
    %c160 = arith.constant 160 : index
    %95 = vector.load %arg22[%c0_61, %c160] : memref<17x192xf32, #tpu.memory_space<vmem>>, vector<17x16xf32>
    %c34_62 = arith.constant 34 : index
    %c0_63 = arith.constant 0 : index
    %96 = vector.load %arg23[%c34_62, %c0_63] : memref<68x17xf32, #tpu.memory_space<vmem>>, vector<17x17xf32>
    %97 = arith.truncf %96 : vector<17x17xf32> to vector<17x17xbf16>
    %98 = arith.truncf %95 : vector<17x16xf32> to vector<17x16xbf16>
    %cst_64 = arith.constant dense<0.000000e+00> : vector<17x16xf32>
    %99 = tpu.matmul %97, %98, %cst_64 {dimension_numbers = #tpu.dot_dimension_numbers<[1], [0], [0], [1], [0, 0, 1, 1], [], []>} : vector<17x17xbf16>, vector<17x16xbf16>, vector<17x16xf32> -> vector<17x16xf32>
    %c0_65 = arith.constant 0 : index
    %c32_66 = arith.constant 32 : index
    %100 = vector.load %arg24[%c0_65, %c32_66] : memref<17x64xf32, #tpu.memory_space<vmem>>, vector<17x16xf32>
    tpu.vector_store %arg24[%c0_65, %c32_66], %99 {strides = array<i32>} : memref<17x64xf32, #tpu.memory_space<vmem>>, vector<17x16xf32>,
    %c0_67 = arith.constant 0 : index
    %c176 = arith.constant 176 : index
    %101 = vector.load %arg22[%c0_67, %c176] : memref<17x192xf32, #tpu.memory_space<vmem>>, vector<17x16xf32>
    %c51_68 = arith.constant 51 : index
    %c0_69 = arith.constant 0 : index
    %102 = vector.load %arg23[%c51_68, %c0_69] : memref<68x17xf32, #tpu.memory_space<vmem>>, vector<17x17xf32>
    %103 = arith.truncf %102 : vector<17x17xf32> to vector<17x17xbf16>
    %104 = arith.truncf %101 : vector<17x16xf32> to vector<17x16xbf16>
    %cst_70 = arith.constant dense<0.000000e+00> : vector<17x16xf32>
    %105 = tpu.matmul %103, %104, %cst_70 {dimension_numbers = #tpu.dot_dimension_numbers<[1], [0], [0], [1], [0, 0, 1, 1], [], []>} : vector<17x17xbf16>, vector<17x16xbf16>, vector<17x16xf32> -> vector<17x16xf32>
    %c0_71 = arith.constant 0 : index
    %c48_72 = arith.constant 48 : index
    %106 = vector.load %arg24[%c0_71, %c48_72] : memref<17x64xf32, #tpu.memory_space<vmem>>, vector<17x16xf32>
    tpu.vector_store %arg24[%c0_71, %c48_72], %105 {strides = array<i32>} : memref<17x64xf32, #tpu.memory_space<vmem>>, vector<17x16xf32>,
    %c0_73 = arith.constant 0 : index
    %c0_74 = arith.constant 0 : index
    %107 = vector.load %arg24[%c0_73, %c0_74] : memref<17x64xf32, #tpu.memory_space<vmem>>, vector<17x64xf32>
    %108 = arith.truncf %107 : vector<17x64xf32> to vector<17x64xbf16>
    %c0_75 = arith.constant 0 : index
    %c0_76 = arith.constant 0 : index
    %c0_77 = arith.constant 0 : index
    %109 = vector.load %arg10[%c0_75, %c0_76, %c0_77] : memref<1x64x64xbf16, #tpu.memory_space<vmem>>, vector<1x64x64xbf16>
    %110 = vector.shape_cast %109 : vector<1x64x64xbf16> to vector<64x64xbf16>
    %cst_78 = arith.constant dense<0.000000e+00> : vector<17x64xf32>
    %111 = tpu.matmul %108, %110, %cst_78 {dimension_numbers = #tpu.dot_dimension_numbers<[1], [0], [0], [1], [0, 0, 1, 1], [], []>} : vector<17x64xbf16>, vector<64x64xbf16>, vector<17x64xf32> -> vector<17x64xf32>
    %112 = arith.addf %3, %111 : vector<17x64xf32>
    %c0_79 = arith.constant 0 : index
    %c0_80 = arith.constant 0 : index
    %c0_81 = arith.constant 0 : index
    %113 = vector.load %arg11[%c0_79, %c0_80, %c0_81] : memref<1x1x64xf32, #tpu.memory_space<vmem>>, vector<1x1x64xf32>
    %114 = vector.shape_cast %113 : vector<1x1x64xf32> to vector<1x64xf32>
    %115 = vector.broadcast %114 : vector<1x64xf32> to vector<17x64xf32>
    %116 = arith.addf %112, %115 : vector<17x64xf32>
    %c0_82 = arith.constant 0 : index
    %c0_83 = arith.constant 0 : index
    %c0_84 = arith.constant 0 : index
    %117 = vector.load %arg12[%c0_82, %c0_83, %c0_84] : memref<1x1x64xf32, #tpu.memory_space<vmem>>, vector<1x1x64xf32>
    %118 = vector.shape_cast %117 : vector<1x1x64xf32> to vector<1x64xf32>
    %c0_85 = arith.constant 0 : index
    %c0_86 = arith.constant 0 : index
    %c0_87 = arith.constant 0 : index
    %119 = vector.load %arg13[%c0_85, %c0_86, %c0_87] : memref<1x1x64xf32, #tpu.memory_space<vmem>>, vector<1x1x64xf32>
    %120 = vector.shape_cast %119 : vector<1x1x64xf32> to vector<1x64xf32>
    %cst_88 = arith.constant dense<0.000000e+00> : vector<17xf32>
    %121 = vector.multi_reduction <add>, %116, %cst_88 [1] : vector<17x64xf32> to vector<17xf32>
    %122 = vector.shape_cast %121 : vector<17xf32> to vector<17x1xf32>
    %cst_89 = arith.constant 6.400000e+01 : f32
    %123 = vector.broadcast %cst_89 : f32 to vector<17x1xf32>
    %124 = arith.divf %122, %123 : vector<17x1xf32>
    %125 = vector.broadcast %124 : vector<17x1xf32> to vector<17x64xf32>
    %126 = arith.subf %116, %125 : vector<17x64xf32>
    %127 = arith.mulf %126, %126 : vector<17x64xf32>
    %cst_90 = arith.constant dense<0.000000e+00> : vector<17xf32>
    %128 = vector.multi_reduction <add>, %127, %cst_90 [1] : vector<17x64xf32> to vector<17xf32>
    %129 = vector.shape_cast %128 : vector<17xf32> to vector<17x1xf32>
    %cst_91 = arith.constant 6.400000e+01 : f32
    %130 = vector.broadcast %cst_91 : f32 to vector<17x1xf32>
    %131 = arith.divf %129, %130 : vector<17x1xf32>
    %132 = vector.broadcast %124 : vector<17x1xf32> to vector<17x64xf32>
    %133 = arith.subf %116, %132 : vector<17x64xf32>
    %cst_92 = arith.constant 9.99999974E-6 : f32
    %134 = vector.broadcast %cst_92 : f32 to vector<17x1xf32>
    %135 = arith.addf %131, %134 : vector<17x1xf32>
    %136 = math.rsqrt %135 : vector<17x1xf32>
    %137 = vector.broadcast %136 : vector<17x1xf32> to vector<17x64xf32>
    %138 = arith.mulf %133, %137 : vector<17x64xf32>
    %139 = vector.broadcast %118 : vector<1x64xf32> to vector<17x64xf32>
    %140 = arith.mulf %138, %139 : vector<17x64xf32>
    %141 = vector.broadcast %120 : vector<1x64xf32> to vector<17x64xf32>
    %142 = arith.addf %140, %141 : vector<17x64xf32>
    %143 = arith.truncf %142 : vector<17x64xf32> to vector<17x64xbf16>
    %c0_93 = arith.constant 0 : index
    %c0_94 = arith.constant 0 : index
    %c0_95 = arith.constant 0 : index
    %144 = vector.load %arg14[%c0_93, %c0_94, %c0_95] : memref<1x64x256xbf16, #tpu.memory_space<vmem>>, vector<1x64x256xbf16>
    %145 = vector.shape_cast %144 : vector<1x64x256xbf16> to vector<64x256xbf16>
    %cst_96 = arith.constant dense<0.000000e+00> : vector<17x256xf32>
    %146 = tpu.matmul %143, %145, %cst_96 {dimension_numbers = #tpu.dot_dimension_numbers<[1], [0], [0], [1], [0, 0, 1, 1], [], []>} : vector<17x64xbf16>, vector<64x256xbf16>, vector<17x256xf32> -> vector<17x256xf32>
    %c0_97 = arith.constant 0 : index
    %c0_98 = arith.constant 0 : index
    %c0_99 = arith.constant 0 : index
    %147 = vector.load %arg15[%c0_97, %c0_98, %c0_99] : memref<1x1x256xf32, #tpu.memory_space<vmem>>, vector<1x1x256xf32>
    %148 = vector.shape_cast %147 : vector<1x1x256xf32> to vector<1x256xf32>
    %149 = vector.broadcast %148 : vector<1x256xf32> to vector<17x256xf32>
    %150 = arith.addf %146, %149 : vector<17x256xf32>
    %cst_100 = arith.constant 1.702000e+00 : f32
    %151 = vector.broadcast %cst_100 : f32 to vector<17x256xf32>
    %152 = arith.mulf %151, %150 : vector<17x256xf32>
    %153 = arith.negf %152 : vector<17x256xf32>
    %154 = math.exp %153 : vector<17x256xf32>
    %cst_101 = arith.constant 1.000000e+00 : f32
    %155 = vector.broadcast %cst_101 : f32 to vector<17x256xf32>
    %156 = arith.addf %155, %154 : vector<17x256xf32>
    %157 = arith.divf %155, %156 : vector<17x256xf32>
    %158 = arith.mulf %150, %157 : vector<17x256xf32>
    %159 = arith.truncf %158 : vector<17x256xf32> to vector<17x256xbf16>
    %c0_102 = arith.constant 0 : index
    %c0_103 = arith.constant 0 : index
    %c0_104 = arith.constant 0 : index
    %160 = vector.load %arg16[%c0_102, %c0_103, %c0_104] : memref<1x256x64xbf16, #tpu.memory_space<vmem>>, vector<1x256x64xbf16>
    %161 = vector.shape_cast %160 : vector<1x256x64xbf16> to vector<256x64xbf16>
    %cst_105 = arith.constant dense<0.000000e+00> : vector<17x64xf32>
    %162 = tpu.matmul %159, %161, %cst_105 {dimension_numbers = #tpu.dot_dimension_numbers<[1], [0], [0], [1], [0, 0, 1, 1], [], []>} : vector<17x256xbf16>, vector<256x64xbf16>, vector<17x64xf32> -> vector<17x64xf32>
    %163 = arith.addf %116, %162 : vector<17x64xf32>
    %c0_106 = arith.constant 0 : index
    %c0_107 = arith.constant 0 : index
    %c0_108 = arith.constant 0 : index
    %164 = vector.load %arg17[%c0_106, %c0_107, %c0_108] : memref<1x1x64xf32, #tpu.memory_space<vmem>>, vector<1x1x64xf32>
    %165 = vector.shape_cast %164 : vector<1x1x64xf32> to vector<1x64xf32>
    %166 = vector.broadcast %165 : vector<1x64xf32> to vector<17x64xf32>
    %167 = arith.addf %163, %166 : vector<17x64xf32>
    %c0_109 = arith.constant 0 : index
    %c0_110 = arith.constant 0 : index
    %168 = vector.load %arg25[%c0_109, %c0_110] : memref<17x64xf32, #tpu.memory_space<vmem>>, vector<17x64xf32>
    tpu.vector_store %arg25[%c0_109, %c0_110], %167 {strides = array<i32>} : memref<17x64xf32, #tpu.memory_space<vmem>>, vector<17x64xf32>,
    %c1_i32 = arith.constant 1 : i32
    %169 = arith.cmpi eq, %arg1, %c1_i32 : i32
    %170 = arith.extui %169 : i1 to i32
    %c0_i32_111 = arith.constant 0 : i32
    %171 = arith.cmpi ne, %170, %c0_i32_111 : i32
    scf.if %171 {
      %172 = arith.index_cast %arg0 : i32 to index
      %173 = memref.load %arg2[%172] : memref<2xi32, #tpu.memory_space<smem>>
      %174 = arith.index_cast %173 : i32 to index
      %c0_112 = arith.constant 0 : index
      %175 = vector.load %arg25[%174, %c0_112] : memref<17x64xf32, #tpu.memory_space<vmem>>, vector<1x64xf32>
      %c0_113 = arith.constant 0 : index
      %c0_114 = arith.constant 0 : index
      %176 = vector.load %arg18[%c0_113, %c0_114] : memref<1x64xf32, #tpu.memory_space<vmem>>, vector<1x64xf32>
      %c0_115 = arith.constant 0 : index
      %c0_116 = arith.constant 0 : index
      %177 = vector.load %arg19[%c0_115, %c0_116] : memref<1x64xf32, #tpu.memory_space<vmem>>, vector<1x64xf32>
      %cst_117 = arith.constant dense<0.000000e+00> : vector<1xf32>
      %178 = vector.multi_reduction <add>, %175, %cst_117 [1] : vector<1x64xf32> to vector<1xf32>
      %179 = vector.shape_cast %178 : vector<1xf32> to vector<1x1xf32>
      %cst_118 = arith.constant 6.400000e+01 : f32
      %180 = vector.broadcast %cst_118 : f32 to vector<1x1xf32>
      %181 = arith.divf %179, %180 : vector<1x1xf32>
      %182 = vector.broadcast %181 : vector<1x1xf32> to vector<1x64xf32>
      %183 = arith.subf %175, %182 : vector<1x64xf32>
      %184 = arith.mulf %183, %183 : vector<1x64xf32>
      %cst_119 = arith.constant dense<0.000000e+00> : vector<1xf32>
      %185 = vector.multi_reduction <add>, %184, %cst_119 [1] : vector<1x64xf32> to vector<1xf32>
      %186 = vector.shape_cast %185 : vector<1xf32> to vector<1x1xf32>
      %cst_120 = arith.constant 6.400000e+01 : f32
      %187 = vector.broadcast %cst_120 : f32 to vector<1x1xf32>
      %188 = arith.divf %186, %187 : vector<1x1xf32>
      %189 = vector.broadcast %181 : vector<1x1xf32> to vector<1x64xf32>
      %190 = arith.subf %175, %189 : vector<1x64xf32>
      %cst_121 = arith.constant 9.99999974E-6 : f32
      %191 = vector.broadcast %cst_121 : f32 to vector<1x1xf32>
      %192 = arith.addf %188, %191 : vector<1x1xf32>
      %193 = math.rsqrt %192 : vector<1x1xf32>
      %194 = vector.broadcast %193 : vector<1x1xf32> to vector<1x64xf32>
      %195 = arith.mulf %190, %194 : vector<1x64xf32>
      %196 = arith.mulf %195, %176 : vector<1x64xf32>
      %197 = arith.addf %196, %177 : vector<1x64xf32>
      %198 = arith.truncf %197 : vector<1x64xf32> to vector<1x64xbf16>
      %c0_122 = arith.constant 0 : index
      %c0_123 = arith.constant 0 : index
      %199 = vector.load %arg20[%c0_122, %c0_123] : memref<64x128xbf16, #tpu.memory_space<vmem>>, vector<64x128xbf16>
      %cst_124 = arith.constant dense<0.000000e+00> : vector<1x128xf32>
      %200 = tpu.matmul %198, %199, %cst_124 {dimension_numbers = #tpu.dot_dimension_numbers<[1], [0], [0], [1], [0, 0, 1, 1], [], []>} : vector<1x64xbf16>, vector<64x128xbf16>, vector<1x128xf32> -> vector<1x128xf32>
      %201 = arith.mulf %200, %200 : vector<1x128xf32>
      %cst_125 = arith.constant dense<0.000000e+00> : vector<1xf32>
      %202 = vector.multi_reduction <add>, %201, %cst_125 [1] : vector<1x128xf32> to vector<1xf32>
      %203 = vector.shape_cast %202 : vector<1xf32> to vector<1x1xf32>
      %cst_126 = arith.constant 1.000000e-24 : f32
      %204 = vector.broadcast %cst_126 : f32 to vector<1x1xf32>
      %205 = arith.maximumf %203, %204 : vector<1x1xf32>
      %206 = math.rsqrt %205 : vector<1x1xf32>
      %207 = vector.broadcast %206 : vector<1x1xf32> to vector<1x128xf32>
      %208 = arith.mulf %200, %207 : vector<1x128xf32>
      %209 = vector.shape_cast %208 : vector<1x128xf32> to vector<1x128xf32>
      %210 = vector.broadcast %209 : vector<1x128xf32> to vector<8x128xf32>
      %c0_127 = arith.constant 0 : index
      %c0_128 = arith.constant 0 : index
      %c0_129 = arith.constant 0 : index
      %211 = vector.load %arg21[%c0_127, %c0_128, %c0_129] : memref<1x8x128xf32, #tpu.memory_space<vmem>>, vector<1x8x128xf32>
      %212 = vector.shape_cast %211 : vector<1x8x128xf32> to vector<8x128xf32>
      %213 = vector.shape_cast %210 : vector<8x128xf32> to vector<1x8x128xf32>
      tpu.vector_store %arg21[%c0_127, %c0_128, %c0_129], %213 {strides = array<i32>} : memref<1x8x128xf32, #tpu.memory_space<vmem>>, vector<1x8x128xf32>,
    } else {
    }
    return
  }
  func.func @transform_0(%arg0: i32, %arg1: i32, %arg2: memref<2xi32, #tpu.memory_space<smem>>) -> (i32, i32, i32) {
    %c0_i32 = arith.constant 0 : i32
    %c0_i32_0 = arith.constant 0 : i32
    %c0_i32_1 = arith.constant 0 : i32
    return %arg0, %c0_i32, %c0_i32_0 : i32, i32, i32
  }
  func.func @transform_1(%arg0: i32, %arg1: i32, %arg2: memref<2xi32, #tpu.memory_space<smem>>) -> (i32, i32) {
    %c0_i32 = arith.constant 0 : i32
    %c0_i32_0 = arith.constant 0 : i32
    %c0_i32_1 = arith.constant 0 : i32
    return %c0_i32, %c0_i32_0 : i32, i32
  }
  func.func @transform_2(%arg0: i32, %arg1: i32, %arg2: memref<2xi32, #tpu.memory_space<smem>>) -> (i32, i32) {
    %c0_i32 = arith.constant 0 : i32
    %c0_i32_0 = arith.constant 0 : i32
    %c0_i32_1 = arith.constant 0 : i32
    return %c0_i32, %c0_i32_0 : i32, i32
  }
  func.func @transform_3(%arg0: i32, %arg1: i32, %arg2: memref<2xi32, #tpu.memory_space<smem>>) -> (i32, i32, i32) {
    %c0_i32 = arith.constant 0 : i32
    %c0_i32_0 = arith.constant 0 : i32
    %c0_i32_1 = arith.constant 0 : i32
    return %arg1, %c0_i32, %c0_i32_0 : i32, i32, i32
  }
  func.func @transform_4(%arg0: i32, %arg1: i32, %arg2: memref<2xi32, #tpu.memory_space<smem>>) -> (i32, i32, i32) {
    %c0_i32 = arith.constant 0 : i32
    %c0_i32_0 = arith.constant 0 : i32
    %c0_i32_1 = arith.constant 0 : i32
    return %arg1, %c0_i32, %c0_i32_0 : i32, i32, i32
  }
  func.func @transform_5(%arg0: i32, %arg1: i32, %arg2: memref<2xi32, #tpu.memory_space<smem>>) -> (i32, i32, i32) {
    %c0_i32 = arith.constant 0 : i32
    %c0_i32_0 = arith.constant 0 : i32
    %c0_i32_1 = arith.constant 0 : i32
    return %arg1, %c0_i32, %c0_i32_0 : i32, i32, i32
  }
  func.func @transform_6(%arg0: i32, %arg1: i32, %arg2: memref<2xi32, #tpu.memory_space<smem>>) -> (i32, i32, i32) {
    %c0_i32 = arith.constant 0 : i32
    %c0_i32_0 = arith.constant 0 : i32
    %c0_i32_1 = arith.constant 0 : i32
    return %arg1, %c0_i32, %c0_i32_0 : i32, i32, i32
  }
  func.func @transform_7(%arg0: i32, %arg1: i32, %arg2: memref<2xi32, #tpu.memory_space<smem>>) -> (i32, i32, i32) {
    %c0_i32 = arith.constant 0 : i32
    %c0_i32_0 = arith.constant 0 : i32
    %c0_i32_1 = arith.constant 0 : i32
    return %arg1, %c0_i32, %c0_i32_0 : i32, i32, i32
  }
  func.func @transform_8(%arg0: i32, %arg1: i32, %arg2: memref<2xi32, #tpu.memory_space<smem>>) -> (i32, i32, i32) {
    %c0_i32 = arith.constant 0 : i32
    %c0_i32_0 = arith.constant 0 : i32
    %c0_i32_1 = arith.constant 0 : i32
    return %arg1, %c0_i32, %c0_i32_0 : i32, i32, i32
  }
  func.func @transform_9(%arg0: i32, %arg1: i32, %arg2: memref<2xi32, #tpu.memory_space<smem>>) -> (i32, i32, i32) {
    %c0_i32 = arith.constant 0 : i32
    %c0_i32_0 = arith.constant 0 : i32
    %c0_i32_1 = arith.constant 0 : i32
    return %arg1, %c0_i32, %c0_i32_0 : i32, i32, i32
  }
  func.func @transform_10(%arg0: i32, %arg1: i32, %arg2: memref<2xi32, #tpu.memory_space<smem>>) -> (i32, i32, i32) {
    %c0_i32 = arith.constant 0 : i32
    %c0_i32_0 = arith.constant 0 : i32
    %c0_i32_1 = arith.constant 0 : i32
    return %arg1, %c0_i32, %c0_i32_0 : i32, i32, i32
  }
  func.func @transform_11(%arg0: i32, %arg1: i32, %arg2: memref<2xi32, #tpu.memory_space<smem>>) -> (i32, i32, i32) {
    %c0_i32 = arith.constant 0 : i32
    %c0_i32_0 = arith.constant 0 : i32
    %c0_i32_1 = arith.constant 0 : i32
    return %arg1, %c0_i32, %c0_i32_0 : i32, i32, i32
  }
  func.func @transform_12(%arg0: i32, %arg1: i32, %arg2: memref<2xi32, #tpu.memory_space<smem>>) -> (i32, i32, i32) {
    %c0_i32 = arith.constant 0 : i32
    %c0_i32_0 = arith.constant 0 : i32
    %c0_i32_1 = arith.constant 0 : i32
    return %arg1, %c0_i32, %c0_i32_0 : i32, i32, i32
  }
  func.func @transform_13(%arg0: i32, %arg1: i32, %arg2: memref<2xi32, #tpu.memory_space<smem>>) -> (i32, i32, i32) {
    %c0_i32 = arith.constant 0 : i32
    %c0_i32_0 = arith.constant 0 : i32
    %c0_i32_1 = arith.constant 0 : i32
    return %arg1, %c0_i32, %c0_i32_0 : i32, i32, i32
  }
  func.func @transform_14(%arg0: i32, %arg1: i32, %arg2: memref<2xi32, #tpu.memory_space<smem>>) -> (i32, i32, i32) {
    %c0_i32 = arith.constant 0 : i32
    %c0_i32_0 = arith.constant 0 : i32
    %c0_i32_1 = arith.constant 0 : i32
    return %arg1, %c0_i32, %c0_i32_0 : i32, i32, i32
  }
  func.func @transform_15(%arg0: i32, %arg1: i32, %arg2: memref<2xi32, #tpu.memory_space<smem>>) -> (i32, i32) {
    %c0_i32 = arith.constant 0 : i32
    %c0_i32_0 = arith.constant 0 : i32
    %c0_i32_1 = arith.constant 0 : i32
    return %c0_i32, %c0_i32_0 : i32, i32
  }
  func.func @transform_16(%arg0: i32, %arg1: i32, %arg2: memref<2xi32, #tpu.memory_space<smem>>) -> (i32, i32) {
    %c0_i32 = arith.constant 0 : i32
    %c0_i32_0 = arith.constant 0 : i32
    %c0_i32_1 = arith.constant 0 : i32
    return %c0_i32, %c0_i32_0 : i32, i32
  }
  func.func @transform_17(%arg0: i32, %arg1: i32, %arg2: memref<2xi32, #tpu.memory_space<smem>>) -> (i32, i32) {
    %c0_i32 = arith.constant 0 : i32
    %c0_i32_0 = arith.constant 0 : i32
    %c0_i32_1 = arith.constant 0 : i32
    return %c0_i32, %c0_i32_0 : i32, i32
  }
  func.func @transform_18(%arg0: i32, %arg1: i32, %arg2: memref<2xi32, #tpu.memory_space<smem>>) -> (i32, i32, i32) {
    %c0_i32 = arith.constant 0 : i32
    %c0_i32_0 = arith.constant 0 : i32
    %c0_i32_1 = arith.constant 0 : i32
    return %arg0, %c0_i32, %c0_i32_0 : i32, i32, i32
  }
}

module attributes {stable_mosaic.version = 11 : i64} {
  func.func @_encoder_kernel(%arg0: i32, %arg1: i32, %arg2: memref<4xi32, #tpu.memory_space<smem>>, %arg3: memref<1x8x64xf32, #tpu.memory_space<vmem>>, %arg4: memref<1x1x64xf32, #tpu.memory_space<vmem>>, %arg5: memref<1x1x64xf32, #tpu.memory_space<vmem>>, %arg6: memref<1x64x192xbf16, #tpu.memory_space<vmem>>, %arg7: memref<1x1x192xf32, #tpu.memory_space<vmem>>, %arg8: memref<1x64x64xbf16, #tpu.memory_space<vmem>>, %arg9: memref<1x1x64xf32, #tpu.memory_space<vmem>>, %arg10: memref<1x1x64xf32, #tpu.memory_space<vmem>>, %arg11: memref<1x1x64xf32, #tpu.memory_space<vmem>>, %arg12: memref<1x64x256xbf16, #tpu.memory_space<vmem>>, %arg13: memref<1x1x256xf32, #tpu.memory_space<vmem>>, %arg14: memref<1x256x64xbf16, #tpu.memory_space<vmem>>, %arg15: memref<1x1x64xf32, #tpu.memory_space<vmem>>, %arg16: memref<1x64xf32, #tpu.memory_space<vmem>>, %arg17: memref<1x64xf32, #tpu.memory_space<vmem>>, %arg18: memref<64x128xbf16, #tpu.memory_space<vmem>>, %arg19: memref<1x8x128xf32, #tpu.memory_space<vmem>>, %arg20: memref<8x192xf32, #tpu.memory_space<vmem>>, %arg21: memref<32x8xf32, #tpu.memory_space<vmem>>, %arg22: memref<8x64xf32, #tpu.memory_space<vmem>>, %arg23: memref<8x64xf32, #tpu.memory_space<vmem>>) attributes {dimension_semantics = [#tpu.dimension_semantics<parallel>, #tpu.dimension_semantics<arbitrary>], iteration_bounds = array<i64: 4, 2>, scalar_prefetch = 1 : i64, scratch_operands = 4 : i64, tpu.core_type = #tpu.core_type<tc>, window_params = [{transform_indices = @transform_0, window_bounds = array<i64: 1, 8, 64>}, {transform_indices = @transform_1, window_bounds = array<i64: 1, 1, 64>}, {transform_indices = @transform_2, window_bounds = array<i64: 1, 1, 64>}, {transform_indices = @transform_3, window_bounds = array<i64: 1, 64, 192>}, {transform_indices = @transform_4, window_bounds = array<i64: 1, 1, 192>}, {transform_indices = @transform_5, window_bounds = array<i64: 1, 64, 64>}, {transform_indices = @transform_6, window_bounds = array<i64: 1, 1, 64>}, {transform_indices = @transform_7, window_bounds = array<i64: 1, 1, 64>}, {transform_indices = @transform_8, window_bounds = array<i64: 1, 1, 64>}, {transform_indices = @transform_9, window_bounds = array<i64: 1, 64, 256>}, {transform_indices = @transform_10, window_bounds = array<i64: 1, 1, 256>}, {transform_indices = @transform_11, window_bounds = array<i64: 1, 256, 64>}, {transform_indices = @transform_12, window_bounds = array<i64: 1, 1, 64>}, {pipeline_mode = #tpu.pipeline_mode<synchronous>, transform_indices = @transform_13, window_bounds = array<i64: 1, 64>}, {pipeline_mode = #tpu.pipeline_mode<synchronous>, transform_indices = @transform_14, window_bounds = array<i64: 1, 64>}, {pipeline_mode = #tpu.pipeline_mode<synchronous>, transform_indices = @transform_15, window_bounds = array<i64: 64, 128>}, {transform_indices = @transform_16, window_bounds = array<i64: 1, 8, 128>}]} {
    %c0_i32 = arith.constant 0 : i32
    %0 = arith.cmpi eq, %arg1, %c0_i32 : i32
    %1 = arith.extui %0 : i1 to i32
    %c0_i32_0 = arith.constant 0 : i32
    %2 = arith.cmpi ne, %1, %c0_i32_0 : i32
    scf.if %2 {
      %c0_115 = arith.constant 0 : index
      %c0_116 = arith.constant 0 : index
      %c0_117 = arith.constant 0 : index
      %182 = vector.load %arg3[%c0_115, %c0_116, %c0_117] : memref<1x8x64xf32, #tpu.memory_space<vmem>>, vector<1x8x64xf32>
      %183 = vector.shape_cast %182 : vector<1x8x64xf32> to vector<8x64xf32>
      %c0_118 = arith.constant 0 : index
      %c0_119 = arith.constant 0 : index
      %184 = vector.load %arg23[%c0_118, %c0_119] : memref<8x64xf32, #tpu.memory_space<vmem>>, vector<8x64xf32>
      tpu.vector_store %arg23[%c0_118, %c0_119], %183 {strides = array<i32>} : memref<8x64xf32, #tpu.memory_space<vmem>>, vector<8x64xf32>,
    } else {
    }
    %c0 = arith.constant 0 : index
    %c0_1 = arith.constant 0 : index
    %3 = vector.load %arg23[%c0, %c0_1] : memref<8x64xf32, #tpu.memory_space<vmem>>, vector<8x64xf32>
    %c0_2 = arith.constant 0 : index
    %c0_3 = arith.constant 0 : index
    %c0_4 = arith.constant 0 : index
    %4 = vector.load %arg4[%c0_2, %c0_3, %c0_4] : memref<1x1x64xf32, #tpu.memory_space<vmem>>, vector<1x1x64xf32>
    %5 = vector.shape_cast %4 : vector<1x1x64xf32> to vector<1x64xf32>
    %c0_5 = arith.constant 0 : index
    %c0_6 = arith.constant 0 : index
    %c0_7 = arith.constant 0 : index
    %6 = vector.load %arg5[%c0_5, %c0_6, %c0_7] : memref<1x1x64xf32, #tpu.memory_space<vmem>>, vector<1x1x64xf32>
    %7 = vector.shape_cast %6 : vector<1x1x64xf32> to vector<1x64xf32>
    %cst = arith.constant dense<0.000000e+00> : vector<8xf32>
    %8 = vector.multi_reduction <add>, %3, %cst [1] : vector<8x64xf32> to vector<8xf32>
    %9 = vector.shape_cast %8 : vector<8xf32> to vector<8x1xf32>
    %cst_8 = arith.constant 6.400000e+01 : f32
    %10 = vector.broadcast %cst_8 : f32 to vector<8x1xf32>
    %11 = arith.divf %9, %10 : vector<8x1xf32>
    %12 = vector.broadcast %11 : vector<8x1xf32> to vector<8x64xf32>
    %13 = arith.subf %3, %12 : vector<8x64xf32>
    %14 = arith.mulf %13, %13 : vector<8x64xf32>
    %cst_9 = arith.constant dense<0.000000e+00> : vector<8xf32>
    %15 = vector.multi_reduction <add>, %14, %cst_9 [1] : vector<8x64xf32> to vector<8xf32>
    %16 = vector.shape_cast %15 : vector<8xf32> to vector<8x1xf32>
    %cst_10 = arith.constant 6.400000e+01 : f32
    %17 = vector.broadcast %cst_10 : f32 to vector<8x1xf32>
    %18 = arith.divf %16, %17 : vector<8x1xf32>
    %19 = vector.broadcast %11 : vector<8x1xf32> to vector<8x64xf32>
    %20 = arith.subf %3, %19 : vector<8x64xf32>
    %cst_11 = arith.constant 9.99999974E-6 : f32
    %21 = vector.broadcast %cst_11 : f32 to vector<8x1xf32>
    %22 = arith.addf %18, %21 : vector<8x1xf32>
    %23 = math.rsqrt %22 : vector<8x1xf32>
    %24 = vector.broadcast %23 : vector<8x1xf32> to vector<8x64xf32>
    %25 = arith.mulf %20, %24 : vector<8x64xf32>
    %26 = vector.broadcast %5 : vector<1x64xf32> to vector<8x64xf32>
    %27 = arith.mulf %25, %26 : vector<8x64xf32>
    %28 = vector.broadcast %7 : vector<1x64xf32> to vector<8x64xf32>
    %29 = arith.addf %27, %28 : vector<8x64xf32>
    %30 = arith.truncf %29 : vector<8x64xf32> to vector<8x64xbf16>
    %c0_12 = arith.constant 0 : index
    %c0_13 = arith.constant 0 : index
    %c0_14 = arith.constant 0 : index
    %31 = vector.load %arg6[%c0_12, %c0_13, %c0_14] : memref<1x64x192xbf16, #tpu.memory_space<vmem>>, vector<1x64x192xbf16>
    %32 = vector.shape_cast %31 : vector<1x64x192xbf16> to vector<64x192xbf16>
    %cst_15 = arith.constant dense<0.000000e+00> : vector<8x192xf32>
    %33 = tpu.matmul %30, %32, %cst_15 {dimension_numbers = #tpu.dot_dimension_numbers<[1], [0], [0], [1], [0, 0, 1, 1], [], []>} : vector<8x64xbf16>, vector<64x192xbf16>, vector<8x192xf32> -> vector<8x192xf32>
    %c0_16 = arith.constant 0 : index
    %c0_17 = arith.constant 0 : index
    %c0_18 = arith.constant 0 : index
    %34 = vector.load %arg7[%c0_16, %c0_17, %c0_18] : memref<1x1x192xf32, #tpu.memory_space<vmem>>, vector<1x1x192xf32>
    %35 = vector.shape_cast %34 : vector<1x1x192xf32> to vector<1x192xf32>
    %36 = vector.broadcast %35 : vector<1x192xf32> to vector<8x192xf32>
    %37 = arith.addf %33, %36 : vector<8x192xf32>
    %c0_19 = arith.constant 0 : index
    %c0_20 = arith.constant 0 : index
    %38 = vector.load %arg20[%c0_19, %c0_20] : memref<8x192xf32, #tpu.memory_space<vmem>>, vector<8x192xf32>
    tpu.vector_store %arg20[%c0_19, %c0_20], %37 {strides = array<i32>} : memref<8x192xf32, #tpu.memory_space<vmem>>, vector<8x192xf32>,
    %39 = tpu.iota {dimensions = array<i32: 0>} : vector<8x8xi32>
    %40 = tpu.iota {dimensions = array<i32: 1>} : vector<8x8xi32>
    %41 = arith.cmpi sle, %40, %39 : vector<8x8xi32>
    %cst_21 = arith.constant 0.000000e+00 : f32
    %cst_22 = arith.constant -1.000000e+30 : f32
    %42 = vector.broadcast %cst_21 : f32 to vector<8x8xf32>
    %43 = vector.broadcast %cst_22 : f32 to vector<8x8xf32>
    %44 = arith.select %41, %42, %43 : vector<8x8xi1>, vector<8x8xf32>
    %c0_23 = arith.constant 0 : index
    %c0_24 = arith.constant 0 : index
    %45 = vector.load %arg20[%c0_23, %c0_24] : memref<8x192xf32, #tpu.memory_space<vmem>>, vector<8x16xf32>
    %cst_25 = arith.constant 2.500000e-01 : f32
    %46 = vector.broadcast %cst_25 : f32 to vector<8x16xf32>
    %47 = arith.mulf %45, %46 : vector<8x16xf32>
    %c0_26 = arith.constant 0 : index
    %c64 = arith.constant 64 : index
    %48 = vector.load %arg20[%c0_26, %c64] : memref<8x192xf32, #tpu.memory_space<vmem>>, vector<8x16xf32>
    %49 = arith.truncf %47 : vector<8x16xf32> to vector<8x16xbf16>
    %50 = arith.truncf %48 : vector<8x16xf32> to vector<8x16xbf16>
    %cst_27 = arith.constant dense<0.000000e+00> : vector<8x8xf32>
    %51 = tpu.matmul %49, %50, %cst_27 {dimension_numbers = #tpu.dot_dimension_numbers<[1], [1], [0], [0], [0, 0, 1, 0], [], []>} : vector<8x16xbf16>, vector<8x16xbf16>, vector<8x8xf32> -> vector<8x8xf32>
    %52 = arith.addf %51, %44 : vector<8x8xf32>
    %c0_28 = arith.constant 0 : index
    %c0_29 = arith.constant 0 : index
    %53 = vector.load %arg21[%c0_28, %c0_29] : memref<32x8xf32, #tpu.memory_space<vmem>>, vector<8x8xf32>
    tpu.vector_store %arg21[%c0_28, %c0_29], %52 {strides = array<i32>} : memref<32x8xf32, #tpu.memory_space<vmem>>, vector<8x8xf32>,
    %c0_30 = arith.constant 0 : index
    %c16 = arith.constant 16 : index
    %54 = vector.load %arg20[%c0_30, %c16] : memref<8x192xf32, #tpu.memory_space<vmem>>, vector<8x16xf32>
    %cst_31 = arith.constant 2.500000e-01 : f32
    %55 = vector.broadcast %cst_31 : f32 to vector<8x16xf32>
    %56 = arith.mulf %54, %55 : vector<8x16xf32>
    %c0_32 = arith.constant 0 : index
    %c80 = arith.constant 80 : index
    %57 = vector.load %arg20[%c0_32, %c80] : memref<8x192xf32, #tpu.memory_space<vmem>>, vector<8x16xf32>
    %58 = arith.truncf %56 : vector<8x16xf32> to vector<8x16xbf16>
    %59 = arith.truncf %57 : vector<8x16xf32> to vector<8x16xbf16>
    %cst_33 = arith.constant dense<0.000000e+00> : vector<8x8xf32>
    %60 = tpu.matmul %58, %59, %cst_33 {dimension_numbers = #tpu.dot_dimension_numbers<[1], [1], [0], [0], [0, 0, 1, 0], [], []>} : vector<8x16xbf16>, vector<8x16xbf16>, vector<8x8xf32> -> vector<8x8xf32>
    %61 = arith.addf %60, %44 : vector<8x8xf32>
    %c8 = arith.constant 8 : index
    %c0_34 = arith.constant 0 : index
    %62 = vector.load %arg21[%c8, %c0_34] : memref<32x8xf32, #tpu.memory_space<vmem>>, vector<8x8xf32>
    tpu.vector_store %arg21[%c8, %c0_34], %61 {strides = array<i32>} : memref<32x8xf32, #tpu.memory_space<vmem>>, vector<8x8xf32>,
    %c0_35 = arith.constant 0 : index
    %c32 = arith.constant 32 : index
    %63 = vector.load %arg20[%c0_35, %c32] : memref<8x192xf32, #tpu.memory_space<vmem>>, vector<8x16xf32>
    %cst_36 = arith.constant 2.500000e-01 : f32
    %64 = vector.broadcast %cst_36 : f32 to vector<8x16xf32>
    %65 = arith.mulf %63, %64 : vector<8x16xf32>
    %c0_37 = arith.constant 0 : index
    %c96 = arith.constant 96 : index
    %66 = vector.load %arg20[%c0_37, %c96] : memref<8x192xf32, #tpu.memory_space<vmem>>, vector<8x16xf32>
    %67 = arith.truncf %65 : vector<8x16xf32> to vector<8x16xbf16>
    %68 = arith.truncf %66 : vector<8x16xf32> to vector<8x16xbf16>
    %cst_38 = arith.constant dense<0.000000e+00> : vector<8x8xf32>
    %69 = tpu.matmul %67, %68, %cst_38 {dimension_numbers = #tpu.dot_dimension_numbers<[1], [1], [0], [0], [0, 0, 1, 0], [], []>} : vector<8x16xbf16>, vector<8x16xbf16>, vector<8x8xf32> -> vector<8x8xf32>
    %70 = arith.addf %69, %44 : vector<8x8xf32>
    %c16_39 = arith.constant 16 : index
    %c0_40 = arith.constant 0 : index
    %71 = vector.load %arg21[%c16_39, %c0_40] : memref<32x8xf32, #tpu.memory_space<vmem>>, vector<8x8xf32>
    tpu.vector_store %arg21[%c16_39, %c0_40], %70 {strides = array<i32>} : memref<32x8xf32, #tpu.memory_space<vmem>>, vector<8x8xf32>,
    %c0_41 = arith.constant 0 : index
    %c48 = arith.constant 48 : index
    %72 = vector.load %arg20[%c0_41, %c48] : memref<8x192xf32, #tpu.memory_space<vmem>>, vector<8x16xf32>
    %cst_42 = arith.constant 2.500000e-01 : f32
    %73 = vector.broadcast %cst_42 : f32 to vector<8x16xf32>
    %74 = arith.mulf %72, %73 : vector<8x16xf32>
    %c0_43 = arith.constant 0 : index
    %c112 = arith.constant 112 : index
    %75 = vector.load %arg20[%c0_43, %c112] : memref<8x192xf32, #tpu.memory_space<vmem>>, vector<8x16xf32>
    %76 = arith.truncf %74 : vector<8x16xf32> to vector<8x16xbf16>
    %77 = arith.truncf %75 : vector<8x16xf32> to vector<8x16xbf16>
    %cst_44 = arith.constant dense<0.000000e+00> : vector<8x8xf32>
    %78 = tpu.matmul %76, %77, %cst_44 {dimension_numbers = #tpu.dot_dimension_numbers<[1], [1], [0], [0], [0, 0, 1, 0], [], []>} : vector<8x16xbf16>, vector<8x16xbf16>, vector<8x8xf32> -> vector<8x8xf32>
    %79 = arith.addf %78, %44 : vector<8x8xf32>
    %c24 = arith.constant 24 : index
    %c0_45 = arith.constant 0 : index
    %80 = vector.load %arg21[%c24, %c0_45] : memref<32x8xf32, #tpu.memory_space<vmem>>, vector<8x8xf32>
    tpu.vector_store %arg21[%c24, %c0_45], %79 {strides = array<i32>} : memref<32x8xf32, #tpu.memory_space<vmem>>, vector<8x8xf32>,
    %c0_46 = arith.constant 0 : index
    %c0_47 = arith.constant 0 : index
    %81 = vector.load %arg21[%c0_46, %c0_47] : memref<32x8xf32, #tpu.memory_space<vmem>>, vector<32x8xf32>
    %cst_48 = arith.constant dense<0xFF800000> : vector<32xf32>
    %82 = vector.multi_reduction <maximumf>, %81, %cst_48 [1] : vector<32x8xf32> to vector<32xf32>
    %83 = vector.shape_cast %82 : vector<32xf32> to vector<32x1xf32>
    %84 = vector.broadcast %83 : vector<32x1xf32> to vector<32x8xf32>
    %85 = arith.subf %81, %84 : vector<32x8xf32>
    %86 = math.exp %85 : vector<32x8xf32>
    %cst_49 = arith.constant dense<0.000000e+00> : vector<32xf32>
    %87 = vector.multi_reduction <add>, %86, %cst_49 [1] : vector<32x8xf32> to vector<32xf32>
    %88 = vector.shape_cast %87 : vector<32xf32> to vector<32x1xf32>
    %89 = tpu.reciprocal %88 {approx = true} : vector<32x1xf32> -> vector<32x1xf32>
    %90 = vector.broadcast %89 : vector<32x1xf32> to vector<32x8xf32>
    %91 = arith.mulf %86, %90 : vector<32x8xf32>
    %c0_50 = arith.constant 0 : index
    %c0_51 = arith.constant 0 : index
    %92 = vector.load %arg21[%c0_50, %c0_51] : memref<32x8xf32, #tpu.memory_space<vmem>>, vector<32x8xf32>
    tpu.vector_store %arg21[%c0_50, %c0_51], %91 {strides = array<i32>} : memref<32x8xf32, #tpu.memory_space<vmem>>, vector<32x8xf32>,
    %c0_52 = arith.constant 0 : index
    %c128 = arith.constant 128 : index
    %93 = vector.load %arg20[%c0_52, %c128] : memref<8x192xf32, #tpu.memory_space<vmem>>, vector<8x16xf32>
    %c0_53 = arith.constant 0 : index
    %c0_54 = arith.constant 0 : index
    %94 = vector.load %arg21[%c0_53, %c0_54] : memref<32x8xf32, #tpu.memory_space<vmem>>, vector<8x8xf32>
    %95 = arith.truncf %94 : vector<8x8xf32> to vector<8x8xbf16>
    %96 = arith.truncf %93 : vector<8x16xf32> to vector<8x16xbf16>
    %cst_55 = arith.constant dense<0.000000e+00> : vector<8x16xf32>
    %97 = tpu.matmul %95, %96, %cst_55 {dimension_numbers = #tpu.dot_dimension_numbers<[1], [0], [0], [1], [0, 0, 1, 1], [], []>} : vector<8x8xbf16>, vector<8x16xbf16>, vector<8x16xf32> -> vector<8x16xf32>
    %c0_56 = arith.constant 0 : index
    %c0_57 = arith.constant 0 : index
    %98 = vector.load %arg22[%c0_56, %c0_57] : memref<8x64xf32, #tpu.memory_space<vmem>>, vector<8x16xf32>
    tpu.vector_store %arg22[%c0_56, %c0_57], %97 {strides = array<i32>} : memref<8x64xf32, #tpu.memory_space<vmem>>, vector<8x16xf32>,
    %c0_58 = arith.constant 0 : index
    %c144 = arith.constant 144 : index
    %99 = vector.load %arg20[%c0_58, %c144] : memref<8x192xf32, #tpu.memory_space<vmem>>, vector<8x16xf32>
    %c8_59 = arith.constant 8 : index
    %c0_60 = arith.constant 0 : index
    %100 = vector.load %arg21[%c8_59, %c0_60] : memref<32x8xf32, #tpu.memory_space<vmem>>, vector<8x8xf32>
    %101 = arith.truncf %100 : vector<8x8xf32> to vector<8x8xbf16>
    %102 = arith.truncf %99 : vector<8x16xf32> to vector<8x16xbf16>
    %cst_61 = arith.constant dense<0.000000e+00> : vector<8x16xf32>
    %103 = tpu.matmul %101, %102, %cst_61 {dimension_numbers = #tpu.dot_dimension_numbers<[1], [0], [0], [1], [0, 0, 1, 1], [], []>} : vector<8x8xbf16>, vector<8x16xbf16>, vector<8x16xf32> -> vector<8x16xf32>
    %c0_62 = arith.constant 0 : index
    %c16_63 = arith.constant 16 : index
    %104 = vector.load %arg22[%c0_62, %c16_63] : memref<8x64xf32, #tpu.memory_space<vmem>>, vector<8x16xf32>
    tpu.vector_store %arg22[%c0_62, %c16_63], %103 {strides = array<i32>} : memref<8x64xf32, #tpu.memory_space<vmem>>, vector<8x16xf32>,
    %c0_64 = arith.constant 0 : index
    %c160 = arith.constant 160 : index
    %105 = vector.load %arg20[%c0_64, %c160] : memref<8x192xf32, #tpu.memory_space<vmem>>, vector<8x16xf32>
    %c16_65 = arith.constant 16 : index
    %c0_66 = arith.constant 0 : index
    %106 = vector.load %arg21[%c16_65, %c0_66] : memref<32x8xf32, #tpu.memory_space<vmem>>, vector<8x8xf32>
    %107 = arith.truncf %106 : vector<8x8xf32> to vector<8x8xbf16>
    %108 = arith.truncf %105 : vector<8x16xf32> to vector<8x16xbf16>
    %cst_67 = arith.constant dense<0.000000e+00> : vector<8x16xf32>
    %109 = tpu.matmul %107, %108, %cst_67 {dimension_numbers = #tpu.dot_dimension_numbers<[1], [0], [0], [1], [0, 0, 1, 1], [], []>} : vector<8x8xbf16>, vector<8x16xbf16>, vector<8x16xf32> -> vector<8x16xf32>
    %c0_68 = arith.constant 0 : index
    %c32_69 = arith.constant 32 : index
    %110 = vector.load %arg22[%c0_68, %c32_69] : memref<8x64xf32, #tpu.memory_space<vmem>>, vector<8x16xf32>
    tpu.vector_store %arg22[%c0_68, %c32_69], %109 {strides = array<i32>} : memref<8x64xf32, #tpu.memory_space<vmem>>, vector<8x16xf32>,
    %c0_70 = arith.constant 0 : index
    %c176 = arith.constant 176 : index
    %111 = vector.load %arg20[%c0_70, %c176] : memref<8x192xf32, #tpu.memory_space<vmem>>, vector<8x16xf32>
    %c24_71 = arith.constant 24 : index
    %c0_72 = arith.constant 0 : index
    %112 = vector.load %arg21[%c24_71, %c0_72] : memref<32x8xf32, #tpu.memory_space<vmem>>, vector<8x8xf32>
    %113 = arith.truncf %112 : vector<8x8xf32> to vector<8x8xbf16>
    %114 = arith.truncf %111 : vector<8x16xf32> to vector<8x16xbf16>
    %cst_73 = arith.constant dense<0.000000e+00> : vector<8x16xf32>
    %115 = tpu.matmul %113, %114, %cst_73 {dimension_numbers = #tpu.dot_dimension_numbers<[1], [0], [0], [1], [0, 0, 1, 1], [], []>} : vector<8x8xbf16>, vector<8x16xbf16>, vector<8x16xf32> -> vector<8x16xf32>
    %c0_74 = arith.constant 0 : index
    %c48_75 = arith.constant 48 : index
    %116 = vector.load %arg22[%c0_74, %c48_75] : memref<8x64xf32, #tpu.memory_space<vmem>>, vector<8x16xf32>
    tpu.vector_store %arg22[%c0_74, %c48_75], %115 {strides = array<i32>} : memref<8x64xf32, #tpu.memory_space<vmem>>, vector<8x16xf32>,
    %c0_76 = arith.constant 0 : index
    %c0_77 = arith.constant 0 : index
    %117 = vector.load %arg22[%c0_76, %c0_77] : memref<8x64xf32, #tpu.memory_space<vmem>>, vector<8x64xf32>
    %118 = arith.truncf %117 : vector<8x64xf32> to vector<8x64xbf16>
    %c0_78 = arith.constant 0 : index
    %c0_79 = arith.constant 0 : index
    %c0_80 = arith.constant 0 : index
    %119 = vector.load %arg8[%c0_78, %c0_79, %c0_80] : memref<1x64x64xbf16, #tpu.memory_space<vmem>>, vector<1x64x64xbf16>
    %120 = vector.shape_cast %119 : vector<1x64x64xbf16> to vector<64x64xbf16>
    %cst_81 = arith.constant dense<0.000000e+00> : vector<8x64xf32>
    %121 = tpu.matmul %118, %120, %cst_81 {dimension_numbers = #tpu.dot_dimension_numbers<[1], [0], [0], [1], [0, 0, 1, 1], [], []>} : vector<8x64xbf16>, vector<64x64xbf16>, vector<8x64xf32> -> vector<8x64xf32>
    %122 = arith.addf %3, %121 : vector<8x64xf32>
    %c0_82 = arith.constant 0 : index
    %c0_83 = arith.constant 0 : index
    %c0_84 = arith.constant 0 : index
    %123 = vector.load %arg9[%c0_82, %c0_83, %c0_84] : memref<1x1x64xf32, #tpu.memory_space<vmem>>, vector<1x1x64xf32>
    %124 = vector.shape_cast %123 : vector<1x1x64xf32> to vector<1x64xf32>
    %125 = vector.broadcast %124 : vector<1x64xf32> to vector<8x64xf32>
    %126 = arith.addf %122, %125 : vector<8x64xf32>
    %c0_85 = arith.constant 0 : index
    %c0_86 = arith.constant 0 : index
    %c0_87 = arith.constant 0 : index
    %127 = vector.load %arg10[%c0_85, %c0_86, %c0_87] : memref<1x1x64xf32, #tpu.memory_space<vmem>>, vector<1x1x64xf32>
    %128 = vector.shape_cast %127 : vector<1x1x64xf32> to vector<1x64xf32>
    %c0_88 = arith.constant 0 : index
    %c0_89 = arith.constant 0 : index
    %c0_90 = arith.constant 0 : index
    %129 = vector.load %arg11[%c0_88, %c0_89, %c0_90] : memref<1x1x64xf32, #tpu.memory_space<vmem>>, vector<1x1x64xf32>
    %130 = vector.shape_cast %129 : vector<1x1x64xf32> to vector<1x64xf32>
    %cst_91 = arith.constant dense<0.000000e+00> : vector<8xf32>
    %131 = vector.multi_reduction <add>, %126, %cst_91 [1] : vector<8x64xf32> to vector<8xf32>
    %132 = vector.shape_cast %131 : vector<8xf32> to vector<8x1xf32>
    %cst_92 = arith.constant 6.400000e+01 : f32
    %133 = vector.broadcast %cst_92 : f32 to vector<8x1xf32>
    %134 = arith.divf %132, %133 : vector<8x1xf32>
    %135 = vector.broadcast %134 : vector<8x1xf32> to vector<8x64xf32>
    %136 = arith.subf %126, %135 : vector<8x64xf32>
    %137 = arith.mulf %136, %136 : vector<8x64xf32>
    %cst_93 = arith.constant dense<0.000000e+00> : vector<8xf32>
    %138 = vector.multi_reduction <add>, %137, %cst_93 [1] : vector<8x64xf32> to vector<8xf32>
    %139 = vector.shape_cast %138 : vector<8xf32> to vector<8x1xf32>
    %cst_94 = arith.constant 6.400000e+01 : f32
    %140 = vector.broadcast %cst_94 : f32 to vector<8x1xf32>
    %141 = arith.divf %139, %140 : vector<8x1xf32>
    %142 = vector.broadcast %134 : vector<8x1xf32> to vector<8x64xf32>
    %143 = arith.subf %126, %142 : vector<8x64xf32>
    %cst_95 = arith.constant 9.99999974E-6 : f32
    %144 = vector.broadcast %cst_95 : f32 to vector<8x1xf32>
    %145 = arith.addf %141, %144 : vector<8x1xf32>
    %146 = math.rsqrt %145 : vector<8x1xf32>
    %147 = vector.broadcast %146 : vector<8x1xf32> to vector<8x64xf32>
    %148 = arith.mulf %143, %147 : vector<8x64xf32>
    %149 = vector.broadcast %128 : vector<1x64xf32> to vector<8x64xf32>
    %150 = arith.mulf %148, %149 : vector<8x64xf32>
    %151 = vector.broadcast %130 : vector<1x64xf32> to vector<8x64xf32>
    %152 = arith.addf %150, %151 : vector<8x64xf32>
    %153 = arith.truncf %152 : vector<8x64xf32> to vector<8x64xbf16>
    %c0_96 = arith.constant 0 : index
    %c0_97 = arith.constant 0 : index
    %c0_98 = arith.constant 0 : index
    %154 = vector.load %arg12[%c0_96, %c0_97, %c0_98] : memref<1x64x256xbf16, #tpu.memory_space<vmem>>, vector<1x64x256xbf16>
    %155 = vector.shape_cast %154 : vector<1x64x256xbf16> to vector<64x256xbf16>
    %cst_99 = arith.constant dense<0.000000e+00> : vector<8x256xf32>
    %156 = tpu.matmul %153, %155, %cst_99 {dimension_numbers = #tpu.dot_dimension_numbers<[1], [0], [0], [1], [0, 0, 1, 1], [], []>} : vector<8x64xbf16>, vector<64x256xbf16>, vector<8x256xf32> -> vector<8x256xf32>
    %c0_100 = arith.constant 0 : index
    %c0_101 = arith.constant 0 : index
    %c0_102 = arith.constant 0 : index
    %157 = vector.load %arg13[%c0_100, %c0_101, %c0_102] : memref<1x1x256xf32, #tpu.memory_space<vmem>>, vector<1x1x256xf32>
    %158 = vector.shape_cast %157 : vector<1x1x256xf32> to vector<1x256xf32>
    %159 = vector.broadcast %158 : vector<1x256xf32> to vector<8x256xf32>
    %160 = arith.addf %156, %159 : vector<8x256xf32>
    %cst_103 = arith.constant 1.702000e+00 : f32
    %161 = vector.broadcast %cst_103 : f32 to vector<8x256xf32>
    %162 = arith.mulf %161, %160 : vector<8x256xf32>
    %163 = arith.negf %162 : vector<8x256xf32>
    %164 = math.exp %163 : vector<8x256xf32>
    %cst_104 = arith.constant 1.000000e+00 : f32
    %165 = vector.broadcast %cst_104 : f32 to vector<8x256xf32>
    %166 = arith.addf %165, %164 : vector<8x256xf32>
    %167 = arith.divf %165, %166 : vector<8x256xf32>
    %168 = arith.mulf %160, %167 : vector<8x256xf32>
    %169 = arith.truncf %168 : vector<8x256xf32> to vector<8x256xbf16>
    %c0_105 = arith.constant 0 : index
    %c0_106 = arith.constant 0 : index
    %c0_107 = arith.constant 0 : index
    %170 = vector.load %arg14[%c0_105, %c0_106, %c0_107] : memref<1x256x64xbf16, #tpu.memory_space<vmem>>, vector<1x256x64xbf16>
    %171 = vector.shape_cast %170 : vector<1x256x64xbf16> to vector<256x64xbf16>
    %cst_108 = arith.constant dense<0.000000e+00> : vector<8x64xf32>
    %172 = tpu.matmul %169, %171, %cst_108 {dimension_numbers = #tpu.dot_dimension_numbers<[1], [0], [0], [1], [0, 0, 1, 1], [], []>} : vector<8x256xbf16>, vector<256x64xbf16>, vector<8x64xf32> -> vector<8x64xf32>
    %173 = arith.addf %126, %172 : vector<8x64xf32>
    %c0_109 = arith.constant 0 : index
    %c0_110 = arith.constant 0 : index
    %c0_111 = arith.constant 0 : index
    %174 = vector.load %arg15[%c0_109, %c0_110, %c0_111] : memref<1x1x64xf32, #tpu.memory_space<vmem>>, vector<1x1x64xf32>
    %175 = vector.shape_cast %174 : vector<1x1x64xf32> to vector<1x64xf32>
    %176 = vector.broadcast %175 : vector<1x64xf32> to vector<8x64xf32>
    %177 = arith.addf %173, %176 : vector<8x64xf32>
    %c0_112 = arith.constant 0 : index
    %c0_113 = arith.constant 0 : index
    %178 = vector.load %arg23[%c0_112, %c0_113] : memref<8x64xf32, #tpu.memory_space<vmem>>, vector<8x64xf32>
    tpu.vector_store %arg23[%c0_112, %c0_113], %177 {strides = array<i32>} : memref<8x64xf32, #tpu.memory_space<vmem>>, vector<8x64xf32>,
    %c1_i32 = arith.constant 1 : i32
    %179 = arith.cmpi eq, %arg1, %c1_i32 : i32
    %180 = arith.extui %179 : i1 to i32
    %c0_i32_114 = arith.constant 0 : i32
    %181 = arith.cmpi ne, %180, %c0_i32_114 : i32
    scf.if %181 {
      %182 = arith.index_cast %arg0 : i32 to index
      %183 = memref.load %arg2[%182] : memref<4xi32, #tpu.memory_space<smem>>
      %184 = arith.index_cast %183 : i32 to index
      %c0_115 = arith.constant 0 : index
      %185 = vector.load %arg23[%184, %c0_115] : memref<8x64xf32, #tpu.memory_space<vmem>>, vector<1x64xf32>
      %c0_116 = arith.constant 0 : index
      %c0_117 = arith.constant 0 : index
      %186 = vector.load %arg16[%c0_116, %c0_117] : memref<1x64xf32, #tpu.memory_space<vmem>>, vector<1x64xf32>
      %c0_118 = arith.constant 0 : index
      %c0_119 = arith.constant 0 : index
      %187 = vector.load %arg17[%c0_118, %c0_119] : memref<1x64xf32, #tpu.memory_space<vmem>>, vector<1x64xf32>
      %cst_120 = arith.constant dense<0.000000e+00> : vector<1xf32>
      %188 = vector.multi_reduction <add>, %185, %cst_120 [1] : vector<1x64xf32> to vector<1xf32>
      %189 = vector.shape_cast %188 : vector<1xf32> to vector<1x1xf32>
      %cst_121 = arith.constant 6.400000e+01 : f32
      %190 = vector.broadcast %cst_121 : f32 to vector<1x1xf32>
      %191 = arith.divf %189, %190 : vector<1x1xf32>
      %192 = vector.broadcast %191 : vector<1x1xf32> to vector<1x64xf32>
      %193 = arith.subf %185, %192 : vector<1x64xf32>
      %194 = arith.mulf %193, %193 : vector<1x64xf32>
      %cst_122 = arith.constant dense<0.000000e+00> : vector<1xf32>
      %195 = vector.multi_reduction <add>, %194, %cst_122 [1] : vector<1x64xf32> to vector<1xf32>
      %196 = vector.shape_cast %195 : vector<1xf32> to vector<1x1xf32>
      %cst_123 = arith.constant 6.400000e+01 : f32
      %197 = vector.broadcast %cst_123 : f32 to vector<1x1xf32>
      %198 = arith.divf %196, %197 : vector<1x1xf32>
      %199 = vector.broadcast %191 : vector<1x1xf32> to vector<1x64xf32>
      %200 = arith.subf %185, %199 : vector<1x64xf32>
      %cst_124 = arith.constant 9.99999974E-6 : f32
      %201 = vector.broadcast %cst_124 : f32 to vector<1x1xf32>
      %202 = arith.addf %198, %201 : vector<1x1xf32>
      %203 = math.rsqrt %202 : vector<1x1xf32>
      %204 = vector.broadcast %203 : vector<1x1xf32> to vector<1x64xf32>
      %205 = arith.mulf %200, %204 : vector<1x64xf32>
      %206 = arith.mulf %205, %186 : vector<1x64xf32>
      %207 = arith.addf %206, %187 : vector<1x64xf32>
      %208 = arith.truncf %207 : vector<1x64xf32> to vector<1x64xbf16>
      %c0_125 = arith.constant 0 : index
      %c0_126 = arith.constant 0 : index
      %209 = vector.load %arg18[%c0_125, %c0_126] : memref<64x128xbf16, #tpu.memory_space<vmem>>, vector<64x128xbf16>
      %cst_127 = arith.constant dense<0.000000e+00> : vector<1x128xf32>
      %210 = tpu.matmul %208, %209, %cst_127 {dimension_numbers = #tpu.dot_dimension_numbers<[1], [0], [0], [1], [0, 0, 1, 1], [], []>} : vector<1x64xbf16>, vector<64x128xbf16>, vector<1x128xf32> -> vector<1x128xf32>
      %211 = arith.mulf %210, %210 : vector<1x128xf32>
      %cst_128 = arith.constant dense<0.000000e+00> : vector<1xf32>
      %212 = vector.multi_reduction <add>, %211, %cst_128 [1] : vector<1x128xf32> to vector<1xf32>
      %213 = vector.shape_cast %212 : vector<1xf32> to vector<1x1xf32>
      %cst_129 = arith.constant 1.000000e-24 : f32
      %214 = vector.broadcast %cst_129 : f32 to vector<1x1xf32>
      %215 = arith.maximumf %213, %214 : vector<1x1xf32>
      %216 = math.rsqrt %215 : vector<1x1xf32>
      %217 = vector.broadcast %216 : vector<1x1xf32> to vector<1x128xf32>
      %218 = arith.mulf %210, %217 : vector<1x128xf32>
      %219 = vector.shape_cast %218 : vector<1x128xf32> to vector<1x128xf32>
      %220 = vector.broadcast %219 : vector<1x128xf32> to vector<8x128xf32>
      %c0_130 = arith.constant 0 : index
      %c0_131 = arith.constant 0 : index
      %c0_132 = arith.constant 0 : index
      %221 = vector.load %arg19[%c0_130, %c0_131, %c0_132] : memref<1x8x128xf32, #tpu.memory_space<vmem>>, vector<1x8x128xf32>
      %222 = vector.shape_cast %221 : vector<1x8x128xf32> to vector<8x128xf32>
      %223 = vector.shape_cast %220 : vector<8x128xf32> to vector<1x8x128xf32>
      tpu.vector_store %arg19[%c0_130, %c0_131, %c0_132], %223 {strides = array<i32>} : memref<1x8x128xf32, #tpu.memory_space<vmem>>, vector<1x8x128xf32>,
    } else {
    }
    return
  }
  func.func @transform_0(%arg0: i32, %arg1: i32, %arg2: memref<4xi32, #tpu.memory_space<smem>>) -> (i32, i32, i32) {
    %c0_i32 = arith.constant 0 : i32
    %c0_i32_0 = arith.constant 0 : i32
    %c0_i32_1 = arith.constant 0 : i32
    return %arg0, %c0_i32, %c0_i32_0 : i32, i32, i32
  }
  func.func @transform_1(%arg0: i32, %arg1: i32, %arg2: memref<4xi32, #tpu.memory_space<smem>>) -> (i32, i32, i32) {
    %c0_i32 = arith.constant 0 : i32
    %c0_i32_0 = arith.constant 0 : i32
    %c0_i32_1 = arith.constant 0 : i32
    return %arg1, %c0_i32, %c0_i32_0 : i32, i32, i32
  }
  func.func @transform_2(%arg0: i32, %arg1: i32, %arg2: memref<4xi32, #tpu.memory_space<smem>>) -> (i32, i32, i32) {
    %c0_i32 = arith.constant 0 : i32
    %c0_i32_0 = arith.constant 0 : i32
    %c0_i32_1 = arith.constant 0 : i32
    return %arg1, %c0_i32, %c0_i32_0 : i32, i32, i32
  }
  func.func @transform_3(%arg0: i32, %arg1: i32, %arg2: memref<4xi32, #tpu.memory_space<smem>>) -> (i32, i32, i32) {
    %c0_i32 = arith.constant 0 : i32
    %c0_i32_0 = arith.constant 0 : i32
    %c0_i32_1 = arith.constant 0 : i32
    return %arg1, %c0_i32, %c0_i32_0 : i32, i32, i32
  }
  func.func @transform_4(%arg0: i32, %arg1: i32, %arg2: memref<4xi32, #tpu.memory_space<smem>>) -> (i32, i32, i32) {
    %c0_i32 = arith.constant 0 : i32
    %c0_i32_0 = arith.constant 0 : i32
    %c0_i32_1 = arith.constant 0 : i32
    return %arg1, %c0_i32, %c0_i32_0 : i32, i32, i32
  }
  func.func @transform_5(%arg0: i32, %arg1: i32, %arg2: memref<4xi32, #tpu.memory_space<smem>>) -> (i32, i32, i32) {
    %c0_i32 = arith.constant 0 : i32
    %c0_i32_0 = arith.constant 0 : i32
    %c0_i32_1 = arith.constant 0 : i32
    return %arg1, %c0_i32, %c0_i32_0 : i32, i32, i32
  }
  func.func @transform_6(%arg0: i32, %arg1: i32, %arg2: memref<4xi32, #tpu.memory_space<smem>>) -> (i32, i32, i32) {
    %c0_i32 = arith.constant 0 : i32
    %c0_i32_0 = arith.constant 0 : i32
    %c0_i32_1 = arith.constant 0 : i32
    return %arg1, %c0_i32, %c0_i32_0 : i32, i32, i32
  }
  func.func @transform_7(%arg0: i32, %arg1: i32, %arg2: memref<4xi32, #tpu.memory_space<smem>>) -> (i32, i32, i32) {
    %c0_i32 = arith.constant 0 : i32
    %c0_i32_0 = arith.constant 0 : i32
    %c0_i32_1 = arith.constant 0 : i32
    return %arg1, %c0_i32, %c0_i32_0 : i32, i32, i32
  }
  func.func @transform_8(%arg0: i32, %arg1: i32, %arg2: memref<4xi32, #tpu.memory_space<smem>>) -> (i32, i32, i32) {
    %c0_i32 = arith.constant 0 : i32
    %c0_i32_0 = arith.constant 0 : i32
    %c0_i32_1 = arith.constant 0 : i32
    return %arg1, %c0_i32, %c0_i32_0 : i32, i32, i32
  }
  func.func @transform_9(%arg0: i32, %arg1: i32, %arg2: memref<4xi32, #tpu.memory_space<smem>>) -> (i32, i32, i32) {
    %c0_i32 = arith.constant 0 : i32
    %c0_i32_0 = arith.constant 0 : i32
    %c0_i32_1 = arith.constant 0 : i32
    return %arg1, %c0_i32, %c0_i32_0 : i32, i32, i32
  }
  func.func @transform_10(%arg0: i32, %arg1: i32, %arg2: memref<4xi32, #tpu.memory_space<smem>>) -> (i32, i32, i32) {
    %c0_i32 = arith.constant 0 : i32
    %c0_i32_0 = arith.constant 0 : i32
    %c0_i32_1 = arith.constant 0 : i32
    return %arg1, %c0_i32, %c0_i32_0 : i32, i32, i32
  }
  func.func @transform_11(%arg0: i32, %arg1: i32, %arg2: memref<4xi32, #tpu.memory_space<smem>>) -> (i32, i32, i32) {
    %c0_i32 = arith.constant 0 : i32
    %c0_i32_0 = arith.constant 0 : i32
    %c0_i32_1 = arith.constant 0 : i32
    return %arg1, %c0_i32, %c0_i32_0 : i32, i32, i32
  }
  func.func @transform_12(%arg0: i32, %arg1: i32, %arg2: memref<4xi32, #tpu.memory_space<smem>>) -> (i32, i32, i32) {
    %c0_i32 = arith.constant 0 : i32
    %c0_i32_0 = arith.constant 0 : i32
    %c0_i32_1 = arith.constant 0 : i32
    return %arg1, %c0_i32, %c0_i32_0 : i32, i32, i32
  }
  func.func @transform_13(%arg0: i32, %arg1: i32, %arg2: memref<4xi32, #tpu.memory_space<smem>>) -> (i32, i32) {
    %c0_i32 = arith.constant 0 : i32
    %c0_i32_0 = arith.constant 0 : i32
    %c0_i32_1 = arith.constant 0 : i32
    return %c0_i32, %c0_i32_0 : i32, i32
  }
  func.func @transform_14(%arg0: i32, %arg1: i32, %arg2: memref<4xi32, #tpu.memory_space<smem>>) -> (i32, i32) {
    %c0_i32 = arith.constant 0 : i32
    %c0_i32_0 = arith.constant 0 : i32
    %c0_i32_1 = arith.constant 0 : i32
    return %c0_i32, %c0_i32_0 : i32, i32
  }
  func.func @transform_15(%arg0: i32, %arg1: i32, %arg2: memref<4xi32, #tpu.memory_space<smem>>) -> (i32, i32) {
    %c0_i32 = arith.constant 0 : i32
    %c0_i32_0 = arith.constant 0 : i32
    %c0_i32_1 = arith.constant 0 : i32
    return %c0_i32, %c0_i32_0 : i32, i32
  }
  func.func @transform_16(%arg0: i32, %arg1: i32, %arg2: memref<4xi32, #tpu.memory_space<smem>>) -> (i32, i32, i32) {
    %c0_i32 = arith.constant 0 : i32
    %c0_i32_0 = arith.constant 0 : i32
    %c0_i32_1 = arith.constant 0 : i32
    return %arg0, %c0_i32, %c0_i32_0 : i32, i32, i32
  }
}

</mosaic_0001>

<llo_original>
// kernel: _forward_numeric.4
$region0: #{_forward_numeric.4}
  #allocation0 [shape = 'u32[]', space=smem, size = 0x4, offset = 0x4, fixed_abs, tag = 'smem constant byte address 0x4 - core index']
  #allocation1 [shape = 'u32[72,128]{1,0:T(1,128)}', space=vmem, size = 0x9000, scoped, tag = 'internal scratch']
  #allocation2 [shape = 'f32[5,96]{1,0:T(8,128)}', space=vmem, size = 0x1000, scoped, tag = 'scratch operand']
  #allocation3 [shape = 'f32[10,5]{1,0:T(8,128)}', space=vmem, size = 0x2000, scoped, tag = 'scratch operand']
  #allocation4 [shape = 'f32[5,32]{1,0:T(8,128)}', space=vmem, size = 0x1000, scoped, tag = 'scratch operand']
  #allocation5 [shape = 'f32[5,32]{1,0:T(8,128)}', space=vmem, size = 0x1000, scoped, tag = 'scratch operand']
  #allocation6 [shape = 's32[1]{0}', space=sflag, size = 0x4, scoped, tag = 'scoped memory for _forward_numeric.4']
  #allocation7 [shape = 'u8[512]{0}', space=smem, size = 0x200, scoped, tag = 'prefetched SMEM operand 0']
  %s0 = inlined_call_operand.vmem [shape: s32[2], index: 0, kind: input, shape index: {}]
  %s1 = inlined_call_operand.vmem [shape: f32[2,5,32], index: 1, kind: input, shape index: {}]
  %s2 = inlined_call_operand.vmem [shape: f32[1,32], index: 2, kind: input, shape index: {}, may-alias: {2,16}]
  %s3 = inlined_call_operand.vmem [shape: f32[1,32], index: 3, kind: input, shape index: {}, may-alias: {3,17}]
  %s4 = inlined_call_operand.vmem [shape: f32[2,1,32], index: 4, kind: input, shape index: {}, may-alias: {4,10}]
  %s5 = inlined_call_operand.vmem [shape: f32[2,1,32], index: 5, kind: input, shape index: {}, may-alias: {5,9,11,15}]
  %s6 = inlined_call_operand.vmem [shape: bf16[2,32,96], index: 6, kind: input, shape index: {}]
  %s7 = inlined_call_operand.vmem [shape: f32[2,1,96], index: 7, kind: input, shape index: {}]
  %s8 = inlined_call_operand.vmem [shape: bf16[2,32,32], index: 8, kind: input, shape index: {}]
  %s9 = inlined_call_operand.vmem [shape: f32[2,1,32], index: 9, kind: input, shape index: {}, may-alias: {5,9,11,15}]
  %s10 = inlined_call_operand.vmem [shape: f32[2,1,32], index: 10, kind: input, shape index: {}, may-alias: {4,10}]
  %s11 = inlined_call_operand.vmem [shape: f32[2,1,32], index: 11, kind: input, shape index: {}, may-alias: {5,9,11,15}]
  %s12 = inlined_call_operand.vmem [shape: bf16[2,32,128], index: 12, kind: input, shape index: {}]
  %s13 = inlined_call_operand.vmem [shape: f32[2,1,128], index: 13, kind: input, shape index: {}]
  %s14 = inlined_call_operand.vmem [shape: bf16[2,128,32], index: 14, kind: input, shape index: {}]
  %s15 = inlined_call_operand.vmem [shape: f32[2,1,32], index: 15, kind: input, shape index: {}, may-alias: {5,9,11,15}]
  %s16 = inlined_call_operand.vmem [shape: f32[1,32], index: 16, kind: input, shape index: {}, may-alias: {2,16}]
  %s17 = inlined_call_operand.vmem [shape: f32[1,32], index: 17, kind: input, shape index: {}, may-alias: {3,17}]
  %s18 = inlined_call_operand.vmem [shape: bf16[32,128], index: 18, kind: input, shape index: {}]
  %s19 = inlined_call_operand.vmem [shape: f32[2,8,128], index: 19, kind: output, shape index: {}]
  %s20 = sld [smem:[#allocation0]]
  $region113: #{_forward_numeric.4} parent=0
    _
  %s22 = ssub.s32 1, %s20
  %s23 = scalar_select 0, %s22, %s20
  %s25 = sshll.u32 %s0, 4
  %s26 = int_to_ptr.vmem [resolvable:$true] %s25
  %28 = dma.vmem_to_smem %s26, 16, [#allocation7], [#allocation6]
  %30 = dma.done [#allocation6], 16
  %31 = sfence
  loop: start=0, step=1, limit=6
  $region2: #{_forward_numeric.4} parent=0 // loop_pre_header
    _
  $region3: #{_forward_numeric.4} parent=0 // loop_header
    %s33 = sphi 0, %s37
    %p34 = scmp.ge.s32.totalorder %s33, 6
    %s40 = sphi 0, %s52
    %s41 = sphi 0, %s48
    %s42 = sphi 0, %s40
    %s43 = sphi 0, %s41
    %s44 = sphi 0, %s42
    %s45 = sphi 0, %s43
    %s55 = sphi 0, %s57
    %s58 = sphi 0, %s55
    %s59 = sphi 0, %s58
    %s75 = sphi 0, %s59
    %s79 = sphi 0, %s79
    %s81 = sphi 0, %s79
    %s82 = sphi 0, %s81
    %s96 = sphi 0, %s82
    %s100 = sphi 0, %s100
    %s102 = sphi 0, %s100
    %s103 = sphi 0, %s102
    %s117 = sphi 0, %s103
    %s123 = sphi 0, %s125
    %s126 = sphi 0, %s123
    %s127 = sphi 0, %s126
    %s143 = sphi 0, %s127
    %s149 = sphi 0, %s151
    %s152 = sphi 0, %s149
    %s153 = sphi 0, %s152
    %s169 = sphi 0, %s153
    %s175 = sphi 0, %s177
    %s178 = sphi 0, %s175
    %s179 = sphi 0, %s178
    %s195 = sphi 0, %s179
    %s201 = sphi 0, %s203
    %s204 = sphi 0, %s201
    %s205 = sphi 0, %s204
    %s221 = sphi 0, %s205
    %s227 = sphi 0, %s229
    %s230 = sphi 0, %s227
    %s231 = sphi 0, %s230
    %s247 = sphi 0, %s231
    %s253 = sphi 0, %s255
    %s256 = sphi 0, %s253
    %s257 = sphi 0, %s256
    %s273 = sphi 0, %s257
    %s279 = sphi 0, %s281
    %s282 = sphi 0, %s279
    %s283 = sphi 0, %s282
    %s299 = sphi 0, %s283
    %s305 = sphi 0, %s307
    %s308 = sphi 0, %s305
    %s309 = sphi 0, %s308
    %s325 = sphi 0, %s309
    %s331 = sphi 0, %s333
    %s334 = sphi 0, %s331
    %s335 = sphi 0, %s334
    %s351 = sphi 0, %s335
    %s357 = sphi 0, %s359
    %s360 = sphi 0, %s357
    %s361 = sphi 0, %s360
    %s377 = sphi 0, %s361
    %s383 = sphi 0, %s385
    %s386 = sphi 0, %s383
    %s387 = sphi 0, %s386
    %s403 = sphi 0, %s387
    %s409 = sphi 0, %s411
    %s412 = sphi 0, %s409
    %s413 = sphi 0, %s412
    %s429 = sphi 0, %s413
    %s433 = sphi 0, %s433
    %s435 = sphi 0, %s433
    %s436 = sphi 0, %s435
    %s450 = sphi 0, %s436
    %s454 = sphi 0, %s454
    %s456 = sphi 0, %s454
    %s457 = sphi 0, %s456
    %s471 = sphi 0, %s457
    %s475 = sphi 0, %s475
    %s477 = sphi 0, %s475
    %s478 = sphi 0, %s477
    %s492 = sphi 0, %s478
    %s498 = sphi 0, %s500
    %s501 = sphi 0, %s498
    %s502 = sphi 0, %s501
    %s518 = sphi 0, %s502
  $region4: #{_forward_numeric.4} parent=0 // loop_header_branch
    %36 = sbr.rel (%p34) target = $region8
  $region5: #{_forward_numeric.4} parent=0 // loop_body
    %s38 = ssub.s32 %s33, 1
    %s39 = ssub.s32 %s33, 2
    %s46 = sadd.s32 1, %s41
    %p47 = scmp.ge.s32.totalorder %s46, 2
    %s48 = scalar_select %p47, 0, %s46
    %s49 = sadd.s32 1, %s40
    %s50 = scalar_select %p47, %s49, %s40
    %p51 = scmp.ge.s32.totalorder %s50, 2
    %s52 = scalar_select %p51, 0, %s50
    %s53 = ssub.s32 %s40, %s52
    %p54 = scmp.eq.s32.totalorder %s53, 0
    %s56 = sadd.s32 %s55, 1
    %s57 = scalar_select %p54, %s55, %s56
    %p60 = pneg %p54
    %p61 = scmp.eq.s32.totalorder %s33, 3
    %p62 = por %p60, %p61
    %p63 = scmp.ne.s32.totalorder %s55, %s58
    %p64 = scmp.eq.s32.totalorder %s33, 0
    %p65 = por %p63, %p64
    %p66 = scmp.ne.s32.totalorder %s55, %s58
    %p67 = scmp.eq.s32.totalorder %s38, 3
    %p68 = por %p66, %p67
    %p69 = scmp.ne.s32.totalorder %s58, %s59
    %p70 = scmp.eq.s32.totalorder %s38, 0
    %p71 = por %p69, %p70
    %p72 = scmp.ne.s32.totalorder %s58, %s59
    %p73 = scmp.eq.s32.totalorder %s39, 3
    %p74 = por %p72, %p73
    %p76 = scmp.ne.s32.totalorder %s59, %s75
    %p77 = scmp.eq.s32.totalorder %s39, 0
    %p78 = por %p76, %p77
    %s80 = sadd.s32 %s79, 1
    %p83 = scmp.eq.s32.totalorder %s33, 3
    %p84 = scmp.ne.s32.totalorder %s79, %s81
    %p85 = scmp.eq.s32.totalorder %s33, 0
    %p86 = por %p84, %p85
    %p87 = scmp.ne.s32.totalorder %s79, %s81
    %p88 = scmp.eq.s32.totalorder %s38, 3
    %p89 = por %p87, %p88
    %p90 = scmp.ne.s32.totalorder %s81, %s82
    %p91 = scmp.eq.s32.totalorder %s38, 0
    %p92 = por %p90, %p91
    %p93 = scmp.ne.s32.totalorder %s81, %s82
    %p94 = scmp.eq.s32.totalorder %s39, 3
    %p95 = por %p93, %p94
    %p97 = scmp.ne.s32.totalorder %s82, %s96
    %p98 = scmp.eq.s32.totalorder %s39, 0
    %p99 = por %p97, %p98
    %s101 = sadd.s32 %s100, 1
    %p104 = scmp.eq.s32.totalorder %s33, 3
    %p105 = scmp.ne.s32.totalorder %s100, %s102
    %p106 = scmp.eq.s32.totalorder %s33, 0
    %p107 = por %p105, %p106
    %p108 = scmp.ne.s32.totalorder %s100, %s102
    %p109 = scmp.eq.s32.totalorder %s38, 3
    %p110 = por %p108, %p109
    %p111 = scmp.ne.s32.totalorder %s102, %s103
    %p112 = scmp.eq.s32.totalorder %s38, 0
    %p113 = por %p111, %p112
    %p114 = scmp.ne.s32.totalorder %s102, %s103
    %p115 = scmp.eq.s32.totalorder %s39, 3
    %p116 = por %p114, %p115
    %p118 = scmp.ne.s32.totalorder %s103, %s117
    %p119 = scmp.eq.s32.totalorder %s39, 0
    %p120 = por %p118, %p119
    %s121 = ssub.s32 %s41, %s48
    %p122 = scmp.eq.s32.totalorder %s121, 0
    %s124 = sadd.s32 %s123, 1
    %s125 = scalar_select %p122, %s123, %s124
    %p128 = pneg %p122
    %p129 = scmp.eq.s32.totalorder %s33, 3
    %p130 = por %p128, %p129
    %p131 = scmp.ne.s32.totalorder %s123, %s126
    %p132 = scmp.eq.s32.totalorder %s33, 0
    %p133 = por %p131, %p132
    %p134 = scmp.ne.s32.totalorder %s123, %s126
    %p135 = scmp.eq.s32.totalorder %s38, 3
    %p136 = por %p134, %p135
    %p137 = scmp.ne.s32.totalorder %s126, %s127
    %p138 = scmp.eq.s32.totalorder %s38, 0
    %p139 = por %p137, %p138
    %p140 = scmp.ne.s32.totalorder %s126, %s127
    %p141 = scmp.eq.s32.totalorder %s39, 3
    %p142 = por %p140, %p141
    %p144 = scmp.ne.s32.totalorder %s127, %s143
    %p145 = scmp.eq.s32.totalorder %s39, 0
    %p146 = por %p144, %p145
    %s147 = ssub.s32 %s41, %s48
    %p148 = scmp.eq.s32.totalorder %s147, 0
    %s150 = sadd.s32 %s149, 1
    %s151 = scalar_select %p148, %s149, %s150
    %p154 = pneg %p148
    %p155 = scmp.eq.s32.totalorder %s33, 3
    %p156 = por %p154, %p155
    %p157 = scmp.ne.s32.totalorder %s149, %s152
    %p158 = scmp.eq.s32.totalorder %s33, 0
    %p159 = por %p157, %p158
    %p160 = scmp.ne.s32.totalorder %s149, %s152
    %p161 = scmp.eq.s32.totalorder %s38, 3
    %p162 = por %p160, %p161
    %p163 = scmp.ne.s32.totalorder %s152, %s153
    %p164 = scmp.eq.s32.totalorder %s38, 0
    %p165 = por %p163, %p164
    %p166 = scmp.ne.s32.totalorder %s152, %s153
    %p167 = scmp.eq.s32.totalorder %s39, 3
    %p168 = por %p166, %p167
    %p170 = scmp.ne.s32.totalorder %s153, %s169
    %p171 = scmp.eq.s32.totalorder %s39, 0
    %p172 = por %p170, %p171
    %s173 = ssub.s32 %s41, %s48
    %p174 = scmp.eq.s32.totalorder %s173, 0
    %s176 = sadd.s32 %s175, 1
    %s177 = scalar_select %p174, %s175, %s176
    %p180 = pneg %p174
    %p181 = scmp.eq.s32.totalorder %s33, 3
    %p182 = por %p180, %p181
    %p183 = scmp.ne.s32.totalorder %s175, %s178
    %p184 = scmp.eq.s32.totalorder %s33, 0
    %p185 = por %p183, %p184
    %p186 = scmp.ne.s32.totalorder %s175, %s178
    %p187 = scmp.eq.s32.totalorder %s38, 3
    %p188 = por %p186, %p187
    %p189 = scmp.ne.s32.totalorder %s178, %s179
    %p190 = scmp.eq.s32.totalorder %s38, 0
    %p191 = por %p189, %p190
    %p192 = scmp.ne.s32.totalorder %s178, %s179
    %p193 = scmp.eq.s32.totalorder %s39, 3
    %p194 = por %p192, %p193
    %p196 = scmp.ne.s32.totalorder %s179, %s195
    %p197 = scmp.eq.s32.totalorder %s39, 0
    %p198 = por %p196, %p197
    %s199 = ssub.s32 %s41, %s48
    %p200 = scmp.eq.s32.totalorder %s199, 0
    %s202 = sadd.s32 %s201, 1
    %s203 = scalar_select %p200, %s201, %s202
    %p206 = pneg %p200
    %p207 = scmp.eq.s32.totalorder %s33, 3
    %p208 = por %p206, %p207
    %p209 = scmp.ne.s32.totalorder %s201, %s204
    %p210 = scmp.eq.s32.totalorder %s33, 0
    %p211 = por %p209, %p210
    %p212 = scmp.ne.s32.totalorder %s201, %s204
    %p213 = scmp.eq.s32.totalorder %s38, 3
    %p214 = por %p212, %p213
    %p215 = scmp.ne.s32.totalorder %s204, %s205
    %p216 = scmp.eq.s32.totalorder %s38, 0
    %p217 = por %p215, %p216
    %p218 = scmp.ne.s32.totalorder %s204, %s205
    %p219 = scmp.eq.s32.totalorder %s39, 3
    %p220 = por %p218, %p219
    %p222 = scmp.ne.s32.totalorder %s205, %s221
    %p223 = scmp.eq.s32.totalorder %s39, 0
    %p224 = por %p222, %p223
    %s225 = ssub.s32 %s41, %s48
    %p226 = scmp.eq.s32.totalorder %s225, 0
    %s228 = sadd.s32 %s227, 1
    %s229 = scalar_select %p226, %s227, %s228
    %p232 = pneg %p226
    %p233 = scmp.eq.s32.totalorder %s33, 3
    %p234 = por %p232, %p233
    %p235 = scmp.ne.s32.totalorder %s227, %s230
    %p236 = scmp.eq.s32.totalorder %s33, 0
    %p237 = por %p235, %p236
    %p238 = scmp.ne.s32.totalorder %s227, %s230
    %p239 = scmp.eq.s32.totalorder %s38, 3
    %p240 = por %p238, %p239
    %p241 = scmp.ne.s32.totalorder %s230, %s231
    %p242 = scmp.eq.s32.totalorder %s38, 0
    %p243 = por %p241, %p242
    %p244 = scmp.ne.s32.totalorder %s230, %s231
    %p245 = scmp.eq.s32.totalorder %s39, 3
    %p246 = por %p244, %p245
    %p248 = scmp.ne.s32.totalorder %s231, %s247
    %p249 = scmp.eq.s32.totalorder %s39, 0
    %p250 = por %p248, %p249
    %s251 = ssub.s32 %s41, %s48
    %p252 = scmp.eq.s32.totalorder %s251, 0
    %s254 = sadd.s32 %s253, 1
    %s255 = scalar_select %p252, %s253, %s254
    %p258 = pneg %p252
    %p259 = scmp.eq.s32.totalorder %s33, 3
    %p260 = por %p258, %p259
    %p261 = scmp.ne.s32.totalorder %s253, %s256
    %p262 = scmp.eq.s32.totalorder %s33, 0
    %p263 = por %p261, %p262
    %p264 = scmp.ne.s32.totalorder %s253, %s256
    %p265 = scmp.eq.s32.totalorder %s38, 3
    %p266 = por %p264, %p265
    %p267 = scmp.ne.s32.totalorder %s256, %s257
    %p268 = scmp.eq.s32.totalorder %s38, 0
    %p269 = por %p267, %p268
    %p270 = scmp.ne.s32.totalorder %s256, %s257
    %p271 = scmp.eq.s32.totalorder %s39, 3
    %p272 = por %p270, %p271
    %p274 = scmp.ne.s32.totalorder %s257, %s273
    %p275 = scmp.eq.s32.totalorder %s39, 0
    %p276 = por %p274, %p275
    %s277 = ssub.s32 %s41, %s48
    %p278 = scmp.eq.s32.totalorder %s277, 0
    %s280 = sadd.s32 %s279, 1
    %s281 = scalar_select %p278, %s279, %s280
    %p284 = pneg %p278
    %p285 = scmp.eq.s32.totalorder %s33, 3
    %p286 = por %p284, %p285
    %p287 = scmp.ne.s32.totalorder %s279, %s282
    %p288 = scmp.eq.s32.totalorder %s33, 0
    %p289 = por %p287, %p288
    %p290 = scmp.ne.s32.totalorder %s279, %s282
    %p291 = scmp.eq.s32.totalorder %s38, 3
    %p292 = por %p290, %p291
    %p293 = scmp.ne.s32.totalorder %s282, %s283
    %p294 = scmp.eq.s32.totalorder %s38, 0
    %p295 = por %p293, %p294
    %p296 = scmp.ne.s32.totalorder %s282, %s283
    %p297 = scmp.eq.s32.totalorder %s39, 3
    %p298 = por %p296, %p297
    %p300 = scmp.ne.s32.totalorder %s283, %s299
    %p301 = scmp.eq.s32.totalorder %s39, 0
    %p302 = por %p300, %p301
    %s303 = ssub.s32 %s41, %s48
    %p304 = scmp.eq.s32.totalorder %s303, 0
    %s306 = sadd.s32 %s305, 1
    %s307 = scalar_select %p304, %s305, %s306
    %p310 = pneg %p304
    %p311 = scmp.eq.s32.totalorder %s33, 3
    %p312 = por %p310, %p311
    %p313 = scmp.ne.s32.totalorder %s305, %s308
    %p314 = scmp.eq.s32.totalorder %s33, 0
    %p315 = por %p313, %p314
    %p316 = scmp.ne.s32.totalorder %s305, %s308
    %p317 = scmp.eq.s32.totalorder %s38, 3
    %p318 = por %p316, %p317
    %p319 = scmp.ne.s32.totalorder %s308, %s309
    %p320 = scmp.eq.s32.totalorder %s38, 0
    %p321 = por %p319, %p320
    %p322 = scmp.ne.s32.totalorder %s308, %s309
    %p323 = scmp.eq.s32.totalorder %s39, 3
    %p324 = por %p322, %p323
    %p326 = scmp.ne.s32.totalorder %s309, %s325
    %p327 = scmp.eq.s32.totalorder %s39, 0
    %p328 = por %p326, %p327
    %s329 = ssub.s32 %s41, %s48
    %p330 = scmp.eq.s32.totalorder %s329, 0
    %s332 = sadd.s32 %s331, 1
    %s333 = scalar_select %p330, %s331, %s332
    %p336 = pneg %p330
    %p337 = scmp.eq.s32.totalorder %s33, 3
    %p338 = por %p336, %p337
    %p339 = scmp.ne.s32.totalorder %s331, %s334
    %p340 = scmp.eq.s32.totalorder %s33, 0
    %p341 = por %p339, %p340
    %p342 = scmp.ne.s32.totalorder %s331, %s334
    %p343 = scmp.eq.s32.totalorder %s38, 3
    %p344 = por %p342, %p343
    %p345 = scmp.ne.s32.totalorder %s334, %s335
    %p346 = scmp.eq.s32.totalorder %s38, 0
    %p347 = por %p345, %p346
    %p348 = scmp.ne.s32.totalorder %s334, %s335
    %p349 = scmp.eq.s32.totalorder %s39, 3
    %p350 = por %p348, %p349
    %p352 = scmp.ne.s32.totalorder %s335, %s351
    %p353 = scmp.eq.s32.totalorder %s39, 0
    %p354 = por %p352, %p353
    %s355 = ssub.s32 %s41, %s48
    %p356 = scmp.eq.s32.totalorder %s355, 0
    %s358 = sadd.s32 %s357, 1
    %s359 = scalar_select %p356, %s357, %s358
    %p362 = pneg %p356
    %p363 = scmp.eq.s32.totalorder %s33, 3
    %p364 = por %p362, %p363
    %p365 = scmp.ne.s32.totalorder %s357, %s360
    %p366 = scmp.eq.s32.totalorder %s33, 0
    %p367 = por %p365, %p366
    %p368 = scmp.ne.s32.totalorder %s357, %s360
    %p369 = scmp.eq.s32.totalorder %s38, 3
    %p370 = por %p368, %p369
    %p371 = scmp.ne.s32.totalorder %s360, %s361
    %p372 = scmp.eq.s32.totalorder %s38, 0
    %p373 = por %p371, %p372
    %p374 = scmp.ne.s32.totalorder %s360, %s361
    %p375 = scmp.eq.s32.totalorder %s39, 3
    %p376 = por %p374, %p375
    %p378 = scmp.ne.s32.totalorder %s361, %s377
    %p379 = scmp.eq.s32.totalorder %s39, 0
    %p380 = por %p378, %p379
    %s381 = ssub.s32 %s41, %s48
    %p382 = scmp.eq.s32.totalorder %s381, 0
    %s384 = sadd.s32 %s383, 1
    %s385 = scalar_select %p382, %s383, %s384
    %p388 = pneg %p382
    %p389 = scmp.eq.s32.totalorder %s33, 3
    %p390 = por %p388, %p389
    %p391 = scmp.ne.s32.totalorder %s383, %s386
    %p392 = scmp.eq.s32.totalorder %s33, 0
    %p393 = por %p391, %p392
    %p394 = scmp.ne.s32.totalorder %s383, %s386
    %p395 = scmp.eq.s32.totalorder %s38, 3
    %p396 = por %p394, %p395
    %p397 = scmp.ne.s32.totalorder %s386, %s387
    %p398 = scmp.eq.s32.totalorder %s38, 0
    %p399 = por %p397, %p398
    %p400 = scmp.ne.s32.totalorder %s386, %s387
    %p401 = scmp.eq.s32.totalorder %s39, 3
    %p402 = por %p400, %p401
    %p404 = scmp.ne.s32.totalorder %s387, %s403
    %p405 = scmp.eq.s32.totalorder %s39, 0
    %p406 = por %p404, %p405
    %s407 = ssub.s32 %s41, %s48
    %p408 = scmp.eq.s32.totalorder %s407, 0
    %s410 = sadd.s32 %s409, 1
    %s411 = scalar_select %p408, %s409, %s410
    %p414 = pneg %p408
    %p415 = scmp.eq.s32.totalorder %s33, 3
    %p416 = por %p414, %p415
    %p417 = scmp.ne.s32.totalorder %s409, %s412
    %p418 = scmp.eq.s32.totalorder %s33, 0
    %p419 = por %p417, %p418
    %p420 = scmp.ne.s32.totalorder %s409, %s412
    %p421 = scmp.eq.s32.totalorder %s38, 3
    %p422 = por %p420, %p421
    %p423 = scmp.ne.s32.totalorder %s412, %s413
    %p424 = scmp.eq.s32.totalorder %s38, 0
    %p425 = por %p423, %p424
    %p426 = scmp.ne.s32.totalorder %s412, %s413
    %p427 = scmp.eq.s32.totalorder %s39, 3
    %p428 = por %p426, %p427
    %p430 = scmp.ne.s32.totalorder %s413, %s429
    %p431 = scmp.eq.s32.totalorder %s39, 0
    %p432 = por %p430, %p431
    %s434 = sadd.s32 %s433, 1
    %p437 = scmp.eq.s32.totalorder %s33, 3
    %p438 = scmp.ne.s32.totalorder %s433, %s435
    %p439 = scmp.eq.s32.totalorder %s33, 0
    %p440 = por %p438, %p439
    %p441 = scmp.ne.s32.totalorder %s433, %s435
    %p442 = scmp.eq.s32.totalorder %s38, 3
    %p443 = por %p441, %p442
    %p444 = scmp.ne.s32.totalorder %s435, %s436
    %p445 = scmp.eq.s32.totalorder %s38, 0
    %p446 = por %p444, %p445
    %p447 = scmp.ne.s32.totalorder %s435, %s436
    %p448 = scmp.eq.s32.totalorder %s39, 3
    %p449 = por %p447, %p448
    %p451 = scmp.ne.s32.totalorder %s436, %s450
    %p452 = scmp.eq.s32.totalorder %s39, 0
    %p453 = por %p451, %p452
    %s455 = sadd.s32 %s454, 1
    %p458 = scmp.eq.s32.totalorder %s33, 3
    %p459 = scmp.ne.s32.totalorder %s454, %s456
    %p460 = scmp.eq.s32.totalorder %s33, 0
    %p461 = por %p459, %p460
    %p462 = scmp.ne.s32.totalorder %s454, %s456
    %p463 = scmp.eq.s32.totalorder %s38, 3
    %p464 = por %p462, %p463
    %p465 = scmp.ne.s32.totalorder %s456, %s457
    %p466 = scmp.eq.s32.totalorder %s38, 0
    %p467 = por %p465, %p466
    %p468 = scmp.ne.s32.totalorder %s456, %s457
    %p469 = scmp.eq.s32.totalorder %s39, 3
    %p470 = por %p468, %p469
    %p472 = scmp.ne.s32.totalorder %s457, %s471
    %p473 = scmp.eq.s32.totalorder %s39, 0
    %p474 = por %p472, %p473
    %s476 = sadd.s32 %s475, 1
    %p479 = scmp.eq.s32.totalorder %s33, 3
    %p480 = scmp.ne.s32.totalorder %s475, %s477
    %p481 = scmp.eq.s32.totalorder %s33, 0
    %p482 = por %p480, %p481
    %p483 = scmp.ne.s32.totalorder %s475, %s477
    %p484 = scmp.eq.s32.totalorder %s38, 3
    %p485 = por %p483, %p484
    %p486 = scmp.ne.s32.totalorder %s477, %s478
    %p487 = scmp.eq.s32.totalorder %s38, 0
    %p488 = por %p486, %p487
    %p489 = scmp.ne.s32.totalorder %s477, %s478
    %p490 = scmp.eq.s32.totalorder %s39, 3
    %p491 = por %p489, %p490
    %p493 = scmp.ne.s32.totalorder %s478, %s492
    %p494 = scmp.eq.s32.totalorder %s39, 0
    %p495 = por %p493, %p494
    %s496 = ssub.s32 %s40, %s52
    %p497 = scmp.eq.s32.totalorder %s496, 0
    %s499 = sadd.s32 %s498, 1
    %s500 = scalar_select %p497, %s498, %s499
    %p503 = pneg %p497
    %p504 = scmp.eq.s32.totalorder %s33, 3
    %p505 = por %p503, %p504
    %p506 = scmp.ne.s32.totalorder %s498, %s501
    %p507 = scmp.eq.s32.totalorder %s33, 0
    %p508 = por %p506, %p507
    %p509 = scmp.ne.s32.totalorder %s498, %s501
    %p510 = scmp.eq.s32.totalorder %s38, 3
    %p511 = por %p509, %p510
    %p512 = scmp.ne.s32.totalorder %s501, %s502
    %p513 = scmp.eq.s32.totalorder %s38, 0
    %p514 = por %p512, %p513
    %p515 = scmp.ne.s32.totalorder %s501, %s502
    %p516 = scmp.eq.s32.totalorder %s39, 3
    %p517 = por %p515, %p516
    %p519 = scmp.ne.s32.totalorder %s502, %s518
    %p520 = scmp.eq.s32.totalorder %s39, 0
    %p521 = por %p519, %p520
    %p522 = scmp.le.s32.totalorder 1, %s33
    %p523 = scmp.lt.s32.totalorder %s33, 5
    %p524 = pnand %p522, %p523
    %p525 = pneg %p524
    // Predicated region
    $region9: #{_forward_numeric.4} parent=5 // pred_check
      _
    $region10: #{_forward_numeric.4} parent=5 // pred_check_branch
      %527 = sbr.rel (%p524) target = $region12
    $region11: #{_forward_numeric.4} parent=5 // pred_region
      %s528 = ssub.s32 %s33, 1
      // Predicated region
      $region13: #{_forward_numeric.4} parent=11 // pred_check
        %p529 = pneg %p92
      $region14: #{_forward_numeric.4} parent=11 // pred_check_branch
        %531 = sbr.rel (%p529) target = $region16
      $region15: #{_forward_numeric.4} parent=11 // pred_region
        _
      $region16: #{_forward_numeric.4} parent=11 // pred_fallthru
        _
      // Predicated region
      $region17: #{_forward_numeric.4} parent=11 // pred_check
        %p532 = pneg %p113
      $region18: #{_forward_numeric.4} parent=11 // pred_check_branch
        %534 = sbr.rel (%p532) target = $region20
      $region19: #{_forward_numeric.4} parent=11 // pred_region
        _
      $region20: #{_forward_numeric.4} parent=11 // pred_fallthru
        _
      // Predicated region
      $region21: #{_forward_numeric.4} parent=11 // pred_check
        %p535 = pneg %p446
      $region22: #{_forward_numeric.4} parent=11 // pred_check_branch
        %537 = sbr.rel (%p535) target = $region24
      $region23: #{_forward_numeric.4} parent=11 // pred_region
        _
      $region24: #{_forward_numeric.4} parent=11 // pred_fallthru
        _
      // Predicated region
      $region25: #{_forward_numeric.4} parent=11 // pred_check
        %p538 = pneg %p467
      $region26: #{_forward_numeric.4} parent=11 // pred_check_branch
        %540 = sbr.rel (%p538) target = $region28
      $region27: #{_forward_numeric.4} parent=11 // pred_region
        _
      $region28: #{_forward_numeric.4} parent=11 // pred_fallthru
        _
      // Predicated region
      $region29: #{_forward_numeric.4} parent=11 // pred_check
        %p541 = pneg %p488
      $region30: #{_forward_numeric.4} parent=11 // pred_check_branch
        %543 = sbr.rel (%p541) target = $region32
      $region31: #{_forward_numeric.4} parent=11 // pred_region
        _
      $region32: #{_forward_numeric.4} parent=11 // pred_fallthru
        _
    $region12: #{_forward_numeric.4} parent=5 // pred_fallthru
      _
    %p544 = scmp.lt.s32.totalorder %s33, 4
    // Predicated region
    $region33: #{_forward_numeric.4} parent=5 // pred_check
      %p545 = pneg %p544
    $region34: #{_forward_numeric.4} parent=5 // pred_check_branch
      %547 = sbr.rel (%p545) target = $region36
    $region35: #{_forward_numeric.4} parent=5 // pred_region
      // Predicated region
      $region37: #{_forward_numeric.4} parent=35 // pred_check
        %p548 = pneg %p65
      $region38: #{_forward_numeric.4} parent=35 // pred_check_branch
        %550 = sbr.rel (%p548) target = $region40
      $region39: #{_forward_numeric.4} parent=35 // pred_region
        %p551 = scmp.lt.s32.totalorder %s40, 1
        %s552 = scalar_select %p551, %s40, 1
        %s553 = smul.addr %s552, 8
        %s554 = scalar_lea.vmem %s1, %s553
      $region40: #{_forward_numeric.4} parent=35 // pred_fallthru
        _
      // Predicated region
      $region41: #{_forward_numeric.4} parent=35 // pred_check
        %p555 = pneg %p133
      $region42: #{_forward_numeric.4} parent=35 // pred_check_branch
        %557 = sbr.rel (%p555) target = $region44
      $region43: #{_forward_numeric.4} parent=35 // pred_region
        %p558 = scmp.lt.s32.totalorder %s41, 1
        %s559 = scalar_select %p558, %s41, 1
        %s560 = scalar_lea.vmem %s4, %s559
      $region44: #{_forward_numeric.4} parent=35 // pred_fallthru
        _
      // Predicated region
      $region45: #{_forward_numeric.4} parent=35 // pred_check
        %p561 = pneg %p159
      $region46: #{_forward_numeric.4} parent=35 // pred_check_branch
        %563 = sbr.rel (%p561) target = $region48
      $region47: #{_forward_numeric.4} parent=35 // pred_region
        %p564 = scmp.lt.s32.totalorder %s41, 1
        %s565 = scalar_select %p564, %s41, 1
        %s566 = scalar_lea.vmem %s5, %s565
      $region48: #{_forward_numeric.4} parent=35 // pred_fallthru
        _
      // Predicated region
      $region49: #{_forward_numeric.4} parent=35 // pred_check
        %p567 = pneg %p185
      $region50: #{_forward_numeric.4} parent=35 // pred_check_branch
        %569 = sbr.rel (%p567) target = $region52
      $region51: #{_forward_numeric.4} parent=35 // pred_region
        %p570 = scmp.lt.s32.totalorder %s41, 1
        %s571 = scalar_select %p570, %s41, 1
        %s572 = smul.addr %s571, 4
        %s573 = smul.addr %s572, 4
        %s574 = scalar_lea.vmem %s6, %s573
      $region52: #{_forward_numeric.4} parent=35 // pred_fallthru
        _
      // Predicated region
      $region53: #{_forward_numeric.4} parent=35 // pred_check
        %p575 = pneg %p211
      $region54: #{_forward_numeric.4} parent=35 // pred_check_branch
        %577 = sbr.rel (%p575) target = $region56
      $region55: #{_forward_numeric.4} parent=35 // pred_region
        %p578 = scmp.lt.s32.totalorder %s41, 1
        %s579 = scalar_select %p578, %s41, 1
        %s580 = scalar_lea.vmem %s7, %s579
      $region56: #{_forward_numeric.4} parent=35 // pred_fallthru
        _
      // Predicated region
      $region57: #{_forward_numeric.4} parent=35 // pred_check
        %p581 = pneg %p237
      $region58: #{_forward_numeric.4} parent=35 // pred_check_branch
        %583 = sbr.rel (%p581) target = $region60
      $region59: #{_forward_numeric.4} parent=35 // pred_region
        %p584 = scmp.lt.s32.totalorder %s41, 1
        %s585 = scalar_select %p584, %s41, 1
        %s586 = smul.addr %s585, 4
        %s587 = smul.addr %s586, 4
        %s588 = scalar_lea.vmem %s8, %s587
      $region60: #{_forward_numeric.4} parent=35 // pred_fallthru
        _
      // Predicated region
      $region61: #{_forward_numeric.4} parent=35 // pred_check
        %p589 = pneg %p263
      $region62: #{_forward_numeric.4} parent=35 // pred_check_branch
        %591 = sbr.rel (%p589) target = $region64
      $region63: #{_forward_numeric.4} parent=35 // pred_region
        %p592 = scmp.lt.s32.totalorder %s41, 1
        %s593 = scalar_select %p592, %s41, 1
        %s594 = scalar_lea.vmem %s9, %s593
      $region64: #{_forward_numeric.4} parent=35 // pred_fallthru
        _
      // Predicated region
      $region65: #{_forward_numeric.4} parent=35 // pred_check
        %p595 = pneg %p289
      $region66: #{_forward_numeric.4} parent=35 // pred_check_branch
        %597 = sbr.rel (%p595) target = $region68
      $region67: #{_forward_numeric.4} parent=35 // pred_region
        %p598 = scmp.lt.s32.totalorder %s41, 1
        %s599 = scalar_select %p598, %s41, 1
        %s600 = scalar_lea.vmem %s10, %s599
      $region68: #{_forward_numeric.4} parent=35 // pred_fallthru
        _
      // Predicated region
      $region69: #{_forward_numeric.4} parent=35 // pred_check
        %p601 = pneg %p315
      $region70: #{_forward_numeric.4} parent=35 // pred_check_branch
        %603 = sbr.rel (%p601) target = $region72
      $region71: #{_forward_numeric.4} parent=35 // pred_region
        %p604 = scmp.lt.s32.totalorder %s41, 1
        %s605 = scalar_select %p604, %s41, 1
        %s606 = scalar_lea.vmem %s11, %s605
      $region72: #{_forward_numeric.4} parent=35 // pred_fallthru
        _
      // Predicated region
      $region73: #{_forward_numeric.4} parent=35 // pred_check
        %p607 = pneg %p341
      $region74: #{_forward_numeric.4} parent=35 // pred_check_branch
        %609 = sbr.rel (%p607) target = $region76
      $region75: #{_forward_numeric.4} parent=35 // pred_region
        %p610 = scmp.lt.s32.totalorder %s41, 1
        %s611 = scalar_select %p610, %s41, 1
        %s612 = smul.addr %s611, 4
        %s613 = smul.addr %s612, 4
        %s614 = scalar_lea.vmem %s12, %s613
      $region76: #{_forward_numeric.4} parent=35 // pred_fallthru
        _
      // Predicated region
      $region77: #{_forward_numeric.4} parent=35 // pred_check
        %p615 = pneg %p367
      $region78: #{_forward_numeric.4} parent=35 // pred_check_branch
        %617 = sbr.rel (%p615) target = $region80
      $region79: #{_forward_numeric.4} parent=35 // pred_region
        %p618 = scmp.lt.s32.totalorder %s41, 1
        %s619 = scalar_select %p618, %s41, 1
        %s620 = scalar_lea.vmem %s13, %s619
      $region80: #{_forward_numeric.4} parent=35 // pred_fallthru
        _
      // Predicated region
      $region81: #{_forward_numeric.4} parent=35 // pred_check
        %p621 = pneg %p393
      $region82: #{_forward_numeric.4} parent=35 // pred_check_branch
        %623 = sbr.rel (%p621) target = $region84
      $region83: #{_forward_numeric.4} parent=35 // pred_region
        %p624 = scmp.lt.s32.totalorder %s41, 1
        %s625 = scalar_select %p624, %s41, 1
        %s626 = smul.addr %s625, 16
        %s627 = smul.addr %s626, 4
        %s628 = scalar_lea.vmem %s14, %s627
      $region84: #{_forward_numeric.4} parent=35 // pred_fallthru
        _
      // Predicated region
      $region85: #{_forward_numeric.4} parent=35 // pred_check
        %p629 = pneg %p419
      $region86: #{_forward_numeric.4} parent=35 // pred_check_branch
        %631 = sbr.rel (%p629) target = $region88
      $region87: #{_forward_numeric.4} parent=35 // pred_region
        %p632 = scmp.lt.s32.totalorder %s41, 1
        %s633 = scalar_select %p632, %s41, 1
        %s634 = scalar_lea.vmem %s15, %s633
      $region88: #{_forward_numeric.4} parent=35 // pred_fallthru
        _
    $region36: #{_forward_numeric.4} parent=5 // pred_fallthru
      _
    %p635 = scmp.le.s32.totalorder 1, %s33
    %p636 = scmp.lt.s32.totalorder %s33, 5
    %p637 = pnand %p635, %p636
    %p638 = pneg %p637
    // Predicated region
    $region89: #{_forward_numeric.4} parent=5 // pred_check
      _
    $region90: #{_forward_numeric.4} parent=5 // pred_check_branch
      %640 = sbr.rel (%p637) target = $region92
    $region91: #{_forward_numeric.4} parent=5 // pred_region
      %s641 = ssub.s32 %s33, 1
      %p642 = scmp.lt.s32.totalorder %s42, 1
      %s643 = scalar_select %p642, %s42, 1
      %s644 = smul.addr %s643, 8
      %s645 = scalar_lea.vmem %s1, %s644
      %p646 = pneg %p71
      %p647 = pneg %p68
      %p648 = pneg %p92
      %p649 = pneg %p89
      %p650 = pneg %p113
      %p651 = pneg %p110
      %p652 = scmp.lt.s32.totalorder %s43, 1
      %s653 = scalar_select %p652, %s43, 1
      %s654 = scalar_lea.vmem %s4, %s653
      %p655 = pneg %p139
      %p656 = pneg %p136
      %p657 = scmp.lt.s32.totalorder %s43, 1
      %s658 = scalar_select %p657, %s43, 1
      %s659 = scalar_lea.vmem %s5, %s658
      %p660 = pneg %p165
      %p661 = pneg %p162
      %p662 = scmp.lt.s32.totalorder %s43, 1
      %s663 = scalar_select %p662, %s43, 1
      %s664 = smul.addr %s663, 4
      %s665 = smul.addr %s664, 4
      %s666 = scalar_lea.vmem %s6, %s665
      %p667 = pneg %p191
      %p668 = pneg %p188
      %p669 = scmp.lt.s32.totalorder %s43, 1
      %s670 = scalar_select %p669, %s43, 1
      %s671 = scalar_lea.vmem %s7, %s670
      %p672 = pneg %p217
      %p673 = pneg %p214
      %p674 = scmp.lt.s32.totalorder %s43, 1
      %s675 = scalar_select %p674, %s43, 1
      %s676 = smul.addr %s675, 4
      %s677 = smul.addr %s676, 4
      %s678 = scalar_lea.vmem %s8, %s677
      %p679 = pneg %p243
      %p680 = pneg %p240
      %p681 = scmp.lt.s32.totalorder %s43, 1
      %s682 = scalar_select %p681, %s43, 1
      %s683 = scalar_lea.vmem %s9, %s682
      %p684 = pneg %p269
      %p685 = pneg %p266
      %p686 = scmp.lt.s32.totalorder %s43, 1
      %s687 = scalar_select %p686, %s43, 1
      %s688 = scalar_lea.vmem %s10, %s687
      %p689 = pneg %p295
      %p690 = pneg %p292
      %p691 = scmp.lt.s32.totalorder %s43, 1
      %s692 = scalar_select %p691, %s43, 1
      %s693 = scalar_lea.vmem %s11, %s692
      %p694 = pneg %p321
      %p695 = pneg %p318
      %p696 = scmp.lt.s32.totalorder %s43, 1
      %s697 = scalar_select %p696, %s43, 1
      %s698 = smul.addr %s697, 4
      %s699 = smul.addr %s698, 4
      %s700 = scalar_lea.vmem %s12, %s699
      %p701 = pneg %p347
      %p702 = pneg %p344
      %p703 = scmp.lt.s32.totalorder %s43, 1
      %s704 = scalar_select %p703, %s43, 1
      %s705 = scalar_lea.vmem %s13, %s704
      %p706 = pneg %p373
      %p707 = pneg %p370
      %p708 = scmp.lt.s32.totalorder %s43, 1
      %s709 = scalar_select %p708, %s43, 1
      %s710 = smul.addr %s709, 16
      %s711 = smul.addr %s710, 4
      %s712 = scalar_lea.vmem %s14, %s711
      %p713 = pneg %p399
      %p714 = pneg %p396
      %p715 = scmp.lt.s32.totalorder %s43, 1
      %s716 = scalar_select %p715, %s43, 1
      %s717 = scalar_lea.vmem %s15, %s716
      %p718 = pneg %p425
      %p719 = pneg %p422
      %p720 = pneg %p446
      %p721 = pneg %p443
      %p722 = pneg %p467
      %p723 = pneg %p464
      %p724 = pneg %p488
      %p725 = pneg %p485
      %p726 = pneg %p514
      %p727 = pneg %p511
      %p728 = scmp.lt.s32.totalorder %s42, 1
      %s729 = scalar_select %p728, %s42, 1
      %s730 = smul.addr %s729, 8
      %s731 = scalar_lea.vmem %s19, %s730
      %p732 = scmp.lt.s32.totalorder %s42, 1
      %s733 = scalar_select %p732, %s42, 1
      %s734 = smul.addr %s733, 8
      %s735 = scalar_lea.vmem %s1, %s734
      %p736 = scmp.lt.s32.totalorder %s43, 1
      %s737 = scalar_select %p736, %s43, 1
      %s738 = scalar_lea.vmem %s4, %s737
      %p739 = scmp.lt.s32.totalorder %s43, 1
      %s740 = scalar_select %p739, %s43, 1
      %s741 = scalar_lea.vmem %s5, %s740
      %p742 = scmp.lt.s32.totalorder %s43, 1
      %s743 = scalar_select %p742, %s43, 1
      %s744 = smul.addr %s743, 4
      %s745 = smul.addr %s744, 4
      %s746 = scalar_lea.vmem %s6, %s745
      %p747 = scmp.lt.s32.totalorder %s43, 1
      %s748 = scalar_select %p747, %s43, 1
      %s749 = scalar_lea.vmem %s7, %s748
      %p750 = scmp.lt.s32.totalorder %s43, 1
      %s751 = scalar_select %p750, %s43, 1
      %s752 = smul.addr %s751, 4
      %s753 = smul.addr %s752, 4
      %s754 = scalar_lea.vmem %s8, %s753
      %p755 = scmp.lt.s32.totalorder %s43, 1
      %s756 = scalar_select %p755, %s43, 1
      %s757 = scalar_lea.vmem %s9, %s756
      %p758 = scmp.lt.s32.totalorder %s43, 1
      %s759 = scalar_select %p758, %s43, 1
      %s760 = scalar_lea.vmem %s10, %s759
      %p761 = scmp.lt.s32.totalorder %s43, 1
      %s762 = scalar_select %p761, %s43, 1
      %s763 = scalar_lea.vmem %s11, %s762
      %p764 = scmp.lt.s32.totalorder %s43, 1
      %s765 = scalar_select %p764, %s43, 1
      %s766 = smul.addr %s765, 4
      %s767 = smul.addr %s766, 4
      %s768 = scalar_lea.vmem %s12, %s767
      %p769 = scmp.lt.s32.totalorder %s43, 1
      %s770 = scalar_select %p769, %s43, 1
      %s771 = scalar_lea.vmem %s13, %s770
      %p772 = scmp.lt.s32.totalorder %s43, 1
      %s773 = scalar_select %p772, %s43, 1
      %s774 = smul.addr %s773, 16
      %s775 = smul.addr %s774, 4
      %s776 = scalar_lea.vmem %s14, %s775
      %p777 = scmp.lt.s32.totalorder %s43, 1
      %s778 = scalar_select %p777, %s43, 1
      %s779 = scalar_lea.vmem %s15, %s778
      %p780 = scmp.lt.s32.totalorder %s42, 1
      %s781 = scalar_select %p780, %s42, 1
      %s782 = smul.addr %s781, 8
      %s783 = scalar_lea.vmem %s19, %s782
      %p785 = scmp.eq.s32.totalorder %s43, 0
      // Predicated region
      $region93: #{_forward_numeric.4} parent=91 // pred_check
        %p786 = pneg %p785
      $region94: #{_forward_numeric.4} parent=91 // pred_check_branch
        %788 = sbr.rel (%p786) target = $region96
      $region95: #{_forward_numeric.4} parent=91 // pred_region
        %v789 = vld [vmem:[%s735] sm:$0x1f]
        %v790 = vld [vmem:[%s2] sm:$0x1]
        %v791 = vld [vmem:[%s3] sm:$0x1]
        %vm792 = vcmask 258048
        %v793 = vsel %vm792, %v789, 0.0
        %794 = vadd.xlane.f32.xlu0 %v793
        %v795 = vpop.xlane.xlu0 %794
        %v796 = vrcp.pop 32.0
        %v797 = vmul.f32 32.0, %v796
        %v798 = vsub.f32 1.0, %v797
        %v799 = vmul.f32 %v796, %v798
        %v800 = vadd.f32 %v796, %v799
        %vm801 = vweird.f32 %v796
        %v802 = vsel %vm801, %v796, %v800
        %v803 = vmul.f32 %v795, %v802
        %v804 = vsub.f32 %v789, %v803
        %v805 = vmul.f32 %v804, %v804
        %v806 = vsel %vm792, %v805, 0.0
        %807 = vadd.xlane.f32.xlu0 %v806
        %v808 = vpop.xlane.xlu0 %807
        %v809 = vmul.f32 %v808, %v802
        %v810 = vadd.f32 %v809, 1e-05
        %v811 = vrsqrt.pop %v810
        %v812 = vmul.f32 %v811, %v810
        %v813 = vmul.f32 %v812, %v811
        %v814 = vmul.f32 0.5, %v813
        %v815 = vsub.f32 1.5, %v814
        %v816 = vmul.f32 %v811, %v815
        %vm817 = vweird.f32 %v810
        %vm818 = vweird.f32 %v811
        %vm819 = vmor %vm817, %vm818
        %v820 = vsel %vm819, %v811, %v816
        %v821 = vmul.f32 %v804, %v820
        %v823 = vperm.slane %v790, 0
        %v825 = vmul.f32 %v821, %v823
        %v827 = vperm.slane %v791, 0
        %v829 = vadd.f32 %v825, %v827
        %830 = vst.msk [vmem:[#allocation5] sm:$0x1f] %vm792, %v829
      $region96: #{_forward_numeric.4} parent=91 // pred_fallthru
        _
      %v831 = vld [vmem:[#allocation5] sm:$0x1f]
      %v832 = vld [vmem:[%s738] sm:$0x1]
      %v833 = vld [vmem:[%s741] sm:$0x1]
      %vm834 = vcmask 258048
      %v835 = vsel %vm834, %v831, 0.0
      %836 = vadd.xlane.f32.xlu0 %v835
      %v837 = vpop.xlane.xlu0 %836
      %v838 = vrcp.pop 32.0
      %v839 = vmul.f32 32.0, %v838
      %v840 = vsub.f32 1.0, %v839
      %v841 = vmul.f32 %v838, %v840
      %v842 = vadd.f32 %v838, %v841
      %vm843 = vweird.f32 %v838
      %v844 = vsel %vm843, %v838, %v842
      %v845 = vmul.f32 %v837, %v844
      %v846 = vsub.f32 %v831, %v845
      %v847 = vmul.f32 %v846, %v846
      %v848 = vsel %vm834, %v847, 0.0
      %849 = vadd.xlane.f32.xlu0 %v848
      %v850 = vpop.xlane.xlu0 %849
      %v851 = vmul.f32 %v850, %v844
      %v852 = vadd.f32 %v851, 1e-05
      %v853 = vrsqrt.pop %v852
      %v854 = vmul.f32 %v853, %v852
      %v855 = vmul.f32 %v854, %v853
      %v856 = vmul.f32 0.5, %v855
      %v857 = vsub.f32 1.5, %v856
      %v858 = vmul.f32 %v853, %v857
      %vm859 = vweird.f32 %v852
      %vm860 = vweird.f32 %v853
      %vm861 = vmor %vm859, %vm860
      %v862 = vsel %vm861, %v853, %v858
      %v863 = vmul.f32 %v846, %v862
      %v865 = vperm.slane %v832, 0
      %v867 = vmul.f32 %v863, %v865
      %v869 = vperm.slane %v833, 0
      %v871 = vadd.f32 %v867, %v869
      %v872 = vpack.c.bf16 %v871, %v871
      %v873 = vld [vmem:[%s746] sm:$0xf]
      %v874 = vld [vmem:[%s746 + $0x4] sm:$0xf]
      %v875 = vld [vmem:[%s746 + $0x8] sm:$0xf]
      %v876 = vld [vmem:[%s746 + $0xc] sm:$0xf]
      %v877 = vld [vmem:[%s749] sm:$0x1]
      %v879 = vperm.slane %v877, 0
      %v885 = vunpack.c.l.b16 %v873
      %v886 = vunpack.c.l.b16 %v874
      %v887 = vunpack.c.l.b16 %v875
      %v888 = vunpack.c.l.b16 %v876
      %v889 = vpack.c.b16 %v886, %v885
      %v890 = vpack.c.b16 %v888, %v887
      %vm893 = vcmask 261120
      %v895 = vsel %vm893, %v872, 0
      %897 = vmatpush.bf16.msra.mxu0 0
      %898 = vmatpush.bf16.msra.mxu0 0
      %899 = vmatpush.bf16.msra.mxu0 0
      %900 = vmatpush.bf16.msra.mxu0 0
      %901 = vmatpush.bf16.msra.mxu0 0
      %902 = vmatpush.bf16.msra.mxu0 0
      %903 = vmatpush.bf16.msra.mxu0 %v890
      %904 = vmatpush.bf16.msra.mxu0 %v889
      %905 = vmatmul.bf16.gmra.mxu0 %v895
      %v906 = vpop.f32.mrf.mxu0
      %v907 = vadd.f32 %v879, %v906
      %v908 = vpop.f32.mrf.mxu0
      %909 = vdwg.mxu0
      %vm910 = vcmask 782336
      %911 = vst.msk [vmem:[#allocation2] sm:$0x1f] %vm910, %v907
      %v912 = vld [vmem:[#allocation2] sm:$0x1f]
      %v913 = vmul.f32 %v912, 0.25
      %v914 = vpack.c.bf16 %v913, %v913
      %v915 = vpack.c.bf16 %v912, %v912
      %917 = vrot.lane.b32.xlu0 %v915, 96
      %v918 = vpop.permute.xlu0 %917
      %vm919 = vcmask 130048
      %v921 = vsel %vm919, %v914, 0
      %v924 = vsel %vm919, %v918, 0
      %926 = vmatpush.bf16.xpose.msra.mxu0 0
      %927 = vmatpush.bf16.xpose.msra.mxu0 0
      %928 = vmatpush.bf16.xpose.msra.mxu0 0
      %929 = vmatpush.bf16.xpose.msra.mxu0 0
      %930 = vmatpush.bf16.xpose.msra.mxu0 0
      %931 = vmatpush.bf16.xpose.msra.mxu0 0
      %932 = vmatpush.bf16.xpose.msra.mxu0 0
      %933 = vmatpush.bf16.xpose.msra.mxu0 %v924
      %934 = vmatmul.bf16.gmra.mxu0 %v921
      %v935 = vpop.f32.mrf.mxu0
      %v936 = vadd.f32 0.0, %v935
      %v937 = vpop.f32.mrf.mxu0
      %938 = vdwg.mxu0
      %vm939 = vcmask 36864
      %940 = vst.msk [vmem:[#allocation3] sm:$0x1f] %vm939, %v936
      %v941 = vld [vmem:[#allocation2] sm:$0x1f]
      %v942 = vmul.f32 %v941, 0.25
      %v943 = vpack.c.bf16 %v942, %v942
      %v944 = vpack.c.bf16 %v941, %v941
      %946 = vrot.lane.b32.xlu0 %v943, 112
      %v947 = vpop.permute.xlu0 %946
      %949 = vrot.lane.b32.xlu0 %v944, 80
      %v950 = vpop.permute.xlu0 %949
      %v952 = vsel %vm919, %v947, 0
      %v955 = vsel %vm919, %v950, 0
      %957 = vmatpush.bf16.xpose.msra.mxu0 0
      %958 = vmatpush.bf16.xpose.msra.mxu0 0
      %959 = vmatpush.bf16.xpose.msra.mxu0 0
      %960 = vmatpush.bf16.xpose.msra.mxu0 0
      %961 = vmatpush.bf16.xpose.msra.mxu0 0
      %962 = vmatpush.bf16.xpose.msra.mxu0 0
      %963 = vmatpush.bf16.xpose.msra.mxu0 0
      %964 = vmatpush.bf16.xpose.msra.mxu0 %v955
      %965 = vmatmul.bf16.gmra.mxu0 %v952
      %v966 = vpop.f32.mrf.mxu0
      %v967 = vadd.f32 0.0, %v966
      %v968 = vpop.f32.mrf.mxu0
      %969 = vdwg.mxu0
      %970 = vst.msk [vmem:[#allocation3 + $0x5] sm:$0x1f] %vm939, %v967
      %v971 = vld [vmem:[#allocation3] sm:$0xff]
      %v972 = vld [vmem:[#allocation3 + $0x8] sm:$0x3]
      %vm973 = vcmask 39936
      %v974 = vsel %vm973, %v971, -inf
      %975 = vmax.xlane.f32.xlu0 %v974
      %v976 = vpop.xlane.xlu0 %975
      %vm977 = vcmask 33792
      %v978 = vsel %vm977, %v972, -inf
      %979 = vmax.xlane.f32.xlu0 %v978
      %v980 = vpop.xlane.xlu0 %979
      %v981 = vsub.f32 %v971, %v976
      %v982 = vsub.f32 %v972, %v980
      %v983 = vmul.f32 %v981, 1.442695
      %v984 = vpow.pop %v983
      %v985 = vmul.f32 %v982, 1.442695
      %v986 = vpow.pop %v985
      %v987 = vsel %vm973, %v984, 0.0
      %988 = vadd.xlane.f32.xlu0 %v987
      %v989 = vpop.xlane.xlu0 %988
      %v990 = vsel %vm977, %v986, 0.0
      %991 = vadd.xlane.f32.xlu0 %v990
      %v992 = vpop.xlane.xlu0 %991
      %v993 = vrcp.pop %v989
      %v994 = vrcp.pop %v992
      %v995 = vmul.f32 %v984, %v993
      %v996 = vmul.f32 %v986, %v994
      %997 = vst.msk [vmem:[#allocation3] sm:$0xff] %vm973, %v995
      %998 = vst.msk [vmem:[#allocation3 + $0x8] sm:$0x3] %vm977, %v996
      %v999 = vld [vmem:[#allocation2] sm:$0x1f]
      %v1000 = vld [vmem:[#allocation3] sm:$0x1f]
      %v1001 = vpack.c.bf16 %v1000, %v1000
      %v1002 = vpack.c.bf16 %v999, %v999
      %1004 = vrot.lane.b32.xlu0 %v1002, 64
      %v1005 = vpop.permute.xlu0 %1004
      %v1007 = vsel %vm973, %v1001, 0
      %vm1009 = vcmask 1041408
      %vm1010 = vcmask 1042432
      %v1011 = vsel %vm1009, 4294967295, 65535
      %v1012 = vsel %vm1010, %v1011, 0
      %v1014 = vand.u32 %v1005, %v1012
      %1016 = vmatpush.bf16.msra.mxu0 0
      %1017 = vmatpush.bf16.msra.mxu0 0
      %1018 = vmatpush.bf16.msra.mxu0 0
      %1019 = vmatpush.bf16.msra.mxu0 0
      %1020 = vmatpush.bf16.msra.mxu0 0
      %1021 = vmatpush.bf16.msra.mxu0 0
      %1022 = vmatpush.bf16.msra.mxu0 0
      %1023 = vmatpush.bf16.msra.mxu0 %v1014
      %1024 = vmatmul.bf16.gmra.mxu0 %v1007
      %v1025 = vpop.f32.mrf.mxu0
      %v1026 = vadd.f32 0.0, %v1025
      %v1027 = vpop.f32.mrf.mxu0
      %1028 = vdwg.mxu0
      %vm1029 = vcmask 126976
      %1030 = vst.msk [vmem:[#allocation4] sm:$0x1f] %vm1029, %v1026
      %v1031 = vld [vmem:[#allocation2] sm:$0x1f]
      %v1032 = vld [vmem:[#allocation3 + $0x5] sm:$0x1f]
      %v1033 = vpack.c.bf16 %v1032, %v1032
      %v1034 = vpack.c.bf16 %v1031, %v1031
      %1036 = vrot.lane.b32.xlu0 %v1034, 48
      %v1037 = vpop.permute.xlu0 %1036
      %v1039 = vsel %vm973, %v1033, 0
      %v1042 = vand.u32 %v1037, %v1012
      %1044 = vmatpush.bf16.msra.mxu0 0
      %1045 = vmatpush.bf16.msra.mxu0 0
      %1046 = vmatpush.bf16.msra.mxu0 0
      %1047 = vmatpush.bf16.msra.mxu0 0
      %1048 = vmatpush.bf16.msra.mxu0 0
      %1049 = vmatpush.bf16.msra.mxu0 0
      %1050 = vmatpush.bf16.msra.mxu0 0
      %1051 = vmatpush.bf16.msra.mxu0 %v1042
      %1052 = vmatmul.bf16.gmra.mxu0 %v1039
      %v1053 = vpop.f32.mrf.mxu0
      %v1054 = vadd.f32 0.0, %v1053
      %v1055 = vpop.f32.mrf.mxu0
      %1056 = vdwg.mxu0
      %1058 = vrot.lane.b32.xlu0 %v1054, 16
      %v1059 = vpop.permute.xlu0 %1058
      %vm1061 = vcmask 258176
      %1062 = vst.msk [vmem:[#allocation4] sm:$0x1f] %vm1061, %v1059
      %v1063 = vld [vmem:[#allocation4] sm:$0x1f]
      %v1064 = vpack.c.bf16 %v1063, %v1063
      %v1065 = vld [vmem:[%s754] sm:$0xf]
      %v1066 = vld [vmem:[%s754 + $0x4] sm:$0xf]
      %v1067 = vld [vmem:[%s754 + $0x8] sm:$0xf]
      %v1068 = vld [vmem:[%s754 + $0xc] sm:$0xf]
      %v1073 = vunpack.c.l.b16 %v1065
      %v1074 = vunpack.c.l.b16 %v1066
      %v1075 = vunpack.c.l.b16 %v1067
      %v1076 = vunpack.c.l.b16 %v1068
      %v1077 = vpack.c.b16 %v1074, %v1073
      %v1078 = vpack.c.b16 %v1076, %v1075
      %v1082 = vsel %vm893, %v1064, 0
      %1084 = vmatpush.bf16.msra.mxu0 0
      %1085 = vmatpush.bf16.msra.mxu0 0
      %1086 = vmatpush.bf16.msra.mxu0 0
      %1087 = vmatpush.bf16.msra.mxu0 0
      %1088 = vmatpush.bf16.msra.mxu0 0
      %1089 = vmatpush.bf16.msra.mxu0 0
      %1090 = vmatpush.bf16.msra.mxu0 %v1078
      %1091 = vmatpush.bf16.msra.mxu0 %v1077
      %1092 = vmatmul.bf16.gmra.mxu0 %v1082
      %v1093 = vpop.f32.mrf.mxu0
      %v1094 = vadd.f32 0.0, %v1093
      %v1095 = vpop.f32.mrf.mxu0
      %1096 = vdwg.mxu0
      %v1097 = vadd.f32 %v831, %v1094
      %v1098 = vld [vmem:[%s757] sm:$0x1]
      %v1100 = vperm.slane %v1098, 0
      %v1102 = vadd.f32 %v1097, %v1100
      %v1103 = vld [vmem:[%s760] sm:$0x1]
      %v1104 = vld [vmem:[%s763] sm:$0x1]
      %v1105 = vsel %vm834, %v1102, 0.0
      %1106 = vadd.xlane.f32.xlu0 %v1105
      %v1107 = vpop.xlane.xlu0 %1106
      %v1108 = vmul.f32 %v1107, %v844
      %v1109 = vsub.f32 %v1102, %v1108
      %v1110 = vmul.f32 %v1109, %v1109
      %v1111 = vsel %vm834, %v1110, 0.0
      %1112 = vadd.xlane.f32.xlu0 %v1111
      %v1113 = vpop.xlane.xlu0 %1112
      %v1114 = vmul.f32 %v1113, %v844
      %v1115 = vadd.f32 %v1114, 1e-05
      %v1116 = vrsqrt.pop %v1115
      %v1117 = vmul.f32 %v1116, %v1115
      %v1118 = vmul.f32 %v1117, %v1116
      %v1119 = vmul.f32 0.5, %v1118
      %v1120 = vsub.f32 1.5, %v1119
      %v1121 = vmul.f32 %v1116, %v1120
      %vm1122 = vweird.f32 %v1115
      %vm1123 = vweird.f32 %v1116
      %vm1124 = vmor %vm1122, %vm1123
      %v1125 = vsel %vm1124, %v1116, %v1121
      %v1126 = vmul.f32 %v1109, %v1125
      %v1128 = vperm.slane %v1103, 0
      %v1130 = vmul.f32 %v1126, %v1128
      %v1132 = vperm.slane %v1104, 0
      %v1134 = vadd.f32 %v1130, %v1132
      %v1135 = vpack.c.bf16 %v1134, %v1134
      %v1136 = vld [vmem:[%s768] sm:$0xf]
      %v1137 = vld [vmem:[%s768 + $0x4] sm:$0xf]
      %v1138 = vld [vmem:[%s768 + $0x8] sm:$0xf]
      %v1139 = vld [vmem:[%s768 + $0xc] sm:$0xf]
      %v1140 = vld [vmem:[%s771] sm:$0x1]
      %v1142 = vperm.slane %v1140, 0
      %v1148 = vunpack.c.l.b16 %v1136
      %v1149 = vunpack.c.l.b16 %v1137
      %v1150 = vunpack.c.l.b16 %v1138
      %v1151 = vunpack.c.l.b16 %v1139
      %v1152 = vpack.c.b16 %v1149, %v1148
      %v1153 = vpack.c.b16 %v1151, %v1150
      %v1157 = vsel %vm893, %v1135, 0
      %1159 = vmatpush.bf16.msra.mxu0 0
      %1160 = vmatpush.bf16.msra.mxu0 0
      %1161 = vmatpush.bf16.msra.mxu0 0
      %1162 = vmatpush.bf16.msra.mxu0 0
      %1163 = vmatpush.bf16.msra.mxu0 0
      %1164 = vmatpush.bf16.msra.mxu0 0
      %1165 = vmatpush.bf16.msra.mxu0 %v1153
      %1166 = vmatpush.bf16.msra.mxu0 %v1152
      %1167 = vmatmul.bf16.gmra.mxu0 %v1157
      %v1168 = vpop.f32.mrf.mxu0
      %v1169 = vadd.f32 %v1142, %v1168
      %v1170 = vpop.f32.mrf.mxu0
      %1171 = vdwg.mxu0
      %v1172 = vmul.f32 %v1169, 1.702
      %v1173 = vxor.u32 %v1172, 2147483648
      %v1174 = vmul.f32 %v1173, 1.442695
      %v1175 = vpow.pop %v1174
      %v1176 = vadd.f32 %v1175, 1.0
      %v1177 = vrcp.pop %v1176
      %v1178 = vmul.f32 %v1176, %v1177
      %v1179 = vsub.f32 1.0, %v1178
      %v1180 = vmul.f32 %v1177, %v1179
      %v1181 = vadd.f32 %v1177, %v1180
      %vm1182 = vweird.f32 %v1176
      %vm1183 = vweird.f32 %v1177
      %vm1184 = vmor %vm1182, %vm1183
      %v1185 = vsel %vm1184, %v1177, %v1181
      %v1186 = vand.u32 2147483647, %v1176
      %vm1187 = vcmp.eq.f32.partialorder %v1186, 8.507059e+37
      %v1188 = vand.u32 %v1176, 2147483648
      %v1189 = vor.u32 1.1754944e-38, %v1188
      %v1190 = vsel %vm1187, %v1189, %v1185
      %v1191 = vmul.f32 1.0, %v1190
      %v1192 = vmul.f32 %v1169, %v1191
      %v1193 = vpack.c.bf16 %v1192, %v1192
      %v1194 = vld [vmem:[%s776] sm:$0xf]
      %v1195 = vld [vmem:[%s776 + $0x4] sm:$0xf]
      %v1196 = vld [vmem:[%s776 + $0x8] sm:$0xf]
      %v1197 = vld [vmem:[%s776 + $0xc] sm:$0xf]
      %v1198 = vld [vmem:[%s776 + $0x10] sm:$0xf]
      %v1199 = vld [vmem:[%s776 + $0x14] sm:$0xf]
      %v1200 = vld [vmem:[%s776 + $0x18] sm:$0xf]
      %v1201 = vld [vmem:[%s776 + $0x1c] sm:$0xf]
      %v1202 = vld [vmem:[%s776 + $0x20] sm:$0xf]
      %v1203 = vld [vmem:[%s776 + $0x24] sm:$0xf]
      %v1204 = vld [vmem:[%s776 + $0x28] sm:$0xf]
      %v1205 = vld [vmem:[%s776 + $0x2c] sm:$0xf]
      %v1206 = vld [vmem:[%s776 + $0x30] sm:$0xf]
      %v1207 = vld [vmem:[%s776 + $0x34] sm:$0xf]
      %v1208 = vld [vmem:[%s776 + $0x38] sm:$0xf]
      %v1209 = vld [vmem:[%s776 + $0x3c] sm:$0xf]
      %v1226 = vunpack.c.l.b16 %v1194
      %v1227 = vunpack.c.l.b16 %v1195
      %v1228 = vunpack.c.l.b16 %v1196
      %v1229 = vunpack.c.l.b16 %v1197
      %v1230 = vunpack.c.l.b16 %v1198
      %v1231 = vunpack.c.l.b16 %v1199
      %v1232 = vunpack.c.l.b16 %v1200
      %v1233 = vunpack.c.l.b16 %v1201
      %v1234 = vunpack.c.l.b16 %v1202
      %v1235 = vunpack.c.l.b16 %v1203
      %v1236 = vunpack.c.l.b16 %v1204
      %v1237 = vunpack.c.l.b16 %v1205
      %v1238 = vunpack.c.l.b16 %v1206
      %v1239 = vunpack.c.l.b16 %v1207
      %v1240 = vunpack.c.l.b16 %v1208
      %v1241 = vunpack.c.l.b16 %v1209
      %v1242 = vpack.c.b16 %v1227, %v1226
      %v1243 = vpack.c.b16 %v1229, %v1228
      %v1244 = vpack.c.b16 %v1231, %v1230
      %v1245 = vpack.c.b16 %v1233, %v1232
      %v1246 = vpack.c.b16 %v1235, %v1234
      %v1247 = vpack.c.b16 %v1237, %v1236
      %v1248 = vpack.c.b16 %v1239, %v1238
      %v1249 = vpack.c.b16 %v1241, %v1240
      %1258 = vmatpush.bf16.msra.mxu0 %v1249
      %1259 = vmatpush.bf16.msra.mxu0 %v1248
      %1260 = vmatpush.bf16.msra.mxu0 %v1247
      %1261 = vmatpush.bf16.msra.mxu0 %v1246
      %1262 = vmatpush.bf16.msra.mxu0 %v1245
      %1263 = vmatpush.bf16.msra.mxu0 %v1244
      %1264 = vmatpush.bf16.msra.mxu0 %v1243
      %1265 = vmatpush.bf16.msra.mxu0 %v1242
      %1266 = vmatmul.bf16.gmra.mxu0 %v1193
      %v1267 = vpop.f32.mrf.mxu0
      %v1268 = vadd.f32 0.0, %v1267
      %v1269 = vpop.f32.mrf.mxu0
      %1270 = vdwg.mxu0
      %v1271 = vadd.f32 %v1102, %v1268
      %v1272 = vld [vmem:[%s779] sm:$0x1]
      %v1274 = vperm.slane %v1272, 0
      %v1276 = vadd.f32 %v1271, %v1274
      %1277 = vst.msk [vmem:[#allocation5] sm:$0x1f] %vm834, %v1276
      %p1278 = scmp.eq.s32.totalorder %s43, 1
      // Predicated region
      $region97: #{_forward_numeric.4} parent=91 // pred_check
        %p1279 = pneg %p1278
      $region98: #{_forward_numeric.4} parent=91 // pred_check_branch
        %1281 = sbr.rel (%p1279) target = $region100
      $region99: #{_forward_numeric.4} parent=91 // pred_region
        %s1282 = sld [smem:[#allocation7 + %s42]]
        %s1283 = scalar_lea.vmem [#allocation5], %s1282
        %v1284 = vld [vmem:[%s1283] sm:$0x1]
        %v1285 = vld [vmem:[%s16] sm:$0x1]
        %v1286 = vld [vmem:[%s17] sm:$0x1]
        %vm1287 = vcmask 253952
        %v1288 = vsel %vm1287, %v1284, 0.0
        %1289 = vadd.xlane.f32.xlu0 %v1288
        %v1290 = vpop.xlane.xlu0 %1289
        %v1291 = vmul.f32 %v1290, %v844
        %v1292 = vsub.f32 %v1284, %v1291
        %v1293 = vmul.f32 %v1292, %v1292
        %v1294 = vsel %vm1287, %v1293, 0.0
        %1295 = vadd.xlane.f32.xlu0 %v1294
        %v1296 = vpop.xlane.xlu0 %1295
        %v1297 = vmul.f32 %v1296, %v844
        %v1298 = vadd.f32 %v1297, 1e-05
        %v1299 = vrsqrt.pop %v1298
        %v1300 = vmul.f32 %v1299, %v1298
        %v1301 = vmul.f32 %v1300, %v1299
        %v1302 = vmul.f32 0.5, %v1301
        %v1303 = vsub.f32 1.5, %v1302
        %v1304 = vmul.f32 %v1299, %v1303
        %vm1305 = vweird.f32 %v1298
        %vm1306 = vweird.f32 %v1299
        %vm1307 = vmor %vm1305, %vm1306
        %v1308 = vsel %vm1307, %v1299, %v1304
        %v1309 = vmul.f32 %v1292, %v1308
        %v1310 = vmul.f32 %v1309, %v1285
        %v1311 = vadd.f32 %v1310, %v1286
        %v1312 = vpack.c.bf16 %v1311, %v1311
        %v1313 = vld [vmem:[%s18] sm:$0xf]
        %v1314 = vld [vmem:[%s18 + $0x4] sm:$0xf]
        %v1315 = vld [vmem:[%s18 + $0x8] sm:$0xf]
        %v1316 = vld [vmem:[%s18 + $0xc] sm:$0xf]
        %v1321 = vunpack.c.l.b16 %v1313
        %v1322 = vunpack.c.l.b16 %v1314
        %v1323 = vunpack.c.l.b16 %v1315
        %v1324 = vunpack.c.l.b16 %v1316
        %v1325 = vpack.c.b16 %v1322, %v1321
        %v1326 = vpack.c.b16 %v1324, %v1323
        %v1330 = vsel %vm893, %v1312, 0
        %1332 = vmatpush.bf16.msra.mxu0 0
        %1333 = vmatpush.bf16.msra.mxu0 0
        %1334 = vmatpush.bf16.msra.mxu0 0
        %1335 = vmatpush.bf16.msra.mxu0 0
        %1336 = vmatpush.bf16.msra.mxu0 0
        %1337 = vmatpush.bf16.msra.mxu0 0
        %1338 = vmatpush.bf16.msra.mxu0 %v1326
        %1339 = vmatpush.bf16.msra.mxu0 %v1325
        %1340 = vmatmul.bf16.gmra.mxu0 %v1330
        %v1341 = vpop.f32.mrf.mxu0
        %v1342 = vadd.f32 0.0, %v1341
        %v1343 = vpop.f32.mrf.mxu0
        %1344 = vdwg.mxu0
        %v1345 = vmul.f32 %v1342, %v1342
        %vm1346 = vcmask 1040384
        %v1347 = vsel %vm1346, %v1345, 0.0
        %1348 = vadd.xlane.f32.xlu0 %v1347
        %v1349 = vpop.xlane.xlu0 %1348
        %v1350 = vmax.f32 %v1349, 1e-24
        %v1351 = vrsqrt.pop %v1350
        %v1352 = vmul.f32 %v1351, %v1350
        %v1353 = vmul.f32 %v1352, %v1351
        %v1354 = vmul.f32 0.5, %v1353
        %v1355 = vsub.f32 1.5, %v1354
        %v1356 = vmul.f32 %v1351, %v1355
        %vm1357 = vweird.f32 %v1350
        %vm1358 = vweird.f32 %v1351
        %vm1359 = vmor %vm1357, %vm1358
        %v1360 = vsel %vm1359, %v1351, %v1356
        %v1361 = vmul.f32 %v1342, %v1360
        %v1362 = vperm.slane %v1361, 0
        %1363 = vst [vmem:[%s783] sm:$0xff] %v1362
      $region100: #{_forward_numeric.4} parent=91 // pred_fallthru
        _
      %p1364 = scmp.lt.s32.totalorder %s42, 1
      %s1365 = scalar_select %p1364, %s42, 1
      %s1366 = smul.addr %s1365, 8
      %s1367 = scalar_lea.vmem %s19, %s1366
      // Predicated region
      $region101: #{_forward_numeric.4} parent=91 // pred_check
        %p1368 = pneg %p511
      $region102: #{_forward_numeric.4} parent=91 // pred_check_branch
        %1370 = sbr.rel (%p1368) target = $region104
      $region103: #{_forward_numeric.4} parent=91 // pred_region
        _
      $region104: #{_forward_numeric.4} parent=91 // pred_fallthru
        _
    $region92: #{_forward_numeric.4} parent=5 // pred_fallthru
      _
    %p1371 = scmp.le.s32.totalorder 2, %s33
    // Predicated region
    $region105: #{_forward_numeric.4} parent=5 // pred_check
      %p1372 = pneg %p1371
    $region106: #{_forward_numeric.4} parent=5 // pred_check_branch
      %1374 = sbr.rel (%p1372) target = $region108
    $region107: #{_forward_numeric.4} parent=5 // pred_region
      %s1375 = ssub.s32 %s33, 2
      // Predicated region
      $region109: #{_forward_numeric.4} parent=107 // pred_check
        %p1376 = pneg %p517
      $region110: #{_forward_numeric.4} parent=107 // pred_check_branch
        %1378 = sbr.rel (%p1376) target = $region112
      $region111: #{_forward_numeric.4} parent=107 // pred_region
        %p1379 = scmp.lt.s32.totalorder %s44, 1
        %s1380 = scalar_select %p1379, %s44, 1
        %s1381 = smul.addr %s1380, 8
        %s1382 = scalar_lea.vmem %s19, %s1381
      $region112: #{_forward_numeric.4} parent=107 // pred_fallthru
        _
    $region108: #{_forward_numeric.4} parent=5 // pred_fallthru
      _
  $region6: #{_forward_numeric.4} parent=0 // loop_footer
    %s37 = sadd.s32 1, %s33
  $region7: #{_forward_numeric.4} parent=0 // loop_footer_branch
    %32 = sbr.rel target = $region3
  $region8: #{_forward_numeric.4} parent=0 // loop_exit
    _

// kernel: _forward_numeric.5
$region0: #{_forward_numeric.5}
  #allocation0 [shape = 'u32[]', space=smem, size = 0x4, offset = 0x4, fixed_abs, tag = 'smem constant byte address 0x4 - core index']
  #allocation1 [shape = 'u32[72,128]{1,0:T(1,128)}', space=vmem, size = 0x9000, scoped, tag = 'internal scratch']
  #allocation2 [shape = 'f32[8,96]{1,0:T(8,128)}', space=vmem, size = 0x1000, scoped, tag = 'scratch operand']
  #allocation3 [shape = 'f32[16,8]{1,0:T(8,128)}', space=vmem, size = 0x2000, scoped, tag = 'scratch operand']
  #allocation4 [shape = 'f32[8,32]{1,0:T(8,128)}', space=vmem, size = 0x1000, scoped, tag = 'scratch operand']
  #allocation5 [shape = 'f32[8,32]{1,0:T(8,128)}', space=vmem, size = 0x1000, scoped, tag = 'scratch operand']
  #allocation6 [shape = 's32[1]{0}', space=sflag, size = 0x4, scoped, tag = 'scoped memory for _forward_numeric.5']
  #allocation7 [shape = 'u8[512]{0}', space=smem, size = 0x200, scoped, tag = 'prefetched SMEM operand 0']
  %s0 = inlined_call_operand.vmem [shape: s32[4], index: 0, kind: input, shape index: {}]
  %s1 = inlined_call_operand.vmem [shape: f32[4,8,32], index: 1, kind: input, shape index: {}]
  %s2 = inlined_call_operand.vmem [shape: f32[2,1,32], index: 2, kind: input, shape index: {}, may-alias: {2,8}]
  %s3 = inlined_call_operand.vmem [shape: f32[2,1,32], index: 3, kind: input, shape index: {}, may-alias: {3,7,9,13}]
  %s4 = inlined_call_operand.vmem [shape: bf16[2,32,96], index: 4, kind: input, shape index: {}]
  %s5 = inlined_call_operand.vmem [shape: f32[2,1,96], index: 5, kind: input, shape index: {}]
  %s6 = inlined_call_operand.vmem [shape: bf16[2,32,32], index: 6, kind: input, shape index: {}]
  %s7 = inlined_call_operand.vmem [shape: f32[2,1,32], index: 7, kind: input, shape index: {}, may-alias: {3,7,9,13}]
  %s8 = inlined_call_operand.vmem [shape: f32[2,1,32], index: 8, kind: input, shape index: {}, may-alias: {2,8}]
  %s9 = inlined_call_operand.vmem [shape: f32[2,1,32], index: 9, kind: input, shape index: {}, may-alias: {3,7,9,13}]
  %s10 = inlined_call_operand.vmem [shape: bf16[2,32,128], index: 10, kind: input, shape index: {}]
  %s11 = inlined_call_operand.vmem [shape: f32[2,1,128], index: 11, kind: input, shape index: {}]
  %s12 = inlined_call_operand.vmem [shape: bf16[2,128,32], index: 12, kind: input, shape index: {}]
  %s13 = inlined_call_operand.vmem [shape: f32[2,1,32], index: 13, kind: input, shape index: {}, may-alias: {3,7,9,13}]
  %s14 = inlined_call_operand.vmem [shape: f32[1,32], index: 14, kind: input, shape index: {}]
  %s15 = inlined_call_operand.vmem [shape: f32[1,32], index: 15, kind: input, shape index: {}]
  %s16 = inlined_call_operand.vmem [shape: bf16[32,128], index: 16, kind: input, shape index: {}]
  %s17 = inlined_call_operand.vmem [shape: f32[4,8,128], index: 17, kind: output, shape index: {}]
  %s18 = sld [smem:[#allocation0]]
  $region105: #{_forward_numeric.5} parent=0
    _
  %s20 = ssub.s32 1, %s18
  %s21 = scalar_select 0, %s20, %s18
  %s23 = sshll.u32 %s0, 4
  %s24 = int_to_ptr.vmem [resolvable:$true] %s23
  %26 = dma.vmem_to_smem %s24, 16, [#allocation7], [#allocation6]
  %28 = dma.done [#allocation6], 16
  %29 = sfence
  loop: start=0, step=1, limit=10
  $region2: #{_forward_numeric.5} parent=0 // loop_pre_header
    _
  $region3: #{_forward_numeric.5} parent=0 // loop_header
    %s31 = sphi 0, %s35
    %p32 = scmp.ge.s32.totalorder %s31, 10
    %s38 = sphi 0, %s50
    %s39 = sphi 0, %s46
    %s40 = sphi 0, %s38
    %s41 = sphi 0, %s39
    %s42 = sphi 0, %s40
    %s43 = sphi 0, %s41
    %s53 = sphi 0, %s55
    %s56 = sphi 0, %s53
    %s57 = sphi 0, %s56
    %s73 = sphi 0, %s57
    %s79 = sphi 0, %s81
    %s82 = sphi 0, %s79
    %s83 = sphi 0, %s82
    %s99 = sphi 0, %s83
    %s105 = sphi 0, %s107
    %s108 = sphi 0, %s105
    %s109 = sphi 0, %s108
    %s125 = sphi 0, %s109
    %s131 = sphi 0, %s133
    %s134 = sphi 0, %s131
    %s135 = sphi 0, %s134
    %s151 = sphi 0, %s135
    %s157 = sphi 0, %s159
    %s160 = sphi 0, %s157
    %s161 = sphi 0, %s160
    %s177 = sphi 0, %s161
    %s183 = sphi 0, %s185
    %s186 = sphi 0, %s183
    %s187 = sphi 0, %s186
    %s203 = sphi 0, %s187
    %s209 = sphi 0, %s211
    %s212 = sphi 0, %s209
    %s213 = sphi 0, %s212
    %s229 = sphi 0, %s213
    %s235 = sphi 0, %s237
    %s238 = sphi 0, %s235
    %s239 = sphi 0, %s238
    %s255 = sphi 0, %s239
    %s261 = sphi 0, %s263
    %s264 = sphi 0, %s261
    %s265 = sphi 0, %s264
    %s281 = sphi 0, %s265
    %s287 = sphi 0, %s289
    %s290 = sphi 0, %s287
    %s291 = sphi 0, %s290
    %s307 = sphi 0, %s291
    %s313 = sphi 0, %s315
    %s316 = sphi 0, %s313
    %s317 = sphi 0, %s316
    %s333 = sphi 0, %s317
    %s339 = sphi 0, %s341
    %s342 = sphi 0, %s339
    %s343 = sphi 0, %s342
    %s359 = sphi 0, %s343
    %s365 = sphi 0, %s367
    %s368 = sphi 0, %s365
    %s369 = sphi 0, %s368
    %s385 = sphi 0, %s369
    %s389 = sphi 0, %s389
    %s391 = sphi 0, %s389
    %s392 = sphi 0, %s391
    %s406 = sphi 0, %s392
    %s410 = sphi 0, %s410
    %s412 = sphi 0, %s410
    %s413 = sphi 0, %s412
    %s427 = sphi 0, %s413
    %s431 = sphi 0, %s431
    %s433 = sphi 0, %s431
    %s434 = sphi 0, %s433
    %s448 = sphi 0, %s434
    %s454 = sphi 0, %s456
    %s457 = sphi 0, %s454
    %s458 = sphi 0, %s457
    %s474 = sphi 0, %s458
  $region4: #{_forward_numeric.5} parent=0 // loop_header_branch
    %34 = sbr.rel (%p32) target = $region8
  $region5: #{_forward_numeric.5} parent=0 // loop_body
    %s36 = ssub.s32 %s31, 1
    %s37 = ssub.s32 %s31, 2
    %s44 = sadd.s32 1, %s39
    %p45 = scmp.ge.s32.totalorder %s44, 2
    %s46 = scalar_select %p45, 0, %s44
    %s47 = sadd.s32 1, %s38
    %s48 = scalar_select %p45, %s47, %s38
    %p49 = scmp.ge.s32.totalorder %s48, 4
    %s50 = scalar_select %p49, 0, %s48
    %s51 = ssub.s32 %s38, %s50
    %p52 = scmp.eq.s32.totalorder %s51, 0
    %s54 = sadd.s32 %s53, 1
    %s55 = scalar_select %p52, %s53, %s54
    %p58 = pneg %p52
    %p59 = scmp.eq.s32.totalorder %s31, 7
    %p60 = por %p58, %p59
    %p61 = scmp.ne.s32.totalorder %s53, %s56
    %p62 = scmp.eq.s32.totalorder %s31, 0
    %p63 = por %p61, %p62
    %p64 = scmp.ne.s32.totalorder %s53, %s56
    %p65 = scmp.eq.s32.totalorder %s36, 7
    %p66 = por %p64, %p65
    %p67 = scmp.ne.s32.totalorder %s56, %s57
    %p68 = scmp.eq.s32.totalorder %s36, 0
    %p69 = por %p67, %p68
    %p70 = scmp.ne.s32.totalorder %s56, %s57
    %p71 = scmp.eq.s32.totalorder %s37, 7
    %p72 = por %p70, %p71
    %p74 = scmp.ne.s32.totalorder %s57, %s73
    %p75 = scmp.eq.s32.totalorder %s37, 0
    %p76 = por %p74, %p75
    %s77 = ssub.s32 %s39, %s46
    %p78 = scmp.eq.s32.totalorder %s77, 0
    %s80 = sadd.s32 %s79, 1
    %s81 = scalar_select %p78, %s79, %s80
    %p84 = pneg %p78
    %p85 = scmp.eq.s32.totalorder %s31, 7
    %p86 = por %p84, %p85
    %p87 = scmp.ne.s32.totalorder %s79, %s82
    %p88 = scmp.eq.s32.totalorder %s31, 0
    %p89 = por %p87, %p88
    %p90 = scmp.ne.s32.totalorder %s79, %s82
    %p91 = scmp.eq.s32.totalorder %s36, 7
    %p92 = por %p90, %p91
    %p93 = scmp.ne.s32.totalorder %s82, %s83
    %p94 = scmp.eq.s32.totalorder %s36, 0
    %p95 = por %p93, %p94
    %p96 = scmp.ne.s32.totalorder %s82, %s83
    %p97 = scmp.eq.s32.totalorder %s37, 7
    %p98 = por %p96, %p97
    %p100 = scmp.ne.s32.totalorder %s83, %s99
    %p101 = scmp.eq.s32.totalorder %s37, 0
    %p102 = por %p100, %p101
    %s103 = ssub.s32 %s39, %s46
    %p104 = scmp.eq.s32.totalorder %s103, 0
    %s106 = sadd.s32 %s105, 1
    %s107 = scalar_select %p104, %s105, %s106
    %p110 = pneg %p104
    %p111 = scmp.eq.s32.totalorder %s31, 7
    %p112 = por %p110, %p111
    %p113 = scmp.ne.s32.totalorder %s105, %s108
    %p114 = scmp.eq.s32.totalorder %s31, 0
    %p115 = por %p113, %p114
    %p116 = scmp.ne.s32.totalorder %s105, %s108
    %p117 = scmp.eq.s32.totalorder %s36, 7
    %p118 = por %p116, %p117
    %p119 = scmp.ne.s32.totalorder %s108, %s109
    %p120 = scmp.eq.s32.totalorder %s36, 0
    %p121 = por %p119, %p120
    %p122 = scmp.ne.s32.totalorder %s108, %s109
    %p123 = scmp.eq.s32.totalorder %s37, 7
    %p124 = por %p122, %p123
    %p126 = scmp.ne.s32.totalorder %s109, %s125
    %p127 = scmp.eq.s32.totalorder %s37, 0
    %p128 = por %p126, %p127
    %s129 = ssub.s32 %s39, %s46
    %p130 = scmp.eq.s32.totalorder %s129, 0
    %s132 = sadd.s32 %s131, 1
    %s133 = scalar_select %p130, %s131, %s132
    %p136 = pneg %p130
    %p137 = scmp.eq.s32.totalorder %s31, 7
    %p138 = por %p136, %p137
    %p139 = scmp.ne.s32.totalorder %s131, %s134
    %p140 = scmp.eq.s32.totalorder %s31, 0
    %p141 = por %p139, %p140
    %p142 = scmp.ne.s32.totalorder %s131, %s134
    %p143 = scmp.eq.s32.totalorder %s36, 7
    %p144 = por %p142, %p143
    %p145 = scmp.ne.s32.totalorder %s134, %s135
    %p146 = scmp.eq.s32.totalorder %s36, 0
    %p147 = por %p145, %p146
    %p148 = scmp.ne.s32.totalorder %s134, %s135
    %p149 = scmp.eq.s32.totalorder %s37, 7
    %p150 = por %p148, %p149
    %p152 = scmp.ne.s32.totalorder %s135, %s151
    %p153 = scmp.eq.s32.totalorder %s37, 0
    %p154 = por %p152, %p153
    %s155 = ssub.s32 %s39, %s46
    %p156 = scmp.eq.s32.totalorder %s155, 0
    %s158 = sadd.s32 %s157, 1
    %s159 = scalar_select %p156, %s157, %s158
    %p162 = pneg %p156
    %p163 = scmp.eq.s32.totalorder %s31, 7
    %p164 = por %p162, %p163
    %p165 = scmp.ne.s32.totalorder %s157, %s160
    %p166 = scmp.eq.s32.totalorder %s31, 0
    %p167 = por %p165, %p166
    %p168 = scmp.ne.s32.totalorder %s157, %s160
    %p169 = scmp.eq.s32.totalorder %s36, 7
    %p170 = por %p168, %p169
    %p171 = scmp.ne.s32.totalorder %s160, %s161
    %p172 = scmp.eq.s32.totalorder %s36, 0
    %p173 = por %p171, %p172
    %p174 = scmp.ne.s32.totalorder %s160, %s161
    %p175 = scmp.eq.s32.totalorder %s37, 7
    %p176 = por %p174, %p175
    %p178 = scmp.ne.s32.totalorder %s161, %s177
    %p179 = scmp.eq.s32.totalorder %s37, 0
    %p180 = por %p178, %p179
    %s181 = ssub.s32 %s39, %s46
    %p182 = scmp.eq.s32.totalorder %s181, 0
    %s184 = sadd.s32 %s183, 1
    %s185 = scalar_select %p182, %s183, %s184
    %p188 = pneg %p182
    %p189 = scmp.eq.s32.totalorder %s31, 7
    %p190 = por %p188, %p189
    %p191 = scmp.ne.s32.totalorder %s183, %s186
    %p192 = scmp.eq.s32.totalorder %s31, 0
    %p193 = por %p191, %p192
    %p194 = scmp.ne.s32.totalorder %s183, %s186
    %p195 = scmp.eq.s32.totalorder %s36, 7
    %p196 = por %p194, %p195
    %p197 = scmp.ne.s32.totalorder %s186, %s187
    %p198 = scmp.eq.s32.totalorder %s36, 0
    %p199 = por %p197, %p198
    %p200 = scmp.ne.s32.totalorder %s186, %s187
    %p201 = scmp.eq.s32.totalorder %s37, 7
    %p202 = por %p200, %p201
    %p204 = scmp.ne.s32.totalorder %s187, %s203
    %p205 = scmp.eq.s32.totalorder %s37, 0
    %p206 = por %p204, %p205
    %s207 = ssub.s32 %s39, %s46
    %p208 = scmp.eq.s32.totalorder %s207, 0
    %s210 = sadd.s32 %s209, 1
    %s211 = scalar_select %p208, %s209, %s210
    %p214 = pneg %p208
    %p215 = scmp.eq.s32.totalorder %s31, 7
    %p216 = por %p214, %p215
    %p217 = scmp.ne.s32.totalorder %s209, %s212
    %p218 = scmp.eq.s32.totalorder %s31, 0
    %p219 = por %p217, %p218
    %p220 = scmp.ne.s32.totalorder %s209, %s212
    %p221 = scmp.eq.s32.totalorder %s36, 7
    %p222 = por %p220, %p221
    %p223 = scmp.ne.s32.totalorder %s212, %s213
    %p224 = scmp.eq.s32.totalorder %s36, 0
    %p225 = por %p223, %p224
    %p226 = scmp.ne.s32.totalorder %s212, %s213
    %p227 = scmp.eq.s32.totalorder %s37, 7
    %p228 = por %p226, %p227
    %p230 = scmp.ne.s32.totalorder %s213, %s229
    %p231 = scmp.eq.s32.totalorder %s37, 0
    %p232 = por %p230, %p231
    %s233 = ssub.s32 %s39, %s46
    %p234 = scmp.eq.s32.totalorder %s233, 0
    %s236 = sadd.s32 %s235, 1
    %s237 = scalar_select %p234, %s235, %s236
    %p240 = pneg %p234
    %p241 = scmp.eq.s32.totalorder %s31, 7
    %p242 = por %p240, %p241
    %p243 = scmp.ne.s32.totalorder %s235, %s238
    %p244 = scmp.eq.s32.totalorder %s31, 0
    %p245 = por %p243, %p244
    %p246 = scmp.ne.s32.totalorder %s235, %s238
    %p247 = scmp.eq.s32.totalorder %s36, 7
    %p248 = por %p246, %p247
    %p249 = scmp.ne.s32.totalorder %s238, %s239
    %p250 = scmp.eq.s32.totalorder %s36, 0
    %p251 = por %p249, %p250
    %p252 = scmp.ne.s32.totalorder %s238, %s239
    %p253 = scmp.eq.s32.totalorder %s37, 7
    %p254 = por %p252, %p253
    %p256 = scmp.ne.s32.totalorder %s239, %s255
    %p257 = scmp.eq.s32.totalorder %s37, 0
    %p258 = por %p256, %p257
    %s259 = ssub.s32 %s39, %s46
    %p260 = scmp.eq.s32.totalorder %s259, 0
    %s262 = sadd.s32 %s261, 1
    %s263 = scalar_select %p260, %s261, %s262
    %p266 = pneg %p260
    %p267 = scmp.eq.s32.totalorder %s31, 7
    %p268 = por %p266, %p267
    %p269 = scmp.ne.s32.totalorder %s261, %s264
    %p270 = scmp.eq.s32.totalorder %s31, 0
    %p271 = por %p269, %p270
    %p272 = scmp.ne.s32.totalorder %s261, %s264
    %p273 = scmp.eq.s32.totalorder %s36, 7
    %p274 = por %p272, %p273
    %p275 = scmp.ne.s32.totalorder %s264, %s265
    %p276 = scmp.eq.s32.totalorder %s36, 0
    %p277 = por %p275, %p276
    %p278 = scmp.ne.s32.totalorder %s264, %s265
    %p279 = scmp.eq.s32.totalorder %s37, 7
    %p280 = por %p278, %p279
    %p282 = scmp.ne.s32.totalorder %s265, %s281
    %p283 = scmp.eq.s32.totalorder %s37, 0
    %p284 = por %p282, %p283
    %s285 = ssub.s32 %s39, %s46
    %p286 = scmp.eq.s32.totalorder %s285, 0
    %s288 = sadd.s32 %s287, 1
    %s289 = scalar_select %p286, %s287, %s288
    %p292 = pneg %p286
    %p293 = scmp.eq.s32.totalorder %s31, 7
    %p294 = por %p292, %p293
    %p295 = scmp.ne.s32.totalorder %s287, %s290
    %p296 = scmp.eq.s32.totalorder %s31, 0
    %p297 = por %p295, %p296
    %p298 = scmp.ne.s32.totalorder %s287, %s290
    %p299 = scmp.eq.s32.totalorder %s36, 7
    %p300 = por %p298, %p299
    %p301 = scmp.ne.s32.totalorder %s290, %s291
    %p302 = scmp.eq.s32.totalorder %s36, 0
    %p303 = por %p301, %p302
    %p304 = scmp.ne.s32.totalorder %s290, %s291
    %p305 = scmp.eq.s32.totalorder %s37, 7
    %p306 = por %p304, %p305
    %p308 = scmp.ne.s32.totalorder %s291, %s307
    %p309 = scmp.eq.s32.totalorder %s37, 0
    %p310 = por %p308, %p309
    %s311 = ssub.s32 %s39, %s46
    %p312 = scmp.eq.s32.totalorder %s311, 0
    %s314 = sadd.s32 %s313, 1
    %s315 = scalar_select %p312, %s313, %s314
    %p318 = pneg %p312
    %p319 = scmp.eq.s32.totalorder %s31, 7
    %p320 = por %p318, %p319
    %p321 = scmp.ne.s32.totalorder %s313, %s316
    %p322 = scmp.eq.s32.totalorder %s31, 0
    %p323 = por %p321, %p322
    %p324 = scmp.ne.s32.totalorder %s313, %s316
    %p325 = scmp.eq.s32.totalorder %s36, 7
    %p326 = por %p324, %p325
    %p327 = scmp.ne.s32.totalorder %s316, %s317
    %p328 = scmp.eq.s32.totalorder %s36, 0
    %p329 = por %p327, %p328
    %p330 = scmp.ne.s32.totalorder %s316, %s317
    %p331 = scmp.eq.s32.totalorder %s37, 7
    %p332 = por %p330, %p331
    %p334 = scmp.ne.s32.totalorder %s317, %s333
    %p335 = scmp.eq.s32.totalorder %s37, 0
    %p336 = por %p334, %p335
    %s337 = ssub.s32 %s39, %s46
    %p338 = scmp.eq.s32.totalorder %s337, 0
    %s340 = sadd.s32 %s339, 1
    %s341 = scalar_select %p338, %s339, %s340
    %p344 = pneg %p338
    %p345 = scmp.eq.s32.totalorder %s31, 7
    %p346 = por %p344, %p345
    %p347 = scmp.ne.s32.totalorder %s339, %s342
    %p348 = scmp.eq.s32.totalorder %s31, 0
    %p349 = por %p347, %p348
    %p350 = scmp.ne.s32.totalorder %s339, %s342
    %p351 = scmp.eq.s32.totalorder %s36, 7
    %p352 = por %p350, %p351
    %p353 = scmp.ne.s32.totalorder %s342, %s343
    %p354 = scmp.eq.s32.totalorder %s36, 0
    %p355 = por %p353, %p354
    %p356 = scmp.ne.s32.totalorder %s342, %s343
    %p357 = scmp.eq.s32.totalorder %s37, 7
    %p358 = por %p356, %p357
    %p360 = scmp.ne.s32.totalorder %s343, %s359
    %p361 = scmp.eq.s32.totalorder %s37, 0
    %p362 = por %p360, %p361
    %s363 = ssub.s32 %s39, %s46
    %p364 = scmp.eq.s32.totalorder %s363, 0
    %s366 = sadd.s32 %s365, 1
    %s367 = scalar_select %p364, %s365, %s366
    %p370 = pneg %p364
    %p371 = scmp.eq.s32.totalorder %s31, 7
    %p372 = por %p370, %p371
    %p373 = scmp.ne.s32.totalorder %s365, %s368
    %p374 = scmp.eq.s32.totalorder %s31, 0
    %p375 = por %p373, %p374
    %p376 = scmp.ne.s32.totalorder %s365, %s368
    %p377 = scmp.eq.s32.totalorder %s36, 7
    %p378 = por %p376, %p377
    %p379 = scmp.ne.s32.totalorder %s368, %s369
    %p380 = scmp.eq.s32.totalorder %s36, 0
    %p381 = por %p379, %p380
    %p382 = scmp.ne.s32.totalorder %s368, %s369
    %p383 = scmp.eq.s32.totalorder %s37, 7
    %p384 = por %p382, %p383
    %p386 = scmp.ne.s32.totalorder %s369, %s385
    %p387 = scmp.eq.s32.totalorder %s37, 0
    %p388 = por %p386, %p387
    %s390 = sadd.s32 %s389, 1
    %p393 = scmp.eq.s32.totalorder %s31, 7
    %p394 = scmp.ne.s32.totalorder %s389, %s391
    %p395 = scmp.eq.s32.totalorder %s31, 0
    %p396 = por %p394, %p395
    %p397 = scmp.ne.s32.totalorder %s389, %s391
    %p398 = scmp.eq.s32.totalorder %s36, 7
    %p399 = por %p397, %p398
    %p400 = scmp.ne.s32.totalorder %s391, %s392
    %p401 = scmp.eq.s32.totalorder %s36, 0
    %p402 = por %p400, %p401
    %p403 = scmp.ne.s32.totalorder %s391, %s392
    %p404 = scmp.eq.s32.totalorder %s37, 7
    %p405 = por %p403, %p404
    %p407 = scmp.ne.s32.totalorder %s392, %s406
    %p408 = scmp.eq.s32.totalorder %s37, 0
    %p409 = por %p407, %p408
    %s411 = sadd.s32 %s410, 1
    %p414 = scmp.eq.s32.totalorder %s31, 7
    %p415 = scmp.ne.s32.totalorder %s410, %s412
    %p416 = scmp.eq.s32.totalorder %s31, 0
    %p417 = por %p415, %p416
    %p418 = scmp.ne.s32.totalorder %s410, %s412
    %p419 = scmp.eq.s32.totalorder %s36, 7
    %p420 = por %p418, %p419
    %p421 = scmp.ne.s32.totalorder %s412, %s413
    %p422 = scmp.eq.s32.totalorder %s36, 0
    %p423 = por %p421, %p422
    %p424 = scmp.ne.s32.totalorder %s412, %s413
    %p425 = scmp.eq.s32.totalorder %s37, 7
    %p426 = por %p424, %p425
    %p428 = scmp.ne.s32.totalorder %s413, %s427
    %p429 = scmp.eq.s32.totalorder %s37, 0
    %p430 = por %p428, %p429
    %s432 = sadd.s32 %s431, 1
    %p435 = scmp.eq.s32.totalorder %s31, 7
    %p436 = scmp.ne.s32.totalorder %s431, %s433
    %p437 = scmp.eq.s32.totalorder %s31, 0
    %p438 = por %p436, %p437
    %p439 = scmp.ne.s32.totalorder %s431, %s433
    %p440 = scmp.eq.s32.totalorder %s36, 7
    %p441 = por %p439, %p440
    %p442 = scmp.ne.s32.totalorder %s433, %s434
    %p443 = scmp.eq.s32.totalorder %s36, 0
    %p444 = por %p442, %p443
    %p445 = scmp.ne.s32.totalorder %s433, %s434
    %p446 = scmp.eq.s32.totalorder %s37, 7
    %p447 = por %p445, %p446
    %p449 = scmp.ne.s32.totalorder %s434, %s448
    %p450 = scmp.eq.s32.totalorder %s37, 0
    %p451 = por %p449, %p450
    %s452 = ssub.s32 %s38, %s50
    %p453 = scmp.eq.s32.totalorder %s452, 0
    %s455 = sadd.s32 %s454, 1
    %s456 = scalar_select %p453, %s454, %s455
    %p459 = pneg %p453
    %p460 = scmp.eq.s32.totalorder %s31, 7
    %p461 = por %p459, %p460
    %p462 = scmp.ne.s32.totalorder %s454, %s457
    %p463 = scmp.eq.s32.totalorder %s31, 0
    %p464 = por %p462, %p463
    %p465 = scmp.ne.s32.totalorder %s454, %s457
    %p466 = scmp.eq.s32.totalorder %s36, 7
    %p467 = por %p465, %p466
    %p468 = scmp.ne.s32.totalorder %s457, %s458
    %p469 = scmp.eq.s32.totalorder %s36, 0
    %p470 = por %p468, %p469
    %p471 = scmp.ne.s32.totalorder %s457, %s458
    %p472 = scmp.eq.s32.totalorder %s37, 7
    %p473 = por %p471, %p472
    %p475 = scmp.ne.s32.totalorder %s458, %s474
    %p476 = scmp.eq.s32.totalorder %s37, 0
    %p477 = por %p475, %p476
    %p478 = scmp.le.s32.totalorder 1, %s31
    %p479 = scmp.lt.s32.totalorder %s31, 9
    %p480 = pnand %p478, %p479
    %p481 = pneg %p480
    // Predicated region
    $region9: #{_forward_numeric.5} parent=5 // pred_check
      _
    $region10: #{_forward_numeric.5} parent=5 // pred_check_branch
      %483 = sbr.rel (%p480) target = $region12
    $region11: #{_forward_numeric.5} parent=5 // pred_region
      %s484 = ssub.s32 %s31, 1
      // Predicated region
      $region13: #{_forward_numeric.5} parent=11 // pred_check
        %p485 = pneg %p402
      $region14: #{_forward_numeric.5} parent=11 // pred_check_branch
        %487 = sbr.rel (%p485) target = $region16
      $region15: #{_forward_numeric.5} parent=11 // pred_region
        _
      $region16: #{_forward_numeric.5} parent=11 // pred_fallthru
        _
      // Predicated region
      $region17: #{_forward_numeric.5} parent=11 // pred_check
        %p488 = pneg %p423
      $region18: #{_forward_numeric.5} parent=11 // pred_check_branch
        %490 = sbr.rel (%p488) target = $region20
      $region19: #{_forward_numeric.5} parent=11 // pred_region
        _
      $region20: #{_forward_numeric.5} parent=11 // pred_fallthru
        _
      // Predicated region
      $region21: #{_forward_numeric.5} parent=11 // pred_check
        %p491 = pneg %p444
      $region22: #{_forward_numeric.5} parent=11 // pred_check_branch
        %493 = sbr.rel (%p491) target = $region24
      $region23: #{_forward_numeric.5} parent=11 // pred_region
        _
      $region24: #{_forward_numeric.5} parent=11 // pred_fallthru
        _
    $region12: #{_forward_numeric.5} parent=5 // pred_fallthru
      _
    %p494 = scmp.lt.s32.totalorder %s31, 8
    // Predicated region
    $region25: #{_forward_numeric.5} parent=5 // pred_check
      %p495 = pneg %p494
    $region26: #{_forward_numeric.5} parent=5 // pred_check_branch
      %497 = sbr.rel (%p495) target = $region28
    $region27: #{_forward_numeric.5} parent=5 // pred_region
      // Predicated region
      $region29: #{_forward_numeric.5} parent=27 // pred_check
        %p498 = pneg %p63
      $region30: #{_forward_numeric.5} parent=27 // pred_check_branch
        %500 = sbr.rel (%p498) target = $region32
      $region31: #{_forward_numeric.5} parent=27 // pred_region
        %p501 = scmp.lt.s32.totalorder %s38, 3
        %s502 = scalar_select %p501, %s38, 3
        %s503 = smul.addr %s502, 8
        %s504 = scalar_lea.vmem %s1, %s503
      $region32: #{_forward_numeric.5} parent=27 // pred_fallthru
        _
      // Predicated region
      $region33: #{_forward_numeric.5} parent=27 // pred_check
        %p505 = pneg %p89
      $region34: #{_forward_numeric.5} parent=27 // pred_check_branch
        %507 = sbr.rel (%p505) target = $region36
      $region35: #{_forward_numeric.5} parent=27 // pred_region
        %p508 = scmp.lt.s32.totalorder %s39, 1
        %s509 = scalar_select %p508, %s39, 1
        %s510 = scalar_lea.vmem %s2, %s509
      $region36: #{_forward_numeric.5} parent=27 // pred_fallthru
        _
      // Predicated region
      $region37: #{_forward_numeric.5} parent=27 // pred_check
        %p511 = pneg %p115
      $region38: #{_forward_numeric.5} parent=27 // pred_check_branch
        %513 = sbr.rel (%p511) target = $region40
      $region39: #{_forward_numeric.5} parent=27 // pred_region
        %p514 = scmp.lt.s32.totalorder %s39, 1
        %s515 = scalar_select %p514, %s39, 1
        %s516 = scalar_lea.vmem %s3, %s515
      $region40: #{_forward_numeric.5} parent=27 // pred_fallthru
        _
      // Predicated region
      $region41: #{_forward_numeric.5} parent=27 // pred_check
        %p517 = pneg %p141
      $region42: #{_forward_numeric.5} parent=27 // pred_check_branch
        %519 = sbr.rel (%p517) target = $region44
      $region43: #{_forward_numeric.5} parent=27 // pred_region
        %p520 = scmp.lt.s32.totalorder %s39, 1
        %s521 = scalar_select %p520, %s39, 1
        %s522 = smul.addr %s521, 4
        %s523 = smul.addr %s522, 4
        %s524 = scalar_lea.vmem %s4, %s523
      $region44: #{_forward_numeric.5} parent=27 // pred_fallthru
        _
      // Predicated region
      $region45: #{_forward_numeric.5} parent=27 // pred_check
        %p525 = pneg %p167
      $region46: #{_forward_numeric.5} parent=27 // pred_check_branch
        %527 = sbr.rel (%p525) target = $region48
      $region47: #{_forward_numeric.5} parent=27 // pred_region
        %p528 = scmp.lt.s32.totalorder %s39, 1
        %s529 = scalar_select %p528, %s39, 1
        %s530 = scalar_lea.vmem %s5, %s529
      $region48: #{_forward_numeric.5} parent=27 // pred_fallthru
        _
      // Predicated region
      $region49: #{_forward_numeric.5} parent=27 // pred_check
        %p531 = pneg %p193
      $region50: #{_forward_numeric.5} parent=27 // pred_check_branch
        %533 = sbr.rel (%p531) target = $region52
      $region51: #{_forward_numeric.5} parent=27 // pred_region
        %p534 = scmp.lt.s32.totalorder %s39, 1
        %s535 = scalar_select %p534, %s39, 1
        %s536 = smul.addr %s535, 4
        %s537 = smul.addr %s536, 4
        %s538 = scalar_lea.vmem %s6, %s537
      $region52: #{_forward_numeric.5} parent=27 // pred_fallthru
        _
      // Predicated region
      $region53: #{_forward_numeric.5} parent=27 // pred_check
        %p539 = pneg %p219
      $region54: #{_forward_numeric.5} parent=27 // pred_check_branch
        %541 = sbr.rel (%p539) target = $region56
      $region55: #{_forward_numeric.5} parent=27 // pred_region
        %p542 = scmp.lt.s32.totalorder %s39, 1
        %s543 = scalar_select %p542, %s39, 1
        %s544 = scalar_lea.vmem %s7, %s543
      $region56: #{_forward_numeric.5} parent=27 // pred_fallthru
        _
      // Predicated region
      $region57: #{_forward_numeric.5} parent=27 // pred_check
        %p545 = pneg %p245
      $region58: #{_forward_numeric.5} parent=27 // pred_check_branch
        %547 = sbr.rel (%p545) target = $region60
      $region59: #{_forward_numeric.5} parent=27 // pred_region
        %p548 = scmp.lt.s32.totalorder %s39, 1
        %s549 = scalar_select %p548, %s39, 1
        %s550 = scalar_lea.vmem %s8, %s549
      $region60: #{_forward_numeric.5} parent=27 // pred_fallthru
        _
      // Predicated region
      $region61: #{_forward_numeric.5} parent=27 // pred_check
        %p551 = pneg %p271
      $region62: #{_forward_numeric.5} parent=27 // pred_check_branch
        %553 = sbr.rel (%p551) target = $region64
      $region63: #{_forward_numeric.5} parent=27 // pred_region
        %p554 = scmp.lt.s32.totalorder %s39, 1
        %s555 = scalar_select %p554, %s39, 1
        %s556 = scalar_lea.vmem %s9, %s555
      $region64: #{_forward_numeric.5} parent=27 // pred_fallthru
        _
      // Predicated region
      $region65: #{_forward_numeric.5} parent=27 // pred_check
        %p557 = pneg %p297
      $region66: #{_forward_numeric.5} parent=27 // pred_check_branch
        %559 = sbr.rel (%p557) target = $region68
      $region67: #{_forward_numeric.5} parent=27 // pred_region
        %p560 = scmp.lt.s32.totalorder %s39, 1
        %s561 = scalar_select %p560, %s39, 1
        %s562 = smul.addr %s561, 4
        %s563 = smul.addr %s562, 4
        %s564 = scalar_lea.vmem %s10, %s563
      $region68: #{_forward_numeric.5} parent=27 // pred_fallthru
        _
      // Predicated region
      $region69: #{_forward_numeric.5} parent=27 // pred_check
        %p565 = pneg %p323
      $region70: #{_forward_numeric.5} parent=27 // pred_check_branch
        %567 = sbr.rel (%p565) target = $region72
      $region71: #{_forward_numeric.5} parent=27 // pred_region
        %p568 = scmp.lt.s32.totalorder %s39, 1
        %s569 = scalar_select %p568, %s39, 1
        %s570 = scalar_lea.vmem %s11, %s569
      $region72: #{_forward_numeric.5} parent=27 // pred_fallthru
        _
      // Predicated region
      $region73: #{_forward_numeric.5} parent=27 // pred_check
        %p571 = pneg %p349
      $region74: #{_forward_numeric.5} parent=27 // pred_check_branch
        %573 = sbr.rel (%p571) target = $region76
      $region75: #{_forward_numeric.5} parent=27 // pred_region
        %p574 = scmp.lt.s32.totalorder %s39, 1
        %s575 = scalar_select %p574, %s39, 1
        %s576 = smul.addr %s575, 16
        %s577 = smul.addr %s576, 4
        %s578 = scalar_lea.vmem %s12, %s577
      $region76: #{_forward_numeric.5} parent=27 // pred_fallthru
        _
      // Predicated region
      $region77: #{_forward_numeric.5} parent=27 // pred_check
        %p579 = pneg %p375
      $region78: #{_forward_numeric.5} parent=27 // pred_check_branch
        %581 = sbr.rel (%p579) target = $region80
      $region79: #{_forward_numeric.5} parent=27 // pred_region
        %p582 = scmp.lt.s32.totalorder %s39, 1
        %s583 = scalar_select %p582, %s39, 1
        %s584 = scalar_lea.vmem %s13, %s583
      $region80: #{_forward_numeric.5} parent=27 // pred_fallthru
        _
    $region28: #{_forward_numeric.5} parent=5 // pred_fallthru
      _
    %p585 = scmp.le.s32.totalorder 1, %s31
    %p586 = scmp.lt.s32.totalorder %s31, 9
    %p587 = pnand %p585, %p586
    %p588 = pneg %p587
    // Predicated region
    $region81: #{_forward_numeric.5} parent=5 // pred_check
      _
    $region82: #{_forward_numeric.5} parent=5 // pred_check_branch
      %590 = sbr.rel (%p587) target = $region84
    $region83: #{_forward_numeric.5} parent=5 // pred_region
      %s591 = ssub.s32 %s31, 1
      %p592 = scmp.lt.s32.totalorder %s40, 3
      %s593 = scalar_select %p592, %s40, 3
      %s594 = smul.addr %s593, 8
      %s595 = scalar_lea.vmem %s1, %s594
      %p596 = pneg %p69
      %p597 = pneg %p66
      %p598 = scmp.lt.s32.totalorder %s41, 1
      %s599 = scalar_select %p598, %s41, 1
      %s600 = scalar_lea.vmem %s2, %s599
      %p601 = pneg %p95
      %p602 = pneg %p92
      %p603 = scmp.lt.s32.totalorder %s41, 1
      %s604 = scalar_select %p603, %s41, 1
      %s605 = scalar_lea.vmem %s3, %s604
      %p606 = pneg %p121
      %p607 = pneg %p118
      %p608 = scmp.lt.s32.totalorder %s41, 1
      %s609 = scalar_select %p608, %s41, 1
      %s610 = smul.addr %s609, 4
      %s611 = smul.addr %s610, 4
      %s612 = scalar_lea.vmem %s4, %s611
      %p613 = pneg %p147
      %p614 = pneg %p144
      %p615 = scmp.lt.s32.totalorder %s41, 1
      %s616 = scalar_select %p615, %s41, 1
      %s617 = scalar_lea.vmem %s5, %s616
      %p618 = pneg %p173
      %p619 = pneg %p170
      %p620 = scmp.lt.s32.totalorder %s41, 1
      %s621 = scalar_select %p620, %s41, 1
      %s622 = smul.addr %s621, 4
      %s623 = smul.addr %s622, 4
      %s624 = scalar_lea.vmem %s6, %s623
      %p625 = pneg %p199
      %p626 = pneg %p196
      %p627 = scmp.lt.s32.totalorder %s41, 1
      %s628 = scalar_select %p627, %s41, 1
      %s629 = scalar_lea.vmem %s7, %s628
      %p630 = pneg %p225
      %p631 = pneg %p222
      %p632 = scmp.lt.s32.totalorder %s41, 1
      %s633 = scalar_select %p632, %s41, 1
      %s634 = scalar_lea.vmem %s8, %s633
      %p635 = pneg %p251
      %p636 = pneg %p248
      %p637 = scmp.lt.s32.totalorder %s41, 1
      %s638 = scalar_select %p637, %s41, 1
      %s639 = scalar_lea.vmem %s9, %s638
      %p640 = pneg %p277
      %p641 = pneg %p274
      %p642 = scmp.lt.s32.totalorder %s41, 1
      %s643 = scalar_select %p642, %s41, 1
      %s644 = smul.addr %s643, 4
      %s645 = smul.addr %s644, 4
      %s646 = scalar_lea.vmem %s10, %s645
      %p647 = pneg %p303
      %p648 = pneg %p300
      %p649 = scmp.lt.s32.totalorder %s41, 1
      %s650 = scalar_select %p649, %s41, 1
      %s651 = scalar_lea.vmem %s11, %s650
      %p652 = pneg %p329
      %p653 = pneg %p326
      %p654 = scmp.lt.s32.totalorder %s41, 1
      %s655 = scalar_select %p654, %s41, 1
      %s656 = smul.addr %s655, 16
      %s657 = smul.addr %s656, 4
      %s658 = scalar_lea.vmem %s12, %s657
      %p659 = pneg %p355
      %p660 = pneg %p352
      %p661 = scmp.lt.s32.totalorder %s41, 1
      %s662 = scalar_select %p661, %s41, 1
      %s663 = scalar_lea.vmem %s13, %s662
      %p664 = pneg %p381
      %p665 = pneg %p378
      %p666 = pneg %p402
      %p667 = pneg %p399
      %p668 = pneg %p423
      %p669 = pneg %p420
      %p670 = pneg %p444
      %p671 = pneg %p441
      %p672 = pneg %p470
      %p673 = pneg %p467
      %p674 = scmp.lt.s32.totalorder %s40, 3
      %s675 = scalar_select %p674, %s40, 3
      %s676 = smul.addr %s675, 8
      %s677 = scalar_lea.vmem %s17, %s676
      %p678 = scmp.lt.s32.totalorder %s40, 3
      %s679 = scalar_select %p678, %s40, 3
      %s680 = smul.addr %s679, 8
      %s681 = scalar_lea.vmem %s1, %s680
      %p682 = scmp.lt.s32.totalorder %s41, 1
      %s683 = scalar_select %p682, %s41, 1
      %s684 = scalar_lea.vmem %s2, %s683
      %p685 = scmp.lt.s32.totalorder %s41, 1
      %s686 = scalar_select %p685, %s41, 1
      %s687 = scalar_lea.vmem %s3, %s686
      %p688 = scmp.lt.s32.totalorder %s41, 1
      %s689 = scalar_select %p688, %s41, 1
      %s690 = smul.addr %s689, 4
      %s691 = smul.addr %s690, 4
      %s692 = scalar_lea.vmem %s4, %s691
      %p693 = scmp.lt.s32.totalorder %s41, 1
      %s694 = scalar_select %p693, %s41, 1
      %s695 = scalar_lea.vmem %s5, %s694
      %p696 = scmp.lt.s32.totalorder %s41, 1
      %s697 = scalar_select %p696, %s41, 1
      %s698 = smul.addr %s697, 4
      %s699 = smul.addr %s698, 4
      %s700 = scalar_lea.vmem %s6, %s699
      %p701 = scmp.lt.s32.totalorder %s41, 1
      %s702 = scalar_select %p701, %s41, 1
      %s703 = scalar_lea.vmem %s7, %s702
      %p704 = scmp.lt.s32.totalorder %s41, 1
      %s705 = scalar_select %p704, %s41, 1
      %s706 = scalar_lea.vmem %s8, %s705
      %p707 = scmp.lt.s32.totalorder %s41, 1
      %s708 = scalar_select %p707, %s41, 1
      %s709 = scalar_lea.vmem %s9, %s708
      %p710 = scmp.lt.s32.totalorder %s41, 1
      %s711 = scalar_select %p710, %s41, 1
      %s712 = smul.addr %s711, 4
      %s713 = smul.addr %s712, 4
      %s714 = scalar_lea.vmem %s10, %s713
      %p715 = scmp.lt.s32.totalorder %s41, 1
      %s716 = scalar_select %p715, %s41, 1
      %s717 = scalar_lea.vmem %s11, %s716
      %p718 = scmp.lt.s32.totalorder %s41, 1
      %s719 = scalar_select %p718, %s41, 1
      %s720 = smul.addr %s719, 16
      %s721 = smul.addr %s720, 4
      %s722 = scalar_lea.vmem %s12, %s721
      %p723 = scmp.lt.s32.totalorder %s41, 1
      %s724 = scalar_select %p723, %s41, 1
      %s725 = scalar_lea.vmem %s13, %s724
      %p726 = scmp.lt.s32.totalorder %s40, 3
      %s727 = scalar_select %p726, %s40, 3
      %s728 = smul.addr %s727, 8
      %s729 = scalar_lea.vmem %s17, %s728
      %p731 = scmp.eq.s32.totalorder %s41, 0
      // Predicated region
      $region85: #{_forward_numeric.5} parent=83 // pred_check
        %p732 = pneg %p731
      $region86: #{_forward_numeric.5} parent=83 // pred_check_branch
        %734 = sbr.rel (%p732) target = $region88
      $region87: #{_forward_numeric.5} parent=83 // pred_region
        %v735 = vld [vmem:[%s681] sm:$0xff]
        %vm736 = vcmask 261120
        %737 = vst.msk [vmem:[#allocation5] sm:$0xff] %vm736, %v735
      $region88: #{_forward_numeric.5} parent=83 // pred_fallthru
        _
      %v738 = vld [vmem:[#allocation5] sm:$0xff]
      %v739 = vld [vmem:[%s684] sm:$0x1]
      %v740 = vld [vmem:[%s687] sm:$0x1]
      %vm741 = vcmask 261120
      %v742 = vsel %vm741, %v738, 0.0
      %743 = vadd.xlane.f32.xlu0 %v742
      %v744 = vpop.xlane.xlu0 %743
      %v745 = vrcp.pop 32.0
      %v746 = vmul.f32 32.0, %v745
      %v747 = vsub.f32 1.0, %v746
      %v748 = vmul.f32 %v745, %v747
      %v749 = vadd.f32 %v745, %v748
      %vm750 = vweird.f32 %v745
      %v751 = vsel %vm750, %v745, %v749
      %v752 = vmul.f32 %v744, %v751
      %v753 = vsub.f32 %v738, %v752
      %v754 = vmul.f32 %v753, %v753
      %v755 = vsel %vm741, %v754, 0.0
      %756 = vadd.xlane.f32.xlu0 %v755
      %v757 = vpop.xlane.xlu0 %756
      %v758 = vmul.f32 %v757, %v751
      %v759 = vadd.f32 %v758, 1e-05
      %v760 = vrsqrt.pop %v759
      %v761 = vmul.f32 %v760, %v759
      %v762 = vmul.f32 %v761, %v760
      %v763 = vmul.f32 0.5, %v762
      %v764 = vsub.f32 1.5, %v763
      %v765 = vmul.f32 %v760, %v764
      %vm766 = vweird.f32 %v759
      %vm767 = vweird.f32 %v760
      %vm768 = vmor %vm766, %vm767
      %v769 = vsel %vm768, %v760, %v765
      %v770 = vmul.f32 %v753, %v769
      %v772 = vperm.slane %v739, 0
      %v774 = vmul.f32 %v770, %v772
      %v776 = vperm.slane %v740, 0
      %v778 = vadd.f32 %v774, %v776
      %v779 = vpack.c.bf16 %v778, %v778
      %v780 = vld [vmem:[%s692] sm:$0xf]
      %v781 = vld [vmem:[%s692 + $0x4] sm:$0xf]
      %v782 = vld [vmem:[%s692 + $0x8] sm:$0xf]
      %v783 = vld [vmem:[%s692 + $0xc] sm:$0xf]
      %v784 = vld [vmem:[%s695] sm:$0x1]
      %v786 = vperm.slane %v784, 0
      %v792 = vunpack.c.l.b16 %v780
      %v793 = vunpack.c.l.b16 %v781
      %v794 = vunpack.c.l.b16 %v782
      %v795 = vunpack.c.l.b16 %v783
      %v796 = vpack.c.b16 %v793, %v792
      %v797 = vpack.c.b16 %v795, %v794
      %v801 = vsel %vm741, %v779, 0
      %803 = vmatpush.bf16.msra.mxu0 0
      %804 = vmatpush.bf16.msra.mxu0 0
      %805 = vmatpush.bf16.msra.mxu0 0
      %806 = vmatpush.bf16.msra.mxu0 0
      %807 = vmatpush.bf16.msra.mxu0 0
      %808 = vmatpush.bf16.msra.mxu0 0
      %809 = vmatpush.bf16.msra.mxu0 %v797
      %810 = vmatpush.bf16.msra.mxu0 %v796
      %811 = vmatmul.bf16.gmra.mxu0 %v801
      %v812 = vpop.f32.mrf.mxu0
      %v813 = vadd.f32 %v786, %v812
      %v814 = vpop.f32.mrf.mxu0
      %815 = vdwg.mxu0
      %vm816 = vcmask 785408
      %817 = vst.msk [vmem:[#allocation2] sm:$0xff] %vm816, %v813
      %v818 = vlaneseq
      %v819 = vshrl.u32 %v818, 7
      %v820 = vlaneseq
      %v821 = vand.u32 %v820, 127
      %vm822 = vcmp.le.s32.totalorder %v821, %v819
      %v823 = vsel %vm822, 0.0, -1e+30
      %v824 = vld [vmem:[#allocation2] sm:$0xff]
      %v825 = vmul.f32 %v824, 0.25
      %v826 = vpack.c.bf16 %v825, %v825
      %v827 = vpack.c.bf16 %v824, %v824
      %829 = vrot.lane.b32.xlu0 %v827, 96
      %v830 = vpop.permute.xlu0 %829
      %vm831 = vcmask 130048
      %v833 = vsel %vm831, %v826, 0
      %v836 = vsel %vm831, %v830, 0
      %838 = vmatpush.bf16.xpose.msra.mxu0 0
      %839 = vmatpush.bf16.xpose.msra.mxu0 0
      %840 = vmatpush.bf16.xpose.msra.mxu0 0
      %841 = vmatpush.bf16.xpose.msra.mxu0 0
      %842 = vmatpush.bf16.xpose.msra.mxu0 0
      %843 = vmatpush.bf16.xpose.msra.mxu0 0
      %844 = vmatpush.bf16.xpose.msra.mxu0 0
      %845 = vmatpush.bf16.xpose.msra.mxu0 %v836
      %846 = vmatmul.bf16.gmra.mxu0 %v833
      %v847 = vpop.f32.mrf.mxu0
      %v848 = vadd.f32 %v823, %v847
      %v849 = vpop.f32.mrf.mxu0
      %850 = vdwg.mxu0
      %vm851 = vcmask 64512
      %852 = vst.msk [vmem:[#allocation3] sm:$0xff] %vm851, %v848
      %v853 = vld [vmem:[#allocation2] sm:$0xff]
      %v854 = vmul.f32 %v853, 0.25
      %v855 = vpack.c.bf16 %v854, %v854
      %v856 = vpack.c.bf16 %v853, %v853
      %858 = vrot.lane.b32.xlu0 %v855, 112
      %v859 = vpop.permute.xlu0 %858
      %861 = vrot.lane.b32.xlu0 %v856, 80
      %v862 = vpop.permute.xlu0 %861
      %v864 = vsel %vm831, %v859, 0
      %v867 = vsel %vm831, %v862, 0
      %869 = vmatpush.bf16.xpose.msra.mxu0 0
      %870 = vmatpush.bf16.xpose.msra.mxu0 0
      %871 = vmatpush.bf16.xpose.msra.mxu0 0
      %872 = vmatpush.bf16.xpose.msra.mxu0 0
      %873 = vmatpush.bf16.xpose.msra.mxu0 0
      %874 = vmatpush.bf16.xpose.msra.mxu0 0
      %875 = vmatpush.bf16.xpose.msra.mxu0 0
      %876 = vmatpush.bf16.xpose.msra.mxu0 %v867
      %877 = vmatmul.bf16.gmra.mxu0 %v864
      %v878 = vpop.f32.mrf.mxu0
      %v879 = vadd.f32 %v823, %v878
      %v880 = vpop.f32.mrf.mxu0
      %881 = vdwg.mxu0
      %882 = vst.msk [vmem:[#allocation3 + $0x8] sm:$0xff] %vm851, %v879
      %v883 = vld [vmem:[#allocation3] sm:$0xff]
      %v884 = vld [vmem:[#allocation3 + $0x8] sm:$0xff]
      %v885 = vsel %vm851, %v883, -inf
      %886 = vmax.xlane.f32.xlu0 %v885
      %v887 = vpop.xlane.xlu0 %886
      %v888 = vsel %vm851, %v884, -inf
      %889 = vmax.xlane.f32.xlu0 %v888
      %v890 = vpop.xlane.xlu0 %889
      %v891 = vsub.f32 %v883, %v887
      %v892 = vsub.f32 %v884, %v890
      %v893 = vmul.f32 %v891, 1.442695
      %v894 = vpow.pop %v893
      %v895 = vmul.f32 %v892, 1.442695
      %v896 = vpow.pop %v895
      %v897 = vsel %vm851, %v894, 0.0
      %898 = vadd.xlane.f32.xlu0 %v897
      %v899 = vpop.xlane.xlu0 %898
      %v900 = vsel %vm851, %v896, 0.0
      %901 = vadd.xlane.f32.xlu0 %v900
      %v902 = vpop.xlane.xlu0 %901
      %v903 = vrcp.pop %v899
      %v904 = vrcp.pop %v902
      %v905 = vmul.f32 %v894, %v903
      %v906 = vmul.f32 %v896, %v904
      %907 = vst.msk [vmem:[#allocation3] sm:$0xff] %vm851, %v905
      %908 = vst.msk [vmem:[#allocation3 + $0x8] sm:$0xff] %vm851, %v906
      %v909 = vld [vmem:[#allocation2] sm:$0xff]
      %v910 = vld [vmem:[#allocation3] sm:$0xff]
      %v911 = vpack.c.bf16 %v910, %v910
      %v912 = vpack.c.bf16 %v909, %v909
      %914 = vrot.lane.b32.xlu0 %v912, 64
      %v915 = vpop.permute.xlu0 %914
      %v917 = vsel %vm851, %v911, 0
      %vm919 = vcmask 1043456
      %v921 = vsel %vm919, %v915, 0
      %923 = vmatpush.bf16.msra.mxu0 0
      %924 = vmatpush.bf16.msra.mxu0 0
      %925 = vmatpush.bf16.msra.mxu0 0
      %926 = vmatpush.bf16.msra.mxu0 0
      %927 = vmatpush.bf16.msra.mxu0 0
      %928 = vmatpush.bf16.msra.mxu0 0
      %929 = vmatpush.bf16.msra.mxu0 0
      %930 = vmatpush.bf16.msra.mxu0 %v921
      %931 = vmatmul.bf16.gmra.mxu0 %v917
      %v932 = vpop.f32.mrf.mxu0
      %v933 = vadd.f32 0.0, %v932
      %v934 = vpop.f32.mrf.mxu0
      %935 = vdwg.mxu0
      %936 = vst.msk [vmem:[#allocation4] sm:$0xff] %vm831, %v933
      %v937 = vld [vmem:[#allocation2] sm:$0xff]
      %v938 = vld [vmem:[#allocation3 + $0x8] sm:$0xff]
      %v939 = vpack.c.bf16 %v938, %v938
      %v940 = vpack.c.bf16 %v937, %v937
      %942 = vrot.lane.b32.xlu0 %v940, 48
      %v943 = vpop.permute.xlu0 %942
      %v945 = vsel %vm851, %v939, 0
      %v948 = vsel %vm919, %v943, 0
      %950 = vmatpush.bf16.msra.mxu0 0
      %951 = vmatpush.bf16.msra.mxu0 0
      %952 = vmatpush.bf16.msra.mxu0 0
      %953 = vmatpush.bf16.msra.mxu0 0
      %954 = vmatpush.bf16.msra.mxu0 0
      %955 = vmatpush.bf16.msra.mxu0 0
      %956 = vmatpush.bf16.msra.mxu0 0
      %957 = vmatpush.bf16.msra.mxu0 %v948
      %958 = vmatmul.bf16.gmra.mxu0 %v945
      %v959 = vpop.f32.mrf.mxu0
      %v960 = vadd.f32 0.0, %v959
      %v961 = vpop.f32.mrf.mxu0
      %962 = vdwg.mxu0
      %964 = vrot.lane.b32.xlu0 %v960, 16
      %v965 = vpop.permute.xlu0 %964
      %vm967 = vcmask 261248
      %968 = vst.msk [vmem:[#allocation4] sm:$0xff] %vm967, %v965
      %v969 = vld [vmem:[#allocation4] sm:$0xff]
      %v970 = vpack.c.bf16 %v969, %v969
      %v971 = vld [vmem:[%s700] sm:$0xf]
      %v972 = vld [vmem:[%s700 + $0x4] sm:$0xf]
      %v973 = vld [vmem:[%s700 + $0x8] sm:$0xf]
      %v974 = vld [vmem:[%s700 + $0xc] sm:$0xf]
      %v979 = vunpack.c.l.b16 %v971
      %v980 = vunpack.c.l.b16 %v972
      %v981 = vunpack.c.l.b16 %v973
      %v982 = vunpack.c.l.b16 %v974
      %v983 = vpack.c.b16 %v980, %v979
      %v984 = vpack.c.b16 %v982, %v981
      %v988 = vsel %vm741, %v970, 0
      %990 = vmatpush.bf16.msra.mxu0 0
      %991 = vmatpush.bf16.msra.mxu0 0
      %992 = vmatpush.bf16.msra.mxu0 0
      %993 = vmatpush.bf16.msra.mxu0 0
      %994 = vmatpush.bf16.msra.mxu0 0
      %995 = vmatpush.bf16.msra.mxu0 0
      %996 = vmatpush.bf16.msra.mxu0 %v984
      %997 = vmatpush.bf16.msra.mxu0 %v983
      %998 = vmatmul.bf16.gmra.mxu0 %v988
      %v999 = vpop.f32.mrf.mxu0
      %v1000 = vadd.f32 0.0, %v999
      %v1001 = vpop.f32.mrf.mxu0
      %1002 = vdwg.mxu0
      %v1003 = vadd.f32 %v738, %v1000
      %v1004 = vld [vmem:[%s703] sm:$0x1]
      %v1006 = vperm.slane %v1004, 0
      %v1008 = vadd.f32 %v1003, %v1006
      %v1009 = vld [vmem:[%s706] sm:$0x1]
      %v1010 = vld [vmem:[%s709] sm:$0x1]
      %v1011 = vsel %vm741, %v1008, 0.0
      %1012 = vadd.xlane.f32.xlu0 %v1011
      %v1013 = vpop.xlane.xlu0 %1012
      %v1014 = vmul.f32 %v1013, %v751
      %v1015 = vsub.f32 %v1008, %v1014
      %v1016 = vmul.f32 %v1015, %v1015
      %v1017 = vsel %vm741, %v1016, 0.0
      %1018 = vadd.xlane.f32.xlu0 %v1017
      %v1019 = vpop.xlane.xlu0 %1018
      %v1020 = vmul.f32 %v1019, %v751
      %v1021 = vadd.f32 %v1020, 1e-05
      %v1022 = vrsqrt.pop %v1021
      %v1023 = vmul.f32 %v1022, %v1021
      %v1024 = vmul.f32 %v1023, %v1022
      %v1025 = vmul.f32 0.5, %v1024
      %v1026 = vsub.f32 1.5, %v1025
      %v1027 = vmul.f32 %v1022, %v1026
      %vm1028 = vweird.f32 %v1021
      %vm1029 = vweird.f32 %v1022
      %vm1030 = vmor %vm1028, %vm1029
      %v1031 = vsel %vm1030, %v1022, %v1027
      %v1032 = vmul.f32 %v1015, %v1031
      %v1034 = vperm.slane %v1009, 0
      %v1036 = vmul.f32 %v1032, %v1034
      %v1038 = vperm.slane %v1010, 0
      %v1040 = vadd.f32 %v1036, %v1038
      %v1041 = vpack.c.bf16 %v1040, %v1040
      %v1042 = vld [vmem:[%s714] sm:$0xf]
      %v1043 = vld [vmem:[%s714 + $0x4] sm:$0xf]
      %v1044 = vld [vmem:[%s714 + $0x8] sm:$0xf]
      %v1045 = vld [vmem:[%s714 + $0xc] sm:$0xf]
      %v1046 = vld [vmem:[%s717] sm:$0x1]
      %v1048 = vperm.slane %v1046, 0
      %v1054 = vunpack.c.l.b16 %v1042
      %v1055 = vunpack.c.l.b16 %v1043
      %v1056 = vunpack.c.l.b16 %v1044
      %v1057 = vunpack.c.l.b16 %v1045
      %v1058 = vpack.c.b16 %v1055, %v1054
      %v1059 = vpack.c.b16 %v1057, %v1056
      %v1063 = vsel %vm741, %v1041, 0
      %1065 = vmatpush.bf16.msra.mxu0 0
      %1066 = vmatpush.bf16.msra.mxu0 0
      %1067 = vmatpush.bf16.msra.mxu0 0
      %1068 = vmatpush.bf16.msra.mxu0 0
      %1069 = vmatpush.bf16.msra.mxu0 0
      %1070 = vmatpush.bf16.msra.mxu0 0
      %1071 = vmatpush.bf16.msra.mxu0 %v1059
      %1072 = vmatpush.bf16.msra.mxu0 %v1058
      %1073 = vmatmul.bf16.gmra.mxu0 %v1063
      %v1074 = vpop.f32.mrf.mxu0
      %v1075 = vadd.f32 %v1048, %v1074
      %v1076 = vpop.f32.mrf.mxu0
      %1077 = vdwg.mxu0
      %v1078 = vmul.f32 %v1075, 1.702
      %v1079 = vxor.u32 %v1078, 2147483648
      %v1080 = vmul.f32 %v1079, 1.442695
      %v1081 = vpow.pop %v1080
      %v1082 = vadd.f32 %v1081, 1.0
      %v1083 = vrcp.pop %v1082
      %v1084 = vmul.f32 %v1082, %v1083
      %v1085 = vsub.f32 1.0, %v1084
      %v1086 = vmul.f32 %v1083, %v1085
      %v1087 = vadd.f32 %v1083, %v1086
      %vm1088 = vweird.f32 %v1082
      %vm1089 = vweird.f32 %v1083
      %vm1090 = vmor %vm1088, %vm1089
      %v1091 = vsel %vm1090, %v1083, %v1087
      %v1092 = vand.u32 2147483647, %v1082
      %vm1093 = vcmp.eq.f32.partialorder %v1092, 8.507059e+37
      %v1094 = vand.u32 %v1082, 2147483648
      %v1095 = vor.u32 1.1754944e-38, %v1094
      %v1096 = vsel %vm1093, %v1095, %v1091
      %v1097 = vmul.f32 1.0, %v1096
      %v1098 = vmul.f32 %v1075, %v1097
      %v1099 = vpack.c.bf16 %v1098, %v1098
      %v1100 = vld [vmem:[%s722] sm:$0xf]
      %v1101 = vld [vmem:[%s722 + $0x4] sm:$0xf]
      %v1102 = vld [vmem:[%s722 + $0x8] sm:$0xf]
      %v1103 = vld [vmem:[%s722 + $0xc] sm:$0xf]
      %v1104 = vld [vmem:[%s722 + $0x10] sm:$0xf]
      %v1105 = vld [vmem:[%s722 + $0x14] sm:$0xf]
      %v1106 = vld [vmem:[%s722 + $0x18] sm:$0xf]
      %v1107 = vld [vmem:[%s722 + $0x1c] sm:$0xf]
      %v1108 = vld [vmem:[%s722 + $0x20] sm:$0xf]
      %v1109 = vld [vmem:[%s722 + $0x24] sm:$0xf]
      %v1110 = vld [vmem:[%s722 + $0x28] sm:$0xf]
      %v1111 = vld [vmem:[%s722 + $0x2c] sm:$0xf]
      %v1112 = vld [vmem:[%s722 + $0x30] sm:$0xf]
      %v1113 = vld [vmem:[%s722 + $0x34] sm:$0xf]
      %v1114 = vld [vmem:[%s722 + $0x38] sm:$0xf]
      %v1115 = vld [vmem:[%s722 + $0x3c] sm:$0xf]
      %v1132 = vunpack.c.l.b16 %v1100
      %v1133 = vunpack.c.l.b16 %v1101
      %v1134 = vunpack.c.l.b16 %v1102
      %v1135 = vunpack.c.l.b16 %v1103
      %v1136 = vunpack.c.l.b16 %v1104
      %v1137 = vunpack.c.l.b16 %v1105
      %v1138 = vunpack.c.l.b16 %v1106
      %v1139 = vunpack.c.l.b16 %v1107
      %v1140 = vunpack.c.l.b16 %v1108
      %v1141 = vunpack.c.l.b16 %v1109
      %v1142 = vunpack.c.l.b16 %v1110
      %v1143 = vunpack.c.l.b16 %v1111
      %v1144 = vunpack.c.l.b16 %v1112
      %v1145 = vunpack.c.l.b16 %v1113
      %v1146 = vunpack.c.l.b16 %v1114
      %v1147 = vunpack.c.l.b16 %v1115
      %v1148 = vpack.c.b16 %v1133, %v1132
      %v1149 = vpack.c.b16 %v1135, %v1134
      %v1150 = vpack.c.b16 %v1137, %v1136
      %v1151 = vpack.c.b16 %v1139, %v1138
      %v1152 = vpack.c.b16 %v1141, %v1140
      %v1153 = vpack.c.b16 %v1143, %v1142
      %v1154 = vpack.c.b16 %v1145, %v1144
      %v1155 = vpack.c.b16 %v1147, %v1146
      %1164 = vmatpush.bf16.msra.mxu0 %v1155
      %1165 = vmatpush.bf16.msra.mxu0 %v1154
      %1166 = vmatpush.bf16.msra.mxu0 %v1153
      %1167 = vmatpush.bf16.msra.mxu0 %v1152
      %1168 = vmatpush.bf16.msra.mxu0 %v1151
      %1169 = vmatpush.bf16.msra.mxu0 %v1150
      %1170 = vmatpush.bf16.msra.mxu0 %v1149
      %1171 = vmatpush.bf16.msra.mxu0 %v1148
      %1172 = vmatmul.bf16.gmra.mxu0 %v1099
      %v1173 = vpop.f32.mrf.mxu0
      %v1174 = vadd.f32 0.0, %v1173
      %v1175 = vpop.f32.mrf.mxu0
      %1176 = vdwg.mxu0
      %v1177 = vadd.f32 %v1008, %v1174
      %v1178 = vld [vmem:[%s725] sm:$0x1]
      %v1180 = vperm.slane %v1178, 0
      %v1182 = vadd.f32 %v1177, %v1180
      %1183 = vst.msk [vmem:[#allocation5] sm:$0xff] %vm741, %v1182
      %p1184 = scmp.eq.s32.totalorder %s41, 1
      // Predicated region
      $region89: #{_forward_numeric.5} parent=83 // pred_check
        %p1185 = pneg %p1184
      $region90: #{_forward_numeric.5} parent=83 // pred_check_branch
        %1187 = sbr.rel (%p1185) target = $region92
      $region91: #{_forward_numeric.5} parent=83 // pred_region
        %s1188 = sld [smem:[#allocation7 + %s40]]
        %s1189 = scalar_lea.vmem [#allocation5], %s1188
        %v1190 = vld [vmem:[%s1189] sm:$0x1]
        %v1191 = vld [vmem:[%s14] sm:$0x1]
        %v1192 = vld [vmem:[%s15] sm:$0x1]
        %vm1193 = vcmask 253952
        %v1194 = vsel %vm1193, %v1190, 0.0
        %1195 = vadd.xlane.f32.xlu0 %v1194
        %v1196 = vpop.xlane.xlu0 %1195
        %v1197 = vmul.f32 %v1196, %v751
        %v1198 = vsub.f32 %v1190, %v1197
        %v1199 = vmul.f32 %v1198, %v1198
        %v1200 = vsel %vm1193, %v1199, 0.0
        %1201 = vadd.xlane.f32.xlu0 %v1200
        %v1202 = vpop.xlane.xlu0 %1201
        %v1203 = vmul.f32 %v1202, %v751
        %v1204 = vadd.f32 %v1203, 1e-05
        %v1205 = vrsqrt.pop %v1204
        %v1206 = vmul.f32 %v1205, %v1204
        %v1207 = vmul.f32 %v1206, %v1205
        %v1208 = vmul.f32 0.5, %v1207
        %v1209 = vsub.f32 1.5, %v1208
        %v1210 = vmul.f32 %v1205, %v1209
        %vm1211 = vweird.f32 %v1204
        %vm1212 = vweird.f32 %v1205
        %vm1213 = vmor %vm1211, %vm1212
        %v1214 = vsel %vm1213, %v1205, %v1210
        %v1215 = vmul.f32 %v1198, %v1214
        %v1216 = vmul.f32 %v1215, %v1191
        %v1217 = vadd.f32 %v1216, %v1192
        %v1218 = vpack.c.bf16 %v1217, %v1217
        %v1219 = vld [vmem:[%s16] sm:$0xf]
        %v1220 = vld [vmem:[%s16 + $0x4] sm:$0xf]
        %v1221 = vld [vmem:[%s16 + $0x8] sm:$0xf]
        %v1222 = vld [vmem:[%s16 + $0xc] sm:$0xf]
        %v1227 = vunpack.c.l.b16 %v1219
        %v1228 = vunpack.c.l.b16 %v1220
        %v1229 = vunpack.c.l.b16 %v1221
        %v1230 = vunpack.c.l.b16 %v1222
        %v1231 = vpack.c.b16 %v1228, %v1227
        %v1232 = vpack.c.b16 %v1230, %v1229
        %v1236 = vsel %vm741, %v1218, 0
        %1238 = vmatpush.bf16.msra.mxu0 0
        %1239 = vmatpush.bf16.msra.mxu0 0
        %1240 = vmatpush.bf16.msra.mxu0 0
        %1241 = vmatpush.bf16.msra.mxu0 0
        %1242 = vmatpush.bf16.msra.mxu0 0
        %1243 = vmatpush.bf16.msra.mxu0 0
        %1244 = vmatpush.bf16.msra.mxu0 %v1232
        %1245 = vmatpush.bf16.msra.mxu0 %v1231
        %1246 = vmatmul.bf16.gmra.mxu0 %v1236
        %v1247 = vpop.f32.mrf.mxu0
        %v1248 = vadd.f32 0.0, %v1247
        %v1249 = vpop.f32.mrf.mxu0
        %1250 = vdwg.mxu0
        %v1251 = vmul.f32 %v1248, %v1248
        %vm1252 = vcmask 1040384
        %v1253 = vsel %vm1252, %v1251, 0.0
        %1254 = vadd.xlane.f32.xlu0 %v1253
        %v1255 = vpop.xlane.xlu0 %1254
        %v1256 = vmax.f32 %v1255, 1e-24
        %v1257 = vrsqrt.pop %v1256
        %v1258 = vmul.f32 %v1257, %v1256
        %v1259 = vmul.f32 %v1258, %v1257
        %v1260 = vmul.f32 0.5, %v1259
        %v1261 = vsub.f32 1.5, %v1260
        %v1262 = vmul.f32 %v1257, %v1261
        %vm1263 = vweird.f32 %v1256
        %vm1264 = vweird.f32 %v1257
        %vm1265 = vmor %vm1263, %vm1264
        %v1266 = vsel %vm1265, %v1257, %v1262
        %v1267 = vmul.f32 %v1248, %v1266
        %v1268 = vperm.slane %v1267, 0
        %1269 = vst [vmem:[%s729] sm:$0xff] %v1268
      $region92: #{_forward_numeric.5} parent=83 // pred_fallthru
        _
      %p1270 = scmp.lt.s32.totalorder %s40, 3
      %s1271 = scalar_select %p1270, %s40, 3
      %s1272 = smul.addr %s1271, 8
      %s1273 = scalar_lea.vmem %s17, %s1272
      // Predicated region
      $region93: #{_forward_numeric.5} parent=83 // pred_check
        %p1274 = pneg %p467
      $region94: #{_forward_numeric.5} parent=83 // pred_check_branch
        %1276 = sbr.rel (%p1274) target = $region96
      $region95: #{_forward_numeric.5} parent=83 // pred_region
        _
      $region96: #{_forward_numeric.5} parent=83 // pred_fallthru
        _
    $region84: #{_forward_numeric.5} parent=5 // pred_fallthru
      _
    %p1277 = scmp.le.s32.totalorder 2, %s31
    // Predicated region
    $region97: #{_forward_numeric.5} parent=5 // pred_check
      %p1278 = pneg %p1277
    $region98: #{_forward_numeric.5} parent=5 // pred_check_branch
      %1280 = sbr.rel (%p1278) target = $region100
    $region99: #{_forward_numeric.5} parent=5 // pred_region
      %s1281 = ssub.s32 %s31, 2
      // Predicated region
      $region101: #{_forward_numeric.5} parent=99 // pred_check
        %p1282 = pneg %p473
      $region102: #{_forward_numeric.5} parent=99 // pred_check_branch
        %1284 = sbr.rel (%p1282) target = $region104
      $region103: #{_forward_numeric.5} parent=99 // pred_region
        %p1285 = scmp.lt.s32.totalorder %s42, 3
        %s1286 = scalar_select %p1285, %s42, 3
        %s1287 = smul.addr %s1286, 8
        %s1288 = scalar_lea.vmem %s17, %s1287
      $region104: #{_forward_numeric.5} parent=99 // pred_fallthru
        _
    $region100: #{_forward_numeric.5} parent=5 // pred_fallthru
      _
  $region6: #{_forward_numeric.5} parent=0 // loop_footer
    %s35 = sadd.s32 1, %s31
  $region7: #{_forward_numeric.5} parent=0 // loop_footer_branch
    %30 = sbr.rel target = $region3
  $region8: #{_forward_numeric.5} parent=0 // loop_exit
    _

// kernel: _forward_numeric.7
$region0: #{_forward_numeric.7}
  #allocation0 [shape = 'u32[]', space=smem, size = 0x4, offset = 0x4, fixed_abs, tag = 'smem constant byte address 0x4 - core index']
  #allocation1 [shape = 'u32[72,128]{1,0:T(1,128)}', space=vmem, size = 0x9000, scoped, tag = 'internal scratch']
  #allocation2 [shape = 'f32[8,192]{1,0:T(8,128)}', space=vmem, size = 0x2000, scoped, tag = 'scratch operand']
  #allocation3 [shape = 'f32[32,8]{1,0:T(8,128)}', space=vmem, size = 0x4000, scoped, tag = 'scratch operand']
  #allocation4 [shape = 'f32[8,64]{1,0:T(8,128)}', space=vmem, size = 0x1000, scoped, tag = 'scratch operand']
  #allocation5 [shape = 'f32[8,64]{1,0:T(8,128)}', space=vmem, size = 0x1000, scoped, tag = 'scratch operand']
  #allocation6 [shape = 's32[1]{0}', space=sflag, size = 0x4, scoped, tag = 'scoped memory for _forward_numeric.7']
  #allocation7 [shape = 'u8[512]{0}', space=smem, size = 0x200, scoped, tag = 'prefetched SMEM operand 0']
  %s0 = inlined_call_operand.vmem [shape: s32[4], index: 0, kind: input, shape index: {}]
  %s1 = inlined_call_operand.vmem [shape: f32[4,8,64], index: 1, kind: input, shape index: {}]
  %s2 = inlined_call_operand.vmem [shape: f32[2,1,64], index: 2, kind: input, shape index: {}, may-alias: {2,8}]
  %s3 = inlined_call_operand.vmem [shape: f32[2,1,64], index: 3, kind: input, shape index: {}, may-alias: {3,7,9,13}]
  %s4 = inlined_call_operand.vmem [shape: bf16[2,64,192], index: 4, kind: input, shape index: {}]
  %s5 = inlined_call_operand.vmem [shape: f32[2,1,192], index: 5, kind: input, shape index: {}]
  %s6 = inlined_call_operand.vmem [shape: bf16[2,64,64], index: 6, kind: input, shape index: {}]
  %s7 = inlined_call_operand.vmem [shape: f32[2,1,64], index: 7, kind: input, shape index: {}, may-alias: {3,7,9,13}]
  %s8 = inlined_call_operand.vmem [shape: f32[2,1,64], index: 8, kind: input, shape index: {}, may-alias: {2,8}]
  %s9 = inlined_call_operand.vmem [shape: f32[2,1,64], index: 9, kind: input, shape index: {}, may-alias: {3,7,9,13}]
  %s10 = inlined_call_operand.vmem [shape: bf16[2,64,256], index: 10, kind: input, shape index: {}]
  %s11 = inlined_call_operand.vmem [shape: f32[2,1,256], index: 11, kind: input, shape index: {}]
  %s12 = inlined_call_operand.vmem [shape: bf16[2,256,64], index: 12, kind: input, shape index: {}]
  %s13 = inlined_call_operand.vmem [shape: f32[2,1,64], index: 13, kind: input, shape index: {}, may-alias: {3,7,9,13}]
  %s14 = inlined_call_operand.vmem [shape: f32[1,64], index: 14, kind: input, shape index: {}]
  %s15 = inlined_call_operand.vmem [shape: f32[1,64], index: 15, kind: input, shape index: {}]
  %s16 = inlined_call_operand.vmem [shape: bf16[64,128], index: 16, kind: input, shape index: {}]
  %s17 = inlined_call_operand.vmem [shape: f32[4,8,128], index: 17, kind: output, shape index: {}]
  %s18 = sld [smem:[#allocation0]]
  $region105: #{_forward_numeric.7} parent=0
    _
  %s20 = ssub.s32 1, %s18
  %s21 = scalar_select 0, %s20, %s18
  %s23 = sshll.u32 %s0, 4
  %s24 = int_to_ptr.vmem [resolvable:$true] %s23
  %26 = dma.vmem_to_smem %s24, 16, [#allocation7], [#allocation6]
  %28 = dma.done [#allocation6], 16
  %29 = sfence
  loop: start=0, step=1, limit=10
  $region2: #{_forward_numeric.7} parent=0 // loop_pre_header
    _
  $region3: #{_forward_numeric.7} parent=0 // loop_header
    %s31 = sphi 0, %s35
    %p32 = scmp.ge.s32.totalorder %s31, 10
    %s38 = sphi 0, %s50
    %s39 = sphi 0, %s46
    %s40 = sphi 0, %s38
    %s41 = sphi 0, %s39
    %s42 = sphi 0, %s40
    %s43 = sphi 0, %s41
    %s53 = sphi 0, %s55
    %s56 = sphi 0, %s53
    %s57 = sphi 0, %s56
    %s73 = sphi 0, %s57
    %s79 = sphi 0, %s81
    %s82 = sphi 0, %s79
    %s83 = sphi 0, %s82
    %s99 = sphi 0, %s83
    %s105 = sphi 0, %s107
    %s108 = sphi 0, %s105
    %s109 = sphi 0, %s108
    %s125 = sphi 0, %s109
    %s131 = sphi 0, %s133
    %s134 = sphi 0, %s131
    %s135 = sphi 0, %s134
    %s151 = sphi 0, %s135
    %s157 = sphi 0, %s159
    %s160 = sphi 0, %s157
    %s161 = sphi 0, %s160
    %s177 = sphi 0, %s161
    %s183 = sphi 0, %s185
    %s186 = sphi 0, %s183
    %s187 = sphi 0, %s186
    %s203 = sphi 0, %s187
    %s209 = sphi 0, %s211
    %s212 = sphi 0, %s209
    %s213 = sphi 0, %s212
    %s229 = sphi 0, %s213
    %s235 = sphi 0, %s237
    %s238 = sphi 0, %s235
    %s239 = sphi 0, %s238
    %s255 = sphi 0, %s239
    %s261 = sphi 0, %s263
    %s264 = sphi 0, %s261
    %s265 = sphi 0, %s264
    %s281 = sphi 0, %s265
    %s287 = sphi 0, %s289
    %s290 = sphi 0, %s287
    %s291 = sphi 0, %s290
    %s307 = sphi 0, %s291
    %s313 = sphi 0, %s315
    %s316 = sphi 0, %s313
    %s317 = sphi 0, %s316
    %s333 = sphi 0, %s317
    %s339 = sphi 0, %s341
    %s342 = sphi 0, %s339
    %s343 = sphi 0, %s342
    %s359 = sphi 0, %s343
    %s365 = sphi 0, %s367
    %s368 = sphi 0, %s365
    %s369 = sphi 0, %s368
    %s385 = sphi 0, %s369
    %s389 = sphi 0, %s389
    %s391 = sphi 0, %s389
    %s392 = sphi 0, %s391
    %s406 = sphi 0, %s392
    %s410 = sphi 0, %s410
    %s412 = sphi 0, %s410
    %s413 = sphi 0, %s412
    %s427 = sphi 0, %s413
    %s431 = sphi 0, %s431
    %s433 = sphi 0, %s431
    %s434 = sphi 0, %s433
    %s448 = sphi 0, %s434
    %s454 = sphi 0, %s456
    %s457 = sphi 0, %s454
    %s458 = sphi 0, %s457
    %s474 = sphi 0, %s458
  $region4: #{_forward_numeric.7} parent=0 // loop_header_branch
    %34 = sbr.rel (%p32) target = $region8
  $region5: #{_forward_numeric.7} parent=0 // loop_body
    %s36 = ssub.s32 %s31, 1
    %s37 = ssub.s32 %s31, 2
    %s44 = sadd.s32 1, %s39
    %p45 = scmp.ge.s32.totalorder %s44, 2
    %s46 = scalar_select %p45, 0, %s44
    %s47 = sadd.s32 1, %s38
    %s48 = scalar_select %p45, %s47, %s38
    %p49 = scmp.ge.s32.totalorder %s48, 4
    %s50 = scalar_select %p49, 0, %s48
    %s51 = ssub.s32 %s38, %s50
    %p52 = scmp.eq.s32.totalorder %s51, 0
    %s54 = sadd.s32 %s53, 1
    %s55 = scalar_select %p52, %s53, %s54
    %p58 = pneg %p52
    %p59 = scmp.eq.s32.totalorder %s31, 7
    %p60 = por %p58, %p59
    %p61 = scmp.ne.s32.totalorder %s53, %s56
    %p62 = scmp.eq.s32.totalorder %s31, 0
    %p63 = por %p61, %p62
    %p64 = scmp.ne.s32.totalorder %s53, %s56
    %p65 = scmp.eq.s32.totalorder %s36, 7
    %p66 = por %p64, %p65
    %p67 = scmp.ne.s32.totalorder %s56, %s57
    %p68 = scmp.eq.s32.totalorder %s36, 0
    %p69 = por %p67, %p68
    %p70 = scmp.ne.s32.totalorder %s56, %s57
    %p71 = scmp.eq.s32.totalorder %s37, 7
    %p72 = por %p70, %p71
    %p74 = scmp.ne.s32.totalorder %s57, %s73
    %p75 = scmp.eq.s32.totalorder %s37, 0
    %p76 = por %p74, %p75
    %s77 = ssub.s32 %s39, %s46
    %p78 = scmp.eq.s32.totalorder %s77, 0
    %s80 = sadd.s32 %s79, 1
    %s81 = scalar_select %p78, %s79, %s80
    %p84 = pneg %p78
    %p85 = scmp.eq.s32.totalorder %s31, 7
    %p86 = por %p84, %p85
    %p87 = scmp.ne.s32.totalorder %s79, %s82
    %p88 = scmp.eq.s32.totalorder %s31, 0
    %p89 = por %p87, %p88
    %p90 = scmp.ne.s32.totalorder %s79, %s82
    %p91 = scmp.eq.s32.totalorder %s36, 7
    %p92 = por %p90, %p91
    %p93 = scmp.ne.s32.totalorder %s82, %s83
    %p94 = scmp.eq.s32.totalorder %s36, 0
    %p95 = por %p93, %p94
    %p96 = scmp.ne.s32.totalorder %s82, %s83
    %p97 = scmp.eq.s32.totalorder %s37, 7
    %p98 = por %p96, %p97
    %p100 = scmp.ne.s32.totalorder %s83, %s99
    %p101 = scmp.eq.s32.totalorder %s37, 0
    %p102 = por %p100, %p101
    %s103 = ssub.s32 %s39, %s46
    %p104 = scmp.eq.s32.totalorder %s103, 0
    %s106 = sadd.s32 %s105, 1
    %s107 = scalar_select %p104, %s105, %s106
    %p110 = pneg %p104
    %p111 = scmp.eq.s32.totalorder %s31, 7
    %p112 = por %p110, %p111
    %p113 = scmp.ne.s32.totalorder %s105, %s108
    %p114 = scmp.eq.s32.totalorder %s31, 0
    %p115 = por %p113, %p114
    %p116 = scmp.ne.s32.totalorder %s105, %s108
    %p117 = scmp.eq.s32.totalorder %s36, 7
    %p118 = por %p116, %p117
    %p119 = scmp.ne.s32.totalorder %s108, %s109
    %p120 = scmp.eq.s32.totalorder %s36, 0
    %p121 = por %p119, %p120
    %p122 = scmp.ne.s32.totalorder %s108, %s109
    %p123 = scmp.eq.s32.totalorder %s37, 7
    %p124 = por %p122, %p123
    %p126 = scmp.ne.s32.totalorder %s109, %s125
    %p127 = scmp.eq.s32.totalorder %s37, 0
    %p128 = por %p126, %p127
    %s129 = ssub.s32 %s39, %s46
    %p130 = scmp.eq.s32.totalorder %s129, 0
    %s132 = sadd.s32 %s131, 1
    %s133 = scalar_select %p130, %s131, %s132
    %p136 = pneg %p130
    %p137 = scmp.eq.s32.totalorder %s31, 7
    %p138 = por %p136, %p137
    %p139 = scmp.ne.s32.totalorder %s131, %s134
    %p140 = scmp.eq.s32.totalorder %s31, 0
    %p141 = por %p139, %p140
    %p142 = scmp.ne.s32.totalorder %s131, %s134
    %p143 = scmp.eq.s32.totalorder %s36, 7
    %p144 = por %p142, %p143
    %p145 = scmp.ne.s32.totalorder %s134, %s135
    %p146 = scmp.eq.s32.totalorder %s36, 0
    %p147 = por %p145, %p146
    %p148 = scmp.ne.s32.totalorder %s134, %s135
    %p149 = scmp.eq.s32.totalorder %s37, 7
    %p150 = por %p148, %p149
    %p152 = scmp.ne.s32.totalorder %s135, %s151
    %p153 = scmp.eq.s32.totalorder %s37, 0
    %p154 = por %p152, %p153
    %s155 = ssub.s32 %s39, %s46
    %p156 = scmp.eq.s32.totalorder %s155, 0
    %s158 = sadd.s32 %s157, 1
    %s159 = scalar_select %p156, %s157, %s158
    %p162 = pneg %p156
    %p163 = scmp.eq.s32.totalorder %s31, 7
    %p164 = por %p162, %p163
    %p165 = scmp.ne.s32.totalorder %s157, %s160
    %p166 = scmp.eq.s32.totalorder %s31, 0
    %p167 = por %p165, %p166
    %p168 = scmp.ne.s32.totalorder %s157, %s160
    %p169 = scmp.eq.s32.totalorder %s36, 7
    %p170 = por %p168, %p169
    %p171 = scmp.ne.s32.totalorder %s160, %s161
    %p172 = scmp.eq.s32.totalorder %s36, 0
    %p173 = por %p171, %p172
    %p174 = scmp.ne.s32.totalorder %s160, %s161
    %p175 = scmp.eq.s32.totalorder %s37, 7
    %p176 = por %p174, %p175
    %p178 = scmp.ne.s32.totalorder %s161, %s177
    %p179 = scmp.eq.s32.totalorder %s37, 0
    %p180 = por %p178, %p179
    %s181 = ssub.s32 %s39, %s46
    %p182 = scmp.eq.s32.totalorder %s181, 0
    %s184 = sadd.s32 %s183, 1
    %s185 = scalar_select %p182, %s183, %s184
    %p188 = pneg %p182
    %p189 = scmp.eq.s32.totalorder %s31, 7
    %p190 = por %p188, %p189
    %p191 = scmp.ne.s32.totalorder %s183, %s186
    %p192 = scmp.eq.s32.totalorder %s31, 0
    %p193 = por %p191, %p192
    %p194 = scmp.ne.s32.totalorder %s183, %s186
    %p195 = scmp.eq.s32.totalorder %s36, 7
    %p196 = por %p194, %p195
    %p197 = scmp.ne.s32.totalorder %s186, %s187
    %p198 = scmp.eq.s32.totalorder %s36, 0
    %p199 = por %p197, %p198
    %p200 = scmp.ne.s32.totalorder %s186, %s187
    %p201 = scmp.eq.s32.totalorder %s37, 7
    %p202 = por %p200, %p201
    %p204 = scmp.ne.s32.totalorder %s187, %s203
    %p205 = scmp.eq.s32.totalorder %s37, 0
    %p206 = por %p204, %p205
    %s207 = ssub.s32 %s39, %s46
    %p208 = scmp.eq.s32.totalorder %s207, 0
    %s210 = sadd.s32 %s209, 1
    %s211 = scalar_select %p208, %s209, %s210
    %p214 = pneg %p208
    %p215 = scmp.eq.s32.totalorder %s31, 7
    %p216 = por %p214, %p215
    %p217 = scmp.ne.s32.totalorder %s209, %s212
    %p218 = scmp.eq.s32.totalorder %s31, 0
    %p219 = por %p217, %p218
    %p220 = scmp.ne.s32.totalorder %s209, %s212
    %p221 = scmp.eq.s32.totalorder %s36, 7
    %p222 = por %p220, %p221
    %p223 = scmp.ne.s32.totalorder %s212, %s213
    %p224 = scmp.eq.s32.totalorder %s36, 0
    %p225 = por %p223, %p224
    %p226 = scmp.ne.s32.totalorder %s212, %s213
    %p227 = scmp.eq.s32.totalorder %s37, 7
    %p228 = por %p226, %p227
    %p230 = scmp.ne.s32.totalorder %s213, %s229
    %p231 = scmp.eq.s32.totalorder %s37, 0
    %p232 = por %p230, %p231
    %s233 = ssub.s32 %s39, %s46
    %p234 = scmp.eq.s32.totalorder %s233, 0
    %s236 = sadd.s32 %s235, 1
    %s237 = scalar_select %p234, %s235, %s236
    %p240 = pneg %p234
    %p241 = scmp.eq.s32.totalorder %s31, 7
    %p242 = por %p240, %p241
    %p243 = scmp.ne.s32.totalorder %s235, %s238
    %p244 = scmp.eq.s32.totalorder %s31, 0
    %p245 = por %p243, %p244
    %p246 = scmp.ne.s32.totalorder %s235, %s238
    %p247 = scmp.eq.s32.totalorder %s36, 7
    %p248 = por %p246, %p247
    %p249 = scmp.ne.s32.totalorder %s238, %s239
    %p250 = scmp.eq.s32.totalorder %s36, 0
    %p251 = por %p249, %p250
    %p252 = scmp.ne.s32.totalorder %s238, %s239
    %p253 = scmp.eq.s32.totalorder %s37, 7
    %p254 = por %p252, %p253
    %p256 = scmp.ne.s32.totalorder %s239, %s255
    %p257 = scmp.eq.s32.totalorder %s37, 0
    %p258 = por %p256, %p257
    %s259 = ssub.s32 %s39, %s46
    %p260 = scmp.eq.s32.totalorder %s259, 0
    %s262 = sadd.s32 %s261, 1
    %s263 = scalar_select %p260, %s261, %s262
    %p266 = pneg %p260
    %p267 = scmp.eq.s32.totalorder %s31, 7
    %p268 = por %p266, %p267
    %p269 = scmp.ne.s32.totalorder %s261, %s264
    %p270 = scmp.eq.s32.totalorder %s31, 0
    %p271 = por %p269, %p270
    %p272 = scmp.ne.s32.totalorder %s261, %s264
    %p273 = scmp.eq.s32.totalorder %s36, 7
    %p274 = por %p272, %p273
    %p275 = scmp.ne.s32.totalorder %s264, %s265
    %p276 = scmp.eq.s32.totalorder %s36, 0
    %p277 = por %p275, %p276
    %p278 = scmp.ne.s32.totalorder %s264, %s265
    %p279 = scmp.eq.s32.totalorder %s37, 7
    %p280 = por %p278, %p279
    %p282 = scmp.ne.s32.totalorder %s265, %s281
    %p283 = scmp.eq.s32.totalorder %s37, 0
    %p284 = por %p282, %p283
    %s285 = ssub.s32 %s39, %s46
    %p286 = scmp.eq.s32.totalorder %s285, 0
    %s288 = sadd.s32 %s287, 1
    %s289 = scalar_select %p286, %s287, %s288
    %p292 = pneg %p286
    %p293 = scmp.eq.s32.totalorder %s31, 7
    %p294 = por %p292, %p293
    %p295 = scmp.ne.s32.totalorder %s287, %s290
    %p296 = scmp.eq.s32.totalorder %s31, 0
    %p297 = por %p295, %p296
    %p298 = scmp.ne.s32.totalorder %s287, %s290
    %p299 = scmp.eq.s32.totalorder %s36, 7
    %p300 = por %p298, %p299
    %p301 = scmp.ne.s32.totalorder %s290, %s291
    %p302 = scmp.eq.s32.totalorder %s36, 0
    %p303 = por %p301, %p302
    %p304 = scmp.ne.s32.totalorder %s290, %s291
    %p305 = scmp.eq.s32.totalorder %s37, 7
    %p306 = por %p304, %p305
    %p308 = scmp.ne.s32.totalorder %s291, %s307
    %p309 = scmp.eq.s32.totalorder %s37, 0
    %p310 = por %p308, %p309
    %s311 = ssub.s32 %s39, %s46
    %p312 = scmp.eq.s32.totalorder %s311, 0
    %s314 = sadd.s32 %s313, 1
    %s315 = scalar_select %p312, %s313, %s314
    %p318 = pneg %p312
    %p319 = scmp.eq.s32.totalorder %s31, 7
    %p320 = por %p318, %p319
    %p321 = scmp.ne.s32.totalorder %s313, %s316
    %p322 = scmp.eq.s32.totalorder %s31, 0
    %p323 = por %p321, %p322
    %p324 = scmp.ne.s32.totalorder %s313, %s316
    %p325 = scmp.eq.s32.totalorder %s36, 7
    %p326 = por %p324, %p325
    %p327 = scmp.ne.s32.totalorder %s316, %s317
    %p328 = scmp.eq.s32.totalorder %s36, 0
    %p329 = por %p327, %p328
    %p330 = scmp.ne.s32.totalorder %s316, %s317
    %p331 = scmp.eq.s32.totalorder %s37, 7
    %p332 = por %p330, %p331
    %p334 = scmp.ne.s32.totalorder %s317, %s333
    %p335 = scmp.eq.s32.totalorder %s37, 0
    %p336 = por %p334, %p335
    %s337 = ssub.s32 %s39, %s46
    %p338 = scmp.eq.s32.totalorder %s337, 0
    %s340 = sadd.s32 %s339, 1
    %s341 = scalar_select %p338, %s339, %s340
    %p344 = pneg %p338
    %p345 = scmp.eq.s32.totalorder %s31, 7
    %p346 = por %p344, %p345
    %p347 = scmp.ne.s32.totalorder %s339, %s342
    %p348 = scmp.eq.s32.totalorder %s31, 0
    %p349 = por %p347, %p348
    %p350 = scmp.ne.s32.totalorder %s339, %s342
    %p351 = scmp.eq.s32.totalorder %s36, 7
    %p352 = por %p350, %p351
    %p353 = scmp.ne.s32.totalorder %s342, %s343
    %p354 = scmp.eq.s32.totalorder %s36, 0
    %p355 = por %p353, %p354
    %p356 = scmp.ne.s32.totalorder %s342, %s343
    %p357 = scmp.eq.s32.totalorder %s37, 7
    %p358 = por %p356, %p357
    %p360 = scmp.ne.s32.totalorder %s343, %s359
    %p361 = scmp.eq.s32.totalorder %s37, 0
    %p362 = por %p360, %p361
    %s363 = ssub.s32 %s39, %s46
    %p364 = scmp.eq.s32.totalorder %s363, 0
    %s366 = sadd.s32 %s365, 1
    %s367 = scalar_select %p364, %s365, %s366
    %p370 = pneg %p364
    %p371 = scmp.eq.s32.totalorder %s31, 7
    %p372 = por %p370, %p371
    %p373 = scmp.ne.s32.totalorder %s365, %s368
    %p374 = scmp.eq.s32.totalorder %s31, 0
    %p375 = por %p373, %p374
    %p376 = scmp.ne.s32.totalorder %s365, %s368
    %p377 = scmp.eq.s32.totalorder %s36, 7
    %p378 = por %p376, %p377
    %p379 = scmp.ne.s32.totalorder %s368, %s369
    %p380 = scmp.eq.s32.totalorder %s36, 0
    %p381 = por %p379, %p380
    %p382 = scmp.ne.s32.totalorder %s368, %s369
    %p383 = scmp.eq.s32.totalorder %s37, 7
    %p384 = por %p382, %p383
    %p386 = scmp.ne.s32.totalorder %s369, %s385
    %p387 = scmp.eq.s32.totalorder %s37, 0
    %p388 = por %p386, %p387
    %s390 = sadd.s32 %s389, 1
    %p393 = scmp.eq.s32.totalorder %s31, 7
    %p394 = scmp.ne.s32.totalorder %s389, %s391
    %p395 = scmp.eq.s32.totalorder %s31, 0
    %p396 = por %p394, %p395
    %p397 = scmp.ne.s32.totalorder %s389, %s391
    %p398 = scmp.eq.s32.totalorder %s36, 7
    %p399 = por %p397, %p398
    %p400 = scmp.ne.s32.totalorder %s391, %s392
    %p401 = scmp.eq.s32.totalorder %s36, 0
    %p402 = por %p400, %p401
    %p403 = scmp.ne.s32.totalorder %s391, %s392
    %p404 = scmp.eq.s32.totalorder %s37, 7
    %p405 = por %p403, %p404
    %p407 = scmp.ne.s32.totalorder %s392, %s406
    %p408 = scmp.eq.s32.totalorder %s37, 0
    %p409 = por %p407, %p408
    %s411 = sadd.s32 %s410, 1
    %p414 = scmp.eq.s32.totalorder %s31, 7
    %p415 = scmp.ne.s32.totalorder %s410, %s412
    %p416 = scmp.eq.s32.totalorder %s31, 0
    %p417 = por %p415, %p416
    %p418 = scmp.ne.s32.totalorder %s410, %s412
    %p419 = scmp.eq.s32.totalorder %s36, 7
    %p420 = por %p418, %p419
    %p421 = scmp.ne.s32.totalorder %s412, %s413
    %p422 = scmp.eq.s32.totalorder %s36, 0
    %p423 = por %p421, %p422
    %p424 = scmp.ne.s32.totalorder %s412, %s413
    %p425 = scmp.eq.s32.totalorder %s37, 7
    %p426 = por %p424, %p425
    %p428 = scmp.ne.s32.totalorder %s413, %s427
    %p429 = scmp.eq.s32.totalorder %s37, 0
    %p430 = por %p428, %p429
    %s432 = sadd.s32 %s431, 1
    %p435 = scmp.eq.s32.totalorder %s31, 7
    %p436 = scmp.ne.s32.totalorder %s431, %s433
    %p437 = scmp.eq.s32.totalorder %s31, 0
    %p438 = por %p436, %p437
    %p439 = scmp.ne.s32.totalorder %s431, %s433
    %p440 = scmp.eq.s32.totalorder %s36, 7
    %p441 = por %p439, %p440
    %p442 = scmp.ne.s32.totalorder %s433, %s434
    %p443 = scmp.eq.s32.totalorder %s36, 0
    %p444 = por %p442, %p443
    %p445 = scmp.ne.s32.totalorder %s433, %s434
    %p446 = scmp.eq.s32.totalorder %s37, 7
    %p447 = por %p445, %p446
    %p449 = scmp.ne.s32.totalorder %s434, %s448
    %p450 = scmp.eq.s32.totalorder %s37, 0
    %p451 = por %p449, %p450
    %s452 = ssub.s32 %s38, %s50
    %p453 = scmp.eq.s32.totalorder %s452, 0
    %s455 = sadd.s32 %s454, 1
    %s456 = scalar_select %p453, %s454, %s455
    %p459 = pneg %p453
    %p460 = scmp.eq.s32.totalorder %s31, 7
    %p461 = por %p459, %p460
    %p462 = scmp.ne.s32.totalorder %s454, %s457
    %p463 = scmp.eq.s32.totalorder %s31, 0
    %p464 = por %p462, %p463
    %p465 = scmp.ne.s32.totalorder %s454, %s457
    %p466 = scmp.eq.s32.totalorder %s36, 7
    %p467 = por %p465, %p466
    %p468 = scmp.ne.s32.totalorder %s457, %s458
    %p469 = scmp.eq.s32.totalorder %s36, 0
    %p470 = por %p468, %p469
    %p471 = scmp.ne.s32.totalorder %s457, %s458
    %p472 = scmp.eq.s32.totalorder %s37, 7
    %p473 = por %p471, %p472
    %p475 = scmp.ne.s32.totalorder %s458, %s474
    %p476 = scmp.eq.s32.totalorder %s37, 0
    %p477 = por %p475, %p476
    %p478 = scmp.le.s32.totalorder 1, %s31
    %p479 = scmp.lt.s32.totalorder %s31, 9
    %p480 = pnand %p478, %p479
    %p481 = pneg %p480
    // Predicated region
    $region9: #{_forward_numeric.7} parent=5 // pred_check
      _
    $region10: #{_forward_numeric.7} parent=5 // pred_check_branch
      %483 = sbr.rel (%p480) target = $region12
    $region11: #{_forward_numeric.7} parent=5 // pred_region
      %s484 = ssub.s32 %s31, 1
      // Predicated region
      $region13: #{_forward_numeric.7} parent=11 // pred_check
        %p485 = pneg %p402
      $region14: #{_forward_numeric.7} parent=11 // pred_check_branch
        %487 = sbr.rel (%p485) target = $region16
      $region15: #{_forward_numeric.7} parent=11 // pred_region
        _
      $region16: #{_forward_numeric.7} parent=11 // pred_fallthru
        _
      // Predicated region
      $region17: #{_forward_numeric.7} parent=11 // pred_check
        %p488 = pneg %p423
      $region18: #{_forward_numeric.7} parent=11 // pred_check_branch
        %490 = sbr.rel (%p488) target = $region20
      $region19: #{_forward_numeric.7} parent=11 // pred_region
        _
      $region20: #{_forward_numeric.7} parent=11 // pred_fallthru
        _
      // Predicated region
      $region21: #{_forward_numeric.7} parent=11 // pred_check
        %p491 = pneg %p444
      $region22: #{_forward_numeric.7} parent=11 // pred_check_branch
        %493 = sbr.rel (%p491) target = $region24
      $region23: #{_forward_numeric.7} parent=11 // pred_region
        _
      $region24: #{_forward_numeric.7} parent=11 // pred_fallthru
        _
    $region12: #{_forward_numeric.7} parent=5 // pred_fallthru
      _
    %p494 = scmp.lt.s32.totalorder %s31, 8
    // Predicated region
    $region25: #{_forward_numeric.7} parent=5 // pred_check
      %p495 = pneg %p494
    $region26: #{_forward_numeric.7} parent=5 // pred_check_branch
      %497 = sbr.rel (%p495) target = $region28
    $region27: #{_forward_numeric.7} parent=5 // pred_region
      // Predicated region
      $region29: #{_forward_numeric.7} parent=27 // pred_check
        %p498 = pneg %p63
      $region30: #{_forward_numeric.7} parent=27 // pred_check_branch
        %500 = sbr.rel (%p498) target = $region32
      $region31: #{_forward_numeric.7} parent=27 // pred_region
        %p501 = scmp.lt.s32.totalorder %s38, 3
        %s502 = scalar_select %p501, %s38, 3
        %s503 = smul.addr %s502, 8
        %s504 = scalar_lea.vmem %s1, %s503
      $region32: #{_forward_numeric.7} parent=27 // pred_fallthru
        _
      // Predicated region
      $region33: #{_forward_numeric.7} parent=27 // pred_check
        %p505 = pneg %p89
      $region34: #{_forward_numeric.7} parent=27 // pred_check_branch
        %507 = sbr.rel (%p505) target = $region36
      $region35: #{_forward_numeric.7} parent=27 // pred_region
        %p508 = scmp.lt.s32.totalorder %s39, 1
        %s509 = scalar_select %p508, %s39, 1
        %s510 = scalar_lea.vmem %s2, %s509
      $region36: #{_forward_numeric.7} parent=27 // pred_fallthru
        _
      // Predicated region
      $region37: #{_forward_numeric.7} parent=27 // pred_check
        %p511 = pneg %p115
      $region38: #{_forward_numeric.7} parent=27 // pred_check_branch
        %513 = sbr.rel (%p511) target = $region40
      $region39: #{_forward_numeric.7} parent=27 // pred_region
        %p514 = scmp.lt.s32.totalorder %s39, 1
        %s515 = scalar_select %p514, %s39, 1
        %s516 = scalar_lea.vmem %s3, %s515
      $region40: #{_forward_numeric.7} parent=27 // pred_fallthru
        _
      // Predicated region
      $region41: #{_forward_numeric.7} parent=27 // pred_check
        %p517 = pneg %p141
      $region42: #{_forward_numeric.7} parent=27 // pred_check_branch
        %519 = sbr.rel (%p517) target = $region44
      $region43: #{_forward_numeric.7} parent=27 // pred_region
        %p520 = scmp.lt.s32.totalorder %s39, 1
        %s521 = scalar_select %p520, %s39, 1
        %s522 = smul.addr %s521, 16
        %s523 = smul.addr %s522, 4
        %s524 = scalar_lea.vmem %s4, %s523
      $region44: #{_forward_numeric.7} parent=27 // pred_fallthru
        _
      // Predicated region
      $region45: #{_forward_numeric.7} parent=27 // pred_check
        %p525 = pneg %p167
      $region46: #{_forward_numeric.7} parent=27 // pred_check_branch
        %527 = sbr.rel (%p525) target = $region48
      $region47: #{_forward_numeric.7} parent=27 // pred_region
        %p528 = scmp.lt.s32.totalorder %s39, 1
        %s529 = scalar_select %p528, %s39, 1
        %s530 = smul.addr %s529, 2
        %s531 = scalar_lea.vmem %s5, %s530
      $region48: #{_forward_numeric.7} parent=27 // pred_fallthru
        _
      // Predicated region
      $region49: #{_forward_numeric.7} parent=27 // pred_check
        %p532 = pneg %p193
      $region50: #{_forward_numeric.7} parent=27 // pred_check_branch
        %534 = sbr.rel (%p532) target = $region52
      $region51: #{_forward_numeric.7} parent=27 // pred_region
        %p535 = scmp.lt.s32.totalorder %s39, 1
        %s536 = scalar_select %p535, %s39, 1
        %s537 = smul.addr %s536, 8
        %s538 = smul.addr %s537, 4
        %s539 = scalar_lea.vmem %s6, %s538
      $region52: #{_forward_numeric.7} parent=27 // pred_fallthru
        _
      // Predicated region
      $region53: #{_forward_numeric.7} parent=27 // pred_check
        %p540 = pneg %p219
      $region54: #{_forward_numeric.7} parent=27 // pred_check_branch
        %542 = sbr.rel (%p540) target = $region56
      $region55: #{_forward_numeric.7} parent=27 // pred_region
        %p543 = scmp.lt.s32.totalorder %s39, 1
        %s544 = scalar_select %p543, %s39, 1
        %s545 = scalar_lea.vmem %s7, %s544
      $region56: #{_forward_numeric.7} parent=27 // pred_fallthru
        _
      // Predicated region
      $region57: #{_forward_numeric.7} parent=27 // pred_check
        %p546 = pneg %p245
      $region58: #{_forward_numeric.7} parent=27 // pred_check_branch
        %548 = sbr.rel (%p546) target = $region60
      $region59: #{_forward_numeric.7} parent=27 // pred_region
        %p549 = scmp.lt.s32.totalorder %s39, 1
        %s550 = scalar_select %p549, %s39, 1
        %s551 = scalar_lea.vmem %s8, %s550
      $region60: #{_forward_numeric.7} parent=27 // pred_fallthru
        _
      // Predicated region
      $region61: #{_forward_numeric.7} parent=27 // pred_check
        %p552 = pneg %p271
      $region62: #{_forward_numeric.7} parent=27 // pred_check_branch
        %554 = sbr.rel (%p552) target = $region64
      $region63: #{_forward_numeric.7} parent=27 // pred_region
        %p555 = scmp.lt.s32.totalorder %s39, 1
        %s556 = scalar_select %p555, %s39, 1
        %s557 = scalar_lea.vmem %s9, %s556
      $region64: #{_forward_numeric.7} parent=27 // pred_fallthru
        _
      // Predicated region
      $region65: #{_forward_numeric.7} parent=27 // pred_check
        %p558 = pneg %p297
      $region66: #{_forward_numeric.7} parent=27 // pred_check_branch
        %560 = sbr.rel (%p558) target = $region68
      $region67: #{_forward_numeric.7} parent=27 // pred_region
        %p561 = scmp.lt.s32.totalorder %s39, 1
        %s562 = scalar_select %p561, %s39, 1
        %s563 = smul.addr %s562, 16
        %s564 = smul.addr %s563, 4
        %s565 = scalar_lea.vmem %s10, %s564
      $region68: #{_forward_numeric.7} parent=27 // pred_fallthru
        _
      // Predicated region
      $region69: #{_forward_numeric.7} parent=27 // pred_check
        %p566 = pneg %p323
      $region70: #{_forward_numeric.7} parent=27 // pred_check_branch
        %568 = sbr.rel (%p566) target = $region72
      $region71: #{_forward_numeric.7} parent=27 // pred_region
        %p569 = scmp.lt.s32.totalorder %s39, 1
        %s570 = scalar_select %p569, %s39, 1
        %s571 = smul.addr %s570, 2
        %s572 = scalar_lea.vmem %s11, %s571
      $region72: #{_forward_numeric.7} parent=27 // pred_fallthru
        _
      // Predicated region
      $region73: #{_forward_numeric.7} parent=27 // pred_check
        %p573 = pneg %p349
      $region74: #{_forward_numeric.7} parent=27 // pred_check_branch
        %575 = sbr.rel (%p573) target = $region76
      $region75: #{_forward_numeric.7} parent=27 // pred_region
        %p576 = scmp.lt.s32.totalorder %s39, 1
        %s577 = scalar_select %p576, %s39, 1
        %s578 = smul.addr %s577, 32
        %s579 = smul.addr %s578, 4
        %s580 = scalar_lea.vmem %s12, %s579
      $region76: #{_forward_numeric.7} parent=27 // pred_fallthru
        _
      // Predicated region
      $region77: #{_forward_numeric.7} parent=27 // pred_check
        %p581 = pneg %p375
      $region78: #{_forward_numeric.7} parent=27 // pred_check_branch
        %583 = sbr.rel (%p581) target = $region80
      $region79: #{_forward_numeric.7} parent=27 // pred_region
        %p584 = scmp.lt.s32.totalorder %s39, 1
        %s585 = scalar_select %p584, %s39, 1
        %s586 = scalar_lea.vmem %s13, %s585
      $region80: #{_forward_numeric.7} parent=27 // pred_fallthru
        _
    $region28: #{_forward_numeric.7} parent=5 // pred_fallthru
      _
    %p587 = scmp.le.s32.totalorder 1, %s31
    %p588 = scmp.lt.s32.totalorder %s31, 9
    %p589 = pnand %p587, %p588
    %p590 = pneg %p589
    // Predicated region
    $region81: #{_forward_numeric.7} parent=5 // pred_check
      _
    $region82: #{_forward_numeric.7} parent=5 // pred_check_branch
      %592 = sbr.rel (%p589) target = $region84
    $region83: #{_forward_numeric.7} parent=5 // pred_region
      %s593 = ssub.s32 %s31, 1
      %p594 = scmp.lt.s32.totalorder %s40, 3
      %s595 = scalar_select %p594, %s40, 3
      %s596 = smul.addr %s595, 8
      %s597 = scalar_lea.vmem %s1, %s596
      %p598 = pneg %p69
      %p599 = pneg %p66
      %p600 = scmp.lt.s32.totalorder %s41, 1
      %s601 = scalar_select %p600, %s41, 1
      %s602 = scalar_lea.vmem %s2, %s601
      %p603 = pneg %p95
      %p604 = pneg %p92
      %p605 = scmp.lt.s32.totalorder %s41, 1
      %s606 = scalar_select %p605, %s41, 1
      %s607 = scalar_lea.vmem %s3, %s606
      %p608 = pneg %p121
      %p609 = pneg %p118
      %p610 = scmp.lt.s32.totalorder %s41, 1
      %s611 = scalar_select %p610, %s41, 1
      %s612 = smul.addr %s611, 16
      %s613 = smul.addr %s612, 4
      %s614 = scalar_lea.vmem %s4, %s613
      %p615 = pneg %p147
      %p616 = pneg %p144
      %p617 = scmp.lt.s32.totalorder %s41, 1
      %s618 = scalar_select %p617, %s41, 1
      %s619 = smul.addr %s618, 2
      %s620 = scalar_lea.vmem %s5, %s619
      %p621 = pneg %p173
      %p622 = pneg %p170
      %p623 = scmp.lt.s32.totalorder %s41, 1
      %s624 = scalar_select %p623, %s41, 1
      %s625 = smul.addr %s624, 8
      %s626 = smul.addr %s625, 4
      %s627 = scalar_lea.vmem %s6, %s626
      %p628 = pneg %p199
      %p629 = pneg %p196
      %p630 = scmp.lt.s32.totalorder %s41, 1
      %s631 = scalar_select %p630, %s41, 1
      %s632 = scalar_lea.vmem %s7, %s631
      %p633 = pneg %p225
      %p634 = pneg %p222
      %p635 = scmp.lt.s32.totalorder %s41, 1
      %s636 = scalar_select %p635, %s41, 1
      %s637 = scalar_lea.vmem %s8, %s636
      %p638 = pneg %p251
      %p639 = pneg %p248
      %p640 = scmp.lt.s32.totalorder %s41, 1
      %s641 = scalar_select %p640, %s41, 1
      %s642 = scalar_lea.vmem %s9, %s641
      %p643 = pneg %p277
      %p644 = pneg %p274
      %p645 = scmp.lt.s32.totalorder %s41, 1
      %s646 = scalar_select %p645, %s41, 1
      %s647 = smul.addr %s646, 16
      %s648 = smul.addr %s647, 4
      %s649 = scalar_lea.vmem %s10, %s648
      %p650 = pneg %p303
      %p651 = pneg %p300
      %p652 = scmp.lt.s32.totalorder %s41, 1
      %s653 = scalar_select %p652, %s41, 1
      %s654 = smul.addr %s653, 2
      %s655 = scalar_lea.vmem %s11, %s654
      %p656 = pneg %p329
      %p657 = pneg %p326
      %p658 = scmp.lt.s32.totalorder %s41, 1
      %s659 = scalar_select %p658, %s41, 1
      %s660 = smul.addr %s659, 32
      %s661 = smul.addr %s660, 4
      %s662 = scalar_lea.vmem %s12, %s661
      %p663 = pneg %p355
      %p664 = pneg %p352
      %p665 = scmp.lt.s32.totalorder %s41, 1
      %s666 = scalar_select %p665, %s41, 1
      %s667 = scalar_lea.vmem %s13, %s666
      %p668 = pneg %p381
      %p669 = pneg %p378
      %p670 = pneg %p402
      %p671 = pneg %p399
      %p672 = pneg %p423
      %p673 = pneg %p420
      %p674 = pneg %p444
      %p675 = pneg %p441
      %p676 = pneg %p470
      %p677 = pneg %p467
      %p678 = scmp.lt.s32.totalorder %s40, 3
      %s679 = scalar_select %p678, %s40, 3
      %s680 = smul.addr %s679, 8
      %s681 = scalar_lea.vmem %s17, %s680
      %p682 = scmp.lt.s32.totalorder %s40, 3
      %s683 = scalar_select %p682, %s40, 3
      %s684 = smul.addr %s683, 8
      %s685 = scalar_lea.vmem %s1, %s684
      %p686 = scmp.lt.s32.totalorder %s41, 1
      %s687 = scalar_select %p686, %s41, 1
      %s688 = scalar_lea.vmem %s2, %s687
      %p689 = scmp.lt.s32.totalorder %s41, 1
      %s690 = scalar_select %p689, %s41, 1
      %s691 = scalar_lea.vmem %s3, %s690
      %p692 = scmp.lt.s32.totalorder %s41, 1
      %s693 = scalar_select %p692, %s41, 1
      %s694 = smul.addr %s693, 16
      %s695 = smul.addr %s694, 4
      %s696 = scalar_lea.vmem %s4, %s695
      %p697 = scmp.lt.s32.totalorder %s41, 1
      %s698 = scalar_select %p697, %s41, 1
      %s699 = smul.addr %s698, 2
      %s700 = scalar_lea.vmem %s5, %s699
      %p701 = scmp.lt.s32.totalorder %s41, 1
      %s702 = scalar_select %p701, %s41, 1
      %s703 = smul.addr %s702, 8
      %s704 = smul.addr %s703, 4
      %s705 = scalar_lea.vmem %s6, %s704
      %p706 = scmp.lt.s32.totalorder %s41, 1
      %s707 = scalar_select %p706, %s41, 1
      %s708 = scalar_lea.vmem %s7, %s707
      %p709 = scmp.lt.s32.totalorder %s41, 1
      %s710 = scalar_select %p709, %s41, 1
      %s711 = scalar_lea.vmem %s8, %s710
      %p712 = scmp.lt.s32.totalorder %s41, 1
      %s713 = scalar_select %p712, %s41, 1
      %s714 = scalar_lea.vmem %s9, %s713
      %p715 = scmp.lt.s32.totalorder %s41, 1
      %s716 = scalar_select %p715, %s41, 1
      %s717 = smul.addr %s716, 16
      %s718 = smul.addr %s717, 4
      %s719 = scalar_lea.vmem %s10, %s718
      %p720 = scmp.lt.s32.totalorder %s41, 1
      %s721 = scalar_select %p720, %s41, 1
      %s722 = smul.addr %s721, 2
      %s723 = scalar_lea.vmem %s11, %s722
      %p724 = scmp.lt.s32.totalorder %s41, 1
      %s725 = scalar_select %p724, %s41, 1
      %s726 = smul.addr %s725, 32
      %s727 = smul.addr %s726, 4
      %s728 = scalar_lea.vmem %s12, %s727
      %p729 = scmp.lt.s32.totalorder %s41, 1
      %s730 = scalar_select %p729, %s41, 1
      %s731 = scalar_lea.vmem %s13, %s730
      %p732 = scmp.lt.s32.totalorder %s40, 3
      %s733 = scalar_select %p732, %s40, 3
      %s734 = smul.addr %s733, 8
      %s735 = scalar_lea.vmem %s17, %s734
      %p737 = scmp.eq.s32.totalorder %s41, 0
      // Predicated region
      $region85: #{_forward_numeric.7} parent=83 // pred_check
        %p738 = pneg %p737
      $region86: #{_forward_numeric.7} parent=83 // pred_check_branch
        %740 = sbr.rel (%p738) target = $region88
      $region87: #{_forward_numeric.7} parent=83 // pred_region
        %v741 = vld [vmem:[%s685] sm:$0xff]
        %vm742 = vcmask 523264
        %743 = vst.msk [vmem:[#allocation5] sm:$0xff] %vm742, %v741
      $region88: #{_forward_numeric.7} parent=83 // pred_fallthru
        _
      %v744 = vld [vmem:[#allocation5] sm:$0xff]
      %v745 = vld [vmem:[%s688] sm:$0x1]
      %v746 = vld [vmem:[%s691] sm:$0x1]
      %vm747 = vcmask 523264
      %v748 = vsel %vm747, %v744, 0.0
      %749 = vadd.xlane.f32.xlu0 %v748
      %v750 = vpop.xlane.xlu0 %749
      %v751 = vrcp.pop 64.0
      %v752 = vmul.f32 64.0, %v751
      %v753 = vsub.f32 1.0, %v752
      %v754 = vmul.f32 %v751, %v753
      %v755 = vadd.f32 %v751, %v754
      %vm756 = vweird.f32 %v751
      %v757 = vsel %vm756, %v751, %v755
      %v758 = vmul.f32 %v750, %v757
      %v759 = vsub.f32 %v744, %v758
      %v760 = vmul.f32 %v759, %v759
      %v761 = vsel %vm747, %v760, 0.0
      %762 = vadd.xlane.f32.xlu0 %v761
      %v763 = vpop.xlane.xlu0 %762
      %v764 = vmul.f32 %v763, %v757
      %v765 = vadd.f32 %v764, 1e-05
      %v766 = vrsqrt.pop %v765
      %v767 = vmul.f32 %v766, %v765
      %v768 = vmul.f32 %v767, %v766
      %v769 = vmul.f32 0.5, %v768
      %v770 = vsub.f32 1.5, %v769
      %v771 = vmul.f32 %v766, %v770
      %vm772 = vweird.f32 %v765
      %vm773 = vweird.f32 %v766
      %vm774 = vmor %vm772, %vm773
      %v775 = vsel %vm774, %v766, %v771
      %v776 = vmul.f32 %v759, %v775
      %v778 = vperm.slane %v745, 0
      %v780 = vmul.f32 %v776, %v778
      %v782 = vperm.slane %v746, 0
      %v784 = vadd.f32 %v780, %v782
      %v785 = vpack.c.bf16 %v784, %v784
      %v786 = vld [vmem:[%s696] sm:$0xff]
      %v787 = vld [vmem:[%s696 + $0x8] sm:$0xff]
      %v788 = vld [vmem:[%s696 + $0x10] sm:$0xff]
      %v789 = vld [vmem:[%s696 + $0x18] sm:$0xff]
      %v790 = vld [vmem:[%s696 + $0x20] sm:$0xff]
      %v791 = vld [vmem:[%s696 + $0x28] sm:$0xff]
      %v792 = vld [vmem:[%s696 + $0x30] sm:$0xff]
      %v793 = vld [vmem:[%s696 + $0x38] sm:$0xff]
      %v794 = vld [vmem:[%s700] sm:$0x3]
      %v796 = vperm.slane %v794, 0
      %v797 = vperm.slane %v794, 1
      %v808 = vunpack.c.l.b16 %v786
      %v809 = vunpack.c.h.b16 %v786
      %v810 = vunpack.c.l.b16 %v787
      %v811 = vunpack.c.h.b16 %v787
      %v812 = vunpack.c.l.b16 %v788
      %v813 = vunpack.c.h.b16 %v788
      %v814 = vunpack.c.l.b16 %v789
      %v815 = vunpack.c.h.b16 %v789
      %v816 = vunpack.c.l.b16 %v790
      %v817 = vunpack.c.h.b16 %v790
      %v818 = vunpack.c.l.b16 %v791
      %v819 = vunpack.c.h.b16 %v791
      %v820 = vunpack.c.l.b16 %v792
      %v821 = vunpack.c.h.b16 %v792
      %v822 = vunpack.c.l.b16 %v793
      %v823 = vunpack.c.h.b16 %v793
      %v824 = vpack.c.b16 %v810, %v808
      %v825 = vpack.c.b16 %v811, %v809
      %v826 = vpack.c.b16 %v814, %v812
      %v827 = vpack.c.b16 %v815, %v813
      %v828 = vpack.c.b16 %v818, %v816
      %v829 = vpack.c.b16 %v819, %v817
      %v830 = vpack.c.b16 %v822, %v820
      %v831 = vpack.c.b16 %v823, %v821
      %v841 = vsel %vm747, %v785, 0
      %843 = vmatpush.bf16.msra.mxu0 0
      %844 = vmatpush.bf16.msra.mxu0 0
      %845 = vmatpush.bf16.msra.mxu0 0
      %846 = vmatpush.bf16.msra.mxu0 0
      %847 = vmatpush.bf16.msra.mxu0 %v830
      %848 = vmatpush.bf16.msra.mxu0 %v828
      %849 = vmatpush.bf16.msra.mxu0 %v826
      %850 = vmatpush.bf16.msra.mxu0 %v824
      %851 = vmatmul.bf16.gmra.mxu0 %v841
      %v852 = vpop.f32.mrf.mxu0
      %v853 = vadd.f32 %v796, %v852
      %v854 = vpop.f32.mrf.mxu0
      %855 = vdwg.mxu0
      %856 = vmatpush.bf16.msra.mxu0 0
      %857 = vmatpush.bf16.msra.mxu0 0
      %858 = vmatpush.bf16.msra.mxu0 0
      %859 = vmatpush.bf16.msra.mxu0 0
      %860 = vmatpush.bf16.msra.mxu0 %v831
      %861 = vmatpush.bf16.msra.mxu0 %v829
      %862 = vmatpush.bf16.msra.mxu0 %v827
      %863 = vmatpush.bf16.msra.mxu0 %v825
      %864 = vmatmul.bf16.gmra.mxu0 %v841
      %v865 = vpop.f32.mrf.mxu0
      %v866 = vadd.f32 %v797, %v865
      %v867 = vpop.f32.mrf.mxu0
      %868 = vdwg.mxu0
      %869 = vst [vmem:[#allocation2] sm:$0xff] %v853
      %870 = vst.msk [vmem:[#allocation2 + $0x8] sm:$0xff] %vm747, %v866
      %v871 = vlaneseq
      %v872 = vshrl.u32 %v871, 7
      %v873 = vlaneseq
      %v874 = vand.u32 %v873, 127
      %vm875 = vcmp.le.s32.totalorder %v874, %v872
      %v876 = vsel %vm875, 0.0, -1e+30
      %v877 = vld [vmem:[#allocation2] sm:$0xff]
      %v878 = vmul.f32 %v877, 0.25
      %v879 = vpack.c.bf16 %v878, %v878
      %v880 = vpack.c.bf16 %v877, %v877
      %882 = vrot.lane.b32.xlu0 %v880, 64
      %v883 = vpop.permute.xlu0 %882
      %vm884 = vcmask 130048
      %v886 = vsel %vm884, %v879, 0
      %v889 = vsel %vm884, %v883, 0
      %891 = vmatpush.bf16.xpose.msra.mxu0 0
      %892 = vmatpush.bf16.xpose.msra.mxu0 0
      %893 = vmatpush.bf16.xpose.msra.mxu0 0
      %894 = vmatpush.bf16.xpose.msra.mxu0 0
      %895 = vmatpush.bf16.xpose.msra.mxu0 0
      %896 = vmatpush.bf16.xpose.msra.mxu0 0
      %897 = vmatpush.bf16.xpose.msra.mxu0 0
      %898 = vmatpush.bf16.xpose.msra.mxu0 %v889
      %899 = vmatmul.bf16.gmra.mxu0 %v886
      %v900 = vpop.f32.mrf.mxu0
      %v901 = vadd.f32 %v876, %v900
      %v902 = vpop.f32.mrf.mxu0
      %903 = vdwg.mxu0
      %vm904 = vcmask 64512
      %905 = vst.msk [vmem:[#allocation3] sm:$0xff] %vm904, %v901
      %v906 = vld [vmem:[#allocation2] sm:$0xff]
      %v907 = vmul.f32 %v906, 0.25
      %v908 = vpack.c.bf16 %v907, %v907
      %v909 = vpack.c.bf16 %v906, %v906
      %911 = vrot.lane.b32.xlu0 %v908, 112
      %v912 = vpop.permute.xlu0 %911
      %914 = vrot.lane.b32.xlu0 %v909, 48
      %v915 = vpop.permute.xlu0 %914
      %v917 = vsel %vm884, %v912, 0
      %v920 = vsel %vm884, %v915, 0
      %922 = vmatpush.bf16.xpose.msra.mxu0 0
      %923 = vmatpush.bf16.xpose.msra.mxu0 0
      %924 = vmatpush.bf16.xpose.msra.mxu0 0
      %925 = vmatpush.bf16.xpose.msra.mxu0 0
      %926 = vmatpush.bf16.xpose.msra.mxu0 0
      %927 = vmatpush.bf16.xpose.msra.mxu0 0
      %928 = vmatpush.bf16.xpose.msra.mxu0 0
      %929 = vmatpush.bf16.xpose.msra.mxu0 %v920
      %930 = vmatmul.bf16.gmra.mxu0 %v917
      %v931 = vpop.f32.mrf.mxu0
      %v932 = vadd.f32 %v876, %v931
      %v933 = vpop.f32.mrf.mxu0
      %934 = vdwg.mxu0
      %935 = vst.msk [vmem:[#allocation3 + $0x8] sm:$0xff] %vm904, %v932
      %v936 = vld [vmem:[#allocation2] sm:$0xff]
      %v937 = vmul.f32 %v936, 0.25
      %v938 = vpack.c.bf16 %v937, %v937
      %v939 = vpack.c.bf16 %v936, %v936
      %941 = vrot.lane.b32.xlu0 %v938, 96
      %v942 = vpop.permute.xlu0 %941
      %944 = vrot.lane.b32.xlu0 %v939, 32
      %v945 = vpop.permute.xlu0 %944
      %v947 = vsel %vm884, %v942, 0
      %v950 = vsel %vm884, %v945, 0
      %952 = vmatpush.bf16.xpose.msra.mxu0 0
      %953 = vmatpush.bf16.xpose.msra.mxu0 0
      %954 = vmatpush.bf16.xpose.msra.mxu0 0
      %955 = vmatpush.bf16.xpose.msra.mxu0 0
      %956 = vmatpush.bf16.xpose.msra.mxu0 0
      %957 = vmatpush.bf16.xpose.msra.mxu0 0
      %958 = vmatpush.bf16.xpose.msra.mxu0 0
      %959 = vmatpush.bf16.xpose.msra.mxu0 %v950
      %960 = vmatmul.bf16.gmra.mxu0 %v947
      %v961 = vpop.f32.mrf.mxu0
      %v962 = vadd.f32 %v876, %v961
      %v963 = vpop.f32.mrf.mxu0
      %964 = vdwg.mxu0
      %965 = vst.msk [vmem:[#allocation3 + $0x10] sm:$0xff] %vm904, %v962
      %v966 = vld [vmem:[#allocation2] sm:$0xff]
      %v967 = vmul.f32 %v966, 0.25
      %v968 = vpack.c.bf16 %v967, %v967
      %v969 = vpack.c.bf16 %v966, %v966
      %971 = vrot.lane.b32.xlu0 %v968, 80
      %v972 = vpop.permute.xlu0 %971
      %974 = vrot.lane.b32.xlu0 %v969, 16
      %v975 = vpop.permute.xlu0 %974
      %v977 = vsel %vm884, %v972, 0
      %v980 = vsel %vm884, %v975, 0
      %982 = vmatpush.bf16.xpose.msra.mxu0 0
      %983 = vmatpush.bf16.xpose.msra.mxu0 0
      %984 = vmatpush.bf16.xpose.msra.mxu0 0
      %985 = vmatpush.bf16.xpose.msra.mxu0 0
      %986 = vmatpush.bf16.xpose.msra.mxu0 0
      %987 = vmatpush.bf16.xpose.msra.mxu0 0
      %988 = vmatpush.bf16.xpose.msra.mxu0 0
      %989 = vmatpush.bf16.xpose.msra.mxu0 %v980
      %990 = vmatmul.bf16.gmra.mxu0 %v977
      %v991 = vpop.f32.mrf.mxu0
      %v992 = vadd.f32 %v876, %v991
      %v993 = vpop.f32.mrf.mxu0
      %994 = vdwg.mxu0
      %995 = vst.msk [vmem:[#allocation3 + $0x18] sm:$0xff] %vm904, %v992
      %v996 = vld [vmem:[#allocation3] sm:$0xff]
      %v997 = vld [vmem:[#allocation3 + $0x8] sm:$0xff]
      %v998 = vld [vmem:[#allocation3 + $0x10] sm:$0xff]
      %v999 = vld [vmem:[#allocation3 + $0x18] sm:$0xff]
      %v1000 = vsel %vm904, %v996, -inf
      %1001 = vmax.xlane.f32.xlu0 %v1000
      %v1002 = vpop.xlane.xlu0 %1001
      %v1003 = vsel %vm904, %v997, -inf
      %1004 = vmax.xlane.f32.xlu0 %v1003
      %v1005 = vpop.xlane.xlu0 %1004
      %v1006 = vsel %vm904, %v998, -inf
      %1007 = vmax.xlane.f32.xlu0 %v1006
      %v1008 = vpop.xlane.xlu0 %1007
      %v1009 = vsel %vm904, %v999, -inf
      %1010 = vmax.xlane.f32.xlu0 %v1009
      %v1011 = vpop.xlane.xlu0 %1010
      %v1012 = vsub.f32 %v996, %v1002
      %v1013 = vsub.f32 %v997, %v1005
      %v1014 = vsub.f32 %v998, %v1008
      %v1015 = vsub.f32 %v999, %v1011
      %v1016 = vmul.f32 %v1012, 1.442695
      %v1017 = vpow.pop %v1016
      %v1018 = vmul.f32 %v1013, 1.442695
      %v1019 = vpow.pop %v1018
      %v1020 = vmul.f32 %v1014, 1.442695
      %v1021 = vpow.pop %v1020
      %v1022 = vmul.f32 %v1015, 1.442695
      %v1023 = vpow.pop %v1022
      %v1024 = vsel %vm904, %v1017, 0.0
      %1025 = vadd.xlane.f32.xlu0 %v1024
      %v1026 = vpop.xlane.xlu0 %1025
      %v1027 = vsel %vm904, %v1019, 0.0
      %1028 = vadd.xlane.f32.xlu0 %v1027
      %v1029 = vpop.xlane.xlu0 %1028
      %v1030 = vsel %vm904, %v1021, 0.0
      %1031 = vadd.xlane.f32.xlu0 %v1030
      %v1032 = vpop.xlane.xlu0 %1031
      %v1033 = vsel %vm904, %v1023, 0.0
      %1034 = vadd.xlane.f32.xlu0 %v1033
      %v1035 = vpop.xlane.xlu0 %1034
      %v1036 = vrcp.pop %v1026
      %v1037 = vrcp.pop %v1029
      %v1038 = vrcp.pop %v1032
      %v1039 = vrcp.pop %v1035
      %v1040 = vmul.f32 %v1017, %v1036
      %v1041 = vmul.f32 %v1019, %v1037
      %v1042 = vmul.f32 %v1021, %v1038
      %v1043 = vmul.f32 %v1023, %v1039
      %1044 = vst.msk [vmem:[#allocation3] sm:$0xff] %vm904, %v1040
      %1045 = vst.msk [vmem:[#allocation3 + $0x8] sm:$0xff] %vm904, %v1041
      %1046 = vst.msk [vmem:[#allocation3 + $0x10] sm:$0xff] %vm904, %v1042
      %1047 = vst.msk [vmem:[#allocation3 + $0x18] sm:$0xff] %vm904, %v1043
      %v1048 = vld [vmem:[#allocation2 + $0x8] sm:$0xff]
      %v1049 = vld [vmem:[#allocation3] sm:$0xff]
      %v1050 = vpack.c.bf16 %v1049, %v1049
      %v1051 = vpack.c.bf16 %v1048, %v1048
      %v1053 = vsel %vm904, %v1050, 0
      %vm1055 = vcmask 1043456
      %v1057 = vsel %vm1055, %v1051, 0
      %1059 = vmatpush.bf16.msra.mxu0 0
      %1060 = vmatpush.bf16.msra.mxu0 0
      %1061 = vmatpush.bf16.msra.mxu0 0
      %1062 = vmatpush.bf16.msra.mxu0 0
      %1063 = vmatpush.bf16.msra.mxu0 0
      %1064 = vmatpush.bf16.msra.mxu0 0
      %1065 = vmatpush.bf16.msra.mxu0 0
      %1066 = vmatpush.bf16.msra.mxu0 %v1057
      %1067 = vmatmul.bf16.gmra.mxu0 %v1053
      %v1068 = vpop.f32.mrf.mxu0
      %v1069 = vadd.f32 0.0, %v1068
      %v1070 = vpop.f32.mrf.mxu0
      %1071 = vdwg.mxu0
      %1072 = vst.msk [vmem:[#allocation4] sm:$0xff] %vm884, %v1069
      %v1073 = vld [vmem:[#allocation2 + $0x8] sm:$0xff]
      %v1074 = vld [vmem:[#allocation3 + $0x8] sm:$0xff]
      %v1075 = vpack.c.bf16 %v1074, %v1074
      %v1076 = vpack.c.bf16 %v1073, %v1073
      %1078 = vrot.lane.b32.xlu0 %v1076, 112
      %v1079 = vpop.permute.xlu0 %1078
      %v1081 = vsel %vm904, %v1075, 0
      %v1084 = vsel %vm1055, %v1079, 0
      %1086 = vmatpush.bf16.msra.mxu0 0
      %1087 = vmatpush.bf16.msra.mxu0 0
      %1088 = vmatpush.bf16.msra.mxu0 0
      %1089 = vmatpush.bf16.msra.mxu0 0
      %1090 = vmatpush.bf16.msra.mxu0 0
      %1091 = vmatpush.bf16.msra.mxu0 0
      %1092 = vmatpush.bf16.msra.mxu0 0
      %1093 = vmatpush.bf16.msra.mxu0 %v1084
      %1094 = vmatmul.bf16.gmra.mxu0 %v1081
      %v1095 = vpop.f32.mrf.mxu0
      %v1096 = vadd.f32 0.0, %v1095
      %v1097 = vpop.f32.mrf.mxu0
      %1098 = vdwg.mxu0
      %1100 = vrot.lane.b32.xlu0 %v1096, 16
      %v1101 = vpop.permute.xlu0 %1100
      %vm1103 = vcmask 261248
      %1104 = vst.msk [vmem:[#allocation4] sm:$0xff] %vm1103, %v1101
      %v1105 = vld [vmem:[#allocation2 + $0x8] sm:$0xff]
      %v1106 = vld [vmem:[#allocation3 + $0x10] sm:$0xff]
      %v1107 = vpack.c.bf16 %v1106, %v1106
      %v1108 = vpack.c.bf16 %v1105, %v1105
      %1110 = vrot.lane.b32.xlu0 %v1108, 96
      %v1111 = vpop.permute.xlu0 %1110
      %v1113 = vsel %vm904, %v1107, 0
      %v1116 = vsel %vm1055, %v1111, 0
      %1118 = vmatpush.bf16.msra.mxu0 0
      %1119 = vmatpush.bf16.msra.mxu0 0
      %1120 = vmatpush.bf16.msra.mxu0 0
      %1121 = vmatpush.bf16.msra.mxu0 0
      %1122 = vmatpush.bf16.msra.mxu0 0
      %1123 = vmatpush.bf16.msra.mxu0 0
      %1124 = vmatpush.bf16.msra.mxu0 0
      %1125 = vmatpush.bf16.msra.mxu0 %v1116
      %1126 = vmatmul.bf16.gmra.mxu0 %v1113
      %v1127 = vpop.f32.mrf.mxu0
      %v1128 = vadd.f32 0.0, %v1127
      %v1129 = vpop.f32.mrf.mxu0
      %1130 = vdwg.mxu0
      %1132 = vrot.lane.b32.xlu0 %v1128, 32
      %v1133 = vpop.permute.xlu0 %1132
      %vm1135 = vcmask 392448
      %1136 = vst.msk [vmem:[#allocation4] sm:$0xff] %vm1135, %v1133
      %v1137 = vld [vmem:[#allocation2 + $0x8] sm:$0xff]
      %v1138 = vld [vmem:[#allocation3 + $0x18] sm:$0xff]
      %v1139 = vpack.c.bf16 %v1138, %v1138
      %v1140 = vpack.c.bf16 %v1137, %v1137
      %1142 = vrot.lane.b32.xlu0 %v1140, 80
      %v1143 = vpop.permute.xlu0 %1142
      %v1145 = vsel %vm904, %v1139, 0
      %v1148 = vsel %vm1055, %v1143, 0
      %1150 = vmatpush.bf16.msra.mxu0 0
      %1151 = vmatpush.bf16.msra.mxu0 0
      %1152 = vmatpush.bf16.msra.mxu0 0
      %1153 = vmatpush.bf16.msra.mxu0 0
      %1154 = vmatpush.bf16.msra.mxu0 0
      %1155 = vmatpush.bf16.msra.mxu0 0
      %1156 = vmatpush.bf16.msra.mxu0 0
      %1157 = vmatpush.bf16.msra.mxu0 %v1148
      %1158 = vmatmul.bf16.gmra.mxu0 %v1145
      %v1159 = vpop.f32.mrf.mxu0
      %v1160 = vadd.f32 0.0, %v1159
      %v1161 = vpop.f32.mrf.mxu0
      %1162 = vdwg.mxu0
      %1164 = vrot.lane.b32.xlu0 %v1160, 48
      %v1165 = vpop.permute.xlu0 %1164
      %vm1167 = vcmask 523648
      %1168 = vst.msk [vmem:[#allocation4] sm:$0xff] %vm1167, %v1165
      %v1169 = vld [vmem:[#allocation4] sm:$0xff]
      %v1170 = vpack.c.bf16 %v1169, %v1169
      %v1171 = vld [vmem:[%s705] sm:$0xf]
      %v1172 = vld [vmem:[%s705 + $0x4] sm:$0xf]
      %v1173 = vld [vmem:[%s705 + $0x8] sm:$0xf]
      %v1174 = vld [vmem:[%s705 + $0xc] sm:$0xf]
      %v1175 = vld [vmem:[%s705 + $0x10] sm:$0xf]
      %v1176 = vld [vmem:[%s705 + $0x14] sm:$0xf]
      %v1177 = vld [vmem:[%s705 + $0x18] sm:$0xf]
      %v1178 = vld [vmem:[%s705 + $0x1c] sm:$0xf]
      %v1187 = vunpack.c.l.b16 %v1171
      %v1188 = vunpack.c.l.b16 %v1172
      %v1189 = vunpack.c.l.b16 %v1173
      %v1190 = vunpack.c.l.b16 %v1174
      %v1191 = vunpack.c.l.b16 %v1175
      %v1192 = vunpack.c.l.b16 %v1176
      %v1193 = vunpack.c.l.b16 %v1177
      %v1194 = vunpack.c.l.b16 %v1178
      %v1195 = vpack.c.b16 %v1188, %v1187
      %v1196 = vpack.c.b16 %v1190, %v1189
      %v1197 = vpack.c.b16 %v1192, %v1191
      %v1198 = vpack.c.b16 %v1194, %v1193
      %v1204 = vsel %vm747, %v1170, 0
      %1206 = vmatpush.bf16.msra.mxu0 0
      %1207 = vmatpush.bf16.msra.mxu0 0
      %1208 = vmatpush.bf16.msra.mxu0 0
      %1209 = vmatpush.bf16.msra.mxu0 0
      %1210 = vmatpush.bf16.msra.mxu0 %v1198
      %1211 = vmatpush.bf16.msra.mxu0 %v1197
      %1212 = vmatpush.bf16.msra.mxu0 %v1196
      %1213 = vmatpush.bf16.msra.mxu0 %v1195
      %1214 = vmatmul.bf16.gmra.mxu0 %v1204
      %v1215 = vpop.f32.mrf.mxu0
      %v1216 = vadd.f32 0.0, %v1215
      %v1217 = vpop.f32.mrf.mxu0
      %1218 = vdwg.mxu0
      %v1219 = vadd.f32 %v744, %v1216
      %v1220 = vld [vmem:[%s708] sm:$0x1]
      %v1222 = vperm.slane %v1220, 0
      %v1224 = vadd.f32 %v1219, %v1222
      %v1225 = vld [vmem:[%s711] sm:$0x1]
      %v1226 = vld [vmem:[%s714] sm:$0x1]
      %v1227 = vsel %vm747, %v1224, 0.0
      %1228 = vadd.xlane.f32.xlu0 %v1227
      %v1229 = vpop.xlane.xlu0 %1228
      %v1230 = vmul.f32 %v1229, %v757
      %v1231 = vsub.f32 %v1224, %v1230
      %v1232 = vmul.f32 %v1231, %v1231
      %v1233 = vsel %vm747, %v1232, 0.0
      %1234 = vadd.xlane.f32.xlu0 %v1233
      %v1235 = vpop.xlane.xlu0 %1234
      %v1236 = vmul.f32 %v1235, %v757
      %v1237 = vadd.f32 %v1236, 1e-05
      %v1238 = vrsqrt.pop %v1237
      %v1239 = vmul.f32 %v1238, %v1237
      %v1240 = vmul.f32 %v1239, %v1238
      %v1241 = vmul.f32 0.5, %v1240
      %v1242 = vsub.f32 1.5, %v1241
      %v1243 = vmul.f32 %v1238, %v1242
      %vm1244 = vweird.f32 %v1237
      %vm1245 = vweird.f32 %v1238
      %vm1246 = vmor %vm1244, %vm1245
      %v1247 = vsel %vm1246, %v1238, %v1243
      %v1248 = vmul.f32 %v1231, %v1247
      %v1250 = vperm.slane %v1225, 0
      %v1252 = vmul.f32 %v1248, %v1250
      %v1254 = vperm.slane %v1226, 0
      %v1256 = vadd.f32 %v1252, %v1254
      %v1257 = vpack.c.bf16 %v1256, %v1256
      %v1258 = vld [vmem:[%s719] sm:$0xff]
      %v1259 = vld [vmem:[%s719 + $0x8] sm:$0xff]
      %v1260 = vld [vmem:[%s719 + $0x10] sm:$0xff]
      %v1261 = vld [vmem:[%s719 + $0x18] sm:$0xff]
      %v1262 = vld [vmem:[%s719 + $0x20] sm:$0xff]
      %v1263 = vld [vmem:[%s719 + $0x28] sm:$0xff]
      %v1264 = vld [vmem:[%s719 + $0x30] sm:$0xff]
      %v1265 = vld [vmem:[%s719 + $0x38] sm:$0xff]
      %v1266 = vld [vmem:[%s723] sm:$0x3]
      %v1268 = vperm.slane %v1266, 0
      %v1269 = vperm.slane %v1266, 1
      %v1280 = vunpack.c.l.b16 %v1258
      %v1281 = vunpack.c.h.b16 %v1258
      %v1282 = vunpack.c.l.b16 %v1259
      %v1283 = vunpack.c.h.b16 %v1259
      %v1284 = vunpack.c.l.b16 %v1260
      %v1285 = vunpack.c.h.b16 %v1260
      %v1286 = vunpack.c.l.b16 %v1261
      %v1287 = vunpack.c.h.b16 %v1261
      %v1288 = vunpack.c.l.b16 %v1262
      %v1289 = vunpack.c.h.b16 %v1262
      %v1290 = vunpack.c.l.b16 %v1263
      %v1291 = vunpack.c.h.b16 %v1263
      %v1292 = vunpack.c.l.b16 %v1264
      %v1293 = vunpack.c.h.b16 %v1264
      %v1294 = vunpack.c.l.b16 %v1265
      %v1295 = vunpack.c.h.b16 %v1265
      %v1296 = vpack.c.b16 %v1282, %v1280
      %v1297 = vpack.c.b16 %v1283, %v1281
      %v1298 = vpack.c.b16 %v1286, %v1284
      %v1299 = vpack.c.b16 %v1287, %v1285
      %v1300 = vpack.c.b16 %v1290, %v1288
      %v1301 = vpack.c.b16 %v1291, %v1289
      %v1302 = vpack.c.b16 %v1294, %v1292
      %v1303 = vpack.c.b16 %v1295, %v1293
      %v1313 = vsel %vm747, %v1257, 0
      %1315 = vmatpush.bf16.msra.mxu0 0
      %1316 = vmatpush.bf16.msra.mxu0 0
      %1317 = vmatpush.bf16.msra.mxu0 0
      %1318 = vmatpush.bf16.msra.mxu0 0
      %1319 = vmatpush.bf16.msra.mxu0 %v1302
      %1320 = vmatpush.bf16.msra.mxu0 %v1300
      %1321 = vmatpush.bf16.msra.mxu0 %v1298
      %1322 = vmatpush.bf16.msra.mxu0 %v1296
      %1323 = vmatmul.bf16.gmra.mxu0 %v1313
      %v1324 = vpop.f32.mrf.mxu0
      %v1325 = vadd.f32 %v1268, %v1324
      %v1326 = vpop.f32.mrf.mxu0
      %1327 = vdwg.mxu0
      %1328 = vmatpush.bf16.msra.mxu0 0
      %1329 = vmatpush.bf16.msra.mxu0 0
      %1330 = vmatpush.bf16.msra.mxu0 0
      %1331 = vmatpush.bf16.msra.mxu0 0
      %1332 = vmatpush.bf16.msra.mxu0 %v1303
      %1333 = vmatpush.bf16.msra.mxu0 %v1301
      %1334 = vmatpush.bf16.msra.mxu0 %v1299
      %1335 = vmatpush.bf16.msra.mxu0 %v1297
      %1336 = vmatmul.bf16.gmra.mxu0 %v1313
      %v1337 = vpop.f32.mrf.mxu0
      %v1338 = vadd.f32 %v1269, %v1337
      %v1339 = vpop.f32.mrf.mxu0
      %1340 = vdwg.mxu0
      %v1341 = vmul.f32 %v1325, 1.702
      %v1342 = vmul.f32 %v1338, 1.702
      %v1343 = vxor.u32 %v1341, 2147483648
      %v1344 = vxor.u32 %v1342, 2147483648
      %v1345 = vmul.f32 %v1343, 1.442695
      %v1346 = vpow.pop %v1345
      %v1347 = vmul.f32 %v1344, 1.442695
      %v1348 = vpow.pop %v1347
      %v1349 = vadd.f32 %v1346, 1.0
      %v1350 = vadd.f32 %v1348, 1.0
      %v1351 = vrcp.pop %v1349
      %v1352 = vmul.f32 %v1349, %v1351
      %v1353 = vsub.f32 1.0, %v1352
      %v1354 = vmul.f32 %v1351, %v1353
      %v1355 = vadd.f32 %v1351, %v1354
      %vm1356 = vweird.f32 %v1349
      %vm1357 = vweird.f32 %v1351
      %vm1358 = vmor %vm1356, %vm1357
      %v1359 = vsel %vm1358, %v1351, %v1355
      %v1360 = vand.u32 2147483647, %v1349
      %vm1361 = vcmp.eq.f32.partialorder %v1360, 8.507059e+37
      %v1362 = vand.u32 %v1349, 2147483648
      %v1363 = vor.u32 1.1754944e-38, %v1362
      %v1364 = vsel %vm1361, %v1363, %v1359
      %v1365 = vmul.f32 1.0, %v1364
      %v1366 = vrcp.pop %v1350
      %v1367 = vmul.f32 %v1350, %v1366
      %v1368 = vsub.f32 1.0, %v1367
      %v1369 = vmul.f32 %v1366, %v1368
      %v1370 = vadd.f32 %v1366, %v1369
      %vm1371 = vweird.f32 %v1350
      %vm1372 = vweird.f32 %v1366
      %vm1373 = vmor %vm1371, %vm1372
      %v1374 = vsel %vm1373, %v1366, %v1370
      %v1375 = vand.u32 2147483647, %v1350
      %vm1376 = vcmp.eq.f32.partialorder %v1375, 8.507059e+37
      %v1377 = vand.u32 %v1350, 2147483648
      %v1378 = vor.u32 1.1754944e-38, %v1377
      %v1379 = vsel %vm1376, %v1378, %v1374
      %v1380 = vmul.f32 1.0, %v1379
      %v1381 = vmul.f32 %v1325, %v1365
      %v1382 = vmul.f32 %v1338, %v1380
      %v1383 = vpack.c.bf16 %v1381, %v1381
      %v1384 = vpack.c.bf16 %v1382, %v1382
      %v1385 = vld [vmem:[%s728] sm:$0xf]
      %v1386 = vld [vmem:[%s728 + $0x4] sm:$0xf]
      %v1387 = vld [vmem:[%s728 + $0x8] sm:$0xf]
      %v1388 = vld [vmem:[%s728 + $0xc] sm:$0xf]
      %v1389 = vld [vmem:[%s728 + $0x10] sm:$0xf]
      %v1390 = vld [vmem:[%s728 + $0x14] sm:$0xf]
      %v1391 = vld [vmem:[%s728 + $0x18] sm:$0xf]
      %v1392 = vld [vmem:[%s728 + $0x1c] sm:$0xf]
      %v1393 = vld [vmem:[%s728 + $0x20] sm:$0xf]
      %v1394 = vld [vmem:[%s728 + $0x24] sm:$0xf]
      %v1395 = vld [vmem:[%s728 + $0x28] sm:$0xf]
      %v1396 = vld [vmem:[%s728 + $0x2c] sm:$0xf]
      %v1397 = vld [vmem:[%s728 + $0x30] sm:$0xf]
      %v1398 = vld [vmem:[%s728 + $0x34] sm:$0xf]
      %v1399 = vld [vmem:[%s728 + $0x38] sm:$0xf]
      %v1400 = vld [vmem:[%s728 + $0x3c] sm:$0xf]
      %v1401 = vld [vmem:[%s728 + $0x40] sm:$0xf]
      %v1402 = vld [vmem:[%s728 + $0x44] sm:$0xf]
      %v1403 = vld [vmem:[%s728 + $0x48] sm:$0xf]
      %v1404 = vld [vmem:[%s728 + $0x4c] sm:$0xf]
      %v1405 = vld [vmem:[%s728 + $0x50] sm:$0xf]
      %v1406 = vld [vmem:[%s728 + $0x54] sm:$0xf]
      %v1407 = vld [vmem:[%s728 + $0x58] sm:$0xf]
      %v1408 = vld [vmem:[%s728 + $0x5c] sm:$0xf]
      %v1409 = vld [vmem:[%s728 + $0x60] sm:$0xf]
      %v1410 = vld [vmem:[%s728 + $0x64] sm:$0xf]
      %v1411 = vld [vmem:[%s728 + $0x68] sm:$0xf]
      %v1412 = vld [vmem:[%s728 + $0x6c] sm:$0xf]
      %v1413 = vld [vmem:[%s728 + $0x70] sm:$0xf]
      %v1414 = vld [vmem:[%s728 + $0x74] sm:$0xf]
      %v1415 = vld [vmem:[%s728 + $0x78] sm:$0xf]
      %v1416 = vld [vmem:[%s728 + $0x7c] sm:$0xf]
      %v1449 = vunpack.c.l.b16 %v1385
      %v1450 = vunpack.c.l.b16 %v1386
      %v1451 = vunpack.c.l.b16 %v1387
      %v1452 = vunpack.c.l.b16 %v1388
      %v1453 = vunpack.c.l.b16 %v1389
      %v1454 = vunpack.c.l.b16 %v1390
      %v1455 = vunpack.c.l.b16 %v1391
      %v1456 = vunpack.c.l.b16 %v1392
      %v1457 = vunpack.c.l.b16 %v1393
      %v1458 = vunpack.c.l.b16 %v1394
      %v1459 = vunpack.c.l.b16 %v1395
      %v1460 = vunpack.c.l.b16 %v1396
      %v1461 = vunpack.c.l.b16 %v1397
      %v1462 = vunpack.c.l.b16 %v1398
      %v1463 = vunpack.c.l.b16 %v1399
      %v1464 = vunpack.c.l.b16 %v1400
      %v1465 = vunpack.c.l.b16 %v1401
      %v1466 = vunpack.c.l.b16 %v1402
      %v1467 = vunpack.c.l.b16 %v1403
      %v1468 = vunpack.c.l.b16 %v1404
      %v1469 = vunpack.c.l.b16 %v1405
      %v1470 = vunpack.c.l.b16 %v1406
      %v1471 = vunpack.c.l.b16 %v1407
      %v1472 = vunpack.c.l.b16 %v1408
      %v1473 = vunpack.c.l.b16 %v1409
      %v1474 = vunpack.c.l.b16 %v1410
      %v1475 = vunpack.c.l.b16 %v1411
      %v1476 = vunpack.c.l.b16 %v1412
      %v1477 = vunpack.c.l.b16 %v1413
      %v1478 = vunpack.c.l.b16 %v1414
      %v1479 = vunpack.c.l.b16 %v1415
      %v1480 = vunpack.c.l.b16 %v1416
      %v1481 = vpack.c.b16 %v1450, %v1449
      %v1482 = vpack.c.b16 %v1452, %v1451
      %v1483 = vpack.c.b16 %v1454, %v1453
      %v1484 = vpack.c.b16 %v1456, %v1455
      %v1485 = vpack.c.b16 %v1458, %v1457
      %v1486 = vpack.c.b16 %v1460, %v1459
      %v1487 = vpack.c.b16 %v1462, %v1461
      %v1488 = vpack.c.b16 %v1464, %v1463
      %v1489 = vpack.c.b16 %v1466, %v1465
      %v1490 = vpack.c.b16 %v1468, %v1467
      %v1491 = vpack.c.b16 %v1470, %v1469
      %v1492 = vpack.c.b16 %v1472, %v1471
      %v1493 = vpack.c.b16 %v1474, %v1473
      %v1494 = vpack.c.b16 %v1476, %v1475
      %v1495 = vpack.c.b16 %v1478, %v1477
      %v1496 = vpack.c.b16 %v1480, %v1479
      %1513 = vmatpush.bf16.msra.mxu0 %v1488
      %1514 = vmatpush.bf16.msra.mxu0 %v1487
      %1515 = vmatpush.bf16.msra.mxu0 %v1486
      %1516 = vmatpush.bf16.msra.mxu0 %v1485
      %1517 = vmatpush.bf16.msra.mxu0 %v1484
      %1518 = vmatpush.bf16.msra.mxu0 %v1483
      %1519 = vmatpush.bf16.msra.mxu0 %v1482
      %1520 = vmatpush.bf16.msra.mxu0 %v1481
      %1521 = vmatmul.bf16.gmra.mxu0 %v1383
      %v1522 = vpop.f32.mrf.mxu0
      %v1523 = vadd.f32 0.0, %v1522
      %v1524 = vpop.f32.mrf.mxu0
      %1525 = vdwg.mxu0
      %1526 = vmatpush.bf16.msra.mxu0 %v1496
      %1527 = vmatpush.bf16.msra.mxu0 %v1495
      %1528 = vmatpush.bf16.msra.mxu0 %v1494
      %1529 = vmatpush.bf16.msra.mxu0 %v1493
      %1530 = vmatpush.bf16.msra.mxu0 %v1492
      %1531 = vmatpush.bf16.msra.mxu0 %v1491
      %1532 = vmatpush.bf16.msra.mxu0 %v1490
      %1533 = vmatpush.bf16.msra.mxu0 %v1489
      %1534 = vmatmul.bf16.gmra.mxu0 %v1384
      %v1535 = vpop.f32.mrf.mxu0
      %v1536 = vadd.f32 %v1523, %v1535
      %v1537 = vpop.f32.mrf.mxu0
      %1538 = vdwg.mxu0
      %v1539 = vadd.f32 %v1224, %v1536
      %v1540 = vld [vmem:[%s731] sm:$0x1]
      %v1542 = vperm.slane %v1540, 0
      %v1544 = vadd.f32 %v1539, %v1542
      %1545 = vst.msk [vmem:[#allocation5] sm:$0xff] %vm747, %v1544
      %p1546 = scmp.eq.s32.totalorder %s41, 1
      // Predicated region
      $region89: #{_forward_numeric.7} parent=83 // pred_check
        %p1547 = pneg %p1546
      $region90: #{_forward_numeric.7} parent=83 // pred_check_branch
        %1549 = sbr.rel (%p1547) target = $region92
      $region91: #{_forward_numeric.7} parent=83 // pred_region
        %s1550 = sld [smem:[#allocation7 + %s40]]
        %s1551 = scalar_lea.vmem [#allocation5], %s1550
        %v1552 = vld [vmem:[%s1551] sm:$0x1]
        %v1553 = vld [vmem:[%s14] sm:$0x1]
        %v1554 = vld [vmem:[%s15] sm:$0x1]
        %vm1555 = vcmask 516096
        %v1556 = vsel %vm1555, %v1552, 0.0
        %1557 = vadd.xlane.f32.xlu0 %v1556
        %v1558 = vpop.xlane.xlu0 %1557
        %v1559 = vmul.f32 %v1558, %v757
        %v1560 = vsub.f32 %v1552, %v1559
        %v1561 = vmul.f32 %v1560, %v1560
        %v1562 = vsel %vm1555, %v1561, 0.0
        %1563 = vadd.xlane.f32.xlu0 %v1562
        %v1564 = vpop.xlane.xlu0 %1563
        %v1565 = vmul.f32 %v1564, %v757
        %v1566 = vadd.f32 %v1565, 1e-05
        %v1567 = vrsqrt.pop %v1566
        %v1568 = vmul.f32 %v1567, %v1566
        %v1569 = vmul.f32 %v1568, %v1567
        %v1570 = vmul.f32 0.5, %v1569
        %v1571 = vsub.f32 1.5, %v1570
        %v1572 = vmul.f32 %v1567, %v1571
        %vm1573 = vweird.f32 %v1566
        %vm1574 = vweird.f32 %v1567
        %vm1575 = vmor %vm1573, %vm1574
        %v1576 = vsel %vm1575, %v1567, %v1572
        %v1577 = vmul.f32 %v1560, %v1576
        %v1578 = vmul.f32 %v1577, %v1553
        %v1579 = vadd.f32 %v1578, %v1554
        %v1580 = vpack.c.bf16 %v1579, %v1579
        %v1581 = vld [vmem:[%s16] sm:$0xf]
        %v1582 = vld [vmem:[%s16 + $0x4] sm:$0xf]
        %v1583 = vld [vmem:[%s16 + $0x8] sm:$0xf]
        %v1584 = vld [vmem:[%s16 + $0xc] sm:$0xf]
        %v1585 = vld [vmem:[%s16 + $0x10] sm:$0xf]
        %v1586 = vld [vmem:[%s16 + $0x14] sm:$0xf]
        %v1587 = vld [vmem:[%s16 + $0x18] sm:$0xf]
        %v1588 = vld [vmem:[%s16 + $0x1c] sm:$0xf]
        %v1597 = vunpack.c.l.b16 %v1581
        %v1598 = vunpack.c.l.b16 %v1582
        %v1599 = vunpack.c.l.b16 %v1583
        %v1600 = vunpack.c.l.b16 %v1584
        %v1601 = vunpack.c.l.b16 %v1585
        %v1602 = vunpack.c.l.b16 %v1586
        %v1603 = vunpack.c.l.b16 %v1587
        %v1604 = vunpack.c.l.b16 %v1588
        %v1605 = vpack.c.b16 %v1598, %v1597
        %v1606 = vpack.c.b16 %v1600, %v1599
        %v1607 = vpack.c.b16 %v1602, %v1601
        %v1608 = vpack.c.b16 %v1604, %v1603
        %v1614 = vsel %vm747, %v1580, 0
        %1616 = vmatpush.bf16.msra.mxu0 0
        %1617 = vmatpush.bf16.msra.mxu0 0
        %1618 = vmatpush.bf16.msra.mxu0 0
        %1619 = vmatpush.bf16.msra.mxu0 0
        %1620 = vmatpush.bf16.msra.mxu0 %v1608
        %1621 = vmatpush.bf16.msra.mxu0 %v1607
        %1622 = vmatpush.bf16.msra.mxu0 %v1606
        %1623 = vmatpush.bf16.msra.mxu0 %v1605
        %1624 = vmatmul.bf16.gmra.mxu0 %v1614
        %v1625 = vpop.f32.mrf.mxu0
        %v1626 = vadd.f32 0.0, %v1625
        %v1627 = vpop.f32.mrf.mxu0
        %1628 = vdwg.mxu0
        %v1629 = vmul.f32 %v1626, %v1626
        %vm1630 = vcmask 1040384
        %v1631 = vsel %vm1630, %v1629, 0.0
        %1632 = vadd.xlane.f32.xlu0 %v1631
        %v1633 = vpop.xlane.xlu0 %1632
        %v1634 = vmax.f32 %v1633, 1e-24
        %v1635 = vrsqrt.pop %v1634
        %v1636 = vmul.f32 %v1635, %v1634
        %v1637 = vmul.f32 %v1636, %v1635
        %v1638 = vmul.f32 0.5, %v1637
        %v1639 = vsub.f32 1.5, %v1638
        %v1640 = vmul.f32 %v1635, %v1639
        %vm1641 = vweird.f32 %v1634
        %vm1642 = vweird.f32 %v1635
        %vm1643 = vmor %vm1641, %vm1642
        %v1644 = vsel %vm1643, %v1635, %v1640
        %v1645 = vmul.f32 %v1626, %v1644
        %v1646 = vperm.slane %v1645, 0
        %1647 = vst [vmem:[%s735] sm:$0xff] %v1646
      $region92: #{_forward_numeric.7} parent=83 // pred_fallthru
        _
      %p1648 = scmp.lt.s32.totalorder %s40, 3
      %s1649 = scalar_select %p1648, %s40, 3
      %s1650 = smul.addr %s1649, 8
      %s1651 = scalar_lea.vmem %s17, %s1650
      // Predicated region
      $region93: #{_forward_numeric.7} parent=83 // pred_check
        %p1652 = pneg %p467
      $region94: #{_forward_numeric.7} parent=83 // pred_check_branch
        %1654 = sbr.rel (%p1652) target = $region96
      $region95: #{_forward_numeric.7} parent=83 // pred_region
        _
      $region96: #{_forward_numeric.7} parent=83 // pred_fallthru
        _
    $region84: #{_forward_numeric.7} parent=5 // pred_fallthru
      _
    %p1655 = scmp.le.s32.totalorder 2, %s31
    // Predicated region
    $region97: #{_forward_numeric.7} parent=5 // pred_check
      %p1656 = pneg %p1655
    $region98: #{_forward_numeric.7} parent=5 // pred_check_branch
      %1658 = sbr.rel (%p1656) target = $region100
    $region99: #{_forward_numeric.7} parent=5 // pred_region
      %s1659 = ssub.s32 %s31, 2
      // Predicated region
      $region101: #{_forward_numeric.7} parent=99 // pred_check
        %p1660 = pneg %p473
      $region102: #{_forward_numeric.7} parent=99 // pred_check_branch
        %1662 = sbr.rel (%p1660) target = $region104
      $region103: #{_forward_numeric.7} parent=99 // pred_region
        %p1663 = scmp.lt.s32.totalorder %s42, 3
        %s1664 = scalar_select %p1663, %s42, 3
        %s1665 = smul.addr %s1664, 8
        %s1666 = scalar_lea.vmem %s17, %s1665
      $region104: #{_forward_numeric.7} parent=99 // pred_fallthru
        _
    $region100: #{_forward_numeric.7} parent=5 // pred_fallthru
      _
  $region6: #{_forward_numeric.7} parent=0 // loop_footer
    %s35 = sadd.s32 1, %s31
  $region7: #{_forward_numeric.7} parent=0 // loop_footer_branch
    %30 = sbr.rel target = $region3
  $region8: #{_forward_numeric.7} parent=0 // loop_exit
    _

// kernel: _forward_numeric.6
$region0: #{_forward_numeric.6}
  #allocation0 [shape = 'u32[]', space=smem, size = 0x4, offset = 0x4, fixed_abs, tag = 'smem constant byte address 0x4 - core index']
  #allocation1 [shape = 'u32[72,128]{1,0:T(1,128)}', space=vmem, size = 0x9000, scoped, tag = 'internal scratch']
  #allocation2 [shape = 'f32[17,192]{1,0:T(8,128)}', space=vmem, size = 0x6000, scoped, tag = 'scratch operand']
  #allocation3 [shape = 'f32[68,17]{1,0:T(8,128)}', space=vmem, size = 0x9000, scoped, tag = 'scratch operand']
  #allocation4 [shape = 'f32[17,64]{1,0:T(8,128)}', space=vmem, size = 0x3000, scoped, tag = 'scratch operand']
  #allocation5 [shape = 'f32[17,64]{1,0:T(8,128)}', space=vmem, size = 0x3000, scoped, tag = 'scratch operand']
  #allocation6 [shape = 's32[1]{0}', space=sflag, size = 0x4, scoped, tag = 'scoped memory for _forward_numeric.6']
  #allocation7 [shape = 'u8[512]{0}', space=smem, size = 0x200, scoped, tag = 'prefetched SMEM operand 0']
  %s0 = inlined_call_operand.vmem [shape: s32[2], index: 0, kind: input, shape index: {}]
  %s1 = inlined_call_operand.vmem [shape: f32[2,17,64], index: 1, kind: input, shape index: {}]
  %s2 = inlined_call_operand.vmem [shape: f32[1,64], index: 2, kind: input, shape index: {}, may-alias: {2,16}]
  %s3 = inlined_call_operand.vmem [shape: f32[1,64], index: 3, kind: input, shape index: {}, may-alias: {3,17}]
  %s4 = inlined_call_operand.vmem [shape: f32[2,1,64], index: 4, kind: input, shape index: {}, may-alias: {4,10}]
  %s5 = inlined_call_operand.vmem [shape: f32[2,1,64], index: 5, kind: input, shape index: {}, may-alias: {5,9,11,15}]
  %s6 = inlined_call_operand.vmem [shape: bf16[2,64,192], index: 6, kind: input, shape index: {}]
  %s7 = inlined_call_operand.vmem [shape: f32[2,1,192], index: 7, kind: input, shape index: {}]
  %s8 = inlined_call_operand.vmem [shape: bf16[2,64,64], index: 8, kind: input, shape index: {}]
  %s9 = inlined_call_operand.vmem [shape: f32[2,1,64], index: 9, kind: input, shape index: {}, may-alias: {5,9,11,15}]
  %s10 = inlined_call_operand.vmem [shape: f32[2,1,64], index: 10, kind: input, shape index: {}, may-alias: {4,10}]
  %s11 = inlined_call_operand.vmem [shape: f32[2,1,64], index: 11, kind: input, shape index: {}, may-alias: {5,9,11,15}]
  %s12 = inlined_call_operand.vmem [shape: bf16[2,64,256], index: 12, kind: input, shape index: {}]
  %s13 = inlined_call_operand.vmem [shape: f32[2,1,256], index: 13, kind: input, shape index: {}]
  %s14 = inlined_call_operand.vmem [shape: bf16[2,256,64], index: 14, kind: input, shape index: {}]
  %s15 = inlined_call_operand.vmem [shape: f32[2,1,64], index: 15, kind: input, shape index: {}, may-alias: {5,9,11,15}]
  %s16 = inlined_call_operand.vmem [shape: f32[1,64], index: 16, kind: input, shape index: {}, may-alias: {2,16}]
  %s17 = inlined_call_operand.vmem [shape: f32[1,64], index: 17, kind: input, shape index: {}, may-alias: {3,17}]
  %s18 = inlined_call_operand.vmem [shape: bf16[64,128], index: 18, kind: input, shape index: {}]
  %s19 = inlined_call_operand.vmem [shape: f32[2,8,128], index: 19, kind: output, shape index: {}]
  %s20 = sld [smem:[#allocation0]]
  $region113: #{_forward_numeric.6} parent=0
    _
  %s22 = ssub.s32 1, %s20
  %s23 = scalar_select 0, %s22, %s20
  %s25 = sshll.u32 %s0, 4
  %s26 = int_to_ptr.vmem [resolvable:$true] %s25
  %28 = dma.vmem_to_smem %s26, 16, [#allocation7], [#allocation6]
  %30 = dma.done [#allocation6], 16
  %31 = sfence
  loop: start=0, step=1, limit=6
  $region2: #{_forward_numeric.6} parent=0 // loop_pre_header
    _
  $region3: #{_forward_numeric.6} parent=0 // loop_header
    %s33 = sphi 0, %s37
    %p34 = scmp.ge.s32.totalorder %s33, 6
    %s40 = sphi 0, %s52
    %s41 = sphi 0, %s48
    %s42 = sphi 0, %s40
    %s43 = sphi 0, %s41
    %s44 = sphi 0, %s42
    %s45 = sphi 0, %s43
    %s55 = sphi 0, %s57
    %s58 = sphi 0, %s55
    %s59 = sphi 0, %s58
    %s75 = sphi 0, %s59
    %s79 = sphi 0, %s79
    %s81 = sphi 0, %s79
    %s82 = sphi 0, %s81
    %s96 = sphi 0, %s82
    %s100 = sphi 0, %s100
    %s102 = sphi 0, %s100
    %s103 = sphi 0, %s102
    %s117 = sphi 0, %s103
    %s123 = sphi 0, %s125
    %s126 = sphi 0, %s123
    %s127 = sphi 0, %s126
    %s143 = sphi 0, %s127
    %s149 = sphi 0, %s151
    %s152 = sphi 0, %s149
    %s153 = sphi 0, %s152
    %s169 = sphi 0, %s153
    %s175 = sphi 0, %s177
    %s178 = sphi 0, %s175
    %s179 = sphi 0, %s178
    %s195 = sphi 0, %s179
    %s201 = sphi 0, %s203
    %s204 = sphi 0, %s201
    %s205 = sphi 0, %s204
    %s221 = sphi 0, %s205
    %s227 = sphi 0, %s229
    %s230 = sphi 0, %s227
    %s231 = sphi 0, %s230
    %s247 = sphi 0, %s231
    %s253 = sphi 0, %s255
    %s256 = sphi 0, %s253
    %s257 = sphi 0, %s256
    %s273 = sphi 0, %s257
    %s279 = sphi 0, %s281
    %s282 = sphi 0, %s279
    %s283 = sphi 0, %s282
    %s299 = sphi 0, %s283
    %s305 = sphi 0, %s307
    %s308 = sphi 0, %s305
    %s309 = sphi 0, %s308
    %s325 = sphi 0, %s309
    %s331 = sphi 0, %s333
    %s334 = sphi 0, %s331
    %s335 = sphi 0, %s334
    %s351 = sphi 0, %s335
    %s357 = sphi 0, %s359
    %s360 = sphi 0, %s357
    %s361 = sphi 0, %s360
    %s377 = sphi 0, %s361
    %s383 = sphi 0, %s385
    %s386 = sphi 0, %s383
    %s387 = sphi 0, %s386
    %s403 = sphi 0, %s387
    %s409 = sphi 0, %s411
    %s412 = sphi 0, %s409
    %s413 = sphi 0, %s412
    %s429 = sphi 0, %s413
    %s433 = sphi 0, %s433
    %s435 = sphi 0, %s433
    %s436 = sphi 0, %s435
    %s450 = sphi 0, %s436
    %s454 = sphi 0, %s454
    %s456 = sphi 0, %s454
    %s457 = sphi 0, %s456
    %s471 = sphi 0, %s457
    %s475 = sphi 0, %s475
    %s477 = sphi 0, %s475
    %s478 = sphi 0, %s477
    %s492 = sphi 0, %s478
    %s498 = sphi 0, %s500
    %s501 = sphi 0, %s498
    %s502 = sphi 0, %s501
    %s518 = sphi 0, %s502
  $region4: #{_forward_numeric.6} parent=0 // loop_header_branch
    %36 = sbr.rel (%p34) target = $region8
  $region5: #{_forward_numeric.6} parent=0 // loop_body
    %s38 = ssub.s32 %s33, 1
    %s39 = ssub.s32 %s33, 2
    %s46 = sadd.s32 1, %s41
    %p47 = scmp.ge.s32.totalorder %s46, 2
    %s48 = scalar_select %p47, 0, %s46
    %s49 = sadd.s32 1, %s40
    %s50 = scalar_select %p47, %s49, %s40
    %p51 = scmp.ge.s32.totalorder %s50, 2
    %s52 = scalar_select %p51, 0, %s50
    %s53 = ssub.s32 %s40, %s52
    %p54 = scmp.eq.s32.totalorder %s53, 0
    %s56 = sadd.s32 %s55, 1
    %s57 = scalar_select %p54, %s55, %s56
    %p60 = pneg %p54
    %p61 = scmp.eq.s32.totalorder %s33, 3
    %p62 = por %p60, %p61
    %p63 = scmp.ne.s32.totalorder %s55, %s58
    %p64 = scmp.eq.s32.totalorder %s33, 0
    %p65 = por %p63, %p64
    %p66 = scmp.ne.s32.totalorder %s55, %s58
    %p67 = scmp.eq.s32.totalorder %s38, 3
    %p68 = por %p66, %p67
    %p69 = scmp.ne.s32.totalorder %s58, %s59
    %p70 = scmp.eq.s32.totalorder %s38, 0
    %p71 = por %p69, %p70
    %p72 = scmp.ne.s32.totalorder %s58, %s59
    %p73 = scmp.eq.s32.totalorder %s39, 3
    %p74 = por %p72, %p73
    %p76 = scmp.ne.s32.totalorder %s59, %s75
    %p77 = scmp.eq.s32.totalorder %s39, 0
    %p78 = por %p76, %p77
    %s80 = sadd.s32 %s79, 1
    %p83 = scmp.eq.s32.totalorder %s33, 3
    %p84 = scmp.ne.s32.totalorder %s79, %s81
    %p85 = scmp.eq.s32.totalorder %s33, 0
    %p86 = por %p84, %p85
    %p87 = scmp.ne.s32.totalorder %s79, %s81
    %p88 = scmp.eq.s32.totalorder %s38, 3
    %p89 = por %p87, %p88
    %p90 = scmp.ne.s32.totalorder %s81, %s82
    %p91 = scmp.eq.s32.totalorder %s38, 0
    %p92 = por %p90, %p91
    %p93 = scmp.ne.s32.totalorder %s81, %s82
    %p94 = scmp.eq.s32.totalorder %s39, 3
    %p95 = por %p93, %p94
    %p97 = scmp.ne.s32.totalorder %s82, %s96
    %p98 = scmp.eq.s32.totalorder %s39, 0
    %p99 = por %p97, %p98
    %s101 = sadd.s32 %s100, 1
    %p104 = scmp.eq.s32.totalorder %s33, 3
    %p105 = scmp.ne.s32.totalorder %s100, %s102
    %p106 = scmp.eq.s32.totalorder %s33, 0
    %p107 = por %p105, %p106
    %p108 = scmp.ne.s32.totalorder %s100, %s102
    %p109 = scmp.eq.s32.totalorder %s38, 3
    %p110 = por %p108, %p109
    %p111 = scmp.ne.s32.totalorder %s102, %s103
    %p112 = scmp.eq.s32.totalorder %s38, 0
    %p113 = por %p111, %p112
    %p114 = scmp.ne.s32.totalorder %s102, %s103
    %p115 = scmp.eq.s32.totalorder %s39, 3
    %p116 = por %p114, %p115
    %p118 = scmp.ne.s32.totalorder %s103, %s117
    %p119 = scmp.eq.s32.totalorder %s39, 0
    %p120 = por %p118, %p119
    %s121 = ssub.s32 %s41, %s48
    %p122 = scmp.eq.s32.totalorder %s121, 0
    %s124 = sadd.s32 %s123, 1
    %s125 = scalar_select %p122, %s123, %s124
    %p128 = pneg %p122
    %p129 = scmp.eq.s32.totalorder %s33, 3
    %p130 = por %p128, %p129
    %p131 = scmp.ne.s32.totalorder %s123, %s126
    %p132 = scmp.eq.s32.totalorder %s33, 0
    %p133 = por %p131, %p132
    %p134 = scmp.ne.s32.totalorder %s123, %s126
    %p135 = scmp.eq.s32.totalorder %s38, 3
    %p136 = por %p134, %p135
    %p137 = scmp.ne.s32.totalorder %s126, %s127
    %p138 = scmp.eq.s32.totalorder %s38, 0
    %p139 = por %p137, %p138
    %p140 = scmp.ne.s32.totalorder %s126, %s127
    %p141 = scmp.eq.s32.totalorder %s39, 3
    %p142 = por %p140, %p141
    %p144 = scmp.ne.s32.totalorder %s127, %s143
    %p145 = scmp.eq.s32.totalorder %s39, 0
    %p146 = por %p144, %p145
    %s147 = ssub.s32 %s41, %s48
    %p148 = scmp.eq.s32.totalorder %s147, 0
    %s150 = sadd.s32 %s149, 1
    %s151 = scalar_select %p148, %s149, %s150
    %p154 = pneg %p148
    %p155 = scmp.eq.s32.totalorder %s33, 3
    %p156 = por %p154, %p155
    %p157 = scmp.ne.s32.totalorder %s149, %s152
    %p158 = scmp.eq.s32.totalorder %s33, 0
    %p159 = por %p157, %p158
    %p160 = scmp.ne.s32.totalorder %s149, %s152
    %p161 = scmp.eq.s32.totalorder %s38, 3
    %p162 = por %p160, %p161
    %p163 = scmp.ne.s32.totalorder %s152, %s153
    %p164 = scmp.eq.s32.totalorder %s38, 0
    %p165 = por %p163, %p164
    %p166 = scmp.ne.s32.totalorder %s152, %s153
    %p167 = scmp.eq.s32.totalorder %s39, 3
    %p168 = por %p166, %p167
    %p170 = scmp.ne.s32.totalorder %s153, %s169
    %p171 = scmp.eq.s32.totalorder %s39, 0
    %p172 = por %p170, %p171
    %s173 = ssub.s32 %s41, %s48
    %p174 = scmp.eq.s32.totalorder %s173, 0
    %s176 = sadd.s32 %s175, 1
    %s177 = scalar_select %p174, %s175, %s176
    %p180 = pneg %p174
    %p181 = scmp.eq.s32.totalorder %s33, 3
    %p182 = por %p180, %p181
    %p183 = scmp.ne.s32.totalorder %s175, %s178
    %p184 = scmp.eq.s32.totalorder %s33, 0
    %p185 = por %p183, %p184
    %p186 = scmp.ne.s32.totalorder %s175, %s178
    %p187 = scmp.eq.s32.totalorder %s38, 3
    %p188 = por %p186, %p187
    %p189 = scmp.ne.s32.totalorder %s178, %s179
    %p190 = scmp.eq.s32.totalorder %s38, 0
    %p191 = por %p189, %p190
    %p192 = scmp.ne.s32.totalorder %s178, %s179
    %p193 = scmp.eq.s32.totalorder %s39, 3
    %p194 = por %p192, %p193
    %p196 = scmp.ne.s32.totalorder %s179, %s195
    %p197 = scmp.eq.s32.totalorder %s39, 0
    %p198 = por %p196, %p197
    %s199 = ssub.s32 %s41, %s48
    %p200 = scmp.eq.s32.totalorder %s199, 0
    %s202 = sadd.s32 %s201, 1
    %s203 = scalar_select %p200, %s201, %s202
    %p206 = pneg %p200
    %p207 = scmp.eq.s32.totalorder %s33, 3
    %p208 = por %p206, %p207
    %p209 = scmp.ne.s32.totalorder %s201, %s204
    %p210 = scmp.eq.s32.totalorder %s33, 0
    %p211 = por %p209, %p210
    %p212 = scmp.ne.s32.totalorder %s201, %s204
    %p213 = scmp.eq.s32.totalorder %s38, 3
    %p214 = por %p212, %p213
    %p215 = scmp.ne.s32.totalorder %s204, %s205
    %p216 = scmp.eq.s32.totalorder %s38, 0
    %p217 = por %p215, %p216
    %p218 = scmp.ne.s32.totalorder %s204, %s205
    %p219 = scmp.eq.s32.totalorder %s39, 3
    %p220 = por %p218, %p219
    %p222 = scmp.ne.s32.totalorder %s205, %s221
    %p223 = scmp.eq.s32.totalorder %s39, 0
    %p224 = por %p222, %p223
    %s225 = ssub.s32 %s41, %s48
    %p226 = scmp.eq.s32.totalorder %s225, 0
    %s228 = sadd.s32 %s227, 1
    %s229 = scalar_select %p226, %s227, %s228
    %p232 = pneg %p226
    %p233 = scmp.eq.s32.totalorder %s33, 3
    %p234 = por %p232, %p233
    %p235 = scmp.ne.s32.totalorder %s227, %s230
    %p236 = scmp.eq.s32.totalorder %s33, 0
    %p237 = por %p235, %p236
    %p238 = scmp.ne.s32.totalorder %s227, %s230
    %p239 = scmp.eq.s32.totalorder %s38, 3
    %p240 = por %p238, %p239
    %p241 = scmp.ne.s32.totalorder %s230, %s231
    %p242 = scmp.eq.s32.totalorder %s38, 0
    %p243 = por %p241, %p242
    %p244 = scmp.ne.s32.totalorder %s230, %s231
    %p245 = scmp.eq.s32.totalorder %s39, 3
    %p246 = por %p244, %p245
    %p248 = scmp.ne.s32.totalorder %s231, %s247
    %p249 = scmp.eq.s32.totalorder %s39, 0
    %p250 = por %p248, %p249
    %s251 = ssub.s32 %s41, %s48
    %p252 = scmp.eq.s32.totalorder %s251, 0
    %s254 = sadd.s32 %s253, 1
    %s255 = scalar_select %p252, %s253, %s254
    %p258 = pneg %p252
    %p259 = scmp.eq.s32.totalorder %s33, 3
    %p260 = por %p258, %p259
    %p261 = scmp.ne.s32.totalorder %s253, %s256
    %p262 = scmp.eq.s32.totalorder %s33, 0
    %p263 = por %p261, %p262
    %p264 = scmp.ne.s32.totalorder %s253, %s256
    %p265 = scmp.eq.s32.totalorder %s38, 3
    %p266 = por %p264, %p265
    %p267 = scmp.ne.s32.totalorder %s256, %s257
    %p268 = scmp.eq.s32.totalorder %s38, 0
    %p269 = por %p267, %p268
    %p270 = scmp.ne.s32.totalorder %s256, %s257
    %p271 = scmp.eq.s32.totalorder %s39, 3
    %p272 = por %p270, %p271
    %p274 = scmp.ne.s32.totalorder %s257, %s273
    %p275 = scmp.eq.s32.totalorder %s39, 0
    %p276 = por %p274, %p275
    %s277 = ssub.s32 %s41, %s48
    %p278 = scmp.eq.s32.totalorder %s277, 0
    %s280 = sadd.s32 %s279, 1
    %s281 = scalar_select %p278, %s279, %s280
    %p284 = pneg %p278
    %p285 = scmp.eq.s32.totalorder %s33, 3
    %p286 = por %p284, %p285
    %p287 = scmp.ne.s32.totalorder %s279, %s282
    %p288 = scmp.eq.s32.totalorder %s33, 0
    %p289 = por %p287, %p288
    %p290 = scmp.ne.s32.totalorder %s279, %s282
    %p291 = scmp.eq.s32.totalorder %s38, 3
    %p292 = por %p290, %p291
    %p293 = scmp.ne.s32.totalorder %s282, %s283
    %p294 = scmp.eq.s32.totalorder %s38, 0
    %p295 = por %p293, %p294
    %p296 = scmp.ne.s32.totalorder %s282, %s283
    %p297 = scmp.eq.s32.totalorder %s39, 3
    %p298 = por %p296, %p297
    %p300 = scmp.ne.s32.totalorder %s283, %s299
    %p301 = scmp.eq.s32.totalorder %s39, 0
    %p302 = por %p300, %p301
    %s303 = ssub.s32 %s41, %s48
    %p304 = scmp.eq.s32.totalorder %s303, 0
    %s306 = sadd.s32 %s305, 1
    %s307 = scalar_select %p304, %s305, %s306
    %p310 = pneg %p304
    %p311 = scmp.eq.s32.totalorder %s33, 3
    %p312 = por %p310, %p311
    %p313 = scmp.ne.s32.totalorder %s305, %s308
    %p314 = scmp.eq.s32.totalorder %s33, 0
    %p315 = por %p313, %p314
    %p316 = scmp.ne.s32.totalorder %s305, %s308
    %p317 = scmp.eq.s32.totalorder %s38, 3
    %p318 = por %p316, %p317
    %p319 = scmp.ne.s32.totalorder %s308, %s309
    %p320 = scmp.eq.s32.totalorder %s38, 0
    %p321 = por %p319, %p320
    %p322 = scmp.ne.s32.totalorder %s308, %s309
    %p323 = scmp.eq.s32.totalorder %s39, 3
    %p324 = por %p322, %p323
    %p326 = scmp.ne.s32.totalorder %s309, %s325
    %p327 = scmp.eq.s32.totalorder %s39, 0
    %p328 = por %p326, %p327
    %s329 = ssub.s32 %s41, %s48
    %p330 = scmp.eq.s32.totalorder %s329, 0
    %s332 = sadd.s32 %s331, 1
    %s333 = scalar_select %p330, %s331, %s332
    %p336 = pneg %p330
    %p337 = scmp.eq.s32.totalorder %s33, 3
    %p338 = por %p336, %p337
    %p339 = scmp.ne.s32.totalorder %s331, %s334
    %p340 = scmp.eq.s32.totalorder %s33, 0
    %p341 = por %p339, %p340
    %p342 = scmp.ne.s32.totalorder %s331, %s334
    %p343 = scmp.eq.s32.totalorder %s38, 3
    %p344 = por %p342, %p343
    %p345 = scmp.ne.s32.totalorder %s334, %s335
    %p346 = scmp.eq.s32.totalorder %s38, 0
    %p347 = por %p345, %p346
    %p348 = scmp.ne.s32.totalorder %s334, %s335
    %p349 = scmp.eq.s32.totalorder %s39, 3
    %p350 = por %p348, %p349
    %p352 = scmp.ne.s32.totalorder %s335, %s351
    %p353 = scmp.eq.s32.totalorder %s39, 0
    %p354 = por %p352, %p353
    %s355 = ssub.s32 %s41, %s48
    %p356 = scmp.eq.s32.totalorder %s355, 0
    %s358 = sadd.s32 %s357, 1
    %s359 = scalar_select %p356, %s357, %s358
    %p362 = pneg %p356
    %p363 = scmp.eq.s32.totalorder %s33, 3
    %p364 = por %p362, %p363
    %p365 = scmp.ne.s32.totalorder %s357, %s360
    %p366 = scmp.eq.s32.totalorder %s33, 0
    %p367 = por %p365, %p366
    %p368 = scmp.ne.s32.totalorder %s357, %s360
    %p369 = scmp.eq.s32.totalorder %s38, 3
    %p370 = por %p368, %p369
    %p371 = scmp.ne.s32.totalorder %s360, %s361
    %p372 = scmp.eq.s32.totalorder %s38, 0
    %p373 = por %p371, %p372
    %p374 = scmp.ne.s32.totalorder %s360, %s361
    %p375 = scmp.eq.s32.totalorder %s39, 3
    %p376 = por %p374, %p375
    %p378 = scmp.ne.s32.totalorder %s361, %s377
    %p379 = scmp.eq.s32.totalorder %s39, 0
    %p380 = por %p378, %p379
    %s381 = ssub.s32 %s41, %s48
    %p382 = scmp.eq.s32.totalorder %s381, 0
    %s384 = sadd.s32 %s383, 1
    %s385 = scalar_select %p382, %s383, %s384
    %p388 = pneg %p382
    %p389 = scmp.eq.s32.totalorder %s33, 3
    %p390 = por %p388, %p389
    %p391 = scmp.ne.s32.totalorder %s383, %s386
    %p392 = scmp.eq.s32.totalorder %s33, 0
    %p393 = por %p391, %p392
    %p394 = scmp.ne.s32.totalorder %s383, %s386
    %p395 = scmp.eq.s32.totalorder %s38, 3
    %p396 = por %p394, %p395
    %p397 = scmp.ne.s32.totalorder %s386, %s387
    %p398 = scmp.eq.s32.totalorder %s38, 0
    %p399 = por %p397, %p398
    %p400 = scmp.ne.s32.totalorder %s386, %s387
    %p401 = scmp.eq.s32.totalorder %s39, 3
    %p402 = por %p400, %p401
    %p404 = scmp.ne.s32.totalorder %s387, %s403
    %p405 = scmp.eq.s32.totalorder %s39, 0
    %p406 = por %p404, %p405
    %s407 = ssub.s32 %s41, %s48
    %p408 = scmp.eq.s32.totalorder %s407, 0
    %s410 = sadd.s32 %s409, 1
    %s411 = scalar_select %p408, %s409, %s410
    %p414 = pneg %p408
    %p415 = scmp.eq.s32.totalorder %s33, 3
    %p416 = por %p414, %p415
    %p417 = scmp.ne.s32.totalorder %s409, %s412
    %p418 = scmp.eq.s32.totalorder %s33, 0
    %p419 = por %p417, %p418
    %p420 = scmp.ne.s32.totalorder %s409, %s412
    %p421 = scmp.eq.s32.totalorder %s38, 3
    %p422 = por %p420, %p421
    %p423 = scmp.ne.s32.totalorder %s412, %s413
    %p424 = scmp.eq.s32.totalorder %s38, 0
    %p425 = por %p423, %p424
    %p426 = scmp.ne.s32.totalorder %s412, %s413
    %p427 = scmp.eq.s32.totalorder %s39, 3
    %p428 = por %p426, %p427
    %p430 = scmp.ne.s32.totalorder %s413, %s429
    %p431 = scmp.eq.s32.totalorder %s39, 0
    %p432 = por %p430, %p431
    %s434 = sadd.s32 %s433, 1
    %p437 = scmp.eq.s32.totalorder %s33, 3
    %p438 = scmp.ne.s32.totalorder %s433, %s435
    %p439 = scmp.eq.s32.totalorder %s33, 0
    %p440 = por %p438, %p439
    %p441 = scmp.ne.s32.totalorder %s433, %s435
    %p442 = scmp.eq.s32.totalorder %s38, 3
    %p443 = por %p441, %p442
    %p444 = scmp.ne.s32.totalorder %s435, %s436
    %p445 = scmp.eq.s32.totalorder %s38, 0
    %p446 = por %p444, %p445
    %p447 = scmp.ne.s32.totalorder %s435, %s436
    %p448 = scmp.eq.s32.totalorder %s39, 3
    %p449 = por %p447, %p448
    %p451 = scmp.ne.s32.totalorder %s436, %s450
    %p452 = scmp.eq.s32.totalorder %s39, 0
    %p453 = por %p451, %p452
    %s455 = sadd.s32 %s454, 1
    %p458 = scmp.eq.s32.totalorder %s33, 3
    %p459 = scmp.ne.s32.totalorder %s454, %s456
    %p460 = scmp.eq.s32.totalorder %s33, 0
    %p461 = por %p459, %p460
    %p462 = scmp.ne.s32.totalorder %s454, %s456
    %p463 = scmp.eq.s32.totalorder %s38, 3
    %p464 = por %p462, %p463
    %p465 = scmp.ne.s32.totalorder %s456, %s457
    %p466 = scmp.eq.s32.totalorder %s38, 0
    %p467 = por %p465, %p466
    %p468 = scmp.ne.s32.totalorder %s456, %s457
    %p469 = scmp.eq.s32.totalorder %s39, 3
    %p470 = por %p468, %p469
    %p472 = scmp.ne.s32.totalorder %s457, %s471
    %p473 = scmp.eq.s32.totalorder %s39, 0
    %p474 = por %p472, %p473
    %s476 = sadd.s32 %s475, 1
    %p479 = scmp.eq.s32.totalorder %s33, 3
    %p480 = scmp.ne.s32.totalorder %s475, %s477
    %p481 = scmp.eq.s32.totalorder %s33, 0
    %p482 = por %p480, %p481
    %p483 = scmp.ne.s32.totalorder %s475, %s477
    %p484 = scmp.eq.s32.totalorder %s38, 3
    %p485 = por %p483, %p484
    %p486 = scmp.ne.s32.totalorder %s477, %s478
    %p487 = scmp.eq.s32.totalorder %s38, 0
    %p488 = por %p486, %p487
    %p489 = scmp.ne.s32.totalorder %s477, %s478
    %p490 = scmp.eq.s32.totalorder %s39, 3
    %p491 = por %p489, %p490
    %p493 = scmp.ne.s32.totalorder %s478, %s492
    %p494 = scmp.eq.s32.totalorder %s39, 0
    %p495 = por %p493, %p494
    %s496 = ssub.s32 %s40, %s52
    %p497 = scmp.eq.s32.totalorder %s496, 0
    %s499 = sadd.s32 %s498, 1
    %s500 = scalar_select %p497, %s498, %s499
    %p503 = pneg %p497
    %p504 = scmp.eq.s32.totalorder %s33, 3
    %p505 = por %p503, %p504
    %p506 = scmp.ne.s32.totalorder %s498, %s501
    %p507 = scmp.eq.s32.totalorder %s33, 0
    %p508 = por %p506, %p507
    %p509 = scmp.ne.s32.totalorder %s498, %s501
    %p510 = scmp.eq.s32.totalorder %s38, 3
    %p511 = por %p509, %p510
    %p512 = scmp.ne.s32.totalorder %s501, %s502
    %p513 = scmp.eq.s32.totalorder %s38, 0
    %p514 = por %p512, %p513
    %p515 = scmp.ne.s32.totalorder %s501, %s502
    %p516 = scmp.eq.s32.totalorder %s39, 3
    %p517 = por %p515, %p516
    %p519 = scmp.ne.s32.totalorder %s502, %s518
    %p520 = scmp.eq.s32.totalorder %s39, 0
    %p521 = por %p519, %p520
    %p522 = scmp.le.s32.totalorder 1, %s33
    %p523 = scmp.lt.s32.totalorder %s33, 5
    %p524 = pnand %p522, %p523
    %p525 = pneg %p524
    // Predicated region
    $region9: #{_forward_numeric.6} parent=5 // pred_check
      _
    $region10: #{_forward_numeric.6} parent=5 // pred_check_branch
      %527 = sbr.rel (%p524) target = $region12
    $region11: #{_forward_numeric.6} parent=5 // pred_region
      %s528 = ssub.s32 %s33, 1
      // Predicated region
      $region13: #{_forward_numeric.6} parent=11 // pred_check
        %p529 = pneg %p92
      $region14: #{_forward_numeric.6} parent=11 // pred_check_branch
        %531 = sbr.rel (%p529) target = $region16
      $region15: #{_forward_numeric.6} parent=11 // pred_region
        _
      $region16: #{_forward_numeric.6} parent=11 // pred_fallthru
        _
      // Predicated region
      $region17: #{_forward_numeric.6} parent=11 // pred_check
        %p532 = pneg %p113
      $region18: #{_forward_numeric.6} parent=11 // pred_check_branch
        %534 = sbr.rel (%p532) target = $region20
      $region19: #{_forward_numeric.6} parent=11 // pred_region
        _
      $region20: #{_forward_numeric.6} parent=11 // pred_fallthru
        _
      // Predicated region
      $region21: #{_forward_numeric.6} parent=11 // pred_check
        %p535 = pneg %p446
      $region22: #{_forward_numeric.6} parent=11 // pred_check_branch
        %537 = sbr.rel (%p535) target = $region24
      $region23: #{_forward_numeric.6} parent=11 // pred_region
        _
      $region24: #{_forward_numeric.6} parent=11 // pred_fallthru
        _
      // Predicated region
      $region25: #{_forward_numeric.6} parent=11 // pred_check
        %p538 = pneg %p467
      $region26: #{_forward_numeric.6} parent=11 // pred_check_branch
        %540 = sbr.rel (%p538) target = $region28
      $region27: #{_forward_numeric.6} parent=11 // pred_region
        _
      $region28: #{_forward_numeric.6} parent=11 // pred_fallthru
        _
      // Predicated region
      $region29: #{_forward_numeric.6} parent=11 // pred_check
        %p541 = pneg %p488
      $region30: #{_forward_numeric.6} parent=11 // pred_check_branch
        %543 = sbr.rel (%p541) target = $region32
      $region31: #{_forward_numeric.6} parent=11 // pred_region
        _
      $region32: #{_forward_numeric.6} parent=11 // pred_fallthru
        _
    $region12: #{_forward_numeric.6} parent=5 // pred_fallthru
      _
    %p544 = scmp.lt.s32.totalorder %s33, 4
    // Predicated region
    $region33: #{_forward_numeric.6} parent=5 // pred_check
      %p545 = pneg %p544
    $region34: #{_forward_numeric.6} parent=5 // pred_check_branch
      %547 = sbr.rel (%p545) target = $region36
    $region35: #{_forward_numeric.6} parent=5 // pred_region
      // Predicated region
      $region37: #{_forward_numeric.6} parent=35 // pred_check
        %p548 = pneg %p65
      $region38: #{_forward_numeric.6} parent=35 // pred_check_branch
        %550 = sbr.rel (%p548) target = $region40
      $region39: #{_forward_numeric.6} parent=35 // pred_region
        %p551 = scmp.lt.s32.totalorder %s40, 1
        %s552 = scalar_select %p551, %s40, 1
        %s553 = smul.addr %s552, 3
        %s554 = smul.addr %s553, 8
        %s555 = scalar_lea.vmem %s1, %s554
      $region40: #{_forward_numeric.6} parent=35 // pred_fallthru
        _
      // Predicated region
      $region41: #{_forward_numeric.6} parent=35 // pred_check
        %p556 = pneg %p133
      $region42: #{_forward_numeric.6} parent=35 // pred_check_branch
        %558 = sbr.rel (%p556) target = $region44
      $region43: #{_forward_numeric.6} parent=35 // pred_region
        %p559 = scmp.lt.s32.totalorder %s41, 1
        %s560 = scalar_select %p559, %s41, 1
        %s561 = scalar_lea.vmem %s4, %s560
      $region44: #{_forward_numeric.6} parent=35 // pred_fallthru
        _
      // Predicated region
      $region45: #{_forward_numeric.6} parent=35 // pred_check
        %p562 = pneg %p159
      $region46: #{_forward_numeric.6} parent=35 // pred_check_branch
        %564 = sbr.rel (%p562) target = $region48
      $region47: #{_forward_numeric.6} parent=35 // pred_region
        %p565 = scmp.lt.s32.totalorder %s41, 1
        %s566 = scalar_select %p565, %s41, 1
        %s567 = scalar_lea.vmem %s5, %s566
      $region48: #{_forward_numeric.6} parent=35 // pred_fallthru
        _
      // Predicated region
      $region49: #{_forward_numeric.6} parent=35 // pred_check
        %p568 = pneg %p185
      $region50: #{_forward_numeric.6} parent=35 // pred_check_branch
        %570 = sbr.rel (%p568) target = $region52
      $region51: #{_forward_numeric.6} parent=35 // pred_region
        %p571 = scmp.lt.s32.totalorder %s41, 1
        %s572 = scalar_select %p571, %s41, 1
        %s573 = smul.addr %s572, 16
        %s574 = smul.addr %s573, 4
        %s575 = scalar_lea.vmem %s6, %s574
      $region52: #{_forward_numeric.6} parent=35 // pred_fallthru
        _
      // Predicated region
      $region53: #{_forward_numeric.6} parent=35 // pred_check
        %p576 = pneg %p211
      $region54: #{_forward_numeric.6} parent=35 // pred_check_branch
        %578 = sbr.rel (%p576) target = $region56
      $region55: #{_forward_numeric.6} parent=35 // pred_region
        %p579 = scmp.lt.s32.totalorder %s41, 1
        %s580 = scalar_select %p579, %s41, 1
        %s581 = smul.addr %s580, 2
        %s582 = scalar_lea.vmem %s7, %s581
      $region56: #{_forward_numeric.6} parent=35 // pred_fallthru
        _
      // Predicated region
      $region57: #{_forward_numeric.6} parent=35 // pred_check
        %p583 = pneg %p237
      $region58: #{_forward_numeric.6} parent=35 // pred_check_branch
        %585 = sbr.rel (%p583) target = $region60
      $region59: #{_forward_numeric.6} parent=35 // pred_region
        %p586 = scmp.lt.s32.totalorder %s41, 1
        %s587 = scalar_select %p586, %s41, 1
        %s588 = smul.addr %s587, 8
        %s589 = smul.addr %s588, 4
        %s590 = scalar_lea.vmem %s8, %s589
      $region60: #{_forward_numeric.6} parent=35 // pred_fallthru
        _
      // Predicated region
      $region61: #{_forward_numeric.6} parent=35 // pred_check
        %p591 = pneg %p263
      $region62: #{_forward_numeric.6} parent=35 // pred_check_branch
        %593 = sbr.rel (%p591) target = $region64
      $region63: #{_forward_numeric.6} parent=35 // pred_region
        %p594 = scmp.lt.s32.totalorder %s41, 1
        %s595 = scalar_select %p594, %s41, 1
        %s596 = scalar_lea.vmem %s9, %s595
      $region64: #{_forward_numeric.6} parent=35 // pred_fallthru
        _
      // Predicated region
      $region65: #{_forward_numeric.6} parent=35 // pred_check
        %p597 = pneg %p289
      $region66: #{_forward_numeric.6} parent=35 // pred_check_branch
        %599 = sbr.rel (%p597) target = $region68
      $region67: #{_forward_numeric.6} parent=35 // pred_region
        %p600 = scmp.lt.s32.totalorder %s41, 1
        %s601 = scalar_select %p600, %s41, 1
        %s602 = scalar_lea.vmem %s10, %s601
      $region68: #{_forward_numeric.6} parent=35 // pred_fallthru
        _
      // Predicated region
      $region69: #{_forward_numeric.6} parent=35 // pred_check
        %p603 = pneg %p315
      $region70: #{_forward_numeric.6} parent=35 // pred_check_branch
        %605 = sbr.rel (%p603) target = $region72
      $region71: #{_forward_numeric.6} parent=35 // pred_region
        %p606 = scmp.lt.s32.totalorder %s41, 1
        %s607 = scalar_select %p606, %s41, 1
        %s608 = scalar_lea.vmem %s11, %s607
      $region72: #{_forward_numeric.6} parent=35 // pred_fallthru
        _
      // Predicated region
      $region73: #{_forward_numeric.6} parent=35 // pred_check
        %p609 = pneg %p341
      $region74: #{_forward_numeric.6} parent=35 // pred_check_branch
        %611 = sbr.rel (%p609) target = $region76
      $region75: #{_forward_numeric.6} parent=35 // pred_region
        %p612 = scmp.lt.s32.totalorder %s41, 1
        %s613 = scalar_select %p612, %s41, 1
        %s614 = smul.addr %s613, 16
        %s615 = smul.addr %s614, 4
        %s616 = scalar_lea.vmem %s12, %s615
      $region76: #{_forward_numeric.6} parent=35 // pred_fallthru
        _
      // Predicated region
      $region77: #{_forward_numeric.6} parent=35 // pred_check
        %p617 = pneg %p367
      $region78: #{_forward_numeric.6} parent=35 // pred_check_branch
        %619 = sbr.rel (%p617) target = $region80
      $region79: #{_forward_numeric.6} parent=35 // pred_region
        %p620 = scmp.lt.s32.totalorder %s41, 1
        %s621 = scalar_select %p620, %s41, 1
        %s622 = smul.addr %s621, 2
        %s623 = scalar_lea.vmem %s13, %s622
      $region80: #{_forward_numeric.6} parent=35 // pred_fallthru
        _
      // Predicated region
      $region81: #{_forward_numeric.6} parent=35 // pred_check
        %p624 = pneg %p393
      $region82: #{_forward_numeric.6} parent=35 // pred_check_branch
        %626 = sbr.rel (%p624) target = $region84
      $region83: #{_forward_numeric.6} parent=35 // pred_region
        %p627 = scmp.lt.s32.totalorder %s41, 1
        %s628 = scalar_select %p627, %s41, 1
        %s629 = smul.addr %s628, 32
        %s630 = smul.addr %s629, 4
        %s631 = scalar_lea.vmem %s14, %s630
      $region84: #{_forward_numeric.6} parent=35 // pred_fallthru
        _
      // Predicated region
      $region85: #{_forward_numeric.6} parent=35 // pred_check
        %p632 = pneg %p419
      $region86: #{_forward_numeric.6} parent=35 // pred_check_branch
        %634 = sbr.rel (%p632) target = $region88
      $region87: #{_forward_numeric.6} parent=35 // pred_region
        %p635 = scmp.lt.s32.totalorder %s41, 1
        %s636 = scalar_select %p635, %s41, 1
        %s637 = scalar_lea.vmem %s15, %s636
      $region88: #{_forward_numeric.6} parent=35 // pred_fallthru
        _
    $region36: #{_forward_numeric.6} parent=5 // pred_fallthru
      _
    %p638 = scmp.le.s32.totalorder 1, %s33
    %p639 = scmp.lt.s32.totalorder %s33, 5
    %p640 = pnand %p638, %p639
    %p641 = pneg %p640
    // Predicated region
    $region89: #{_forward_numeric.6} parent=5 // pred_check
      _
    $region90: #{_forward_numeric.6} parent=5 // pred_check_branch
      %643 = sbr.rel (%p640) target = $region92
    $region91: #{_forward_numeric.6} parent=5 // pred_region
      %s644 = ssub.s32 %s33, 1
      %p645 = scmp.lt.s32.totalorder %s42, 1
      %s646 = scalar_select %p645, %s42, 1
      %s647 = smul.addr %s646, 3
      %s648 = smul.addr %s647, 8
      %s649 = scalar_lea.vmem %s1, %s648
      %p650 = pneg %p71
      %p651 = pneg %p68
      %p652 = pneg %p92
      %p653 = pneg %p89
      %p654 = pneg %p113
      %p655 = pneg %p110
      %p656 = scmp.lt.s32.totalorder %s43, 1
      %s657 = scalar_select %p656, %s43, 1
      %s658 = scalar_lea.vmem %s4, %s657
      %p659 = pneg %p139
      %p660 = pneg %p136
      %p661 = scmp.lt.s32.totalorder %s43, 1
      %s662 = scalar_select %p661, %s43, 1
      %s663 = scalar_lea.vmem %s5, %s662
      %p664 = pneg %p165
      %p665 = pneg %p162
      %p666 = scmp.lt.s32.totalorder %s43, 1
      %s667 = scalar_select %p666, %s43, 1
      %s668 = smul.addr %s667, 16
      %s669 = smul.addr %s668, 4
      %s670 = scalar_lea.vmem %s6, %s669
      %p671 = pneg %p191
      %p672 = pneg %p188
      %p673 = scmp.lt.s32.totalorder %s43, 1
      %s674 = scalar_select %p673, %s43, 1
      %s675 = smul.addr %s674, 2
      %s676 = scalar_lea.vmem %s7, %s675
      %p677 = pneg %p217
      %p678 = pneg %p214
      %p679 = scmp.lt.s32.totalorder %s43, 1
      %s680 = scalar_select %p679, %s43, 1
      %s681 = smul.addr %s680, 8
      %s682 = smul.addr %s681, 4
      %s683 = scalar_lea.vmem %s8, %s682
      %p684 = pneg %p243
      %p685 = pneg %p240
      %p686 = scmp.lt.s32.totalorder %s43, 1
      %s687 = scalar_select %p686, %s43, 1
      %s688 = scalar_lea.vmem %s9, %s687
      %p689 = pneg %p269
      %p690 = pneg %p266
      %p691 = scmp.lt.s32.totalorder %s43, 1
      %s692 = scalar_select %p691, %s43, 1
      %s693 = scalar_lea.vmem %s10, %s692
      %p694 = pneg %p295
      %p695 = pneg %p292
      %p696 = scmp.lt.s32.totalorder %s43, 1
      %s697 = scalar_select %p696, %s43, 1
      %s698 = scalar_lea.vmem %s11, %s697
      %p699 = pneg %p321
      %p700 = pneg %p318
      %p701 = scmp.lt.s32.totalorder %s43, 1
      %s702 = scalar_select %p701, %s43, 1
      %s703 = smul.addr %s702, 16
      %s704 = smul.addr %s703, 4
      %s705 = scalar_lea.vmem %s12, %s704
      %p706 = pneg %p347
      %p707 = pneg %p344
      %p708 = scmp.lt.s32.totalorder %s43, 1
      %s709 = scalar_select %p708, %s43, 1
      %s710 = smul.addr %s709, 2
      %s711 = scalar_lea.vmem %s13, %s710
      %p712 = pneg %p373
      %p713 = pneg %p370
      %p714 = scmp.lt.s32.totalorder %s43, 1
      %s715 = scalar_select %p714, %s43, 1
      %s716 = smul.addr %s715, 32
      %s717 = smul.addr %s716, 4
      %s718 = scalar_lea.vmem %s14, %s717
      %p719 = pneg %p399
      %p720 = pneg %p396
      %p721 = scmp.lt.s32.totalorder %s43, 1
      %s722 = scalar_select %p721, %s43, 1
      %s723 = scalar_lea.vmem %s15, %s722
      %p724 = pneg %p425
      %p725 = pneg %p422
      %p726 = pneg %p446
      %p727 = pneg %p443
      %p728 = pneg %p467
      %p729 = pneg %p464
      %p730 = pneg %p488
      %p731 = pneg %p485
      %p732 = pneg %p514
      %p733 = pneg %p511
      %p734 = scmp.lt.s32.totalorder %s42, 1
      %s735 = scalar_select %p734, %s42, 1
      %s736 = smul.addr %s735, 8
      %s737 = scalar_lea.vmem %s19, %s736
      %p738 = scmp.lt.s32.totalorder %s42, 1
      %s739 = scalar_select %p738, %s42, 1
      %s740 = smul.addr %s739, 3
      %s741 = smul.addr %s740, 8
      %s742 = scalar_lea.vmem %s1, %s741
      %p743 = scmp.lt.s32.totalorder %s43, 1
      %s744 = scalar_select %p743, %s43, 1
      %s745 = scalar_lea.vmem %s4, %s744
      %p746 = scmp.lt.s32.totalorder %s43, 1
      %s747 = scalar_select %p746, %s43, 1
      %s748 = scalar_lea.vmem %s5, %s747
      %p749 = scmp.lt.s32.totalorder %s43, 1
      %s750 = scalar_select %p749, %s43, 1
      %s751 = smul.addr %s750, 16
      %s752 = smul.addr %s751, 4
      %s753 = scalar_lea.vmem %s6, %s752
      %p754 = scmp.lt.s32.totalorder %s43, 1
      %s755 = scalar_select %p754, %s43, 1
      %s756 = smul.addr %s755, 2
      %s757 = scalar_lea.vmem %s7, %s756
      %p758 = scmp.lt.s32.totalorder %s43, 1
      %s759 = scalar_select %p758, %s43, 1
      %s760 = smul.addr %s759, 8
      %s761 = smul.addr %s760, 4
      %s762 = scalar_lea.vmem %s8, %s761
      %p763 = scmp.lt.s32.totalorder %s43, 1
      %s764 = scalar_select %p763, %s43, 1
      %s765 = scalar_lea.vmem %s9, %s764
      %p766 = scmp.lt.s32.totalorder %s43, 1
      %s767 = scalar_select %p766, %s43, 1
      %s768 = scalar_lea.vmem %s10, %s767
      %p769 = scmp.lt.s32.totalorder %s43, 1
      %s770 = scalar_select %p769, %s43, 1
      %s771 = scalar_lea.vmem %s11, %s770
      %p772 = scmp.lt.s32.totalorder %s43, 1
      %s773 = scalar_select %p772, %s43, 1
      %s774 = smul.addr %s773, 16
      %s775 = smul.addr %s774, 4
      %s776 = scalar_lea.vmem %s12, %s775
      %p777 = scmp.lt.s32.totalorder %s43, 1
      %s778 = scalar_select %p777, %s43, 1
      %s779 = smul.addr %s778, 2
      %s780 = scalar_lea.vmem %s13, %s779
      %p781 = scmp.lt.s32.totalorder %s43, 1
      %s782 = scalar_select %p781, %s43, 1
      %s783 = smul.addr %s782, 32
      %s784 = smul.addr %s783, 4
      %s785 = scalar_lea.vmem %s14, %s784
      %p786 = scmp.lt.s32.totalorder %s43, 1
      %s787 = scalar_select %p786, %s43, 1
      %s788 = scalar_lea.vmem %s15, %s787
      %p789 = scmp.lt.s32.totalorder %s42, 1
      %s790 = scalar_select %p789, %s42, 1
      %s791 = smul.addr %s790, 8
      %s792 = scalar_lea.vmem %s19, %s791
      %p794 = scmp.eq.s32.totalorder %s43, 0
      // Predicated region
      $region93: #{_forward_numeric.6} parent=91 // pred_check
        %p795 = pneg %p794
      $region94: #{_forward_numeric.6} parent=91 // pred_check_branch
        %797 = sbr.rel (%p795) target = $region96
      $region95: #{_forward_numeric.6} parent=91 // pred_region
        %v798 = vld [vmem:[%s742] sm:$0xff]
        %v799 = vld [vmem:[%s742 + $0x8] sm:$0xff]
        %v800 = vld [vmem:[%s742 + $0x10] sm:$0x1]
        %v801 = vld [vmem:[%s2] sm:$0x1]
        %v802 = vld [vmem:[%s3] sm:$0x1]
        %vm803 = vcmask 523264
        %v804 = vsel %vm803, %v798, 0.0
        %805 = vadd.xlane.f32.xlu0 %v804
        %v806 = vpop.xlane.xlu0 %805
        %v807 = vsel %vm803, %v799, 0.0
        %808 = vadd.xlane.f32.xlu0 %v807
        %v809 = vpop.xlane.xlu0 %808
        %vm810 = vcmask 516096
        %v811 = vsel %vm810, %v800, 0.0
        %812 = vadd.xlane.f32.xlu0 %v811
        %v813 = vpop.xlane.xlu0 %812
        %v814 = vrcp.pop 64.0
        %v815 = vmul.f32 64.0, %v814
        %v816 = vsub.f32 1.0, %v815
        %v817 = vmul.f32 %v814, %v816
        %v818 = vadd.f32 %v814, %v817
        %vm819 = vweird.f32 %v814
        %v820 = vsel %vm819, %v814, %v818
        %v821 = vmul.f32 %v806, %v820
        %v822 = vmul.f32 %v809, %v820
        %v823 = vmul.f32 %v813, %v820
        %v824 = vsub.f32 %v798, %v821
        %v825 = vsub.f32 %v799, %v822
        %v826 = vsub.f32 %v800, %v823
        %v827 = vmul.f32 %v824, %v824
        %v828 = vmul.f32 %v825, %v825
        %v829 = vmul.f32 %v826, %v826
        %v830 = vsel %vm803, %v827, 0.0
        %831 = vadd.xlane.f32.xlu0 %v830
        %v832 = vpop.xlane.xlu0 %831
        %v833 = vsel %vm803, %v828, 0.0
        %834 = vadd.xlane.f32.xlu0 %v833
        %v835 = vpop.xlane.xlu0 %834
        %v836 = vsel %vm810, %v829, 0.0
        %837 = vadd.xlane.f32.xlu0 %v836
        %v838 = vpop.xlane.xlu0 %837
        %v839 = vmul.f32 %v832, %v820
        %v840 = vmul.f32 %v835, %v820
        %v841 = vmul.f32 %v838, %v820
        %v842 = vadd.f32 %v839, 1e-05
        %v843 = vadd.f32 %v840, 1e-05
        %v844 = vadd.f32 %v841, 1e-05
        %v845 = vrsqrt.pop %v842
        %v846 = vmul.f32 %v845, %v842
        %v847 = vmul.f32 %v846, %v845
        %v848 = vmul.f32 0.5, %v847
        %v849 = vsub.f32 1.5, %v848
        %v850 = vmul.f32 %v845, %v849
        %vm851 = vweird.f32 %v842
        %vm852 = vweird.f32 %v845
        %vm853 = vmor %vm851, %vm852
        %v854 = vsel %vm853, %v845, %v850
        %v855 = vrsqrt.pop %v843
        %v856 = vmul.f32 %v855, %v843
        %v857 = vmul.f32 %v856, %v855
        %v858 = vmul.f32 0.5, %v857
        %v859 = vsub.f32 1.5, %v858
        %v860 = vmul.f32 %v855, %v859
        %vm861 = vweird.f32 %v843
        %vm862 = vweird.f32 %v855
        %vm863 = vmor %vm861, %vm862
        %v864 = vsel %vm863, %v855, %v860
        %v865 = vrsqrt.pop %v844
        %v866 = vmul.f32 %v865, %v844
        %v867 = vmul.f32 %v866, %v865
        %v868 = vmul.f32 0.5, %v867
        %v869 = vsub.f32 1.5, %v868
        %v870 = vmul.f32 %v865, %v869
        %vm871 = vweird.f32 %v844
        %vm872 = vweird.f32 %v865
        %vm873 = vmor %vm871, %vm872
        %v874 = vsel %vm873, %v865, %v870
        %v875 = vmul.f32 %v824, %v854
        %v876 = vmul.f32 %v825, %v864
        %v877 = vmul.f32 %v826, %v874
        %v879 = vperm.slane %v801, 0
        %v881 = vmul.f32 %v875, %v879
        %v882 = vmul.f32 %v876, %v879
        %v883 = vmul.f32 %v877, %v879
        %v885 = vperm.slane %v802, 0
        %v887 = vadd.f32 %v881, %v885
        %v888 = vadd.f32 %v882, %v885
        %v889 = vadd.f32 %v883, %v885
        %890 = vst.msk [vmem:[#allocation5] sm:$0xff] %vm803, %v887
        %891 = vst.msk [vmem:[#allocation5 + $0x8] sm:$0xff] %vm803, %v888
        %892 = vst.msk [vmem:[#allocation5 + $0x10] sm:$0x1] %vm810, %v889
      $region96: #{_forward_numeric.6} parent=91 // pred_fallthru
        _
      %v893 = vld [vmem:[#allocation5] sm:$0xff]
      %v894 = vld [vmem:[#allocation5 + $0x8] sm:$0xff]
      %v895 = vld [vmem:[#allocation5 + $0x10] sm:$0x1]
      %v896 = vld [vmem:[%s745] sm:$0x1]
      %v897 = vld [vmem:[%s748] sm:$0x1]
      %vm898 = vcmask 523264
      %v899 = vsel %vm898, %v893, 0.0
      %900 = vadd.xlane.f32.xlu0 %v899
      %v901 = vpop.xlane.xlu0 %900
      %v902 = vsel %vm898, %v894, 0.0
      %903 = vadd.xlane.f32.xlu0 %v902
      %v904 = vpop.xlane.xlu0 %903
      %vm905 = vcmask 516096
      %v906 = vsel %vm905, %v895, 0.0
      %907 = vadd.xlane.f32.xlu0 %v906
      %v908 = vpop.xlane.xlu0 %907
      %v909 = vrcp.pop 64.0
      %v910 = vmul.f32 64.0, %v909
      %v911 = vsub.f32 1.0, %v910
      %v912 = vmul.f32 %v909, %v911
      %v913 = vadd.f32 %v909, %v912
      %vm914 = vweird.f32 %v909
      %v915 = vsel %vm914, %v909, %v913
      %v916 = vmul.f32 %v901, %v915
      %v917 = vmul.f32 %v904, %v915
      %v918 = vmul.f32 %v908, %v915
      %v919 = vsub.f32 %v893, %v916
      %v920 = vsub.f32 %v894, %v917
      %v921 = vsub.f32 %v895, %v918
      %v922 = vmul.f32 %v919, %v919
      %v923 = vmul.f32 %v920, %v920
      %v924 = vmul.f32 %v921, %v921
      %v925 = vsel %vm898, %v922, 0.0
      %926 = vadd.xlane.f32.xlu0 %v925
      %v927 = vpop.xlane.xlu0 %926
      %v928 = vsel %vm898, %v923, 0.0
      %929 = vadd.xlane.f32.xlu0 %v928
      %v930 = vpop.xlane.xlu0 %929
      %v931 = vsel %vm905, %v924, 0.0
      %932 = vadd.xlane.f32.xlu0 %v931
      %v933 = vpop.xlane.xlu0 %932
      %v934 = vmul.f32 %v927, %v915
      %v935 = vmul.f32 %v930, %v915
      %v936 = vmul.f32 %v933, %v915
      %v937 = vadd.f32 %v934, 1e-05
      %v938 = vadd.f32 %v935, 1e-05
      %v939 = vadd.f32 %v936, 1e-05
      %v940 = vrsqrt.pop %v937
      %v941 = vmul.f32 %v940, %v937
      %v942 = vmul.f32 %v941, %v940
      %v943 = vmul.f32 0.5, %v942
      %v944 = vsub.f32 1.5, %v943
      %v945 = vmul.f32 %v940, %v944
      %vm946 = vweird.f32 %v937
      %vm947 = vweird.f32 %v940
      %vm948 = vmor %vm946, %vm947
      %v949 = vsel %vm948, %v940, %v945
      %v950 = vrsqrt.pop %v938
      %v951 = vmul.f32 %v950, %v938
      %v952 = vmul.f32 %v951, %v950
      %v953 = vmul.f32 0.5, %v952
      %v954 = vsub.f32 1.5, %v953
      %v955 = vmul.f32 %v950, %v954
      %vm956 = vweird.f32 %v938
      %vm957 = vweird.f32 %v950
      %vm958 = vmor %vm956, %vm957
      %v959 = vsel %vm958, %v950, %v955
      %v960 = vrsqrt.pop %v939
      %v961 = vmul.f32 %v960, %v939
      %v962 = vmul.f32 %v961, %v960
      %v963 = vmul.f32 0.5, %v962
      %v964 = vsub.f32 1.5, %v963
      %v965 = vmul.f32 %v960, %v964
      %vm966 = vweird.f32 %v939
      %vm967 = vweird.f32 %v960
      %vm968 = vmor %vm966, %vm967
      %v969 = vsel %vm968, %v960, %v965
      %v970 = vmul.f32 %v919, %v949
      %v971 = vmul.f32 %v920, %v959
      %v972 = vmul.f32 %v921, %v969
      %v974 = vperm.slane %v896, 0
      %v976 = vmul.f32 %v970, %v974
      %v977 = vmul.f32 %v971, %v974
      %v978 = vmul.f32 %v972, %v974
      %v980 = vperm.slane %v897, 0
      %v982 = vadd.f32 %v976, %v980
      %v983 = vadd.f32 %v977, %v980
      %v984 = vadd.f32 %v978, %v980
      %v985 = vpack.c.bf16 %v983, %v982
      %v986 = vpack.c.bf16 %v984, %v984
      %v987 = vld [vmem:[%s753] sm:$0xff]
      %v988 = vld [vmem:[%s753 + $0x8] sm:$0xff]
      %v989 = vld [vmem:[%s753 + $0x10] sm:$0xff]
      %v990 = vld [vmem:[%s753 + $0x18] sm:$0xff]
      %v991 = vld [vmem:[%s753 + $0x20] sm:$0xff]
      %v992 = vld [vmem:[%s753 + $0x28] sm:$0xff]
      %v993 = vld [vmem:[%s753 + $0x30] sm:$0xff]
      %v994 = vld [vmem:[%s753 + $0x38] sm:$0xff]
      %v995 = vld [vmem:[%s757] sm:$0x3]
      %v997 = vperm.slane %v995, 0
      %v998 = vperm.slane %v995, 1
      %v1009 = vunpack.c.l.b16 %v987
      %v1010 = vunpack.c.h.b16 %v987
      %v1011 = vunpack.c.l.b16 %v988
      %v1012 = vunpack.c.h.b16 %v988
      %v1013 = vunpack.c.l.b16 %v989
      %v1014 = vunpack.c.h.b16 %v989
      %v1015 = vunpack.c.l.b16 %v990
      %v1016 = vunpack.c.h.b16 %v990
      %v1017 = vunpack.c.l.b16 %v991
      %v1018 = vunpack.c.h.b16 %v991
      %v1019 = vunpack.c.l.b16 %v992
      %v1020 = vunpack.c.h.b16 %v992
      %v1021 = vunpack.c.l.b16 %v993
      %v1022 = vunpack.c.h.b16 %v993
      %v1023 = vunpack.c.l.b16 %v994
      %v1024 = vunpack.c.h.b16 %v994
      %v1025 = vpack.c.b16 %v1011, %v1009
      %v1026 = vpack.c.b16 %v1012, %v1010
      %v1027 = vpack.c.b16 %v1015, %v1013
      %v1028 = vpack.c.b16 %v1016, %v1014
      %v1029 = vpack.c.b16 %v1019, %v1017
      %v1030 = vpack.c.b16 %v1020, %v1018
      %v1031 = vpack.c.b16 %v1023, %v1021
      %v1032 = vpack.c.b16 %v1024, %v1022
      %v1042 = vsel %vm898, %v985, 0
      %v1045 = vsel %vm898, %v986, 0
      %1047 = vmatpush.bf16.msra.mxu0 0
      %1048 = vmatpush.bf16.msra.mxu0 0
      %1049 = vmatpush.bf16.msra.mxu0 0
      %1050 = vmatpush.bf16.msra.mxu0 0
      %1051 = vmatpush.bf16.msra.mxu0 %v1031
      %1052 = vmatpush.bf16.msra.mxu0 %v1029
      %1053 = vmatpush.bf16.msra.mxu0 %v1027
      %1054 = vmatpush.bf16.msra.mxu0 %v1025
      %1055 = vmatmul.bf16.gmra.mxu0 %v1042
      %v1056 = vpop.f32.mrf.mxu0
      %v1057 = vadd.f32 %v997, %v1056
      %v1058 = vpop.f32.mrf.mxu0
      %v1059 = vadd.f32 %v997, %v1058
      %1060 = vmatmul.bf16.gmra.mxu0 %v1045
      %v1061 = vpop.f32.mrf.mxu0
      %v1062 = vadd.f32 %v997, %v1061
      %v1063 = vpop.f32.mrf.mxu0
      %1064 = vdwg.mxu0
      %1065 = vmatpush.bf16.msra.mxu0 0
      %1066 = vmatpush.bf16.msra.mxu0 0
      %1067 = vmatpush.bf16.msra.mxu0 0
      %1068 = vmatpush.bf16.msra.mxu0 0
      %1069 = vmatpush.bf16.msra.mxu0 %v1032
      %1070 = vmatpush.bf16.msra.mxu0 %v1030
      %1071 = vmatpush.bf16.msra.mxu0 %v1028
      %1072 = vmatpush.bf16.msra.mxu0 %v1026
      %1073 = vmatmul.bf16.gmra.mxu0 %v1042
      %v1074 = vpop.f32.mrf.mxu0
      %v1075 = vadd.f32 %v998, %v1074
      %v1076 = vpop.f32.mrf.mxu0
      %v1077 = vadd.f32 %v998, %v1076
      %1078 = vmatmul.bf16.gmra.mxu0 %v1045
      %v1079 = vpop.f32.mrf.mxu0
      %v1080 = vadd.f32 %v998, %v1079
      %v1081 = vpop.f32.mrf.mxu0
      %1082 = vdwg.mxu0
      %1083 = vst [vmem:[#allocation2] sm:$0xff] %v1057
      %1084 = vst.msk [vmem:[#allocation2 + $0x8] sm:$0xff] %vm898, %v1075
      %1085 = vst [vmem:[#allocation2 + $0x10] sm:$0xff] %v1059
      %1086 = vst.msk [vmem:[#allocation2 + $0x18] sm:$0xff] %vm898, %v1077
      %1087 = vst [vmem:[#allocation2 + $0x20] sm:$0x1] %v1062
      %1088 = vst.msk [vmem:[#allocation2 + $0x28] sm:$0x1] %vm905, %v1080
      %v1089 = vld [vmem:[#allocation2] sm:$0xff]
      %v1090 = vld [vmem:[#allocation2 + $0x10] sm:$0xff]
      %v1091 = vld [vmem:[#allocation2 + $0x20] sm:$0x1]
      %v1092 = vmul.f32 %v1089, 0.25
      %v1093 = vmul.f32 %v1090, 0.25
      %v1094 = vmul.f32 %v1091, 0.25
      %v1095 = vpack.c.bf16 %v1093, %v1092
      %v1096 = vpack.c.bf16 %v1094, %v1094
      %v1097 = vpack.c.bf16 %v1090, %v1089
      %v1098 = vpack.c.bf16 %v1091, %v1091
      %1101 = vrot.lane.b32.xlu0 %v1097, 64
      %v1102 = vpop.permute.xlu0 %1101
      %1103 = vrot.lane.b32.xlu0 %v1098, 64
      %v1104 = vpop.permute.xlu0 %1103
      %vm1105 = vcmask 130048
      %v1107 = vsel %vm1105, %v1095, 0
      %v1110 = vsel %vm1105, %v1096, 0
      %v1113 = vsel %vm1105, %v1102, 0
      %v1116 = vsel %vm1105, %v1104, 0
      %1118 = vmatpush.bf16.xpose.msra.mxu0 0
      %1119 = vmatpush.bf16.xpose.msra.mxu0 0
      %1120 = vmatpush.bf16.xpose.msra.mxu0 0
      %1121 = vmatpush.bf16.xpose.msra.mxu0 0
      %1122 = vmatpush.bf16.xpose.msra.mxu0 0
      %1123 = vmatpush.bf16.xpose.msra.mxu0 0
      %1124 = vmatpush.bf16.xpose.msra.mxu0 %v1116
      %1125 = vmatpush.bf16.xpose.msra.mxu0 %v1113
      %1126 = vmatmul.bf16.gmra.mxu0 %v1107
      %v1127 = vpop.f32.mrf.mxu0
      %v1128 = vadd.f32 0.0, %v1127
      %v1129 = vpop.f32.mrf.mxu0
      %v1130 = vadd.f32 0.0, %v1129
      %1131 = vmatmul.bf16.gmra.mxu0 %v1110
      %v1132 = vpop.f32.mrf.mxu0
      %v1133 = vadd.f32 0.0, %v1132
      %v1134 = vpop.f32.mrf.mxu0
      %1135 = vdwg.mxu0
      %vm1136 = vcmask 138240
      %1137 = vst.msk [vmem:[#allocation3] sm:$0xff] %vm1136, %v1128
      %1138 = vst.msk [vmem:[#allocation3 + $0x8] sm:$0xff] %vm1136, %v1130
      %vm1139 = vcmask 131072
      %1140 = vst.msk [vmem:[#allocation3 + $0x10] sm:$0x1] %vm1139, %v1133
      %v1141 = vld [vmem:[#allocation2] sm:$0xff]
      %v1142 = vld [vmem:[#allocation2 + $0x10] sm:$0xff]
      %v1143 = vld [vmem:[#allocation2 + $0x20] sm:$0x1]
      %v1144 = vmul.f32 %v1141, 0.25
      %v1145 = vmul.f32 %v1142, 0.25
      %v1146 = vmul.f32 %v1143, 0.25
      %v1147 = vpack.c.bf16 %v1145, %v1144
      %v1148 = vpack.c.bf16 %v1146, %v1146
      %v1149 = vpack.c.bf16 %v1142, %v1141
      %v1150 = vpack.c.bf16 %v1143, %v1143
      %1153 = vrot.lane.b32.xlu0 %v1147, 112
      %v1154 = vpop.permute.xlu0 %1153
      %1155 = vrot.lane.b32.xlu0 %v1148, 112
      %v1156 = vpop.permute.xlu0 %1155
      %1159 = vrot.lane.b32.xlu0 %v1149, 48
      %v1160 = vpop.permute.xlu0 %1159
      %1161 = vrot.lane.b32.xlu0 %v1150, 48
      %v1162 = vpop.permute.xlu0 %1161
      %v1164 = vsel %vm1105, %v1154, 0
      %v1167 = vsel %vm1105, %v1156, 0
      %v1170 = vsel %vm1105, %v1160, 0
      %v1173 = vsel %vm1105, %v1162, 0
      %1175 = vmatpush.bf16.xpose.msra.mxu0 0
      %1176 = vmatpush.bf16.xpose.msra.mxu0 0
      %1177 = vmatpush.bf16.xpose.msra.mxu0 0
      %1178 = vmatpush.bf16.xpose.msra.mxu0 0
      %1179 = vmatpush.bf16.xpose.msra.mxu0 0
      %1180 = vmatpush.bf16.xpose.msra.mxu0 0
      %1181 = vmatpush.bf16.xpose.msra.mxu0 %v1173
      %1182 = vmatpush.bf16.xpose.msra.mxu0 %v1170
      %1183 = vmatmul.bf16.gmra.mxu0 %v1164
      %v1184 = vpop.f32.mrf.mxu0
      %v1185 = vadd.f32 0.0, %v1184
      %v1186 = vpop.f32.mrf.mxu0
      %v1187 = vadd.f32 0.0, %v1186
      %1188 = vmatmul.bf16.gmra.mxu0 %v1167
      %v1189 = vpop.f32.mrf.mxu0
      %v1190 = vadd.f32 0.0, %v1189
      %v1191 = vpop.f32.mrf.mxu0
      %1192 = vdwg.mxu0
      %1193 = vst.msk [vmem:[#allocation3 + $0x11] sm:$0xff] %vm1136, %v1185
      %1194 = vst.msk [vmem:[#allocation3 + $0x19] sm:$0xff] %vm1136, %v1187
      %1195 = vst.msk [vmem:[#allocation3 + $0x21] sm:$0x1] %vm1139, %v1190
      %v1196 = vld [vmem:[#allocation2] sm:$0xff]
      %v1197 = vld [vmem:[#allocation2 + $0x10] sm:$0xff]
      %v1198 = vld [vmem:[#allocation2 + $0x20] sm:$0x1]
      %v1199 = vmul.f32 %v1196, 0.25
      %v1200 = vmul.f32 %v1197, 0.25
      %v1201 = vmul.f32 %v1198, 0.25
      %v1202 = vpack.c.bf16 %v1200, %v1199
      %v1203 = vpack.c.bf16 %v1201, %v1201
      %v1204 = vpack.c.bf16 %v1197, %v1196
      %v1205 = vpack.c.bf16 %v1198, %v1198
      %1208 = vrot.lane.b32.xlu0 %v1202, 96
      %v1209 = vpop.permute.xlu0 %1208
      %1210 = vrot.lane.b32.xlu0 %v1203, 96
      %v1211 = vpop.permute.xlu0 %1210
      %1214 = vrot.lane.b32.xlu0 %v1204, 32
      %v1215 = vpop.permute.xlu0 %1214
      %1216 = vrot.lane.b32.xlu0 %v1205, 32
      %v1217 = vpop.permute.xlu0 %1216
      %v1219 = vsel %vm1105, %v1209, 0
      %v1222 = vsel %vm1105, %v1211, 0
      %v1225 = vsel %vm1105, %v1215, 0
      %v1228 = vsel %vm1105, %v1217, 0
      %1230 = vmatpush.bf16.xpose.msra.mxu0 0
      %1231 = vmatpush.bf16.xpose.msra.mxu0 0
      %1232 = vmatpush.bf16.xpose.msra.mxu0 0
      %1233 = vmatpush.bf16.xpose.msra.mxu0 0
      %1234 = vmatpush.bf16.xpose.msra.mxu0 0
      %1235 = vmatpush.bf16.xpose.msra.mxu0 0
      %1236 = vmatpush.bf16.xpose.msra.mxu0 %v1228
      %1237 = vmatpush.bf16.xpose.msra.mxu0 %v1225
      %1238 = vmatmul.bf16.gmra.mxu0 %v1219
      %v1239 = vpop.f32.mrf.mxu0
      %v1240 = vadd.f32 0.0, %v1239
      %v1241 = vpop.f32.mrf.mxu0
      %v1242 = vadd.f32 0.0, %v1241
      %1243 = vmatmul.bf16.gmra.mxu0 %v1222
      %v1244 = vpop.f32.mrf.mxu0
      %v1245 = vadd.f32 0.0, %v1244
      %v1246 = vpop.f32.mrf.mxu0
      %1247 = vdwg.mxu0
      %1248 = vst.msk [vmem:[#allocation3 + $0x22] sm:$0xff] %vm1136, %v1240
      %1249 = vst.msk [vmem:[#allocation3 + $0x2a] sm:$0xff] %vm1136, %v1242
      %1250 = vst.msk [vmem:[#allocation3 + $0x32] sm:$0x1] %vm1139, %v1245
      %v1251 = vld [vmem:[#allocation2] sm:$0xff]
      %v1252 = vld [vmem:[#allocation2 + $0x10] sm:$0xff]
      %v1253 = vld [vmem:[#allocation2 + $0x20] sm:$0x1]
      %v1254 = vmul.f32 %v1251, 0.25
      %v1255 = vmul.f32 %v1252, 0.25
      %v1256 = vmul.f32 %v1253, 0.25
      %v1257 = vpack.c.bf16 %v1255, %v1254
      %v1258 = vpack.c.bf16 %v1256, %v1256
      %v1259 = vpack.c.bf16 %v1252, %v1251
      %v1260 = vpack.c.bf16 %v1253, %v1253
      %1263 = vrot.lane.b32.xlu0 %v1257, 80
      %v1264 = vpop.permute.xlu0 %1263
      %1265 = vrot.lane.b32.xlu0 %v1258, 80
      %v1266 = vpop.permute.xlu0 %1265
      %1269 = vrot.lane.b32.xlu0 %v1259, 16
      %v1270 = vpop.permute.xlu0 %1269
      %1271 = vrot.lane.b32.xlu0 %v1260, 16
      %v1272 = vpop.permute.xlu0 %1271
      %v1274 = vsel %vm1105, %v1264, 0
      %v1277 = vsel %vm1105, %v1266, 0
      %v1280 = vsel %vm1105, %v1270, 0
      %v1283 = vsel %vm1105, %v1272, 0
      %1285 = vmatpush.bf16.xpose.msra.mxu0 0
      %1286 = vmatpush.bf16.xpose.msra.mxu0 0
      %1287 = vmatpush.bf16.xpose.msra.mxu0 0
      %1288 = vmatpush.bf16.xpose.msra.mxu0 0
      %1289 = vmatpush.bf16.xpose.msra.mxu0 0
      %1290 = vmatpush.bf16.xpose.msra.mxu0 0
      %1291 = vmatpush.bf16.xpose.msra.mxu0 %v1283
      %1292 = vmatpush.bf16.xpose.msra.mxu0 %v1280
      %1293 = vmatmul.bf16.gmra.mxu0 %v1274
      %v1294 = vpop.f32.mrf.mxu0
      %v1295 = vadd.f32 0.0, %v1294
      %v1296 = vpop.f32.mrf.mxu0
      %v1297 = vadd.f32 0.0, %v1296
      %1298 = vmatmul.bf16.gmra.mxu0 %v1277
      %v1299 = vpop.f32.mrf.mxu0
      %v1300 = vadd.f32 0.0, %v1299
      %v1301 = vpop.f32.mrf.mxu0
      %1302 = vdwg.mxu0
      %1303 = vst.msk [vmem:[#allocation3 + $0x33] sm:$0xff] %vm1136, %v1295
      %1304 = vst.msk [vmem:[#allocation3 + $0x3b] sm:$0xff] %vm1136, %v1297
      %1305 = vst.msk [vmem:[#allocation3 + $0x43] sm:$0x1] %vm1139, %v1300
      %v1306 = vld [vmem:[#allocation3] sm:$0xff]
      %v1307 = vld [vmem:[#allocation3 + $0x8] sm:$0xff]
      %v1308 = vld [vmem:[#allocation3 + $0x10] sm:$0xff]
      %v1309 = vld [vmem:[#allocation3 + $0x18] sm:$0xff]
      %v1310 = vld [vmem:[#allocation3 + $0x20] sm:$0xff]
      %v1311 = vld [vmem:[#allocation3 + $0x28] sm:$0xff]
      %v1312 = vld [vmem:[#allocation3 + $0x30] sm:$0xff]
      %v1313 = vld [vmem:[#allocation3 + $0x38] sm:$0xff]
      %v1314 = vld [vmem:[#allocation3 + $0x40] sm:$0xf]
      %v1315 = vsel %vm1136, %v1306, -inf
      %1316 = vmax.xlane.f32.xlu0 %v1315
      %v1317 = vpop.xlane.xlu0 %1316
      %v1318 = vsel %vm1136, %v1307, -inf
      %1319 = vmax.xlane.f32.xlu0 %v1318
      %v1320 = vpop.xlane.xlu0 %1319
      %v1321 = vsel %vm1136, %v1308, -inf
      %1322 = vmax.xlane.f32.xlu0 %v1321
      %v1323 = vpop.xlane.xlu0 %1322
      %v1324 = vsel %vm1136, %v1309, -inf
      %1325 = vmax.xlane.f32.xlu0 %v1324
      %v1326 = vpop.xlane.xlu0 %1325
      %v1327 = vsel %vm1136, %v1310, -inf
      %1328 = vmax.xlane.f32.xlu0 %v1327
      %v1329 = vpop.xlane.xlu0 %1328
      %v1330 = vsel %vm1136, %v1311, -inf
      %1331 = vmax.xlane.f32.xlu0 %v1330
      %v1332 = vpop.xlane.xlu0 %1331
      %v1333 = vsel %vm1136, %v1312, -inf
      %1334 = vmax.xlane.f32.xlu0 %v1333
      %v1335 = vpop.xlane.xlu0 %1334
      %v1336 = vsel %vm1136, %v1313, -inf
      %1337 = vmax.xlane.f32.xlu0 %v1336
      %v1338 = vpop.xlane.xlu0 %1337
      %vm1339 = vcmask 134144
      %v1340 = vsel %vm1339, %v1314, -inf
      %1341 = vmax.xlane.f32.xlu0 %v1340
      %v1342 = vpop.xlane.xlu0 %1341
      %v1343 = vsub.f32 %v1306, %v1317
      %v1344 = vsub.f32 %v1307, %v1320
      %v1345 = vsub.f32 %v1308, %v1323
      %v1346 = vsub.f32 %v1309, %v1326
      %v1347 = vsub.f32 %v1310, %v1329
      %v1348 = vsub.f32 %v1311, %v1332
      %v1349 = vsub.f32 %v1312, %v1335
      %v1350 = vsub.f32 %v1313, %v1338
      %v1351 = vsub.f32 %v1314, %v1342
      %v1352 = vmul.f32 %v1343, 1.442695
      %v1353 = vpow.pop %v1352
      %v1354 = vmul.f32 %v1344, 1.442695
      %v1355 = vpow.pop %v1354
      %v1356 = vmul.f32 %v1345, 1.442695
      %v1357 = vpow.pop %v1356
      %v1358 = vmul.f32 %v1346, 1.442695
      %v1359 = vpow.pop %v1358
      %v1360 = vmul.f32 %v1347, 1.442695
      %v1361 = vpow.pop %v1360
      %v1362 = vmul.f32 %v1348, 1.442695
      %v1363 = vpow.pop %v1362
      %v1364 = vmul.f32 %v1349, 1.442695
      %v1365 = vpow.pop %v1364
      %v1366 = vmul.f32 %v1350, 1.442695
      %v1367 = vpow.pop %v1366
      %v1368 = vmul.f32 %v1351, 1.442695
      %v1369 = vpow.pop %v1368
      %v1370 = vsel %vm1136, %v1353, 0.0
      %1371 = vadd.xlane.f32.xlu0 %v1370
      %v1372 = vpop.xlane.xlu0 %1371
      %v1373 = vsel %vm1136, %v1355, 0.0
      %1374 = vadd.xlane.f32.xlu0 %v1373
      %v1375 = vpop.xlane.xlu0 %1374
      %v1376 = vsel %vm1136, %v1357, 0.0
      %1377 = vadd.xlane.f32.xlu0 %v1376
      %v1378 = vpop.xlane.xlu0 %1377
      %v1379 = vsel %vm1136, %v1359, 0.0
      %1380 = vadd.xlane.f32.xlu0 %v1379
      %v1381 = vpop.xlane.xlu0 %1380
      %v1382 = vsel %vm1136, %v1361, 0.0
      %1383 = vadd.xlane.f32.xlu0 %v1382
      %v1384 = vpop.xlane.xlu0 %1383
      %v1385 = vsel %vm1136, %v1363, 0.0
      %1386 = vadd.xlane.f32.xlu0 %v1385
      %v1387 = vpop.xlane.xlu0 %1386
      %v1388 = vsel %vm1136, %v1365, 0.0
      %1389 = vadd.xlane.f32.xlu0 %v1388
      %v1390 = vpop.xlane.xlu0 %1389
      %v1391 = vsel %vm1136, %v1367, 0.0
      %1392 = vadd.xlane.f32.xlu0 %v1391
      %v1393 = vpop.xlane.xlu0 %1392
      %v1394 = vsel %vm1339, %v1369, 0.0
      %1395 = vadd.xlane.f32.xlu0 %v1394
      %v1396 = vpop.xlane.xlu0 %1395
      %v1397 = vrcp.pop %v1372
      %v1398 = vrcp.pop %v1375
      %v1399 = vrcp.pop %v1378
      %v1400 = vrcp.pop %v1381
      %v1401 = vrcp.pop %v1384
      %v1402 = vrcp.pop %v1387
      %v1403 = vrcp.pop %v1390
      %v1404 = vrcp.pop %v1393
      %v1405 = vrcp.pop %v1396
      %v1406 = vmul.f32 %v1353, %v1397
      %v1407 = vmul.f32 %v1355, %v1398
      %v1408 = vmul.f32 %v1357, %v1399
      %v1409 = vmul.f32 %v1359, %v1400
      %v1410 = vmul.f32 %v1361, %v1401
      %v1411 = vmul.f32 %v1363, %v1402
      %v1412 = vmul.f32 %v1365, %v1403
      %v1413 = vmul.f32 %v1367, %v1404
      %v1414 = vmul.f32 %v1369, %v1405
      %1415 = vst.msk [vmem:[#allocation3] sm:$0xff] %vm1136, %v1406
      %1416 = vst.msk [vmem:[#allocation3 + $0x8] sm:$0xff] %vm1136, %v1407
      %1417 = vst.msk [vmem:[#allocation3 + $0x10] sm:$0xff] %vm1136, %v1408
      %1418 = vst.msk [vmem:[#allocation3 + $0x18] sm:$0xff] %vm1136, %v1409
      %1419 = vst.msk [vmem:[#allocation3 + $0x20] sm:$0xff] %vm1136, %v1410
      %1420 = vst.msk [vmem:[#allocation3 + $0x28] sm:$0xff] %vm1136, %v1411
      %1421 = vst.msk [vmem:[#allocation3 + $0x30] sm:$0xff] %vm1136, %v1412
      %1422 = vst.msk [vmem:[#allocation3 + $0x38] sm:$0xff] %vm1136, %v1413
      %1423 = vst.msk [vmem:[#allocation3 + $0x40] sm:$0xf] %vm1339, %v1414
      %v1424 = vld [vmem:[#allocation2 + $0x8] sm:$0xff]
      %v1425 = vld [vmem:[#allocation2 + $0x18] sm:$0xff]
      %v1426 = vld [vmem:[#allocation2 + $0x28] sm:$0x1]
      %v1427 = vld [vmem:[#allocation3] sm:$0xff]
      %v1428 = vld [vmem:[#allocation3 + $0x8] sm:$0xff]
      %v1429 = vld [vmem:[#allocation3 + $0x10] sm:$0x1]
      %v1430 = vpack.c.bf16 %v1428, %v1427
      %v1431 = vpack.c.bf16 %v1429, %v1429
      %v1432 = vpack.c.bf16 %v1425, %v1424
      %v1433 = vpack.c.bf16 %v1426, %v1426
      %v1435 = vsel %vm1136, %v1430, 0
      %v1438 = vsel %vm1136, %v1431, 0
      %vm1440 = vcmask 1040384
      %v1441 = vsel 0, 4294967295, 65535
      %v1442 = vsel %vm1440, %v1441, 0
      %v1444 = vand.u32 %v1433, %v1442
      %1446 = vmatpush.bf16.msra.mxu0 0
      %1447 = vmatpush.bf16.msra.mxu0 0
      %1448 = vmatpush.bf16.msra.mxu0 0
      %1449 = vmatpush.bf16.msra.mxu0 0
      %1450 = vmatpush.bf16.msra.mxu0 0
      %1451 = vmatpush.bf16.msra.mxu0 0
      %1452 = vmatpush.bf16.msra.mxu0 %v1444
      %1453 = vmatpush.bf16.msra.mxu0 %v1432
      %1454 = vmatmul.bf16.gmra.mxu0 %v1435
      %v1455 = vpop.f32.mrf.mxu0
      %v1456 = vadd.f32 0.0, %v1455
      %v1457 = vpop.f32.mrf.mxu0
      %v1458 = vadd.f32 0.0, %v1457
      %1459 = vmatmul.bf16.gmra.mxu0 %v1438
      %v1460 = vpop.f32.mrf.mxu0
      %v1461 = vadd.f32 0.0, %v1460
      %v1462 = vpop.f32.mrf.mxu0
      %1463 = vdwg.mxu0
      %1464 = vst.msk [vmem:[#allocation4] sm:$0xff] %vm1105, %v1456
      %1465 = vst.msk [vmem:[#allocation4 + $0x8] sm:$0xff] %vm1105, %v1458
      %vm1466 = vcmask 122880
      %1467 = vst.msk [vmem:[#allocation4 + $0x10] sm:$0x1] %vm1466, %v1461
      %v1468 = vld [vmem:[#allocation2 + $0x8] sm:$0xff]
      %v1469 = vld [vmem:[#allocation2 + $0x18] sm:$0xff]
      %v1470 = vld [vmem:[#allocation2 + $0x28] sm:$0x1]
      %v1471 = vld [vmem:[#allocation3 + $0x11] sm:$0xff]
      %v1472 = vld [vmem:[#allocation3 + $0x19] sm:$0xff]
      %v1473 = vld [vmem:[#allocation3 + $0x21] sm:$0x1]
      %v1474 = vpack.c.bf16 %v1472, %v1471
      %v1475 = vpack.c.bf16 %v1473, %v1473
      %v1476 = vpack.c.bf16 %v1469, %v1468
      %v1477 = vpack.c.bf16 %v1470, %v1470
      %1480 = vrot.lane.b32.xlu0 %v1476, 112
      %v1481 = vpop.permute.xlu0 %1480
      %1482 = vrot.lane.b32.xlu0 %v1477, 112
      %v1483 = vpop.permute.xlu0 %1482
      %v1486 = vsel %vm1136, %v1474, 0
      %v1489 = vsel %vm1136, %v1475, 0
      %v1492 = vand.u32 %v1483, %v1442
      %1494 = vmatpush.bf16.msra.mxu0 0
      %1495 = vmatpush.bf16.msra.mxu0 0
      %1496 = vmatpush.bf16.msra.mxu0 0
      %1497 = vmatpush.bf16.msra.mxu0 0
      %1498 = vmatpush.bf16.msra.mxu0 0
      %1499 = vmatpush.bf16.msra.mxu0 0
      %1500 = vmatpush.bf16.msra.mxu0 %v1492
      %1501 = vmatpush.bf16.msra.mxu0 %v1481
      %1502 = vmatmul.bf16.gmra.mxu0 %v1486
      %v1503 = vpop.f32.mrf.mxu0
      %v1504 = vadd.f32 0.0, %v1503
      %v1505 = vpop.f32.mrf.mxu0
      %v1506 = vadd.f32 0.0, %v1505
      %1507 = vmatmul.bf16.gmra.mxu0 %v1489
      %v1508 = vpop.f32.mrf.mxu0
      %v1509 = vadd.f32 0.0, %v1508
      %v1510 = vpop.f32.mrf.mxu0
      %1511 = vdwg.mxu0
      %1515 = vrot.lane.b32.xlu0 %v1504, 16
      %v1516 = vpop.permute.xlu0 %1515
      %1517 = vrot.lane.b32.xlu0 %v1506, 16
      %v1518 = vpop.permute.xlu0 %1517
      %1519 = vrot.lane.b32.xlu0 %v1509, 16
      %v1520 = vpop.permute.xlu0 %1519
      %vm1524 = vcmask 261248
      %1525 = vst.msk [vmem:[#allocation4] sm:$0xff] %vm1524, %v1516
      %1526 = vst.msk [vmem:[#allocation4 + $0x8] sm:$0xff] %vm1524, %v1518
      %vm1527 = vcmask 254080
      %1528 = vst.msk [vmem:[#allocation4 + $0x10] sm:$0x1] %vm1527, %v1520
      %v1529 = vld [vmem:[#allocation2 + $0x8] sm:$0xff]
      %v1530 = vld [vmem:[#allocation2 + $0x18] sm:$0xff]
      %v1531 = vld [vmem:[#allocation2 + $0x28] sm:$0x1]
      %v1532 = vld [vmem:[#allocation3 + $0x22] sm:$0xff]
      %v1533 = vld [vmem:[#allocation3 + $0x2a] sm:$0xff]
      %v1534 = vld [vmem:[#allocation3 + $0x32] sm:$0x1]
      %v1535 = vpack.c.bf16 %v1533, %v1532
      %v1536 = vpack.c.bf16 %v1534, %v1534
      %v1537 = vpack.c.bf16 %v1530, %v1529
      %v1538 = vpack.c.bf16 %v1531, %v1531
      %1541 = vrot.lane.b32.xlu0 %v1537, 96
      %v1542 = vpop.permute.xlu0 %1541
      %1543 = vrot.lane.b32.xlu0 %v1538, 96
      %v1544 = vpop.permute.xlu0 %1543
      %v1547 = vsel %vm1136, %v1535, 0
      %v1550 = vsel %vm1136, %v1536, 0
      %v1553 = vand.u32 %v1544, %v1442
      %1555 = vmatpush.bf16.msra.mxu0 0
      %1556 = vmatpush.bf16.msra.mxu0 0
      %1557 = vmatpush.bf16.msra.mxu0 0
      %1558 = vmatpush.bf16.msra.mxu0 0
      %1559 = vmatpush.bf16.msra.mxu0 0
      %1560 = vmatpush.bf16.msra.mxu0 0
      %1561 = vmatpush.bf16.msra.mxu0 %v1553
      %1562 = vmatpush.bf16.msra.mxu0 %v1542
      %1563 = vmatmul.bf16.gmra.mxu0 %v1547
      %v1564 = vpop.f32.mrf.mxu0
      %v1565 = vadd.f32 0.0, %v1564
      %v1566 = vpop.f32.mrf.mxu0
      %v1567 = vadd.f32 0.0, %v1566
      %1568 = vmatmul.bf16.gmra.mxu0 %v1550
      %v1569 = vpop.f32.mrf.mxu0
      %v1570 = vadd.f32 0.0, %v1569
      %v1571 = vpop.f32.mrf.mxu0
      %1572 = vdwg.mxu0
      %1576 = vrot.lane.b32.xlu0 %v1565, 32
      %v1577 = vpop.permute.xlu0 %1576
      %1578 = vrot.lane.b32.xlu0 %v1567, 32
      %v1579 = vpop.permute.xlu0 %1578
      %1580 = vrot.lane.b32.xlu0 %v1570, 32
      %v1581 = vpop.permute.xlu0 %1580
      %vm1585 = vcmask 392448
      %1586 = vst.msk [vmem:[#allocation4] sm:$0xff] %vm1585, %v1577
      %1587 = vst.msk [vmem:[#allocation4 + $0x8] sm:$0xff] %vm1585, %v1579
      %vm1588 = vcmask 385280
      %1589 = vst.msk [vmem:[#allocation4 + $0x10] sm:$0x1] %vm1588, %v1581
      %v1590 = vld [vmem:[#allocation2 + $0x8] sm:$0xff]
      %v1591 = vld [vmem:[#allocation2 + $0x18] sm:$0xff]
      %v1592 = vld [vmem:[#allocation2 + $0x28] sm:$0x1]
      %v1593 = vld [vmem:[#allocation3 + $0x33] sm:$0xff]
      %v1594 = vld [vmem:[#allocation3 + $0x3b] sm:$0xff]
      %v1595 = vld [vmem:[#allocation3 + $0x43] sm:$0x1]
      %v1596 = vpack.c.bf16 %v1594, %v1593
      %v1597 = vpack.c.bf16 %v1595, %v1595
      %v1598 = vpack.c.bf16 %v1591, %v1590
      %v1599 = vpack.c.bf16 %v1592, %v1592
      %1602 = vrot.lane.b32.xlu0 %v1598, 80
      %v1603 = vpop.permute.xlu0 %1602
      %1604 = vrot.lane.b32.xlu0 %v1599, 80
      %v1605 = vpop.permute.xlu0 %1604
      %v1608 = vsel %vm1136, %v1596, 0
      %v1611 = vsel %vm1136, %v1597, 0
      %v1614 = vand.u32 %v1605, %v1442
      %1616 = vmatpush.bf16.msra.mxu0 0
      %1617 = vmatpush.bf16.msra.mxu0 0
      %1618 = vmatpush.bf16.msra.mxu0 0
      %1619 = vmatpush.bf16.msra.mxu0 0
      %1620 = vmatpush.bf16.msra.mxu0 0
      %1621 = vmatpush.bf16.msra.mxu0 0
      %1622 = vmatpush.bf16.msra.mxu0 %v1614
      %1623 = vmatpush.bf16.msra.mxu0 %v1603
      %1624 = vmatmul.bf16.gmra.mxu0 %v1608
      %v1625 = vpop.f32.mrf.mxu0
      %v1626 = vadd.f32 0.0, %v1625
      %v1627 = vpop.f32.mrf.mxu0
      %v1628 = vadd.f32 0.0, %v1627
      %1629 = vmatmul.bf16.gmra.mxu0 %v1611
      %v1630 = vpop.f32.mrf.mxu0
      %v1631 = vadd.f32 0.0, %v1630
      %v1632 = vpop.f32.mrf.mxu0
      %1633 = vdwg.mxu0
      %1637 = vrot.lane.b32.xlu0 %v1626, 48
      %v1638 = vpop.permute.xlu0 %1637
      %1639 = vrot.lane.b32.xlu0 %v1628, 48
      %v1640 = vpop.permute.xlu0 %1639
      %1641 = vrot.lane.b32.xlu0 %v1631, 48
      %v1642 = vpop.permute.xlu0 %1641
      %vm1646 = vcmask 523648
      %1647 = vst.msk [vmem:[#allocation4] sm:$0xff] %vm1646, %v1638
      %1648 = vst.msk [vmem:[#allocation4 + $0x8] sm:$0xff] %vm1646, %v1640
      %vm1649 = vcmask 516480
      %1650 = vst.msk [vmem:[#allocation4 + $0x10] sm:$0x1] %vm1649, %v1642
      %v1651 = vld [vmem:[#allocation4] sm:$0xff]
      %v1652 = vld [vmem:[#allocation4 + $0x8] sm:$0xff]
      %v1653 = vld [vmem:[#allocation4 + $0x10] sm:$0x1]
      %v1654 = vpack.c.bf16 %v1652, %v1651
      %v1655 = vpack.c.bf16 %v1653, %v1653
      %v1656 = vld [vmem:[%s762] sm:$0xf]
      %v1657 = vld [vmem:[%s762 + $0x4] sm:$0xf]
      %v1658 = vld [vmem:[%s762 + $0x8] sm:$0xf]
      %v1659 = vld [vmem:[%s762 + $0xc] sm:$0xf]
      %v1660 = vld [vmem:[%s762 + $0x10] sm:$0xf]
      %v1661 = vld [vmem:[%s762 + $0x14] sm:$0xf]
      %v1662 = vld [vmem:[%s762 + $0x18] sm:$0xf]
      %v1663 = vld [vmem:[%s762 + $0x1c] sm:$0xf]
      %v1672 = vunpack.c.l.b16 %v1656
      %v1673 = vunpack.c.l.b16 %v1657
      %v1674 = vunpack.c.l.b16 %v1658
      %v1675 = vunpack.c.l.b16 %v1659
      %v1676 = vunpack.c.l.b16 %v1660
      %v1677 = vunpack.c.l.b16 %v1661
      %v1678 = vunpack.c.l.b16 %v1662
      %v1679 = vunpack.c.l.b16 %v1663
      %v1680 = vpack.c.b16 %v1673, %v1672
      %v1681 = vpack.c.b16 %v1675, %v1674
      %v1682 = vpack.c.b16 %v1677, %v1676
      %v1683 = vpack.c.b16 %v1679, %v1678
      %v1689 = vsel %vm898, %v1654, 0
      %v1692 = vsel %vm898, %v1655, 0
      %1694 = vmatpush.bf16.msra.mxu0 0
      %1695 = vmatpush.bf16.msra.mxu0 0
      %1696 = vmatpush.bf16.msra.mxu0 0
      %1697 = vmatpush.bf16.msra.mxu0 0
      %1698 = vmatpush.bf16.msra.mxu0 %v1683
      %1699 = vmatpush.bf16.msra.mxu0 %v1682
      %1700 = vmatpush.bf16.msra.mxu0 %v1681
      %1701 = vmatpush.bf16.msra.mxu0 %v1680
      %1702 = vmatmul.bf16.gmra.mxu0 %v1689
      %v1703 = vpop.f32.mrf.mxu0
      %v1704 = vadd.f32 0.0, %v1703
      %v1705 = vpop.f32.mrf.mxu0
      %v1706 = vadd.f32 0.0, %v1705
      %1707 = vmatmul.bf16.gmra.mxu0 %v1692
      %v1708 = vpop.f32.mrf.mxu0
      %v1709 = vadd.f32 0.0, %v1708
      %v1710 = vpop.f32.mrf.mxu0
      %1711 = vdwg.mxu0
      %v1712 = vadd.f32 %v893, %v1704
      %v1713 = vadd.f32 %v894, %v1706
      %v1714 = vadd.f32 %v895, %v1709
      %v1715 = vld [vmem:[%s765] sm:$0x1]
      %v1717 = vperm.slane %v1715, 0
      %v1719 = vadd.f32 %v1712, %v1717
      %v1720 = vadd.f32 %v1713, %v1717
      %v1721 = vadd.f32 %v1714, %v1717
      %v1722 = vld [vmem:[%s768] sm:$0x1]
      %v1723 = vld [vmem:[%s771] sm:$0x1]
      %v1724 = vsel %vm898, %v1719, 0.0
      %1725 = vadd.xlane.f32.xlu0 %v1724
      %v1726 = vpop.xlane.xlu0 %1725
      %v1727 = vsel %vm898, %v1720, 0.0
      %1728 = vadd.xlane.f32.xlu0 %v1727
      %v1729 = vpop.xlane.xlu0 %1728
      %v1730 = vsel %vm905, %v1721, 0.0
      %1731 = vadd.xlane.f32.xlu0 %v1730
      %v1732 = vpop.xlane.xlu0 %1731
      %v1733 = vmul.f32 %v1726, %v915
      %v1734 = vmul.f32 %v1729, %v915
      %v1735 = vmul.f32 %v1732, %v915
      %v1736 = vsub.f32 %v1719, %v1733
      %v1737 = vsub.f32 %v1720, %v1734
      %v1738 = vsub.f32 %v1721, %v1735
      %v1739 = vmul.f32 %v1736, %v1736
      %v1740 = vmul.f32 %v1737, %v1737
      %v1741 = vmul.f32 %v1738, %v1738
      %v1742 = vsel %vm898, %v1739, 0.0
      %1743 = vadd.xlane.f32.xlu0 %v1742
      %v1744 = vpop.xlane.xlu0 %1743
      %v1745 = vsel %vm898, %v1740, 0.0
      %1746 = vadd.xlane.f32.xlu0 %v1745
      %v1747 = vpop.xlane.xlu0 %1746
      %v1748 = vsel %vm905, %v1741, 0.0
      %1749 = vadd.xlane.f32.xlu0 %v1748
      %v1750 = vpop.xlane.xlu0 %1749
      %v1751 = vmul.f32 %v1744, %v915
      %v1752 = vmul.f32 %v1747, %v915
      %v1753 = vmul.f32 %v1750, %v915
      %v1754 = vadd.f32 %v1751, 1e-05
      %v1755 = vadd.f32 %v1752, 1e-05
      %v1756 = vadd.f32 %v1753, 1e-05
      %v1757 = vrsqrt.pop %v1754
      %v1758 = vmul.f32 %v1757, %v1754
      %v1759 = vmul.f32 %v1758, %v1757
      %v1760 = vmul.f32 0.5, %v1759
      %v1761 = vsub.f32 1.5, %v1760
      %v1762 = vmul.f32 %v1757, %v1761
      %vm1763 = vweird.f32 %v1754
      %vm1764 = vweird.f32 %v1757
      %vm1765 = vmor %vm1763, %vm1764
      %v1766 = vsel %vm1765, %v1757, %v1762
      %v1767 = vrsqrt.pop %v1755
      %v1768 = vmul.f32 %v1767, %v1755
      %v1769 = vmul.f32 %v1768, %v1767
      %v1770 = vmul.f32 0.5, %v1769
      %v1771 = vsub.f32 1.5, %v1770
      %v1772 = vmul.f32 %v1767, %v1771
      %vm1773 = vweird.f32 %v1755
      %vm1774 = vweird.f32 %v1767
      %vm1775 = vmor %vm1773, %vm1774
      %v1776 = vsel %vm1775, %v1767, %v1772
      %v1777 = vrsqrt.pop %v1756
      %v1778 = vmul.f32 %v1777, %v1756
      %v1779 = vmul.f32 %v1778, %v1777
      %v1780 = vmul.f32 0.5, %v1779
      %v1781 = vsub.f32 1.5, %v1780
      %v1782 = vmul.f32 %v1777, %v1781
      %vm1783 = vweird.f32 %v1756
      %vm1784 = vweird.f32 %v1777
      %vm1785 = vmor %vm1783, %vm1784
      %v1786 = vsel %vm1785, %v1777, %v1782
      %v1787 = vmul.f32 %v1736, %v1766
      %v1788 = vmul.f32 %v1737, %v1776
      %v1789 = vmul.f32 %v1738, %v1786
      %v1791 = vperm.slane %v1722, 0
      %v1793 = vmul.f32 %v1787, %v1791
      %v1794 = vmul.f32 %v1788, %v1791
      %v1795 = vmul.f32 %v1789, %v1791
      %v1797 = vperm.slane %v1723, 0
      %v1799 = vadd.f32 %v1793, %v1797
      %v1800 = vadd.f32 %v1794, %v1797
      %v1801 = vadd.f32 %v1795, %v1797
      %v1802 = vpack.c.bf16 %v1800, %v1799
      %v1803 = vpack.c.bf16 %v1801, %v1801
      %v1804 = vld [vmem:[%s776] sm:$0xff]
      %v1805 = vld [vmem:[%s776 + $0x8] sm:$0xff]
      %v1806 = vld [vmem:[%s776 + $0x10] sm:$0xff]
      %v1807 = vld [vmem:[%s776 + $0x18] sm:$0xff]
      %v1808 = vld [vmem:[%s776 + $0x20] sm:$0xff]
      %v1809 = vld [vmem:[%s776 + $0x28] sm:$0xff]
      %v1810 = vld [vmem:[%s776 + $0x30] sm:$0xff]
      %v1811 = vld [vmem:[%s776 + $0x38] sm:$0xff]
      %v1812 = vld [vmem:[%s780] sm:$0x3]
      %v1814 = vperm.slane %v1812, 0
      %v1815 = vperm.slane %v1812, 1
      %v1826 = vunpack.c.l.b16 %v1804
      %v1827 = vunpack.c.h.b16 %v1804
      %v1828 = vunpack.c.l.b16 %v1805
      %v1829 = vunpack.c.h.b16 %v1805
      %v1830 = vunpack.c.l.b16 %v1806
      %v1831 = vunpack.c.h.b16 %v1806
      %v1832 = vunpack.c.l.b16 %v1807
      %v1833 = vunpack.c.h.b16 %v1807
      %v1834 = vunpack.c.l.b16 %v1808
      %v1835 = vunpack.c.h.b16 %v1808
      %v1836 = vunpack.c.l.b16 %v1809
      %v1837 = vunpack.c.h.b16 %v1809
      %v1838 = vunpack.c.l.b16 %v1810
      %v1839 = vunpack.c.h.b16 %v1810
      %v1840 = vunpack.c.l.b16 %v1811
      %v1841 = vunpack.c.h.b16 %v1811
      %v1842 = vpack.c.b16 %v1828, %v1826
      %v1843 = vpack.c.b16 %v1829, %v1827
      %v1844 = vpack.c.b16 %v1832, %v1830
      %v1845 = vpack.c.b16 %v1833, %v1831
      %v1846 = vpack.c.b16 %v1836, %v1834
      %v1847 = vpack.c.b16 %v1837, %v1835
      %v1848 = vpack.c.b16 %v1840, %v1838
      %v1849 = vpack.c.b16 %v1841, %v1839
      %v1859 = vsel %vm898, %v1802, 0
      %v1862 = vsel %vm898, %v1803, 0
      %1864 = vmatpush.bf16.msra.mxu0 0
      %1865 = vmatpush.bf16.msra.mxu0 0
      %1866 = vmatpush.bf16.msra.mxu0 0
      %1867 = vmatpush.bf16.msra.mxu0 0
      %1868 = vmatpush.bf16.msra.mxu0 %v1848
      %1869 = vmatpush.bf16.msra.mxu0 %v1846
      %1870 = vmatpush.bf16.msra.mxu0 %v1844
      %1871 = vmatpush.bf16.msra.mxu0 %v1842
      %1872 = vmatmul.bf16.gmra.mxu0 %v1859
      %v1873 = vpop.f32.mrf.mxu0
      %v1874 = vadd.f32 %v1814, %v1873
      %v1875 = vpop.f32.mrf.mxu0
      %v1876 = vadd.f32 %v1814, %v1875
      %1877 = vmatmul.bf16.gmra.mxu0 %v1862
      %v1878 = vpop.f32.mrf.mxu0
      %v1879 = vadd.f32 %v1814, %v1878
      %v1880 = vpop.f32.mrf.mxu0
      %1881 = vdwg.mxu0
      %1882 = vmatpush.bf16.msra.mxu0 0
      %1883 = vmatpush.bf16.msra.mxu0 0
      %1884 = vmatpush.bf16.msra.mxu0 0
      %1885 = vmatpush.bf16.msra.mxu0 0
      %1886 = vmatpush.bf16.msra.mxu0 %v1849
      %1887 = vmatpush.bf16.msra.mxu0 %v1847
      %1888 = vmatpush.bf16.msra.mxu0 %v1845
      %1889 = vmatpush.bf16.msra.mxu0 %v1843
      %1890 = vmatmul.bf16.gmra.mxu0 %v1859
      %v1891 = vpop.f32.mrf.mxu0
      %v1892 = vadd.f32 %v1815, %v1891
      %v1893 = vpop.f32.mrf.mxu0
      %v1894 = vadd.f32 %v1815, %v1893
      %1895 = vmatmul.bf16.gmra.mxu0 %v1862
      %v1896 = vpop.f32.mrf.mxu0
      %v1897 = vadd.f32 %v1815, %v1896
      %v1898 = vpop.f32.mrf.mxu0
      %1899 = vdwg.mxu0
      %v1900 = vmul.f32 %v1874, 1.702
      %v1901 = vmul.f32 %v1892, 1.702
      %v1902 = vmul.f32 %v1876, 1.702
      %v1903 = vmul.f32 %v1894, 1.702
      %v1904 = vmul.f32 %v1879, 1.702
      %v1905 = vmul.f32 %v1897, 1.702
      %v1906 = vxor.u32 %v1900, 2147483648
      %v1907 = vxor.u32 %v1901, 2147483648
      %v1908 = vxor.u32 %v1902, 2147483648
      %v1909 = vxor.u32 %v1903, 2147483648
      %v1910 = vxor.u32 %v1904, 2147483648
      %v1911 = vxor.u32 %v1905, 2147483648
      %v1912 = vmul.f32 %v1906, 1.442695
      %v1913 = vpow.pop %v1912
      %v1914 = vmul.f32 %v1907, 1.442695
      %v1915 = vpow.pop %v1914
      %v1916 = vmul.f32 %v1908, 1.442695
      %v1917 = vpow.pop %v1916
      %v1918 = vmul.f32 %v1909, 1.442695
      %v1919 = vpow.pop %v1918
      %v1920 = vmul.f32 %v1910, 1.442695
      %v1921 = vpow.pop %v1920
      %v1922 = vmul.f32 %v1911, 1.442695
      %v1923 = vpow.pop %v1922
      %v1924 = vadd.f32 %v1913, 1.0
      %v1925 = vadd.f32 %v1915, 1.0
      %v1926 = vadd.f32 %v1917, 1.0
      %v1927 = vadd.f32 %v1919, 1.0
      %v1928 = vadd.f32 %v1921, 1.0
      %v1929 = vadd.f32 %v1923, 1.0
      %v1930 = vrcp.pop %v1924
      %v1931 = vmul.f32 %v1924, %v1930
      %v1932 = vsub.f32 1.0, %v1931
      %v1933 = vmul.f32 %v1930, %v1932
      %v1934 = vadd.f32 %v1930, %v1933
      %vm1935 = vweird.f32 %v1924
      %vm1936 = vweird.f32 %v1930
      %vm1937 = vmor %vm1935, %vm1936
      %v1938 = vsel %vm1937, %v1930, %v1934
      %v1939 = vand.u32 2147483647, %v1924
      %vm1940 = vcmp.eq.f32.partialorder %v1939, 8.507059e+37
      %v1941 = vand.u32 %v1924, 2147483648
      %v1942 = vor.u32 1.1754944e-38, %v1941
      %v1943 = vsel %vm1940, %v1942, %v1938
      %v1944 = vmul.f32 1.0, %v1943
      %v1945 = vrcp.pop %v1925
      %v1946 = vmul.f32 %v1925, %v1945
      %v1947 = vsub.f32 1.0, %v1946
      %v1948 = vmul.f32 %v1945, %v1947
      %v1949 = vadd.f32 %v1945, %v1948
      %vm1950 = vweird.f32 %v1925
      %vm1951 = vweird.f32 %v1945
      %vm1952 = vmor %vm1950, %vm1951
      %v1953 = vsel %vm1952, %v1945, %v1949
      %v1954 = vand.u32 2147483647, %v1925
      %vm1955 = vcmp.eq.f32.partialorder %v1954, 8.507059e+37
      %v1956 = vand.u32 %v1925, 2147483648
      %v1957 = vor.u32 1.1754944e-38, %v1956
      %v1958 = vsel %vm1955, %v1957, %v1953
      %v1959 = vmul.f32 1.0, %v1958
      %v1960 = vrcp.pop %v1926
      %v1961 = vmul.f32 %v1926, %v1960
      %v1962 = vsub.f32 1.0, %v1961
      %v1963 = vmul.f32 %v1960, %v1962
      %v1964 = vadd.f32 %v1960, %v1963
      %vm1965 = vweird.f32 %v1926
      %vm1966 = vweird.f32 %v1960
      %vm1967 = vmor %vm1965, %vm1966
      %v1968 = vsel %vm1967, %v1960, %v1964
      %v1969 = vand.u32 2147483647, %v1926
      %vm1970 = vcmp.eq.f32.partialorder %v1969, 8.507059e+37
      %v1971 = vand.u32 %v1926, 2147483648
      %v1972 = vor.u32 1.1754944e-38, %v1971
      %v1973 = vsel %vm1970, %v1972, %v1968
      %v1974 = vmul.f32 1.0, %v1973
      %v1975 = vrcp.pop %v1927
      %v1976 = vmul.f32 %v1927, %v1975
      %v1977 = vsub.f32 1.0, %v1976
      %v1978 = vmul.f32 %v1975, %v1977
      %v1979 = vadd.f32 %v1975, %v1978
      %vm1980 = vweird.f32 %v1927
      %vm1981 = vweird.f32 %v1975
      %vm1982 = vmor %vm1980, %vm1981
      %v1983 = vsel %vm1982, %v1975, %v1979
      %v1984 = vand.u32 2147483647, %v1927
      %vm1985 = vcmp.eq.f32.partialorder %v1984, 8.507059e+37
      %v1986 = vand.u32 %v1927, 2147483648
      %v1987 = vor.u32 1.1754944e-38, %v1986
      %v1988 = vsel %vm1985, %v1987, %v1983
      %v1989 = vmul.f32 1.0, %v1988
      %v1990 = vrcp.pop %v1928
      %v1991 = vmul.f32 %v1928, %v1990
      %v1992 = vsub.f32 1.0, %v1991
      %v1993 = vmul.f32 %v1990, %v1992
      %v1994 = vadd.f32 %v1990, %v1993
      %vm1995 = vweird.f32 %v1928
      %vm1996 = vweird.f32 %v1990
      %vm1997 = vmor %vm1995, %vm1996
      %v1998 = vsel %vm1997, %v1990, %v1994
      %v1999 = vand.u32 2147483647, %v1928
      %vm2000 = vcmp.eq.f32.partialorder %v1999, 8.507059e+37
      %v2001 = vand.u32 %v1928, 2147483648
      %v2002 = vor.u32 1.1754944e-38, %v2001
      %v2003 = vsel %vm2000, %v2002, %v1998
      %v2004 = vmul.f32 1.0, %v2003
      %v2005 = vrcp.pop %v1929
      %v2006 = vmul.f32 %v1929, %v2005
      %v2007 = vsub.f32 1.0, %v2006
      %v2008 = vmul.f32 %v2005, %v2007
      %v2009 = vadd.f32 %v2005, %v2008
      %vm2010 = vweird.f32 %v1929
      %vm2011 = vweird.f32 %v2005
      %vm2012 = vmor %vm2010, %vm2011
      %v2013 = vsel %vm2012, %v2005, %v2009
      %v2014 = vand.u32 2147483647, %v1929
      %vm2015 = vcmp.eq.f32.partialorder %v2014, 8.507059e+37
      %v2016 = vand.u32 %v1929, 2147483648
      %v2017 = vor.u32 1.1754944e-38, %v2016
      %v2018 = vsel %vm2015, %v2017, %v2013
      %v2019 = vmul.f32 1.0, %v2018
      %v2020 = vmul.f32 %v1874, %v1944
      %v2021 = vmul.f32 %v1892, %v1959
      %v2022 = vmul.f32 %v1876, %v1974
      %v2023 = vmul.f32 %v1894, %v1989
      %v2024 = vmul.f32 %v1879, %v2004
      %v2025 = vmul.f32 %v1897, %v2019
      %v2026 = vpack.c.bf16 %v2022, %v2020
      %v2027 = vpack.c.bf16 %v2023, %v2021
      %v2028 = vpack.c.bf16 %v2024, %v2024
      %v2029 = vpack.c.bf16 %v2025, %v2025
      %v2030 = vld [vmem:[%s785] sm:$0xf]
      %v2031 = vld [vmem:[%s785 + $0x4] sm:$0xf]
      %v2032 = vld [vmem:[%s785 + $0x8] sm:$0xf]
      %v2033 = vld [vmem:[%s785 + $0xc] sm:$0xf]
      %v2034 = vld [vmem:[%s785 + $0x10] sm:$0xf]
      %v2035 = vld [vmem:[%s785 + $0x14] sm:$0xf]
      %v2036 = vld [vmem:[%s785 + $0x18] sm:$0xf]
      %v2037 = vld [vmem:[%s785 + $0x1c] sm:$0xf]
      %v2038 = vld [vmem:[%s785 + $0x20] sm:$0xf]
      %v2039 = vld [vmem:[%s785 + $0x24] sm:$0xf]
      %v2040 = vld [vmem:[%s785 + $0x28] sm:$0xf]
      %v2041 = vld [vmem:[%s785 + $0x2c] sm:$0xf]
      %v2042 = vld [vmem:[%s785 + $0x30] sm:$0xf]
      %v2043 = vld [vmem:[%s785 + $0x34] sm:$0xf]
      %v2044 = vld [vmem:[%s785 + $0x38] sm:$0xf]
      %v2045 = vld [vmem:[%s785 + $0x3c] sm:$0xf]
      %v2046 = vld [vmem:[%s785 + $0x40] sm:$0xf]
      %v2047 = vld [vmem:[%s785 + $0x44] sm:$0xf]
      %v2048 = vld [vmem:[%s785 + $0x48] sm:$0xf]
      %v2049 = vld [vmem:[%s785 + $0x4c] sm:$0xf]
      %v2050 = vld [vmem:[%s785 + $0x50] sm:$0xf]
      %v2051 = vld [vmem:[%s785 + $0x54] sm:$0xf]
      %v2052 = vld [vmem:[%s785 + $0x58] sm:$0xf]
      %v2053 = vld [vmem:[%s785 + $0x5c] sm:$0xf]
      %v2054 = vld [vmem:[%s785 + $0x60] sm:$0xf]
      %v2055 = vld [vmem:[%s785 + $0x64] sm:$0xf]
      %v2056 = vld [vmem:[%s785 + $0x68] sm:$0xf]
      %v2057 = vld [vmem:[%s785 + $0x6c] sm:$0xf]
      %v2058 = vld [vmem:[%s785 + $0x70] sm:$0xf]
      %v2059 = vld [vmem:[%s785 + $0x74] sm:$0xf]
      %v2060 = vld [vmem:[%s785 + $0x78] sm:$0xf]
      %v2061 = vld [vmem:[%s785 + $0x7c] sm:$0xf]
      %v2094 = vunpack.c.l.b16 %v2030
      %v2095 = vunpack.c.l.b16 %v2031
      %v2096 = vunpack.c.l.b16 %v2032
      %v2097 = vunpack.c.l.b16 %v2033
      %v2098 = vunpack.c.l.b16 %v2034
      %v2099 = vunpack.c.l.b16 %v2035
      %v2100 = vunpack.c.l.b16 %v2036
      %v2101 = vunpack.c.l.b16 %v2037
      %v2102 = vunpack.c.l.b16 %v2038
      %v2103 = vunpack.c.l.b16 %v2039
      %v2104 = vunpack.c.l.b16 %v2040
      %v2105 = vunpack.c.l.b16 %v2041
      %v2106 = vunpack.c.l.b16 %v2042
      %v2107 = vunpack.c.l.b16 %v2043
      %v2108 = vunpack.c.l.b16 %v2044
      %v2109 = vunpack.c.l.b16 %v2045
      %v2110 = vunpack.c.l.b16 %v2046
      %v2111 = vunpack.c.l.b16 %v2047
      %v2112 = vunpack.c.l.b16 %v2048
      %v2113 = vunpack.c.l.b16 %v2049
      %v2114 = vunpack.c.l.b16 %v2050
      %v2115 = vunpack.c.l.b16 %v2051
      %v2116 = vunpack.c.l.b16 %v2052
      %v2117 = vunpack.c.l.b16 %v2053
      %v2118 = vunpack.c.l.b16 %v2054
      %v2119 = vunpack.c.l.b16 %v2055
      %v2120 = vunpack.c.l.b16 %v2056
      %v2121 = vunpack.c.l.b16 %v2057
      %v2122 = vunpack.c.l.b16 %v2058
      %v2123 = vunpack.c.l.b16 %v2059
      %v2124 = vunpack.c.l.b16 %v2060
      %v2125 = vunpack.c.l.b16 %v2061
      %v2126 = vpack.c.b16 %v2095, %v2094
      %v2127 = vpack.c.b16 %v2097, %v2096
      %v2128 = vpack.c.b16 %v2099, %v2098
      %v2129 = vpack.c.b16 %v2101, %v2100
      %v2130 = vpack.c.b16 %v2103, %v2102
      %v2131 = vpack.c.b16 %v2105, %v2104
      %v2132 = vpack.c.b16 %v2107, %v2106
      %v2133 = vpack.c.b16 %v2109, %v2108
      %v2134 = vpack.c.b16 %v2111, %v2110
      %v2135 = vpack.c.b16 %v2113, %v2112
      %v2136 = vpack.c.b16 %v2115, %v2114
      %v2137 = vpack.c.b16 %v2117, %v2116
      %v2138 = vpack.c.b16 %v2119, %v2118
      %v2139 = vpack.c.b16 %v2121, %v2120
      %v2140 = vpack.c.b16 %v2123, %v2122
      %v2141 = vpack.c.b16 %v2125, %v2124
      %2158 = vmatpush.bf16.msra.mxu0 %v2133
      %2159 = vmatpush.bf16.msra.mxu0 %v2132
      %2160 = vmatpush.bf16.msra.mxu0 %v2131
      %2161 = vmatpush.bf16.msra.mxu0 %v2130
      %2162 = vmatpush.bf16.msra.mxu0 %v2129
      %2163 = vmatpush.bf16.msra.mxu0 %v2128
      %2164 = vmatpush.bf16.msra.mxu0 %v2127
      %2165 = vmatpush.bf16.msra.mxu0 %v2126
      %2166 = vmatmul.bf16.gmra.mxu0 %v2026
      %v2167 = vpop.f32.mrf.mxu0
      %v2168 = vadd.f32 0.0, %v2167
      %v2169 = vpop.f32.mrf.mxu0
      %v2170 = vadd.f32 0.0, %v2169
      %2171 = vmatmul.bf16.gmra.mxu0 %v2028
      %v2172 = vpop.f32.mrf.mxu0
      %v2173 = vadd.f32 0.0, %v2172
      %v2174 = vpop.f32.mrf.mxu0
      %2175 = vdwg.mxu0
      %2176 = vmatpush.bf16.msra.mxu0 %v2141
      %2177 = vmatpush.bf16.msra.mxu0 %v2140
      %2178 = vmatpush.bf16.msra.mxu0 %v2139
      %2179 = vmatpush.bf16.msra.mxu0 %v2138
      %2180 = vmatpush.bf16.msra.mxu0 %v2137
      %2181 = vmatpush.bf16.msra.mxu0 %v2136
      %2182 = vmatpush.bf16.msra.mxu0 %v2135
      %2183 = vmatpush.bf16.msra.mxu0 %v2134
      %2184 = vmatmul.bf16.gmra.mxu0 %v2027
      %v2185 = vpop.f32.mrf.mxu0
      %v2186 = vadd.f32 %v2168, %v2185
      %v2187 = vpop.f32.mrf.mxu0
      %v2188 = vadd.f32 %v2170, %v2187
      %2189 = vmatmul.bf16.gmra.mxu0 %v2029
      %v2190 = vpop.f32.mrf.mxu0
      %v2191 = vadd.f32 %v2173, %v2190
      %v2192 = vpop.f32.mrf.mxu0
      %2193 = vdwg.mxu0
      %v2194 = vadd.f32 %v1719, %v2186
      %v2195 = vadd.f32 %v1720, %v2188
      %v2196 = vadd.f32 %v1721, %v2191
      %v2197 = vld [vmem:[%s788] sm:$0x1]
      %v2199 = vperm.slane %v2197, 0
      %v2201 = vadd.f32 %v2194, %v2199
      %v2202 = vadd.f32 %v2195, %v2199
      %v2203 = vadd.f32 %v2196, %v2199
      %2204 = vst.msk [vmem:[#allocation5] sm:$0xff] %vm898, %v2201
      %2205 = vst.msk [vmem:[#allocation5 + $0x8] sm:$0xff] %vm898, %v2202
      %2206 = vst.msk [vmem:[#allocation5 + $0x10] sm:$0x1] %vm905, %v2203
      %p2207 = scmp.eq.s32.totalorder %s43, 1
      // Predicated region
      $region97: #{_forward_numeric.6} parent=91 // pred_check
        %p2208 = pneg %p2207
      $region98: #{_forward_numeric.6} parent=91 // pred_check_branch
        %2210 = sbr.rel (%p2208) target = $region100
      $region99: #{_forward_numeric.6} parent=91 // pred_region
        %s2211 = sld [smem:[#allocation7 + %s42]]
        %s2212 = scalar_lea.vmem [#allocation5], %s2211
        %v2213 = vld [vmem:[%s2212] sm:$0x1]
        %v2214 = vld [vmem:[%s16] sm:$0x1]
        %v2215 = vld [vmem:[%s17] sm:$0x1]
        %v2216 = vsel %vm905, %v2213, 0.0
        %2217 = vadd.xlane.f32.xlu0 %v2216
        %v2218 = vpop.xlane.xlu0 %2217
        %v2219 = vmul.f32 %v2218, %v915
        %v2220 = vsub.f32 %v2213, %v2219
        %v2221 = vmul.f32 %v2220, %v2220
        %v2222 = vsel %vm905, %v2221, 0.0
        %2223 = vadd.xlane.f32.xlu0 %v2222
        %v2224 = vpop.xlane.xlu0 %2223
        %v2225 = vmul.f32 %v2224, %v915
        %v2226 = vadd.f32 %v2225, 1e-05
        %v2227 = vrsqrt.pop %v2226
        %v2228 = vmul.f32 %v2227, %v2226
        %v2229 = vmul.f32 %v2228, %v2227
        %v2230 = vmul.f32 0.5, %v2229
        %v2231 = vsub.f32 1.5, %v2230
        %v2232 = vmul.f32 %v2227, %v2231
        %vm2233 = vweird.f32 %v2226
        %vm2234 = vweird.f32 %v2227
        %vm2235 = vmor %vm2233, %vm2234
        %v2236 = vsel %vm2235, %v2227, %v2232
        %v2237 = vmul.f32 %v2220, %v2236
        %v2238 = vmul.f32 %v2237, %v2214
        %v2239 = vadd.f32 %v2238, %v2215
        %v2240 = vpack.c.bf16 %v2239, %v2239
        %v2241 = vld [vmem:[%s18] sm:$0xf]
        %v2242 = vld [vmem:[%s18 + $0x4] sm:$0xf]
        %v2243 = vld [vmem:[%s18 + $0x8] sm:$0xf]
        %v2244 = vld [vmem:[%s18 + $0xc] sm:$0xf]
        %v2245 = vld [vmem:[%s18 + $0x10] sm:$0xf]
        %v2246 = vld [vmem:[%s18 + $0x14] sm:$0xf]
        %v2247 = vld [vmem:[%s18 + $0x18] sm:$0xf]
        %v2248 = vld [vmem:[%s18 + $0x1c] sm:$0xf]
        %v2257 = vunpack.c.l.b16 %v2241
        %v2258 = vunpack.c.l.b16 %v2242
        %v2259 = vunpack.c.l.b16 %v2243
        %v2260 = vunpack.c.l.b16 %v2244
        %v2261 = vunpack.c.l.b16 %v2245
        %v2262 = vunpack.c.l.b16 %v2246
        %v2263 = vunpack.c.l.b16 %v2247
        %v2264 = vunpack.c.l.b16 %v2248
        %v2265 = vpack.c.b16 %v2258, %v2257
        %v2266 = vpack.c.b16 %v2260, %v2259
        %v2267 = vpack.c.b16 %v2262, %v2261
        %v2268 = vpack.c.b16 %v2264, %v2263
        %v2274 = vsel %vm898, %v2240, 0
        %2276 = vmatpush.bf16.msra.mxu0 0
        %2277 = vmatpush.bf16.msra.mxu0 0
        %2278 = vmatpush.bf16.msra.mxu0 0
        %2279 = vmatpush.bf16.msra.mxu0 0
        %2280 = vmatpush.bf16.msra.mxu0 %v2268
        %2281 = vmatpush.bf16.msra.mxu0 %v2267
        %2282 = vmatpush.bf16.msra.mxu0 %v2266
        %2283 = vmatpush.bf16.msra.mxu0 %v2265
        %2284 = vmatmul.bf16.gmra.mxu0 %v2274
        %v2285 = vpop.f32.mrf.mxu0
        %v2286 = vadd.f32 0.0, %v2285
        %v2287 = vpop.f32.mrf.mxu0
        %2288 = vdwg.mxu0
        %v2289 = vmul.f32 %v2286, %v2286
        %v2290 = vsel %vm1440, %v2289, 0.0
        %2291 = vadd.xlane.f32.xlu0 %v2290
        %v2292 = vpop.xlane.xlu0 %2291
        %v2293 = vmax.f32 %v2292, 1e-24
        %v2294 = vrsqrt.pop %v2293
        %v2295 = vmul.f32 %v2294, %v2293
        %v2296 = vmul.f32 %v2295, %v2294
        %v2297 = vmul.f32 0.5, %v2296
        %v2298 = vsub.f32 1.5, %v2297
        %v2299 = vmul.f32 %v2294, %v2298
        %vm2300 = vweird.f32 %v2293
        %vm2301 = vweird.f32 %v2294
        %vm2302 = vmor %vm2300, %vm2301
        %v2303 = vsel %vm2302, %v2294, %v2299
        %v2304 = vmul.f32 %v2286, %v2303
        %v2305 = vperm.slane %v2304, 0
        %2306 = vst [vmem:[%s792] sm:$0xff] %v2305
      $region100: #{_forward_numeric.6} parent=91 // pred_fallthru
        _
      %p2307 = scmp.lt.s32.totalorder %s42, 1
      %s2308 = scalar_select %p2307, %s42, 1
      %s2309 = smul.addr %s2308, 8
      %s2310 = scalar_lea.vmem %s19, %s2309
      // Predicated region
      $region101: #{_forward_numeric.6} parent=91 // pred_check
        %p2311 = pneg %p511
      $region102: #{_forward_numeric.6} parent=91 // pred_check_branch
        %2313 = sbr.rel (%p2311) target = $region104
      $region103: #{_forward_numeric.6} parent=91 // pred_region
        _
      $region104: #{_forward_numeric.6} parent=91 // pred_fallthru
        _
    $region92: #{_forward_numeric.6} parent=5 // pred_fallthru
      _
    %p2314 = scmp.le.s32.totalorder 2, %s33
    // Predicated region
    $region105: #{_forward_numeric.6} parent=5 // pred_check
      %p2315 = pneg %p2314
    $region106: #{_forward_numeric.6} parent=5 // pred_check_branch
      %2317 = sbr.rel (%p2315) target = $region108
    $region107: #{_forward_numeric.6} parent=5 // pred_region
      %s2318 = ssub.s32 %s33, 2
      // Predicated region
      $region109: #{_forward_numeric.6} parent=107 // pred_check
        %p2319 = pneg %p517
      $region110: #{_forward_numeric.6} parent=107 // pred_check_branch
        %2321 = sbr.rel (%p2319) target = $region112
      $region111: #{_forward_numeric.6} parent=107 // pred_region
        %p2322 = scmp.lt.s32.totalorder %s44, 1
        %s2323 = scalar_select %p2322, %s44, 1
        %s2324 = smul.addr %s2323, 8
        %s2325 = scalar_lea.vmem %s19, %s2324
      $region112: #{_forward_numeric.6} parent=107 // pred_fallthru
        _
    $region108: #{_forward_numeric.6} parent=5 // pred_fallthru
      _
  $region6: #{_forward_numeric.6} parent=0 // loop_footer
    %s37 = sadd.s32 1, %s33
  $region7: #{_forward_numeric.6} parent=0 // loop_footer_branch
    %32 = sbr.rel target = $region3
  $region8: #{_forward_numeric.6} parent=0 // loop_exit
    _

</llo_original>
